<compile_context>
chip_gen: v7x
topology: tpu7x:2x2x1
jax: 0.10.0
libtpu: 0.0.40
codegen_flags: <defaults>
</compile_context>

<pallas_src>
import functools
import math

import jax
import jax.numpy as jnp
from jax import lax
from jax.experimental import pallas as pl
from jax.experimental.pallas import tpu as pltpu

# ---------------- synthetic small config ----------------
VOCAB        = 128   # bloom vocab (multiple of 128 -> lane-dense logits store)
D_BLOOM      = 32    # bloom_config.hidden_size
D_CUTIE      = 24    # bert_config.hidden_size
D_IMG        = 40    # convnextv2_config.hidden_sizes[-1]  (all differ -> use_projection=True)
N_QUERY      = 8     # cutie query tokens
BLOOM_HEADS  = 4
BLOOM_HDIM   = D_BLOOM // BLOOM_HEADS
BLOOM_LAYERS = 2
CUTIE_HEADS  = 4
CUTIE_HDIM   = D_CUTIE // CUTIE_HEADS
L_IMG        = 16
L_INS        = 8
L_LM         = 8
LN_EPS_BLOOM = 1e-5
LN_EPS_CUTIE = 1e-12
NEG_INF      = -1e9


# ---------------- in-kernel helpers (operate on traced f32 arrays) ----------------
def _ln(x, g, b, eps):
    mu = jnp.mean(x, axis=-1, keepdims=True)
    var = jnp.mean(jnp.square(x - mu), axis=-1, keepdims=True)
    return (x - mu) * lax.rsqrt(var + eps) * g + b


def _gelu(y):  # BLOOM tanh-approx gelu
    return 0.5 * y * (1.0 + jnp.tanh(0.7978845608028654 * y * (1.0 + 0.044715 * y * y)))


def _softmax_rows(s):
    s = s - jnp.max(s, axis=-1, keepdims=True)
    p = jnp.exp(s)
    # approx reciprocal -> EUP slot (kernel is VPU/latency bound; ~1e-3 rel err is fine here)
    return p * pl.reciprocal(jnp.sum(p, axis=-1, keepdims=True), approx=True)


def _mha(q, k, v, head_bias, wo, n_heads, d):
    """q:(Lq,H*d) ALREADY scaled by 1/sqrt(d); k/v:(Lk,H*d); head_bias[h]:(.,Lk) additive.

    Heads are contiguous lane chunks (static slices, no gather/transpose); per-head
    ctx is concatenated and projected with ONE matmul against wo (no bias)."""
    ctxs = []
    for h in range(n_heads):
        sl = slice(h * d, (h + 1) * d)
        s = lax.dot_general(q[:, sl], k[:, sl],
                            dimension_numbers=(((1,), (1,)), ((), ())),
                            preferred_element_type=jnp.float32)          # (Lq, Lk)
        p = _softmax_rows(s + head_bias[h])
        ctxs.append(jnp.dot(p, v[:, sl], preferred_element_type=jnp.float32))   # (Lq, d)
    ctx = jnp.concatenate(ctxs, axis=-1)                                 # (Lq, H*d)
    return jnp.dot(ctx, wo, preferred_element_type=jnp.float32)


# ---------------- single fused kernel ----------------
def _visual_bloom_kernel(*refs, num_layers):
    (img_ref, ids_ref, ctx_mask_ref, cat_mask_ref, arange_ref,
     emb_w, wln_g, wln_b,
     t2c_w, t2c_b, i2c_w, i2c_b,
     qe_ref,
     wq_w, wq_b, wk_w, wk_b, wv_w, wv_b, wo_w, wo_b,
     cln1_g, cln1_b, cw1_w, cw1_b, cw2_w, cw2_b, cln2_g, cln2_b,
     c2t_w, c2t_b) = refs[:31]
    idx = 31
    layer_refs = [refs[idx + 12 * l: idx + 12 * (l + 1)] for l in range(num_layers)]
    idx += 12 * num_layers
    lnf_g, lnf_b = refs[idx:idx + 2]
    out_ref = refs[idx + 2]

    f32 = jnp.float32
    B = ctx_mask_ref.shape[0]
    Lc = L_IMG + L_INS
    L = N_QUERY + L_LM
    D, H, d = D_BLOOM, BLOOM_HEADS, BLOOM_HDIM

    # --- token embeddings via one-hot matmul (no gather HLO, no HBM (B,L,D) intermediate) ---
    ids = ids_ref[...]                                                    # (Ntok, 1) int32
    ntok = ids.shape[0]
    onehot = (ids == lax.broadcasted_iota(jnp.int32, (ntok, VOCAB), 1)).astype(f32)
    tok = jnp.dot(onehot, emb_w[...], preferred_element_type=f32)         # (Ntok, D_BLOOM)
    # word_embeddings_layernorm at the VisualBloom.forward level (both instr & lm tokens)
    tok = _ln(tok, wln_g[...], wln_b[...], LN_EPS_BLOOM)
    n_ins = B * L_INS
    ins = tok[:n_ins]                                                     # (B*L_INS, D_BLOOM)
    lm = tok[n_ins:]                                                      # (B*L_LM,  D_BLOOM)

    # --- Cutie: project to cutie space -> cross-attention block -> project back ---
    img = img_ref[...].astype(f32)                                        # (B*L_IMG, D_IMG)
    img_c = jnp.dot(img, i2c_w[...], preferred_element_type=f32) + i2c_b[...]
    ins_c = jnp.dot(ins, t2c_w[...], preferred_element_type=f32) + t2c_b[...]
    ctx = jnp.concatenate(
        [x for b in range(B)
         for x in (img_c[b * L_IMG:(b + 1) * L_IMG], ins_c[b * L_INS:(b + 1) * L_INS])],
        axis=0)                                                           # (B*Lc, D_CUTIE)
    k_all = jnp.dot(ctx, wk_w[...], preferred_element_type=f32) + wk_b[...]
    v_all = jnp.dot(ctx, wv_w[...], preferred_element_type=f32) + wv_b[...]

    hq = qe_ref[...].astype(f32)                                          # (NQ, D_CUTIE), shared across batch
    q_c = jnp.dot(hq, wq_w[...], preferred_element_type=f32) + wq_b[...]  # wq pre-scaled by 1/sqrt(d)

    attn_rows = []
    for b in range(B):
        pad_bias = jnp.where(ctx_mask_ref[b] > 0.0, 0.0, NEG_INF)         # (1, Lc)
        kb = k_all[b * Lc:(b + 1) * Lc]
        vb = v_all[b * Lc:(b + 1) * Lc]
        attn_rows.append(_mha(q_c, kb, vb, [pad_bias] * CUTIE_HEADS,
                              wo_w[...], CUTIE_HEADS, CUTIE_HDIM))
    attn = jnp.concatenate(attn_rows, axis=0) + wo_b[...]                  # (B*NQ, D_CUTIE)

    hq_b = jnp.concatenate([hq] * B, axis=0)                               # (B*NQ, D_CUTIE)
    hc = _ln(hq_b + attn, cln1_g[...], cln1_b[...], LN_EPS_CUTIE)
    ff = _gelu(jnp.dot(hc, cw1_w[...], preferred_element_type=f32) + cw1_b[...])
    ff = jnp.dot(ff, cw2_w[...], preferred_element_type=f32) + cw2_b[...]
    hc = _ln(hc + ff, cln2_g[...], cln2_b[...], LN_EPS_CUTIE)
    cutie = jnp.dot(hc, c2t_w[...], preferred_element_type=f32) + c2t_b[...]   # (B*NQ, D_BLOOM)

    # --- Bloom LM: cat [cutie ; lm] per batch (stacked along sublanes), LN, layers, head ---
    emb_cat = jnp.concatenate(
        [x for b in range(B)
         for x in (cutie[b * N_QUERY:(b + 1) * N_QUERY], lm[b * L_LM:(b + 1) * L_LM])],
        axis=0)                                                            # (B*L, D)
    # BloomModel applies word_embeddings_layernorm to inputs_embeds (so the lm path is
    # LN'd twice, matching the HF reference exactly).
    h = _ln(emb_cat, wln_g[...], wln_b[...], LN_EPS_BLOOM)

    # additive attention bias (ALiBi + causal + padding), hoisted out of the layer/head loops
    row = lax.broadcasted_iota(jnp.int32, (L, L), 0)
    col = lax.broadcasted_iota(jnp.int32, (L, L), 1)
    causal = col > row
    base = 2.0 ** (-(2.0 ** -(math.log2(H) - 3.0)))                        # HF build_alibi_tensor (H pow2)
    slopes = [base ** (i + 1) for i in range(H)]
    bias = []                                                              # bias[b][h] : (L, L)
    for b in range(B):
        masked = jnp.logical_or(causal, cat_mask_ref[b] <= 0.0)            # (L, L)
        ar = arange_ref[b]                                                  # (1, L) ALiBi positions
        bias.append([jnp.where(masked, NEG_INF, s * ar) for s in slopes])

    # fused Bloom blocks; activations stay in VMEM across the whole stack
    for (ln1_g, ln1_b, qkv_w, qkv_b, dense_w, dense_b,
         ln2_g, ln2_b, w1_w, w1_b, w2_w, w2_b) in layer_refs:
        x = _ln(h, ln1_g[...], ln1_b[...], LN_EPS_BLOOM)
        qkv = jnp.dot(x, qkv_w[...], preferred_element_type=f32) + qkv_b[...]   # (B*L, 3D), Q chunk pre-scaled
        q, k, v = qkv[:, :D], qkv[:, D:2 * D], qkv[:, 2 * D:]              # contiguous [Q|K|V] chunks
        attn_rows = []
        for b in range(B):
            sl = slice(b * L, (b + 1) * L)
            attn_rows.append(_mha(q[sl], k[sl], v[sl], bias[b], dense_w[...], H, d))
        attn = jnp.concatenate(attn_rows, axis=0) + dense_b[...]
        h = h + attn
        x = _ln(h, ln2_g[...], ln2_b[...], LN_EPS_BLOOM)
        ff = _gelu(jnp.dot(x, w1_w[...], preferred_element_type=f32) + w1_b[...])
        ff = jnp.dot(ff, w2_w[...], preferred_element_type=f32) + w2_b[...]
        h = h + ff

    h = _ln(h, lnf_g[...], lnf_b[...], LN_EPS_BLOOM)
    # tied LM head: contract against the VMEM-resident word_emb along its feature dim
    logits = lax.dot_general(h, emb_w[...],
                             dimension_numbers=(((1,), (1,)), ((), ())),
                             preferred_element_type=f32)                   # (B*L, VOCAB) lane-dense
    out_ref[...] = logits.astype(out_ref.dtype)


# ---------------- pallas_call wrapper (single fused call, no grid) ----------------
def visual_bloom_fused(p, image_features, image_attentions,
                       instr_ids, instruction_attention_mask,
                       lm_ids, language_model_attention_mask):
    B = image_features.shape[0]
    Lc = L_IMG + L_INS
    L = N_QUERY + L_LM

    img_flat = image_features.reshape(B * L_IMG, D_IMG)
    ids_all = jnp.concatenate([instr_ids.reshape(-1), lm_ids.reshape(-1)]).astype(jnp.int32)[:, None]
    ctx_mask = jnp.concatenate([image_attentions, instruction_attention_mask], axis=1)[:, None, :]
    cutie_attentions = jnp.ones((B, N_QUERY), jnp.float32)                 # query_attentions.expand(B,-1)
    cat_mask2d = jnp.concatenate([cutie_attentions, language_model_attention_mask], axis=1)  # (B, L)
    arange = (jnp.cumsum(cat_mask2d, axis=-1) - 1.0) * cat_mask2d          # ALiBi positions (tiny JAX glue)

    data = [img_flat, ids_all, ctx_mask, cat_mask2d[:, None, :], arange[:, None, :]]
    cl = p["cutie"]["layer"]
    weights = [
        p["word_emb"], p["word_ln"]["g"], p["word_ln"]["b"],
        p["text_to_cutie"]["w"], p["text_to_cutie"]["b"],
        p["image_to_cutie"]["w"], p["image_to_cutie"]["b"],
        p["cutie"]["query_embeds"],
        cl["wq"]["w"], cl["wq"]["b"], cl["wk"]["w"], cl["wk"]["b"],
        cl["wv"]["w"], cl["wv"]["b"], cl["wo"]["w"], cl["wo"]["b"],
        cl["ln1"]["g"], cl["ln1"]["b"], cl["w1"]["w"], cl["w1"]["b"],
        cl["w2"]["w"], cl["w2"]["b"], cl["ln2"]["g"], cl["ln2"]["b"],
        p["cutie_to_text"]["w"], p["cutie_to_text"]["b"],
    ]
    for lp in p["layers"]:
        weights += [lp["ln1"]["g"], lp["ln1"]["b"], lp["qkv"]["w"], lp["qkv"]["b"],
                    lp["dense"]["w"], lp["dense"]["b"], lp["ln2"]["g"], lp["ln2"]["b"],
                    lp["w1"]["w"], lp["w1"]["b"], lp["w2"]["w"], lp["w2"]["b"]]
    weights += [p["ln_f"]["g"], p["ln_f"]["b"]]
    arrays = data + weights

    nl = len(p["layers"])
    ntok = B * (L_INS + L_LM)
    flops = (2 * ntok * VOCAB * D_BLOOM
             + 2 * B * L_IMG * D_IMG * D_CUTIE + 2 * B * L_INS * D_BLOOM * D_CUTIE
             + 4 * B * Lc * D_CUTIE * D_CUTIE + 2 * N_QUERY * D_CUTIE * D_CUTIE
             + 4 * B * N_QUERY * Lc * D_CUTIE + 2 * B * N_QUERY * D_CUTIE * D_CUTIE
             + 16 * B * N_QUERY * D_CUTIE * D_CUTIE + 2 * B * N_QUERY * D_CUTIE * D_BLOOM
             + nl * (6 * B * L * D_BLOOM * D_BLOOM + 4 * B * L * L * D_BLOOM
                     + 2 * B * L * D_BLOOM * D_BLOOM + 16 * B * L * D_BLOOM * D_BLOOM)
             + 2 * B * L * D_BLOOM * VOCAB)
    trans = (B * CUTIE_HEADS * N_QUERY * Lc + B * N_QUERY * 4 * D_CUTIE
             + nl * (B * BLOOM_HEADS * L * L + B * L * 4 * D_BLOOM))
    bytes_acc = sum(int(a.size) * a.dtype.itemsize for a in arrays) + B * L * VOCAB * 4
    ce = pl.CostEstimate(flops=flops, transcendentals=trans, bytes_accessed=bytes_acc)

    logits_flat = pl.pallas_call(
        functools.partial(_visual_bloom_kernel, num_layers=nl),
        out_shape=jax.ShapeDtypeStruct((B * L, VOCAB), jnp.float32),
        cost_estimate=ce,
    )(*arrays)
    return logits_flat.reshape(B, L, VOCAB), cat_mask2d


# ---------------- parameter init (deterministic, synthetic) ----------------
def init_params(key):
    ks = iter(jax.random.split(key, 128))

    def w(shape, scale=0.02):
        return jax.random.normal(next(ks), shape, jnp.float32) * scale

    def lin(din, dout):
        return {"w": w((din, dout)), "b": w((1, dout), 0.01)}

    def ln(d):
        return {"g": 1.0 + w((1, d), 0.01), "b": w((1, d), 0.01)}

    def bloom_layer():
        # fused QKV laid out as contiguous [Q | K | V] chunks of the output dim.
        # TODO(synk): if loading a real HF Bloom checkpoint, re-pack its per-head
        # interleaved (H,3,d) QKV weight into this contiguous layout and re-apply
        # the 1/sqrt(head_dim) fold below.
        layer = {
            "ln1": ln(D_BLOOM),
            "qkv": lin(D_BLOOM, 3 * D_BLOOM),
            "dense": lin(D_BLOOM, D_BLOOM),
            "ln2": ln(D_BLOOM),
            "w1": lin(D_BLOOM, 4 * D_BLOOM),
            "w2": lin(4 * D_BLOOM, D_BLOOM),
        }
        # fold 1/sqrt(head_dim) attention scale into the Q chunk (zero runtime cost)
        s = 1.0 / math.sqrt(BLOOM_HDIM)
        layer["qkv"]["w"] = layer["qkv"]["w"].at[:, :D_BLOOM].multiply(s)
        layer["qkv"]["b"] = layer["qkv"]["b"].at[:, :D_BLOOM].multiply(s)
        return layer

    cutie_layer = {
        "wq": lin(D_CUTIE, D_CUTIE), "wk": lin(D_CUTIE, D_CUTIE),
        "wv": lin(D_CUTIE, D_CUTIE), "wo": lin(D_CUTIE, D_CUTIE),
        "ln1": ln(D_CUTIE),
        "w1": lin(D_CUTIE, 4 * D_CUTIE), "w2": lin(4 * D_CUTIE, D_CUTIE),
        "ln2": ln(D_CUTIE),
    }
    # fold 1/sqrt(head_dim) into the cutie Q projection as well
    sc = 1.0 / math.sqrt(CUTIE_HDIM)
    cutie_layer["wq"]["w"] = cutie_layer["wq"]["w"] * sc
    cutie_layer["wq"]["b"] = cutie_layer["wq"]["b"] * sc

    return {
        # bloom word_embeddings; lm_head is tied and reuses this array in-kernel
        # via dot_general (no pre-transposed copy needed).
        "word_emb": w((VOCAB, D_BLOOM)),
        "word_ln": ln(D_BLOOM),                      # word_embeddings_layernorm
        "text_to_cutie": lin(D_BLOOM, D_CUTIE),
        "image_to_cutie": lin(D_IMG, D_CUTIE),
        "cutie_to_text": lin(D_CUTIE, D_BLOOM),
        "cutie": {"query_embeds": w((N_QUERY, D_CUTIE)), "layer": cutie_layer},
        "layers": [bloom_layer() for _ in range(BLOOM_LAYERS)],
        "ln_f": ln(D_BLOOM),
    }


# ---------------- forward ----------------
def visual_bloom_forward(p, image_features, image_attentions,
                         instruction_input_ids, instruction_attention_mask,
                         language_model_input_ids, language_model_attention_mask,
                         language_model_labels):
    # TODO(synk): Cutie's exact BERT/Q-Former layer stack is not given in the reference;
    # implemented as one cross-attention block (learned queries over [image; instruction]).
    logits, _ = visual_bloom_fused(p, image_features, image_attentions,
                                   instruction_input_ids, instruction_attention_mask,
                                   language_model_input_ids, language_model_attention_mask)

    B = logits.shape[0]
    cutie_labels = jnp.full((B, N_QUERY), -100, jnp.int32)                # query_labels.expand(B,-1)
    cat_labels = jnp.concatenate([cutie_labels, language_model_labels], axis=1)

    # causal-LM loss with shift and -100 ignore_index (JAX glue)
    shift_logits = logits[:, :-1].astype(jnp.float32)
    shift_labels = cat_labels[:, 1:]
    valid = shift_labels != -100
    logz = jax.nn.logsumexp(shift_logits, axis=-1)
    safe = jnp.where(valid, shift_labels, 0)
    tgt = jnp.take_along_axis(shift_logits, safe[..., None], axis=-1)[..., 0]
    loss = jnp.sum((logz - tgt) * valid) / jnp.maximum(jnp.sum(valid), 1)
    return loss, logits
    # TODO(synk): pretrained-checkpoint loading and .generate() (contrastive search) are not translated.


# ---------------- main ----------------
if __name__ == "__main__":
    params = init_params(jax.random.PRNGKey(0))
    kin = jax.random.split(jax.random.PRNGKey(1), 4)
    B = 2

    image_features = jax.random.normal(kin[0], (B, L_IMG, D_IMG), jnp.float32)
    image_attentions = jnp.ones((B, L_IMG), jnp.float32)
    instruction_input_ids = jax.random.randint(kin[1], (B, L_INS), 0, VOCAB)
    instruction_attention_mask = jnp.ones((B, L_INS), jnp.float32).at[1, -2:].set(0.0)
    language_model_input_ids = jax.random.randint(kin[2], (B, L_LM), 0, VOCAB)
    language_model_attention_mask = jnp.ones((B, L_LM), jnp.float32).at[1, -1:].set(0.0)
    language_model_labels = jnp.where(language_model_attention_mask > 0,
                                      language_model_input_ids, -100).astype(jnp.int32)

    fwd = jax.jit(visual_bloom_forward)
    loss, logits = fwd(params, image_features, image_attentions,
                       instruction_input_ids, instruction_attention_mask,
                       language_model_input_ids, language_model_attention_mask,
                       language_model_labels)

    jax.block_until_ready((loss, logits))
    assert logits.shape == (B, N_QUERY + L_LM, VOCAB)
    assert jnp.isfinite(loss)
    print("KERNEL_OK")
</pallas_src>

<mosaic_0001>
module attributes {stable_mosaic.version = 11 : i64} {
  func.func @_visual_bloom_kernel(%arg0: memref<32x40xf32, #tpu.memory_space<vmem>>, %arg1: memref<32x1xi32, #tpu.memory_space<vmem>>, %arg2: memref<2x1x24xf32, #tpu.memory_space<vmem>>, %arg3: memref<2x1x16xf32, #tpu.memory_space<vmem>>, %arg4: memref<2x1x16xf32, #tpu.memory_space<vmem>>, %arg5: memref<128x32xf32, #tpu.memory_space<vmem>>, %arg6: memref<1x32xf32, #tpu.memory_space<vmem>>, %arg7: memref<1x32xf32, #tpu.memory_space<vmem>>, %arg8: memref<32x24xf32, #tpu.memory_space<vmem>>, %arg9: memref<1x24xf32, #tpu.memory_space<vmem>>, %arg10: memref<40x24xf32, #tpu.memory_space<vmem>>, %arg11: memref<1x24xf32, #tpu.memory_space<vmem>>, %arg12: memref<8x24xf32, #tpu.memory_space<vmem>>, %arg13: memref<24x24xf32, #tpu.memory_space<vmem>>, %arg14: memref<1x24xf32, #tpu.memory_space<vmem>>, %arg15: memref<24x24xf32, #tpu.memory_space<vmem>>, %arg16: memref<1x24xf32, #tpu.memory_space<vmem>>, %arg17: memref<24x24xf32, #tpu.memory_space<vmem>>, %arg18: memref<1x24xf32, #tpu.memory_space<vmem>>, %arg19: memref<24x24xf32, #tpu.memory_space<vmem>>, %arg20: memref<1x24xf32, #tpu.memory_space<vmem>>, %arg21: memref<1x24xf32, #tpu.memory_space<vmem>>, %arg22: memref<1x24xf32, #tpu.memory_space<vmem>>, %arg23: memref<24x96xf32, #tpu.memory_space<vmem>>, %arg24: memref<1x96xf32, #tpu.memory_space<vmem>>, %arg25: memref<96x24xf32, #tpu.memory_space<vmem>>, %arg26: memref<1x24xf32, #tpu.memory_space<vmem>>, %arg27: memref<1x24xf32, #tpu.memory_space<vmem>>, %arg28: memref<1x24xf32, #tpu.memory_space<vmem>>, %arg29: memref<24x32xf32, #tpu.memory_space<vmem>>, %arg30: memref<1x32xf32, #tpu.memory_space<vmem>>, %arg31: memref<1x32xf32, #tpu.memory_space<vmem>>, %arg32: memref<1x32xf32, #tpu.memory_space<vmem>>, %arg33: memref<32x96xf32, #tpu.memory_space<vmem>>, %arg34: memref<1x96xf32, #tpu.memory_space<vmem>>, %arg35: memref<32x32xf32, #tpu.memory_space<vmem>>, %arg36: memref<1x32xf32, #tpu.memory_space<vmem>>, %arg37: memref<1x32xf32, #tpu.memory_space<vmem>>, %arg38: memref<1x32xf32, #tpu.memory_space<vmem>>, %arg39: memref<32x128xf32, #tpu.memory_space<vmem>>, %arg40: memref<1x128xf32, #tpu.memory_space<vmem>>, %arg41: memref<128x32xf32, #tpu.memory_space<vmem>>, %arg42: memref<1x32xf32, #tpu.memory_space<vmem>>, %arg43: memref<1x32xf32, #tpu.memory_space<vmem>>, %arg44: memref<1x32xf32, #tpu.memory_space<vmem>>, %arg45: memref<32x96xf32, #tpu.memory_space<vmem>>, %arg46: memref<1x96xf32, #tpu.memory_space<vmem>>, %arg47: memref<32x32xf32, #tpu.memory_space<vmem>>, %arg48: memref<1x32xf32, #tpu.memory_space<vmem>>, %arg49: memref<1x32xf32, #tpu.memory_space<vmem>>, %arg50: memref<1x32xf32, #tpu.memory_space<vmem>>, %arg51: memref<32x128xf32, #tpu.memory_space<vmem>>, %arg52: memref<1x128xf32, #tpu.memory_space<vmem>>, %arg53: memref<128x32xf32, #tpu.memory_space<vmem>>, %arg54: memref<1x32xf32, #tpu.memory_space<vmem>>, %arg55: memref<1x32xf32, #tpu.memory_space<vmem>>, %arg56: memref<1x32xf32, #tpu.memory_space<vmem>>, %arg57: memref<32x128xf32, #tpu.memory_space<vmem>>) attributes {dimension_semantics = [], scalar_prefetch = 0 : i64, scratch_operands = 0 : i64, tpu.core_type = #tpu.core_type<tc>} {
    %c0 = arith.constant 0 : index
    %c0_0 = arith.constant 0 : index
    %0 = vector.load %arg1[%c0, %c0_0] : memref<32x1xi32, #tpu.memory_space<vmem>>, vector<32x1xi32>
    %1 = tpu.iota {dimensions = array<i32: 1>} : vector<32x128xi32>
    %2 = vector.broadcast %0 : vector<32x1xi32> to vector<32x128xi32>
    %3 = arith.cmpi eq, %2, %1 : vector<32x128xi32>
    %4 = arith.extui %3 : vector<32x128xi1> to vector<32x128xi32>
    %5 = arith.sitofp %4 : vector<32x128xi32> to vector<32x128xf32>
    %c0_1 = arith.constant 0 : index
    %c0_2 = arith.constant 0 : index
    %6 = vector.load %arg5[%c0_1, %c0_2] : memref<128x32xf32, #tpu.memory_space<vmem>>, vector<128x32xf32>
    %cst = arith.constant dense<0.000000e+00> : vector<32x32xf32>
    %7 = tpu.matmul %5, %6, %cst {dimension_numbers = #tpu.dot_dimension_numbers<[1], [0], [0], [1], [0, 0, 1, 1], [], []>} : vector<32x128xf32>, vector<128x32xf32>, vector<32x32xf32> -> vector<32x32xf32>
    %c0_3 = arith.constant 0 : index
    %c0_4 = arith.constant 0 : index
    %8 = vector.load %arg6[%c0_3, %c0_4] : memref<1x32xf32, #tpu.memory_space<vmem>>, vector<1x32xf32>
    %c0_5 = arith.constant 0 : index
    %c0_6 = arith.constant 0 : index
    %9 = vector.load %arg7[%c0_5, %c0_6] : memref<1x32xf32, #tpu.memory_space<vmem>>, vector<1x32xf32>
    %cst_7 = arith.constant dense<0.000000e+00> : vector<32xf32>
    %10 = vector.multi_reduction <add>, %7, %cst_7 [1] : vector<32x32xf32> to vector<32xf32>
    %11 = vector.shape_cast %10 : vector<32xf32> to vector<32x1xf32>
    %cst_8 = arith.constant 3.200000e+01 : f32
    %12 = vector.broadcast %cst_8 : f32 to vector<32x1xf32>
    %13 = arith.divf %11, %12 : vector<32x1xf32>
    %14 = vector.broadcast %13 : vector<32x1xf32> to vector<32x32xf32>
    %15 = arith.subf %7, %14 : vector<32x32xf32>
    %16 = arith.mulf %15, %15 : vector<32x32xf32>
    %cst_9 = arith.constant dense<0.000000e+00> : vector<32xf32>
    %17 = vector.multi_reduction <add>, %16, %cst_9 [1] : vector<32x32xf32> to vector<32xf32>
    %18 = vector.shape_cast %17 : vector<32xf32> to vector<32x1xf32>
    %cst_10 = arith.constant 3.200000e+01 : f32
    %19 = vector.broadcast %cst_10 : f32 to vector<32x1xf32>
    %20 = arith.divf %18, %19 : vector<32x1xf32>
    %21 = vector.broadcast %13 : vector<32x1xf32> to vector<32x32xf32>
    %22 = arith.subf %7, %21 : vector<32x32xf32>
    %cst_11 = arith.constant 9.99999974E-6 : f32
    %23 = vector.broadcast %cst_11 : f32 to vector<32x1xf32>
    %24 = arith.addf %20, %23 : vector<32x1xf32>
    %25 = math.rsqrt %24 : vector<32x1xf32>
    %26 = vector.broadcast %25 : vector<32x1xf32> to vector<32x32xf32>
    %27 = arith.mulf %22, %26 : vector<32x32xf32>
    %28 = vector.broadcast %8 : vector<1x32xf32> to vector<32x32xf32>
    %29 = arith.mulf %27, %28 : vector<32x32xf32>
    %30 = vector.broadcast %9 : vector<1x32xf32> to vector<32x32xf32>
    %31 = arith.addf %29, %30 : vector<32x32xf32>
    %32 = vector.extract_strided_slice %31 {offsets = [0, 0], sizes = [16, 32], strides = [1, 1]} : vector<32x32xf32> to vector<16x32xf32>
    %33 = vector.extract_strided_slice %31 {offsets = [16, 0], sizes = [16, 32], strides = [1, 1]} : vector<32x32xf32> to vector<16x32xf32>
    %c0_12 = arith.constant 0 : index
    %c0_13 = arith.constant 0 : index
    %34 = vector.load %arg0[%c0_12, %c0_13] : memref<32x40xf32, #tpu.memory_space<vmem>>, vector<32x40xf32>
    %c0_14 = arith.constant 0 : index
    %c0_15 = arith.constant 0 : index
    %35 = vector.load %arg10[%c0_14, %c0_15] : memref<40x24xf32, #tpu.memory_space<vmem>>, vector<40x24xf32>
    %cst_16 = arith.constant dense<0.000000e+00> : vector<32x24xf32>
    %36 = tpu.matmul %34, %35, %cst_16 {dimension_numbers = #tpu.dot_dimension_numbers<[1], [0], [0], [1], [0, 0, 1, 1], [], []>} : vector<32x40xf32>, vector<40x24xf32>, vector<32x24xf32> -> vector<32x24xf32>
    %c0_17 = arith.constant 0 : index
    %c0_18 = arith.constant 0 : index
    %37 = vector.load %arg11[%c0_17, %c0_18] : memref<1x24xf32, #tpu.memory_space<vmem>>, vector<1x24xf32>
    %38 = vector.broadcast %37 : vector<1x24xf32> to vector<32x24xf32>
    %39 = arith.addf %36, %38 : vector<32x24xf32>
    %c0_19 = arith.constant 0 : index
    %c0_20 = arith.constant 0 : index
    %40 = vector.load %arg8[%c0_19, %c0_20] : memref<32x24xf32, #tpu.memory_space<vmem>>, vector<32x24xf32>
    %cst_21 = arith.constant dense<0.000000e+00> : vector<16x24xf32>
    %41 = tpu.matmul %32, %40, %cst_21 {dimension_numbers = #tpu.dot_dimension_numbers<[1], [0], [0], [1], [0, 0, 1, 1], [], []>} : vector<16x32xf32>, vector<32x24xf32>, vector<16x24xf32> -> vector<16x24xf32>
    %c0_22 = arith.constant 0 : index
    %c0_23 = arith.constant 0 : index
    %42 = vector.load %arg9[%c0_22, %c0_23] : memref<1x24xf32, #tpu.memory_space<vmem>>, vector<1x24xf32>
    %43 = vector.broadcast %42 : vector<1x24xf32> to vector<16x24xf32>
    %44 = arith.addf %41, %43 : vector<16x24xf32>
    %45 = vector.extract_strided_slice %39 {offsets = [0, 0], sizes = [16, 24], strides = [1, 1]} : vector<32x24xf32> to vector<16x24xf32>
    %46 = vector.extract_strided_slice %44 {offsets = [0, 0], sizes = [8, 24], strides = [1, 1]} : vector<16x24xf32> to vector<8x24xf32>
    %47 = vector.extract_strided_slice %39 {offsets = [16, 0], sizes = [16, 24], strides = [1, 1]} : vector<32x24xf32> to vector<16x24xf32>
    %48 = vector.extract_strided_slice %44 {offsets = [8, 0], sizes = [8, 24], strides = [1, 1]} : vector<16x24xf32> to vector<8x24xf32>
    %49 = tpu.concatenate %45, %46, %47, %48 in 0 : vector<16x24xf32>, vector<8x24xf32>, vector<16x24xf32>, vector<8x24xf32> -> vector<48x24xf32>
    %c0_24 = arith.constant 0 : index
    %c0_25 = arith.constant 0 : index
    %50 = vector.load %arg15[%c0_24, %c0_25] : memref<24x24xf32, #tpu.memory_space<vmem>>, vector<24x24xf32>
    %cst_26 = arith.constant dense<0.000000e+00> : vector<48x24xf32>
    %51 = tpu.matmul %49, %50, %cst_26 {dimension_numbers = #tpu.dot_dimension_numbers<[1], [0], [0], [1], [0, 0, 1, 1], [], []>} : vector<48x24xf32>, vector<24x24xf32>, vector<48x24xf32> -> vector<48x24xf32>
    %c0_27 = arith.constant 0 : index
    %c0_28 = arith.constant 0 : index
    %52 = vector.load %arg16[%c0_27, %c0_28] : memref<1x24xf32, #tpu.memory_space<vmem>>, vector<1x24xf32>
    %53 = vector.broadcast %52 : vector<1x24xf32> to vector<48x24xf32>
    %54 = arith.addf %51, %53 : vector<48x24xf32>
    %c0_29 = arith.constant 0 : index
    %c0_30 = arith.constant 0 : index
    %55 = vector.load %arg17[%c0_29, %c0_30] : memref<24x24xf32, #tpu.memory_space<vmem>>, vector<24x24xf32>
    %cst_31 = arith.constant dense<0.000000e+00> : vector<48x24xf32>
    %56 = tpu.matmul %49, %55, %cst_31 {dimension_numbers = #tpu.dot_dimension_numbers<[1], [0], [0], [1], [0, 0, 1, 1], [], []>} : vector<48x24xf32>, vector<24x24xf32>, vector<48x24xf32> -> vector<48x24xf32>
    %c0_32 = arith.constant 0 : index
    %c0_33 = arith.constant 0 : index
    %57 = vector.load %arg18[%c0_32, %c0_33] : memref<1x24xf32, #tpu.memory_space<vmem>>, vector<1x24xf32>
    %58 = vector.broadcast %57 : vector<1x24xf32> to vector<48x24xf32>
    %59 = arith.addf %56, %58 : vector<48x24xf32>
    %c0_34 = arith.constant 0 : index
    %c0_35 = arith.constant 0 : index
    %60 = vector.load %arg12[%c0_34, %c0_35] : memref<8x24xf32, #tpu.memory_space<vmem>>, vector<8x24xf32>
    %c0_36 = arith.constant 0 : index
    %c0_37 = arith.constant 0 : index
    %61 = vector.load %arg13[%c0_36, %c0_37] : memref<24x24xf32, #tpu.memory_space<vmem>>, vector<24x24xf32>
    %cst_38 = arith.constant dense<0.000000e+00> : vector<8x24xf32>
    %62 = tpu.matmul %60, %61, %cst_38 {dimension_numbers = #tpu.dot_dimension_numbers<[1], [0], [0], [1], [0, 0, 1, 1], [], []>} : vector<8x24xf32>, vector<24x24xf32>, vector<8x24xf32> -> vector<8x24xf32>
    %c0_39 = arith.constant 0 : index
    %c0_40 = arith.constant 0 : index
    %63 = vector.load %arg14[%c0_39, %c0_40] : memref<1x24xf32, #tpu.memory_space<vmem>>, vector<1x24xf32>
    %64 = vector.broadcast %63 : vector<1x24xf32> to vector<8x24xf32>
    %65 = arith.addf %62, %64 : vector<8x24xf32>
    %c0_41 = arith.constant 0 : index
    %c0_42 = arith.constant 0 : index
    %c0_43 = arith.constant 0 : index
    %66 = vector.load %arg2[%c0_41, %c0_42, %c0_43] : memref<2x1x24xf32, #tpu.memory_space<vmem>>, vector<1x1x24xf32>
    %67 = vector.shape_cast %66 : vector<1x1x24xf32> to vector<1x24xf32>
    %cst_44 = arith.constant 0.000000e+00 : f32
    %68 = vector.broadcast %cst_44 : f32 to vector<1x24xf32>
    %69 = arith.cmpf ogt, %67, %68 : vector<1x24xf32>
    %cst_45 = arith.constant 0.000000e+00 : f32
    %cst_46 = arith.constant -1.000000e+09 : f32
    %70 = vector.broadcast %cst_45 : f32 to vector<1x24xf32>
    %71 = vector.broadcast %cst_46 : f32 to vector<1x24xf32>
    %72 = arith.select %69, %70, %71 : vector<1x24xi1>, vector<1x24xf32>
    %73 = vector.extract_strided_slice %54 {offsets = [0, 0], sizes = [24, 24], strides = [1, 1]} : vector<48x24xf32> to vector<24x24xf32>
    %74 = vector.extract_strided_slice %59 {offsets = [0, 0], sizes = [24, 24], strides = [1, 1]} : vector<48x24xf32> to vector<24x24xf32>
    %c0_47 = arith.constant 0 : index
    %c0_48 = arith.constant 0 : index
    %75 = vector.load %arg19[%c0_47, %c0_48] : memref<24x24xf32, #tpu.memory_space<vmem>>, vector<24x24xf32>
    %76 = vector.extract_strided_slice %65 {offsets = [0, 0], sizes = [8, 6], strides = [1, 1]} : vector<8x24xf32> to vector<8x6xf32>
    %77 = vector.extract_strided_slice %73 {offsets = [0, 0], sizes = [24, 6], strides = [1, 1]} : vector<24x24xf32> to vector<24x6xf32>
    %cst_49 = arith.constant dense<0.000000e+00> : vector<8x24xf32>
    %78 = tpu.matmul %76, %77, %cst_49 {dimension_numbers = #tpu.dot_dimension_numbers<[1], [1], [0], [0], [0, 0, 1, 0], [], []>} : vector<8x6xf32>, vector<24x6xf32>, vector<8x24xf32> -> vector<8x24xf32>
    %79 = vector.broadcast %72 : vector<1x24xf32> to vector<8x24xf32>
    %80 = arith.addf %78, %79 : vector<8x24xf32>
    %cst_50 = arith.constant dense<0xFF800000> : vector<8xf32>
    %81 = vector.multi_reduction <maximumf>, %80, %cst_50 [1] : vector<8x24xf32> to vector<8xf32>
    %82 = vector.shape_cast %81 : vector<8xf32> to vector<8x1xf32>
    %83 = vector.broadcast %82 : vector<8x1xf32> to vector<8x24xf32>
    %84 = arith.subf %80, %83 : vector<8x24xf32>
    %85 = math.exp %84 : vector<8x24xf32>
    %cst_51 = arith.constant dense<0.000000e+00> : vector<8xf32>
    %86 = vector.multi_reduction <add>, %85, %cst_51 [1] : vector<8x24xf32> to vector<8xf32>
    %87 = vector.shape_cast %86 : vector<8xf32> to vector<8x1xf32>
    %88 = tpu.reciprocal %87 {approx = true} : vector<8x1xf32> -> vector<8x1xf32>
    %89 = vector.broadcast %88 : vector<8x1xf32> to vector<8x24xf32>
    %90 = arith.mulf %85, %89 : vector<8x24xf32>
    %91 = vector.extract_strided_slice %74 {offsets = [0, 0], sizes = [24, 6], strides = [1, 1]} : vector<24x24xf32> to vector<24x6xf32>
    %cst_52 = arith.constant dense<0.000000e+00> : vector<8x6xf32>
    %92 = tpu.matmul %90, %91, %cst_52 {dimension_numbers = #tpu.dot_dimension_numbers<[1], [0], [0], [1], [0, 0, 1, 1], [], []>} : vector<8x24xf32>, vector<24x6xf32>, vector<8x6xf32> -> vector<8x6xf32>
    %93 = vector.extract_strided_slice %65 {offsets = [0, 6], sizes = [8, 6], strides = [1, 1]} : vector<8x24xf32> to vector<8x6xf32>
    %94 = vector.extract_strided_slice %73 {offsets = [0, 6], sizes = [24, 6], strides = [1, 1]} : vector<24x24xf32> to vector<24x6xf32>
    %cst_53 = arith.constant dense<0.000000e+00> : vector<8x24xf32>
    %95 = tpu.matmul %93, %94, %cst_53 {dimension_numbers = #tpu.dot_dimension_numbers<[1], [1], [0], [0], [0, 0, 1, 0], [], []>} : vector<8x6xf32>, vector<24x6xf32>, vector<8x24xf32> -> vector<8x24xf32>
    %96 = vector.broadcast %72 : vector<1x24xf32> to vector<8x24xf32>
    %97 = arith.addf %95, %96 : vector<8x24xf32>
    %cst_54 = arith.constant dense<0xFF800000> : vector<8xf32>
    %98 = vector.multi_reduction <maximumf>, %97, %cst_54 [1] : vector<8x24xf32> to vector<8xf32>
    %99 = vector.shape_cast %98 : vector<8xf32> to vector<8x1xf32>
    %100 = vector.broadcast %99 : vector<8x1xf32> to vector<8x24xf32>
    %101 = arith.subf %97, %100 : vector<8x24xf32>
    %102 = math.exp %101 : vector<8x24xf32>
    %cst_55 = arith.constant dense<0.000000e+00> : vector<8xf32>
    %103 = vector.multi_reduction <add>, %102, %cst_55 [1] : vector<8x24xf32> to vector<8xf32>
    %104 = vector.shape_cast %103 : vector<8xf32> to vector<8x1xf32>
    %105 = tpu.reciprocal %104 {approx = true} : vector<8x1xf32> -> vector<8x1xf32>
    %106 = vector.broadcast %105 : vector<8x1xf32> to vector<8x24xf32>
    %107 = arith.mulf %102, %106 : vector<8x24xf32>
    %108 = vector.extract_strided_slice %74 {offsets = [0, 6], sizes = [24, 6], strides = [1, 1]} : vector<24x24xf32> to vector<24x6xf32>
    %cst_56 = arith.constant dense<0.000000e+00> : vector<8x6xf32>
    %109 = tpu.matmul %107, %108, %cst_56 {dimension_numbers = #tpu.dot_dimension_numbers<[1], [0], [0], [1], [0, 0, 1, 1], [], []>} : vector<8x24xf32>, vector<24x6xf32>, vector<8x6xf32> -> vector<8x6xf32>
    %110 = vector.extract_strided_slice %65 {offsets = [0, 12], sizes = [8, 6], strides = [1, 1]} : vector<8x24xf32> to vector<8x6xf32>
    %111 = vector.extract_strided_slice %73 {offsets = [0, 12], sizes = [24, 6], strides = [1, 1]} : vector<24x24xf32> to vector<24x6xf32>
    %cst_57 = arith.constant dense<0.000000e+00> : vector<8x24xf32>
    %112 = tpu.matmul %110, %111, %cst_57 {dimension_numbers = #tpu.dot_dimension_numbers<[1], [1], [0], [0], [0, 0, 1, 0], [], []>} : vector<8x6xf32>, vector<24x6xf32>, vector<8x24xf32> -> vector<8x24xf32>
    %113 = vector.broadcast %72 : vector<1x24xf32> to vector<8x24xf32>
    %114 = arith.addf %112, %113 : vector<8x24xf32>
    %cst_58 = arith.constant dense<0xFF800000> : vector<8xf32>
    %115 = vector.multi_reduction <maximumf>, %114, %cst_58 [1] : vector<8x24xf32> to vector<8xf32>
    %116 = vector.shape_cast %115 : vector<8xf32> to vector<8x1xf32>
    %117 = vector.broadcast %116 : vector<8x1xf32> to vector<8x24xf32>
    %118 = arith.subf %114, %117 : vector<8x24xf32>
    %119 = math.exp %118 : vector<8x24xf32>
    %cst_59 = arith.constant dense<0.000000e+00> : vector<8xf32>
    %120 = vector.multi_reduction <add>, %119, %cst_59 [1] : vector<8x24xf32> to vector<8xf32>
    %121 = vector.shape_cast %120 : vector<8xf32> to vector<8x1xf32>
    %122 = tpu.reciprocal %121 {approx = true} : vector<8x1xf32> -> vector<8x1xf32>
    %123 = vector.broadcast %122 : vector<8x1xf32> to vector<8x24xf32>
    %124 = arith.mulf %119, %123 : vector<8x24xf32>
    %125 = vector.extract_strided_slice %74 {offsets = [0, 12], sizes = [24, 6], strides = [1, 1]} : vector<24x24xf32> to vector<24x6xf32>
    %cst_60 = arith.constant dense<0.000000e+00> : vector<8x6xf32>
    %126 = tpu.matmul %124, %125, %cst_60 {dimension_numbers = #tpu.dot_dimension_numbers<[1], [0], [0], [1], [0, 0, 1, 1], [], []>} : vector<8x24xf32>, vector<24x6xf32>, vector<8x6xf32> -> vector<8x6xf32>
    %127 = vector.extract_strided_slice %65 {offsets = [0, 18], sizes = [8, 6], strides = [1, 1]} : vector<8x24xf32> to vector<8x6xf32>
    %128 = vector.extract_strided_slice %73 {offsets = [0, 18], sizes = [24, 6], strides = [1, 1]} : vector<24x24xf32> to vector<24x6xf32>
    %cst_61 = arith.constant dense<0.000000e+00> : vector<8x24xf32>
    %129 = tpu.matmul %127, %128, %cst_61 {dimension_numbers = #tpu.dot_dimension_numbers<[1], [1], [0], [0], [0, 0, 1, 0], [], []>} : vector<8x6xf32>, vector<24x6xf32>, vector<8x24xf32> -> vector<8x24xf32>
    %130 = vector.broadcast %72 : vector<1x24xf32> to vector<8x24xf32>
    %131 = arith.addf %129, %130 : vector<8x24xf32>
    %cst_62 = arith.constant dense<0xFF800000> : vector<8xf32>
    %132 = vector.multi_reduction <maximumf>, %131, %cst_62 [1] : vector<8x24xf32> to vector<8xf32>
    %133 = vector.shape_cast %132 : vector<8xf32> to vector<8x1xf32>
    %134 = vector.broadcast %133 : vector<8x1xf32> to vector<8x24xf32>
    %135 = arith.subf %131, %134 : vector<8x24xf32>
    %136 = math.exp %135 : vector<8x24xf32>
    %cst_63 = arith.constant dense<0.000000e+00> : vector<8xf32>
    %137 = vector.multi_reduction <add>, %136, %cst_63 [1] : vector<8x24xf32> to vector<8xf32>
    %138 = vector.shape_cast %137 : vector<8xf32> to vector<8x1xf32>
    %139 = tpu.reciprocal %138 {approx = true} : vector<8x1xf32> -> vector<8x1xf32>
    %140 = vector.broadcast %139 : vector<8x1xf32> to vector<8x24xf32>
    %141 = arith.mulf %136, %140 : vector<8x24xf32>
    %142 = vector.extract_strided_slice %74 {offsets = [0, 18], sizes = [24, 6], strides = [1, 1]} : vector<24x24xf32> to vector<24x6xf32>
    %cst_64 = arith.constant dense<0.000000e+00> : vector<8x6xf32>
    %143 = tpu.matmul %141, %142, %cst_64 {dimension_numbers = #tpu.dot_dimension_numbers<[1], [0], [0], [1], [0, 0, 1, 1], [], []>} : vector<8x24xf32>, vector<24x6xf32>, vector<8x6xf32> -> vector<8x6xf32>
    %144 = tpu.concatenate %92, %109, %126, %143 in 1 : vector<8x6xf32>, vector<8x6xf32>, vector<8x6xf32>, vector<8x6xf32> -> vector<8x24xf32>
    %cst_65 = arith.constant dense<0.000000e+00> : vector<8x24xf32>
    %145 = tpu.matmul %144, %75, %cst_65 {dimension_numbers = #tpu.dot_dimension_numbers<[1], [0], [0], [1], [0, 0, 1, 1], [], []>} : vector<8x24xf32>, vector<24x24xf32>, vector<8x24xf32> -> vector<8x24xf32>
    %c1 = arith.constant 1 : index
    %c0_66 = arith.constant 0 : index
    %c0_67 = arith.constant 0 : index
    %146 = vector.load %arg2[%c1, %c0_66, %c0_67] : memref<2x1x24xf32, #tpu.memory_space<vmem>>, vector<1x1x24xf32>
    %147 = vector.shape_cast %146 : vector<1x1x24xf32> to vector<1x24xf32>
    %cst_68 = arith.constant 0.000000e+00 : f32
    %148 = vector.broadcast %cst_68 : f32 to vector<1x24xf32>
    %149 = arith.cmpf ogt, %147, %148 : vector<1x24xf32>
    %cst_69 = arith.constant 0.000000e+00 : f32
    %cst_70 = arith.constant -1.000000e+09 : f32
    %150 = vector.broadcast %cst_69 : f32 to vector<1x24xf32>
    %151 = vector.broadcast %cst_70 : f32 to vector<1x24xf32>
    %152 = arith.select %149, %150, %151 : vector<1x24xi1>, vector<1x24xf32>
    %153 = vector.extract_strided_slice %54 {offsets = [24, 0], sizes = [24, 24], strides = [1, 1]} : vector<48x24xf32> to vector<24x24xf32>
    %154 = vector.extract_strided_slice %59 {offsets = [24, 0], sizes = [24, 24], strides = [1, 1]} : vector<48x24xf32> to vector<24x24xf32>
    %c0_71 = arith.constant 0 : index
    %c0_72 = arith.constant 0 : index
    %155 = vector.load %arg19[%c0_71, %c0_72] : memref<24x24xf32, #tpu.memory_space<vmem>>, vector<24x24xf32>
    %156 = vector.extract_strided_slice %65 {offsets = [0, 0], sizes = [8, 6], strides = [1, 1]} : vector<8x24xf32> to vector<8x6xf32>
    %157 = vector.extract_strided_slice %153 {offsets = [0, 0], sizes = [24, 6], strides = [1, 1]} : vector<24x24xf32> to vector<24x6xf32>
    %cst_73 = arith.constant dense<0.000000e+00> : vector<8x24xf32>
    %158 = tpu.matmul %156, %157, %cst_73 {dimension_numbers = #tpu.dot_dimension_numbers<[1], [1], [0], [0], [0, 0, 1, 0], [], []>} : vector<8x6xf32>, vector<24x6xf32>, vector<8x24xf32> -> vector<8x24xf32>
    %159 = vector.broadcast %152 : vector<1x24xf32> to vector<8x24xf32>
    %160 = arith.addf %158, %159 : vector<8x24xf32>
    %cst_74 = arith.constant dense<0xFF800000> : vector<8xf32>
    %161 = vector.multi_reduction <maximumf>, %160, %cst_74 [1] : vector<8x24xf32> to vector<8xf32>
    %162 = vector.shape_cast %161 : vector<8xf32> to vector<8x1xf32>
    %163 = vector.broadcast %162 : vector<8x1xf32> to vector<8x24xf32>
    %164 = arith.subf %160, %163 : vector<8x24xf32>
    %165 = math.exp %164 : vector<8x24xf32>
    %cst_75 = arith.constant dense<0.000000e+00> : vector<8xf32>
    %166 = vector.multi_reduction <add>, %165, %cst_75 [1] : vector<8x24xf32> to vector<8xf32>
    %167 = vector.shape_cast %166 : vector<8xf32> to vector<8x1xf32>
    %168 = tpu.reciprocal %167 {approx = true} : vector<8x1xf32> -> vector<8x1xf32>
    %169 = vector.broadcast %168 : vector<8x1xf32> to vector<8x24xf32>
    %170 = arith.mulf %165, %169 : vector<8x24xf32>
    %171 = vector.extract_strided_slice %154 {offsets = [0, 0], sizes = [24, 6], strides = [1, 1]} : vector<24x24xf32> to vector<24x6xf32>
    %cst_76 = arith.constant dense<0.000000e+00> : vector<8x6xf32>
    %172 = tpu.matmul %170, %171, %cst_76 {dimension_numbers = #tpu.dot_dimension_numbers<[1], [0], [0], [1], [0, 0, 1, 1], [], []>} : vector<8x24xf32>, vector<24x6xf32>, vector<8x6xf32> -> vector<8x6xf32>
    %173 = vector.extract_strided_slice %65 {offsets = [0, 6], sizes = [8, 6], strides = [1, 1]} : vector<8x24xf32> to vector<8x6xf32>
    %174 = vector.extract_strided_slice %153 {offsets = [0, 6], sizes = [24, 6], strides = [1, 1]} : vector<24x24xf32> to vector<24x6xf32>
    %cst_77 = arith.constant dense<0.000000e+00> : vector<8x24xf32>
    %175 = tpu.matmul %173, %174, %cst_77 {dimension_numbers = #tpu.dot_dimension_numbers<[1], [1], [0], [0], [0, 0, 1, 0], [], []>} : vector<8x6xf32>, vector<24x6xf32>, vector<8x24xf32> -> vector<8x24xf32>
    %176 = vector.broadcast %152 : vector<1x24xf32> to vector<8x24xf32>
    %177 = arith.addf %175, %176 : vector<8x24xf32>
    %cst_78 = arith.constant dense<0xFF800000> : vector<8xf32>
    %178 = vector.multi_reduction <maximumf>, %177, %cst_78 [1] : vector<8x24xf32> to vector<8xf32>
    %179 = vector.shape_cast %178 : vector<8xf32> to vector<8x1xf32>
    %180 = vector.broadcast %179 : vector<8x1xf32> to vector<8x24xf32>
    %181 = arith.subf %177, %180 : vector<8x24xf32>
    %182 = math.exp %181 : vector<8x24xf32>
    %cst_79 = arith.constant dense<0.000000e+00> : vector<8xf32>
    %183 = vector.multi_reduction <add>, %182, %cst_79 [1] : vector<8x24xf32> to vector<8xf32>
    %184 = vector.shape_cast %183 : vector<8xf32> to vector<8x1xf32>
    %185 = tpu.reciprocal %184 {approx = true} : vector<8x1xf32> -> vector<8x1xf32>
    %186 = vector.broadcast %185 : vector<8x1xf32> to vector<8x24xf32>
    %187 = arith.mulf %182, %186 : vector<8x24xf32>
    %188 = vector.extract_strided_slice %154 {offsets = [0, 6], sizes = [24, 6], strides = [1, 1]} : vector<24x24xf32> to vector<24x6xf32>
    %cst_80 = arith.constant dense<0.000000e+00> : vector<8x6xf32>
    %189 = tpu.matmul %187, %188, %cst_80 {dimension_numbers = #tpu.dot_dimension_numbers<[1], [0], [0], [1], [0, 0, 1, 1], [], []>} : vector<8x24xf32>, vector<24x6xf32>, vector<8x6xf32> -> vector<8x6xf32>
    %190 = vector.extract_strided_slice %65 {offsets = [0, 12], sizes = [8, 6], strides = [1, 1]} : vector<8x24xf32> to vector<8x6xf32>
    %191 = vector.extract_strided_slice %153 {offsets = [0, 12], sizes = [24, 6], strides = [1, 1]} : vector<24x24xf32> to vector<24x6xf32>
    %cst_81 = arith.constant dense<0.000000e+00> : vector<8x24xf32>
    %192 = tpu.matmul %190, %191, %cst_81 {dimension_numbers = #tpu.dot_dimension_numbers<[1], [1], [0], [0], [0, 0, 1, 0], [], []>} : vector<8x6xf32>, vector<24x6xf32>, vector<8x24xf32> -> vector<8x24xf32>
    %193 = vector.broadcast %152 : vector<1x24xf32> to vector<8x24xf32>
    %194 = arith.addf %192, %193 : vector<8x24xf32>
    %cst_82 = arith.constant dense<0xFF800000> : vector<8xf32>
    %195 = vector.multi_reduction <maximumf>, %194, %cst_82 [1] : vector<8x24xf32> to vector<8xf32>
    %196 = vector.shape_cast %195 : vector<8xf32> to vector<8x1xf32>
    %197 = vector.broadcast %196 : vector<8x1xf32> to vector<8x24xf32>
    %198 = arith.subf %194, %197 : vector<8x24xf32>
    %199 = math.exp %198 : vector<8x24xf32>
    %cst_83 = arith.constant dense<0.000000e+00> : vector<8xf32>
    %200 = vector.multi_reduction <add>, %199, %cst_83 [1] : vector<8x24xf32> to vector<8xf32>
    %201 = vector.shape_cast %200 : vector<8xf32> to vector<8x1xf32>
    %202 = tpu.reciprocal %201 {approx = true} : vector<8x1xf32> -> vector<8x1xf32>
    %203 = vector.broadcast %202 : vector<8x1xf32> to vector<8x24xf32>
    %204 = arith.mulf %199, %203 : vector<8x24xf32>
    %205 = vector.extract_strided_slice %154 {offsets = [0, 12], sizes = [24, 6], strides = [1, 1]} : vector<24x24xf32> to vector<24x6xf32>
    %cst_84 = arith.constant dense<0.000000e+00> : vector<8x6xf32>
    %206 = tpu.matmul %204, %205, %cst_84 {dimension_numbers = #tpu.dot_dimension_numbers<[1], [0], [0], [1], [0, 0, 1, 1], [], []>} : vector<8x24xf32>, vector<24x6xf32>, vector<8x6xf32> -> vector<8x6xf32>
    %207 = vector.extract_strided_slice %65 {offsets = [0, 18], sizes = [8, 6], strides = [1, 1]} : vector<8x24xf32> to vector<8x6xf32>
    %208 = vector.extract_strided_slice %153 {offsets = [0, 18], sizes = [24, 6], strides = [1, 1]} : vector<24x24xf32> to vector<24x6xf32>
    %cst_85 = arith.constant dense<0.000000e+00> : vector<8x24xf32>
    %209 = tpu.matmul %207, %208, %cst_85 {dimension_numbers = #tpu.dot_dimension_numbers<[1], [1], [0], [0], [0, 0, 1, 0], [], []>} : vector<8x6xf32>, vector<24x6xf32>, vector<8x24xf32> -> vector<8x24xf32>
    %210 = vector.broadcast %152 : vector<1x24xf32> to vector<8x24xf32>
    %211 = arith.addf %209, %210 : vector<8x24xf32>
    %cst_86 = arith.constant dense<0xFF800000> : vector<8xf32>
    %212 = vector.multi_reduction <maximumf>, %211, %cst_86 [1] : vector<8x24xf32> to vector<8xf32>
    %213 = vector.shape_cast %212 : vector<8xf32> to vector<8x1xf32>
    %214 = vector.broadcast %213 : vector<8x1xf32> to vector<8x24xf32>
    %215 = arith.subf %211, %214 : vector<8x24xf32>
    %216 = math.exp %215 : vector<8x24xf32>
    %cst_87 = arith.constant dense<0.000000e+00> : vector<8xf32>
    %217 = vector.multi_reduction <add>, %216, %cst_87 [1] : vector<8x24xf32> to vector<8xf32>
    %218 = vector.shape_cast %217 : vector<8xf32> to vector<8x1xf32>
    %219 = tpu.reciprocal %218 {approx = true} : vector<8x1xf32> -> vector<8x1xf32>
    %220 = vector.broadcast %219 : vector<8x1xf32> to vector<8x24xf32>
    %221 = arith.mulf %216, %220 : vector<8x24xf32>
    %222 = vector.extract_strided_slice %154 {offsets = [0, 18], sizes = [24, 6], strides = [1, 1]} : vector<24x24xf32> to vector<24x6xf32>
    %cst_88 = arith.constant dense<0.000000e+00> : vector<8x6xf32>
    %223 = tpu.matmul %221, %222, %cst_88 {dimension_numbers = #tpu.dot_dimension_numbers<[1], [0], [0], [1], [0, 0, 1, 1], [], []>} : vector<8x24xf32>, vector<24x6xf32>, vector<8x6xf32> -> vector<8x6xf32>
    %224 = tpu.concatenate %172, %189, %206, %223 in 1 : vector<8x6xf32>, vector<8x6xf32>, vector<8x6xf32>, vector<8x6xf32> -> vector<8x24xf32>
    %cst_89 = arith.constant dense<0.000000e+00> : vector<8x24xf32>
    %225 = tpu.matmul %224, %155, %cst_89 {dimension_numbers = #tpu.dot_dimension_numbers<[1], [0], [0], [1], [0, 0, 1, 1], [], []>} : vector<8x24xf32>, vector<24x24xf32>, vector<8x24xf32> -> vector<8x24xf32>
    %226 = tpu.concatenate %145, %225 in 0 : vector<8x24xf32>, vector<8x24xf32> -> vector<16x24xf32>
    %c0_90 = arith.constant 0 : index
    %c0_91 = arith.constant 0 : index
    %227 = vector.load %arg20[%c0_90, %c0_91] : memref<1x24xf32, #tpu.memory_space<vmem>>, vector<1x24xf32>
    %228 = vector.broadcast %227 : vector<1x24xf32> to vector<16x24xf32>
    %229 = arith.addf %226, %228 : vector<16x24xf32>
    %230 = tpu.concatenate %60, %60 in 0 : vector<8x24xf32>, vector<8x24xf32> -> vector<16x24xf32>
    %231 = arith.addf %230, %229 : vector<16x24xf32>
    %c0_92 = arith.constant 0 : index
    %c0_93 = arith.constant 0 : index
    %232 = vector.load %arg21[%c0_92, %c0_93] : memref<1x24xf32, #tpu.memory_space<vmem>>, vector<1x24xf32>
    %c0_94 = arith.constant 0 : index
    %c0_95 = arith.constant 0 : index
    %233 = vector.load %arg22[%c0_94, %c0_95] : memref<1x24xf32, #tpu.memory_space<vmem>>, vector<1x24xf32>
    %cst_96 = arith.constant dense<0.000000e+00> : vector<16xf32>
    %234 = vector.multi_reduction <add>, %231, %cst_96 [1] : vector<16x24xf32> to vector<16xf32>
    %235 = vector.shape_cast %234 : vector<16xf32> to vector<16x1xf32>
    %cst_97 = arith.constant 2.400000e+01 : f32
    %236 = vector.broadcast %cst_97 : f32 to vector<16x1xf32>
    %237 = arith.divf %235, %236 : vector<16x1xf32>
    %238 = vector.broadcast %237 : vector<16x1xf32> to vector<16x24xf32>
    %239 = arith.subf %231, %238 : vector<16x24xf32>
    %240 = arith.mulf %239, %239 : vector<16x24xf32>
    %cst_98 = arith.constant dense<0.000000e+00> : vector<16xf32>
    %241 = vector.multi_reduction <add>, %240, %cst_98 [1] : vector<16x24xf32> to vector<16xf32>
    %242 = vector.shape_cast %241 : vector<16xf32> to vector<16x1xf32>
    %cst_99 = arith.constant 2.400000e+01 : f32
    %243 = vector.broadcast %cst_99 : f32 to vector<16x1xf32>
    %244 = arith.divf %242, %243 : vector<16x1xf32>
    %245 = vector.broadcast %237 : vector<16x1xf32> to vector<16x24xf32>
    %246 = arith.subf %231, %245 : vector<16x24xf32>
    %cst_100 = arith.constant 9.99999996E-13 : f32
    %247 = vector.broadcast %cst_100 : f32 to vector<16x1xf32>
    %248 = arith.addf %244, %247 : vector<16x1xf32>
    %249 = math.rsqrt %248 : vector<16x1xf32>
    %250 = vector.broadcast %249 : vector<16x1xf32> to vector<16x24xf32>
    %251 = arith.mulf %246, %250 : vector<16x24xf32>
    %252 = vector.broadcast %232 : vector<1x24xf32> to vector<16x24xf32>
    %253 = arith.mulf %251, %252 : vector<16x24xf32>
    %254 = vector.broadcast %233 : vector<1x24xf32> to vector<16x24xf32>
    %255 = arith.addf %253, %254 : vector<16x24xf32>
    %c0_101 = arith.constant 0 : index
    %c0_102 = arith.constant 0 : index
    %256 = vector.load %arg23[%c0_101, %c0_102] : memref<24x96xf32, #tpu.memory_space<vmem>>, vector<24x96xf32>
    %cst_103 = arith.constant dense<0.000000e+00> : vector<16x96xf32>
    %257 = tpu.matmul %255, %256, %cst_103 {dimension_numbers = #tpu.dot_dimension_numbers<[1], [0], [0], [1], [0, 0, 1, 1], [], []>} : vector<16x24xf32>, vector<24x96xf32>, vector<16x96xf32> -> vector<16x96xf32>
    %c0_104 = arith.constant 0 : index
    %c0_105 = arith.constant 0 : index
    %258 = vector.load %arg24[%c0_104, %c0_105] : memref<1x96xf32, #tpu.memory_space<vmem>>, vector<1x96xf32>
    %259 = vector.broadcast %258 : vector<1x96xf32> to vector<16x96xf32>
    %260 = arith.addf %257, %259 : vector<16x96xf32>
    %cst_106 = arith.constant 5.000000e-01 : f32
    %261 = vector.broadcast %cst_106 : f32 to vector<16x96xf32>
    %262 = arith.mulf %261, %260 : vector<16x96xf32>
    %cst_107 = arith.constant 0.797884583 : f32
    %263 = vector.broadcast %cst_107 : f32 to vector<16x96xf32>
    %264 = arith.mulf %263, %260 : vector<16x96xf32>
    %cst_108 = arith.constant 4.471500e-02 : f32
    %265 = vector.broadcast %cst_108 : f32 to vector<16x96xf32>
    %266 = arith.mulf %265, %260 : vector<16x96xf32>
    %267 = arith.mulf %266, %260 : vector<16x96xf32>
    %cst_109 = arith.constant 1.000000e+00 : f32
    %268 = vector.broadcast %cst_109 : f32 to vector<16x96xf32>
    %269 = arith.addf %268, %267 : vector<16x96xf32>
    %270 = arith.mulf %264, %269 : vector<16x96xf32>
    %271 = math.tanh %270 : vector<16x96xf32>
    %cst_110 = arith.constant 1.000000e+00 : f32
    %272 = vector.broadcast %cst_110 : f32 to vector<16x96xf32>
    %273 = arith.addf %272, %271 : vector<16x96xf32>
    %274 = arith.mulf %262, %273 : vector<16x96xf32>
    %c0_111 = arith.constant 0 : index
    %c0_112 = arith.constant 0 : index
    %275 = vector.load %arg25[%c0_111, %c0_112] : memref<96x24xf32, #tpu.memory_space<vmem>>, vector<96x24xf32>
    %cst_113 = arith.constant dense<0.000000e+00> : vector<16x24xf32>
    %276 = tpu.matmul %274, %275, %cst_113 {dimension_numbers = #tpu.dot_dimension_numbers<[1], [0], [0], [1], [0, 0, 1, 1], [], []>} : vector<16x96xf32>, vector<96x24xf32>, vector<16x24xf32> -> vector<16x24xf32>
    %c0_114 = arith.constant 0 : index
    %c0_115 = arith.constant 0 : index
    %277 = vector.load %arg26[%c0_114, %c0_115] : memref<1x24xf32, #tpu.memory_space<vmem>>, vector<1x24xf32>
    %278 = vector.broadcast %277 : vector<1x24xf32> to vector<16x24xf32>
    %279 = arith.addf %276, %278 : vector<16x24xf32>
    %280 = arith.addf %255, %279 : vector<16x24xf32>
    %c0_116 = arith.constant 0 : index
    %c0_117 = arith.constant 0 : index
    %281 = vector.load %arg27[%c0_116, %c0_117] : memref<1x24xf32, #tpu.memory_space<vmem>>, vector<1x24xf32>
    %c0_118 = arith.constant 0 : index
    %c0_119 = arith.constant 0 : index
    %282 = vector.load %arg28[%c0_118, %c0_119] : memref<1x24xf32, #tpu.memory_space<vmem>>, vector<1x24xf32>
    %cst_120 = arith.constant dense<0.000000e+00> : vector<16xf32>
    %283 = vector.multi_reduction <add>, %280, %cst_120 [1] : vector<16x24xf32> to vector<16xf32>
    %284 = vector.shape_cast %283 : vector<16xf32> to vector<16x1xf32>
    %cst_121 = arith.constant 2.400000e+01 : f32
    %285 = vector.broadcast %cst_121 : f32 to vector<16x1xf32>
    %286 = arith.divf %284, %285 : vector<16x1xf32>
    %287 = vector.broadcast %286 : vector<16x1xf32> to vector<16x24xf32>
    %288 = arith.subf %280, %287 : vector<16x24xf32>
    %289 = arith.mulf %288, %288 : vector<16x24xf32>
    %cst_122 = arith.constant dense<0.000000e+00> : vector<16xf32>
    %290 = vector.multi_reduction <add>, %289, %cst_122 [1] : vector<16x24xf32> to vector<16xf32>
    %291 = vector.shape_cast %290 : vector<16xf32> to vector<16x1xf32>
    %cst_123 = arith.constant 2.400000e+01 : f32
    %292 = vector.broadcast %cst_123 : f32 to vector<16x1xf32>
    %293 = arith.divf %291, %292 : vector<16x1xf32>
    %294 = vector.broadcast %286 : vector<16x1xf32> to vector<16x24xf32>
    %295 = arith.subf %280, %294 : vector<16x24xf32>
    %cst_124 = arith.constant 9.99999996E-13 : f32
    %296 = vector.broadcast %cst_124 : f32 to vector<16x1xf32>
    %297 = arith.addf %293, %296 : vector<16x1xf32>
    %298 = math.rsqrt %297 : vector<16x1xf32>
    %299 = vector.broadcast %298 : vector<16x1xf32> to vector<16x24xf32>
    %300 = arith.mulf %295, %299 : vector<16x24xf32>
    %301 = vector.broadcast %281 : vector<1x24xf32> to vector<16x24xf32>
    %302 = arith.mulf %300, %301 : vector<16x24xf32>
    %303 = vector.broadcast %282 : vector<1x24xf32> to vector<16x24xf32>
    %304 = arith.addf %302, %303 : vector<16x24xf32>
    %c0_125 = arith.constant 0 : index
    %c0_126 = arith.constant 0 : index
    %305 = vector.load %arg29[%c0_125, %c0_126] : memref<24x32xf32, #tpu.memory_space<vmem>>, vector<24x32xf32>
    %cst_127 = arith.constant dense<0.000000e+00> : vector<16x32xf32>
    %306 = tpu.matmul %304, %305, %cst_127 {dimension_numbers = #tpu.dot_dimension_numbers<[1], [0], [0], [1], [0, 0, 1, 1], [], []>} : vector<16x24xf32>, vector<24x32xf32>, vector<16x32xf32> -> vector<16x32xf32>
    %c0_128 = arith.constant 0 : index
    %c0_129 = arith.constant 0 : index
    %307 = vector.load %arg30[%c0_128, %c0_129] : memref<1x32xf32, #tpu.memory_space<vmem>>, vector<1x32xf32>
    %308 = vector.broadcast %307 : vector<1x32xf32> to vector<16x32xf32>
    %309 = arith.addf %306, %308 : vector<16x32xf32>
    %310 = vector.extract_strided_slice %309 {offsets = [0, 0], sizes = [8, 32], strides = [1, 1]} : vector<16x32xf32> to vector<8x32xf32>
    %311 = vector.extract_strided_slice %33 {offsets = [0, 0], sizes = [8, 32], strides = [1, 1]} : vector<16x32xf32> to vector<8x32xf32>
    %312 = vector.extract_strided_slice %309 {offsets = [8, 0], sizes = [8, 32], strides = [1, 1]} : vector<16x32xf32> to vector<8x32xf32>
    %313 = vector.extract_strided_slice %33 {offsets = [8, 0], sizes = [8, 32], strides = [1, 1]} : vector<16x32xf32> to vector<8x32xf32>
    %314 = tpu.concatenate %310, %311, %312, %313 in 0 : vector<8x32xf32>, vector<8x32xf32>, vector<8x32xf32>, vector<8x32xf32> -> vector<32x32xf32>
    %c0_130 = arith.constant 0 : index
    %c0_131 = arith.constant 0 : index
    %315 = vector.load %arg6[%c0_130, %c0_131] : memref<1x32xf32, #tpu.memory_space<vmem>>, vector<1x32xf32>
    %c0_132 = arith.constant 0 : index
    %c0_133 = arith.constant 0 : index
    %316 = vector.load %arg7[%c0_132, %c0_133] : memref<1x32xf32, #tpu.memory_space<vmem>>, vector<1x32xf32>
    %cst_134 = arith.constant dense<0.000000e+00> : vector<32xf32>
    %317 = vector.multi_reduction <add>, %314, %cst_134 [1] : vector<32x32xf32> to vector<32xf32>
    %318 = vector.shape_cast %317 : vector<32xf32> to vector<32x1xf32>
    %cst_135 = arith.constant 3.200000e+01 : f32
    %319 = vector.broadcast %cst_135 : f32 to vector<32x1xf32>
    %320 = arith.divf %318, %319 : vector<32x1xf32>
    %321 = vector.broadcast %320 : vector<32x1xf32> to vector<32x32xf32>
    %322 = arith.subf %314, %321 : vector<32x32xf32>
    %323 = arith.mulf %322, %322 : vector<32x32xf32>
    %cst_136 = arith.constant dense<0.000000e+00> : vector<32xf32>
    %324 = vector.multi_reduction <add>, %323, %cst_136 [1] : vector<32x32xf32> to vector<32xf32>
    %325 = vector.shape_cast %324 : vector<32xf32> to vector<32x1xf32>
    %cst_137 = arith.constant 3.200000e+01 : f32
    %326 = vector.broadcast %cst_137 : f32 to vector<32x1xf32>
    %327 = arith.divf %325, %326 : vector<32x1xf32>
    %328 = vector.broadcast %320 : vector<32x1xf32> to vector<32x32xf32>
    %329 = arith.subf %314, %328 : vector<32x32xf32>
    %cst_138 = arith.constant 9.99999974E-6 : f32
    %330 = vector.broadcast %cst_138 : f32 to vector<32x1xf32>
    %331 = arith.addf %327, %330 : vector<32x1xf32>
    %332 = math.rsqrt %331 : vector<32x1xf32>
    %333 = vector.broadcast %332 : vector<32x1xf32> to vector<32x32xf32>
    %334 = arith.mulf %329, %333 : vector<32x32xf32>
    %335 = vector.broadcast %315 : vector<1x32xf32> to vector<32x32xf32>
    %336 = arith.mulf %334, %335 : vector<32x32xf32>
    %337 = vector.broadcast %316 : vector<1x32xf32> to vector<32x32xf32>
    %338 = arith.addf %336, %337 : vector<32x32xf32>
    %339 = tpu.iota {dimensions = array<i32: 0>} : vector<16x16xi32>
    %340 = tpu.iota {dimensions = array<i32: 1>} : vector<16x16xi32>
    %341 = arith.cmpi sgt, %340, %339 : vector<16x16xi32>
    %c0_139 = arith.constant 0 : index
    %c0_140 = arith.constant 0 : index
    %c0_141 = arith.constant 0 : index
    %342 = vector.load %arg3[%c0_139, %c0_140, %c0_141] : memref<2x1x16xf32, #tpu.memory_space<vmem>>, vector<1x1x16xf32>
    %343 = vector.shape_cast %342 : vector<1x1x16xf32> to vector<1x16xf32>
    %cst_142 = arith.constant 0.000000e+00 : f32
    %344 = vector.broadcast %cst_142 : f32 to vector<1x16xf32>
    %345 = arith.cmpf ole, %343, %344 : vector<1x16xf32>
    %346 = vector.broadcast %345 : vector<1x16xi1> to vector<16x16xi1>
    %347 = arith.ori %341, %346 : vector<16x16xi1>
    %c0_143 = arith.constant 0 : index
    %c0_144 = arith.constant 0 : index
    %c0_145 = arith.constant 0 : index
    %348 = vector.load %arg4[%c0_143, %c0_144, %c0_145] : memref<2x1x16xf32, #tpu.memory_space<vmem>>, vector<1x1x16xf32>
    %349 = vector.shape_cast %348 : vector<1x1x16xf32> to vector<1x16xf32>
    %cst_146 = arith.constant 2.500000e-01 : f32
    %350 = vector.broadcast %cst_146 : f32 to vector<1x16xf32>
    %351 = arith.mulf %350, %349 : vector<1x16xf32>
    %cst_147 = arith.constant -1.000000e+09 : f32
    %352 = vector.broadcast %cst_147 : f32 to vector<16x16xf32>
    %353 = vector.shape_cast %351 : vector<1x16xf32> to vector<1x16xf32>
    %354 = vector.broadcast %353 : vector<1x16xf32> to vector<16x16xf32>
    %355 = arith.select %347, %352, %354 : vector<16x16xi1>, vector<16x16xf32>
    %cst_148 = arith.constant 6.250000e-02 : f32
    %356 = vector.broadcast %cst_148 : f32 to vector<1x16xf32>
    %357 = arith.mulf %356, %349 : vector<1x16xf32>
    %cst_149 = arith.constant -1.000000e+09 : f32
    %358 = vector.broadcast %cst_149 : f32 to vector<16x16xf32>
    %359 = vector.shape_cast %357 : vector<1x16xf32> to vector<1x16xf32>
    %360 = vector.broadcast %359 : vector<1x16xf32> to vector<16x16xf32>
    %361 = arith.select %347, %358, %360 : vector<16x16xi1>, vector<16x16xf32>
    %cst_150 = arith.constant 1.562500e-02 : f32
    %362 = vector.broadcast %cst_150 : f32 to vector<1x16xf32>
    %363 = arith.mulf %362, %349 : vector<1x16xf32>
    %cst_151 = arith.constant -1.000000e+09 : f32
    %364 = vector.broadcast %cst_151 : f32 to vector<16x16xf32>
    %365 = vector.shape_cast %363 : vector<1x16xf32> to vector<1x16xf32>
    %366 = vector.broadcast %365 : vector<1x16xf32> to vector<16x16xf32>
    %367 = arith.select %347, %364, %366 : vector<16x16xi1>, vector<16x16xf32>
    %cst_152 = arith.constant 3.906250e-03 : f32
    %368 = vector.broadcast %cst_152 : f32 to vector<1x16xf32>
    %369 = arith.mulf %368, %349 : vector<1x16xf32>
    %cst_153 = arith.constant -1.000000e+09 : f32
    %370 = vector.broadcast %cst_153 : f32 to vector<16x16xf32>
    %371 = vector.shape_cast %369 : vector<1x16xf32> to vector<1x16xf32>
    %372 = vector.broadcast %371 : vector<1x16xf32> to vector<16x16xf32>
    %373 = arith.select %347, %370, %372 : vector<16x16xi1>, vector<16x16xf32>
    %c1_154 = arith.constant 1 : index
    %c0_155 = arith.constant 0 : index
    %c0_156 = arith.constant 0 : index
    %374 = vector.load %arg3[%c1_154, %c0_155, %c0_156] : memref<2x1x16xf32, #tpu.memory_space<vmem>>, vector<1x1x16xf32>
    %375 = vector.shape_cast %374 : vector<1x1x16xf32> to vector<1x16xf32>
    %cst_157 = arith.constant 0.000000e+00 : f32
    %376 = vector.broadcast %cst_157 : f32 to vector<1x16xf32>
    %377 = arith.cmpf ole, %375, %376 : vector<1x16xf32>
    %378 = vector.broadcast %377 : vector<1x16xi1> to vector<16x16xi1>
    %379 = arith.ori %341, %378 : vector<16x16xi1>
    %c1_158 = arith.constant 1 : index
    %c0_159 = arith.constant 0 : index
    %c0_160 = arith.constant 0 : index
    %380 = vector.load %arg4[%c1_158, %c0_159, %c0_160] : memref<2x1x16xf32, #tpu.memory_space<vmem>>, vector<1x1x16xf32>
    %381 = vector.shape_cast %380 : vector<1x1x16xf32> to vector<1x16xf32>
    %cst_161 = arith.constant 2.500000e-01 : f32
    %382 = vector.broadcast %cst_161 : f32 to vector<1x16xf32>
    %383 = arith.mulf %382, %381 : vector<1x16xf32>
    %cst_162 = arith.constant -1.000000e+09 : f32
    %384 = vector.broadcast %cst_162 : f32 to vector<16x16xf32>
    %385 = vector.shape_cast %383 : vector<1x16xf32> to vector<1x16xf32>
    %386 = vector.broadcast %385 : vector<1x16xf32> to vector<16x16xf32>
    %387 = arith.select %379, %384, %386 : vector<16x16xi1>, vector<16x16xf32>
    %cst_163 = arith.constant 6.250000e-02 : f32
    %388 = vector.broadcast %cst_163 : f32 to vector<1x16xf32>
    %389 = arith.mulf %388, %381 : vector<1x16xf32>
    %cst_164 = arith.constant -1.000000e+09 : f32
    %390 = vector.broadcast %cst_164 : f32 to vector<16x16xf32>
    %391 = vector.shape_cast %389 : vector<1x16xf32> to vector<1x16xf32>
    %392 = vector.broadcast %391 : vector<1x16xf32> to vector<16x16xf32>
    %393 = arith.select %379, %390, %392 : vector<16x16xi1>, vector<16x16xf32>
    %cst_165 = arith.constant 1.562500e-02 : f32
    %394 = vector.broadcast %cst_165 : f32 to vector<1x16xf32>
    %395 = arith.mulf %394, %381 : vector<1x16xf32>
    %cst_166 = arith.constant -1.000000e+09 : f32
    %396 = vector.broadcast %cst_166 : f32 to vector<16x16xf32>
    %397 = vector.shape_cast %395 : vector<1x16xf32> to vector<1x16xf32>
    %398 = vector.broadcast %397 : vector<1x16xf32> to vector<16x16xf32>
    %399 = arith.select %379, %396, %398 : vector<16x16xi1>, vector<16x16xf32>
    %cst_167 = arith.constant 3.906250e-03 : f32
    %400 = vector.broadcast %cst_167 : f32 to vector<1x16xf32>
    %401 = arith.mulf %400, %381 : vector<1x16xf32>
    %cst_168 = arith.constant -1.000000e+09 : f32
    %402 = vector.broadcast %cst_168 : f32 to vector<16x16xf32>
    %403 = vector.shape_cast %401 : vector<1x16xf32> to vector<1x16xf32>
    %404 = vector.broadcast %403 : vector<1x16xf32> to vector<16x16xf32>
    %405 = arith.select %379, %402, %404 : vector<16x16xi1>, vector<16x16xf32>
    %c0_169 = arith.constant 0 : index
    %c0_170 = arith.constant 0 : index
    %406 = vector.load %arg31[%c0_169, %c0_170] : memref<1x32xf32, #tpu.memory_space<vmem>>, vector<1x32xf32>
    %c0_171 = arith.constant 0 : index
    %c0_172 = arith.constant 0 : index
    %407 = vector.load %arg32[%c0_171, %c0_172] : memref<1x32xf32, #tpu.memory_space<vmem>>, vector<1x32xf32>
    %cst_173 = arith.constant dense<0.000000e+00> : vector<32xf32>
    %408 = vector.multi_reduction <add>, %338, %cst_173 [1] : vector<32x32xf32> to vector<32xf32>
    %409 = vector.shape_cast %408 : vector<32xf32> to vector<32x1xf32>
    %cst_174 = arith.constant 3.200000e+01 : f32
    %410 = vector.broadcast %cst_174 : f32 to vector<32x1xf32>
    %411 = arith.divf %409, %410 : vector<32x1xf32>
    %412 = vector.broadcast %411 : vector<32x1xf32> to vector<32x32xf32>
    %413 = arith.subf %338, %412 : vector<32x32xf32>
    %414 = arith.mulf %413, %413 : vector<32x32xf32>
    %cst_175 = arith.constant dense<0.000000e+00> : vector<32xf32>
    %415 = vector.multi_reduction <add>, %414, %cst_175 [1] : vector<32x32xf32> to vector<32xf32>
    %416 = vector.shape_cast %415 : vector<32xf32> to vector<32x1xf32>
    %cst_176 = arith.constant 3.200000e+01 : f32
    %417 = vector.broadcast %cst_176 : f32 to vector<32x1xf32>
    %418 = arith.divf %416, %417 : vector<32x1xf32>
    %419 = vector.broadcast %411 : vector<32x1xf32> to vector<32x32xf32>
    %420 = arith.subf %338, %419 : vector<32x32xf32>
    %cst_177 = arith.constant 9.99999974E-6 : f32
    %421 = vector.broadcast %cst_177 : f32 to vector<32x1xf32>
    %422 = arith.addf %418, %421 : vector<32x1xf32>
    %423 = math.rsqrt %422 : vector<32x1xf32>
    %424 = vector.broadcast %423 : vector<32x1xf32> to vector<32x32xf32>
    %425 = arith.mulf %420, %424 : vector<32x32xf32>
    %426 = vector.broadcast %406 : vector<1x32xf32> to vector<32x32xf32>
    %427 = arith.mulf %425, %426 : vector<32x32xf32>
    %428 = vector.broadcast %407 : vector<1x32xf32> to vector<32x32xf32>
    %429 = arith.addf %427, %428 : vector<32x32xf32>
    %c0_178 = arith.constant 0 : index
    %c0_179 = arith.constant 0 : index
    %430 = vector.load %arg33[%c0_178, %c0_179] : memref<32x96xf32, #tpu.memory_space<vmem>>, vector<32x96xf32>
    %cst_180 = arith.constant dense<0.000000e+00> : vector<32x96xf32>
    %431 = tpu.matmul %429, %430, %cst_180 {dimension_numbers = #tpu.dot_dimension_numbers<[1], [0], [0], [1], [0, 0, 1, 1], [], []>} : vector<32x32xf32>, vector<32x96xf32>, vector<32x96xf32> -> vector<32x96xf32>
    %c0_181 = arith.constant 0 : index
    %c0_182 = arith.constant 0 : index
    %432 = vector.load %arg34[%c0_181, %c0_182] : memref<1x96xf32, #tpu.memory_space<vmem>>, vector<1x96xf32>
    %433 = vector.broadcast %432 : vector<1x96xf32> to vector<32x96xf32>
    %434 = arith.addf %431, %433 : vector<32x96xf32>
    %435 = vector.extract_strided_slice %434 {offsets = [0, 0], sizes = [32, 32], strides = [1, 1]} : vector<32x96xf32> to vector<32x32xf32>
    %436 = vector.extract_strided_slice %434 {offsets = [0, 32], sizes = [32, 32], strides = [1, 1]} : vector<32x96xf32> to vector<32x32xf32>
    %437 = vector.extract_strided_slice %434 {offsets = [0, 64], sizes = [32, 32], strides = [1, 1]} : vector<32x96xf32> to vector<32x32xf32>
    %438 = vector.extract_strided_slice %435 {offsets = [0, 0], sizes = [16, 32], strides = [1, 1]} : vector<32x32xf32> to vector<16x32xf32>
    %439 = vector.extract_strided_slice %436 {offsets = [0, 0], sizes = [16, 32], strides = [1, 1]} : vector<32x32xf32> to vector<16x32xf32>
    %440 = vector.extract_strided_slice %437 {offsets = [0, 0], sizes = [16, 32], strides = [1, 1]} : vector<32x32xf32> to vector<16x32xf32>
    %c0_183 = arith.constant 0 : index
    %c0_184 = arith.constant 0 : index
    %441 = vector.load %arg35[%c0_183, %c0_184] : memref<32x32xf32, #tpu.memory_space<vmem>>, vector<32x32xf32>
    %442 = vector.extract_strided_slice %438 {offsets = [0, 0], sizes = [16, 8], strides = [1, 1]} : vector<16x32xf32> to vector<16x8xf32>
    %443 = vector.extract_strided_slice %439 {offsets = [0, 0], sizes = [16, 8], strides = [1, 1]} : vector<16x32xf32> to vector<16x8xf32>
    %cst_185 = arith.constant dense<0.000000e+00> : vector<16x16xf32>
    %444 = tpu.matmul %442, %443, %cst_185 {dimension_numbers = #tpu.dot_dimension_numbers<[1], [1], [0], [0], [0, 0, 1, 0], [], []>} : vector<16x8xf32>, vector<16x8xf32>, vector<16x16xf32> -> vector<16x16xf32>
    %445 = arith.addf %444, %355 : vector<16x16xf32>
    %cst_186 = arith.constant dense<0xFF800000> : vector<16xf32>
    %446 = vector.multi_reduction <maximumf>, %445, %cst_186 [1] : vector<16x16xf32> to vector<16xf32>
    %447 = vector.shape_cast %446 : vector<16xf32> to vector<16x1xf32>
    %448 = vector.broadcast %447 : vector<16x1xf32> to vector<16x16xf32>
    %449 = arith.subf %445, %448 : vector<16x16xf32>
    %450 = math.exp %449 : vector<16x16xf32>
    %cst_187 = arith.constant dense<0.000000e+00> : vector<16xf32>
    %451 = vector.multi_reduction <add>, %450, %cst_187 [1] : vector<16x16xf32> to vector<16xf32>
    %452 = vector.shape_cast %451 : vector<16xf32> to vector<16x1xf32>
    %453 = tpu.reciprocal %452 {approx = true} : vector<16x1xf32> -> vector<16x1xf32>
    %454 = vector.broadcast %453 : vector<16x1xf32> to vector<16x16xf32>
    %455 = arith.mulf %450, %454 : vector<16x16xf32>
    %456 = vector.extract_strided_slice %440 {offsets = [0, 0], sizes = [16, 8], strides = [1, 1]} : vector<16x32xf32> to vector<16x8xf32>
    %cst_188 = arith.constant dense<0.000000e+00> : vector<16x8xf32>
    %457 = tpu.matmul %455, %456, %cst_188 {dimension_numbers = #tpu.dot_dimension_numbers<[1], [0], [0], [1], [0, 0, 1, 1], [], []>} : vector<16x16xf32>, vector<16x8xf32>, vector<16x8xf32> -> vector<16x8xf32>
    %458 = vector.extract_strided_slice %438 {offsets = [0, 8], sizes = [16, 8], strides = [1, 1]} : vector<16x32xf32> to vector<16x8xf32>
    %459 = vector.extract_strided_slice %439 {offsets = [0, 8], sizes = [16, 8], strides = [1, 1]} : vector<16x32xf32> to vector<16x8xf32>
    %cst_189 = arith.constant dense<0.000000e+00> : vector<16x16xf32>
    %460 = tpu.matmul %458, %459, %cst_189 {dimension_numbers = #tpu.dot_dimension_numbers<[1], [1], [0], [0], [0, 0, 1, 0], [], []>} : vector<16x8xf32>, vector<16x8xf32>, vector<16x16xf32> -> vector<16x16xf32>
    %461 = arith.addf %460, %361 : vector<16x16xf32>
    %cst_190 = arith.constant dense<0xFF800000> : vector<16xf32>
    %462 = vector.multi_reduction <maximumf>, %461, %cst_190 [1] : vector<16x16xf32> to vector<16xf32>
    %463 = vector.shape_cast %462 : vector<16xf32> to vector<16x1xf32>
    %464 = vector.broadcast %463 : vector<16x1xf32> to vector<16x16xf32>
    %465 = arith.subf %461, %464 : vector<16x16xf32>
    %466 = math.exp %465 : vector<16x16xf32>
    %cst_191 = arith.constant dense<0.000000e+00> : vector<16xf32>
    %467 = vector.multi_reduction <add>, %466, %cst_191 [1] : vector<16x16xf32> to vector<16xf32>
    %468 = vector.shape_cast %467 : vector<16xf32> to vector<16x1xf32>
    %469 = tpu.reciprocal %468 {approx = true} : vector<16x1xf32> -> vector<16x1xf32>
    %470 = vector.broadcast %469 : vector<16x1xf32> to vector<16x16xf32>
    %471 = arith.mulf %466, %470 : vector<16x16xf32>
    %472 = vector.extract_strided_slice %440 {offsets = [0, 8], sizes = [16, 8], strides = [1, 1]} : vector<16x32xf32> to vector<16x8xf32>
    %cst_192 = arith.constant dense<0.000000e+00> : vector<16x8xf32>
    %473 = tpu.matmul %471, %472, %cst_192 {dimension_numbers = #tpu.dot_dimension_numbers<[1], [0], [0], [1], [0, 0, 1, 1], [], []>} : vector<16x16xf32>, vector<16x8xf32>, vector<16x8xf32> -> vector<16x8xf32>
    %474 = vector.extract_strided_slice %438 {offsets = [0, 16], sizes = [16, 8], strides = [1, 1]} : vector<16x32xf32> to vector<16x8xf32>
    %475 = vector.extract_strided_slice %439 {offsets = [0, 16], sizes = [16, 8], strides = [1, 1]} : vector<16x32xf32> to vector<16x8xf32>
    %cst_193 = arith.constant dense<0.000000e+00> : vector<16x16xf32>
    %476 = tpu.matmul %474, %475, %cst_193 {dimension_numbers = #tpu.dot_dimension_numbers<[1], [1], [0], [0], [0, 0, 1, 0], [], []>} : vector<16x8xf32>, vector<16x8xf32>, vector<16x16xf32> -> vector<16x16xf32>
    %477 = arith.addf %476, %367 : vector<16x16xf32>
    %cst_194 = arith.constant dense<0xFF800000> : vector<16xf32>
    %478 = vector.multi_reduction <maximumf>, %477, %cst_194 [1] : vector<16x16xf32> to vector<16xf32>
    %479 = vector.shape_cast %478 : vector<16xf32> to vector<16x1xf32>
    %480 = vector.broadcast %479 : vector<16x1xf32> to vector<16x16xf32>
    %481 = arith.subf %477, %480 : vector<16x16xf32>
    %482 = math.exp %481 : vector<16x16xf32>
    %cst_195 = arith.constant dense<0.000000e+00> : vector<16xf32>
    %483 = vector.multi_reduction <add>, %482, %cst_195 [1] : vector<16x16xf32> to vector<16xf32>
    %484 = vector.shape_cast %483 : vector<16xf32> to vector<16x1xf32>
    %485 = tpu.reciprocal %484 {approx = true} : vector<16x1xf32> -> vector<16x1xf32>
    %486 = vector.broadcast %485 : vector<16x1xf32> to vector<16x16xf32>
    %487 = arith.mulf %482, %486 : vector<16x16xf32>
    %488 = vector.extract_strided_slice %440 {offsets = [0, 16], sizes = [16, 8], strides = [1, 1]} : vector<16x32xf32> to vector<16x8xf32>
    %cst_196 = arith.constant dense<0.000000e+00> : vector<16x8xf32>
    %489 = tpu.matmul %487, %488, %cst_196 {dimension_numbers = #tpu.dot_dimension_numbers<[1], [0], [0], [1], [0, 0, 1, 1], [], []>} : vector<16x16xf32>, vector<16x8xf32>, vector<16x8xf32> -> vector<16x8xf32>
    %490 = vector.extract_strided_slice %438 {offsets = [0, 24], sizes = [16, 8], strides = [1, 1]} : vector<16x32xf32> to vector<16x8xf32>
    %491 = vector.extract_strided_slice %439 {offsets = [0, 24], sizes = [16, 8], strides = [1, 1]} : vector<16x32xf32> to vector<16x8xf32>
    %cst_197 = arith.constant dense<0.000000e+00> : vector<16x16xf32>
    %492 = tpu.matmul %490, %491, %cst_197 {dimension_numbers = #tpu.dot_dimension_numbers<[1], [1], [0], [0], [0, 0, 1, 0], [], []>} : vector<16x8xf32>, vector<16x8xf32>, vector<16x16xf32> -> vector<16x16xf32>
    %493 = arith.addf %492, %373 : vector<16x16xf32>
    %cst_198 = arith.constant dense<0xFF800000> : vector<16xf32>
    %494 = vector.multi_reduction <maximumf>, %493, %cst_198 [1] : vector<16x16xf32> to vector<16xf32>
    %495 = vector.shape_cast %494 : vector<16xf32> to vector<16x1xf32>
    %496 = vector.broadcast %495 : vector<16x1xf32> to vector<16x16xf32>
    %497 = arith.subf %493, %496 : vector<16x16xf32>
    %498 = math.exp %497 : vector<16x16xf32>
    %cst_199 = arith.constant dense<0.000000e+00> : vector<16xf32>
    %499 = vector.multi_reduction <add>, %498, %cst_199 [1] : vector<16x16xf32> to vector<16xf32>
    %500 = vector.shape_cast %499 : vector<16xf32> to vector<16x1xf32>
    %501 = tpu.reciprocal %500 {approx = true} : vector<16x1xf32> -> vector<16x1xf32>
    %502 = vector.broadcast %501 : vector<16x1xf32> to vector<16x16xf32>
    %503 = arith.mulf %498, %502 : vector<16x16xf32>
    %504 = vector.extract_strided_slice %440 {offsets = [0, 24], sizes = [16, 8], strides = [1, 1]} : vector<16x32xf32> to vector<16x8xf32>
    %cst_200 = arith.constant dense<0.000000e+00> : vector<16x8xf32>
    %505 = tpu.matmul %503, %504, %cst_200 {dimension_numbers = #tpu.dot_dimension_numbers<[1], [0], [0], [1], [0, 0, 1, 1], [], []>} : vector<16x16xf32>, vector<16x8xf32>, vector<16x8xf32> -> vector<16x8xf32>
    %506 = tpu.concatenate %457, %473, %489, %505 in 1 : vector<16x8xf32>, vector<16x8xf32>, vector<16x8xf32>, vector<16x8xf32> -> vector<16x32xf32>
    %cst_201 = arith.constant dense<0.000000e+00> : vector<16x32xf32>
    %507 = tpu.matmul %506, %441, %cst_201 {dimension_numbers = #tpu.dot_dimension_numbers<[1], [0], [0], [1], [0, 0, 1, 1], [], []>} : vector<16x32xf32>, vector<32x32xf32>, vector<16x32xf32> -> vector<16x32xf32>
    %508 = vector.extract_strided_slice %435 {offsets = [16, 0], sizes = [16, 32], strides = [1, 1]} : vector<32x32xf32> to vector<16x32xf32>
    %509 = vector.extract_strided_slice %436 {offsets = [16, 0], sizes = [16, 32], strides = [1, 1]} : vector<32x32xf32> to vector<16x32xf32>
    %510 = vector.extract_strided_slice %437 {offsets = [16, 0], sizes = [16, 32], strides = [1, 1]} : vector<32x32xf32> to vector<16x32xf32>
    %c0_202 = arith.constant 0 : index
    %c0_203 = arith.constant 0 : index
    %511 = vector.load %arg35[%c0_202, %c0_203] : memref<32x32xf32, #tpu.memory_space<vmem>>, vector<32x32xf32>
    %512 = vector.extract_strided_slice %508 {offsets = [0, 0], sizes = [16, 8], strides = [1, 1]} : vector<16x32xf32> to vector<16x8xf32>
    %513 = vector.extract_strided_slice %509 {offsets = [0, 0], sizes = [16, 8], strides = [1, 1]} : vector<16x32xf32> to vector<16x8xf32>
    %cst_204 = arith.constant dense<0.000000e+00> : vector<16x16xf32>
    %514 = tpu.matmul %512, %513, %cst_204 {dimension_numbers = #tpu.dot_dimension_numbers<[1], [1], [0], [0], [0, 0, 1, 0], [], []>} : vector<16x8xf32>, vector<16x8xf32>, vector<16x16xf32> -> vector<16x16xf32>
    %515 = arith.addf %514, %387 : vector<16x16xf32>
    %cst_205 = arith.constant dense<0xFF800000> : vector<16xf32>
    %516 = vector.multi_reduction <maximumf>, %515, %cst_205 [1] : vector<16x16xf32> to vector<16xf32>
    %517 = vector.shape_cast %516 : vector<16xf32> to vector<16x1xf32>
    %518 = vector.broadcast %517 : vector<16x1xf32> to vector<16x16xf32>
    %519 = arith.subf %515, %518 : vector<16x16xf32>
    %520 = math.exp %519 : vector<16x16xf32>
    %cst_206 = arith.constant dense<0.000000e+00> : vector<16xf32>
    %521 = vector.multi_reduction <add>, %520, %cst_206 [1] : vector<16x16xf32> to vector<16xf32>
    %522 = vector.shape_cast %521 : vector<16xf32> to vector<16x1xf32>
    %523 = tpu.reciprocal %522 {approx = true} : vector<16x1xf32> -> vector<16x1xf32>
    %524 = vector.broadcast %523 : vector<16x1xf32> to vector<16x16xf32>
    %525 = arith.mulf %520, %524 : vector<16x16xf32>
    %526 = vector.extract_strided_slice %510 {offsets = [0, 0], sizes = [16, 8], strides = [1, 1]} : vector<16x32xf32> to vector<16x8xf32>
    %cst_207 = arith.constant dense<0.000000e+00> : vector<16x8xf32>
    %527 = tpu.matmul %525, %526, %cst_207 {dimension_numbers = #tpu.dot_dimension_numbers<[1], [0], [0], [1], [0, 0, 1, 1], [], []>} : vector<16x16xf32>, vector<16x8xf32>, vector<16x8xf32> -> vector<16x8xf32>
    %528 = vector.extract_strided_slice %508 {offsets = [0, 8], sizes = [16, 8], strides = [1, 1]} : vector<16x32xf32> to vector<16x8xf32>
    %529 = vector.extract_strided_slice %509 {offsets = [0, 8], sizes = [16, 8], strides = [1, 1]} : vector<16x32xf32> to vector<16x8xf32>
    %cst_208 = arith.constant dense<0.000000e+00> : vector<16x16xf32>
    %530 = tpu.matmul %528, %529, %cst_208 {dimension_numbers = #tpu.dot_dimension_numbers<[1], [1], [0], [0], [0, 0, 1, 0], [], []>} : vector<16x8xf32>, vector<16x8xf32>, vector<16x16xf32> -> vector<16x16xf32>
    %531 = arith.addf %530, %393 : vector<16x16xf32>
    %cst_209 = arith.constant dense<0xFF800000> : vector<16xf32>
    %532 = vector.multi_reduction <maximumf>, %531, %cst_209 [1] : vector<16x16xf32> to vector<16xf32>
    %533 = vector.shape_cast %532 : vector<16xf32> to vector<16x1xf32>
    %534 = vector.broadcast %533 : vector<16x1xf32> to vector<16x16xf32>
    %535 = arith.subf %531, %534 : vector<16x16xf32>
    %536 = math.exp %535 : vector<16x16xf32>
    %cst_210 = arith.constant dense<0.000000e+00> : vector<16xf32>
    %537 = vector.multi_reduction <add>, %536, %cst_210 [1] : vector<16x16xf32> to vector<16xf32>
    %538 = vector.shape_cast %537 : vector<16xf32> to vector<16x1xf32>
    %539 = tpu.reciprocal %538 {approx = true} : vector<16x1xf32> -> vector<16x1xf32>
    %540 = vector.broadcast %539 : vector<16x1xf32> to vector<16x16xf32>
    %541 = arith.mulf %536, %540 : vector<16x16xf32>
    %542 = vector.extract_strided_slice %510 {offsets = [0, 8], sizes = [16, 8], strides = [1, 1]} : vector<16x32xf32> to vector<16x8xf32>
    %cst_211 = arith.constant dense<0.000000e+00> : vector<16x8xf32>
    %543 = tpu.matmul %541, %542, %cst_211 {dimension_numbers = #tpu.dot_dimension_numbers<[1], [0], [0], [1], [0, 0, 1, 1], [], []>} : vector<16x16xf32>, vector<16x8xf32>, vector<16x8xf32> -> vector<16x8xf32>
    %544 = vector.extract_strided_slice %508 {offsets = [0, 16], sizes = [16, 8], strides = [1, 1]} : vector<16x32xf32> to vector<16x8xf32>
    %545 = vector.extract_strided_slice %509 {offsets = [0, 16], sizes = [16, 8], strides = [1, 1]} : vector<16x32xf32> to vector<16x8xf32>
    %cst_212 = arith.constant dense<0.000000e+00> : vector<16x16xf32>
    %546 = tpu.matmul %544, %545, %cst_212 {dimension_numbers = #tpu.dot_dimension_numbers<[1], [1], [0], [0], [0, 0, 1, 0], [], []>} : vector<16x8xf32>, vector<16x8xf32>, vector<16x16xf32> -> vector<16x16xf32>
    %547 = arith.addf %546, %399 : vector<16x16xf32>
    %cst_213 = arith.constant dense<0xFF800000> : vector<16xf32>
    %548 = vector.multi_reduction <maximumf>, %547, %cst_213 [1] : vector<16x16xf32> to vector<16xf32>
    %549 = vector.shape_cast %548 : vector<16xf32> to vector<16x1xf32>
    %550 = vector.broadcast %549 : vector<16x1xf32> to vector<16x16xf32>
    %551 = arith.subf %547, %550 : vector<16x16xf32>
    %552 = math.exp %551 : vector<16x16xf32>
    %cst_214 = arith.constant dense<0.000000e+00> : vector<16xf32>
    %553 = vector.multi_reduction <add>, %552, %cst_214 [1] : vector<16x16xf32> to vector<16xf32>
    %554 = vector.shape_cast %553 : vector<16xf32> to vector<16x1xf32>
    %555 = tpu.reciprocal %554 {approx = true} : vector<16x1xf32> -> vector<16x1xf32>
    %556 = vector.broadcast %555 : vector<16x1xf32> to vector<16x16xf32>
    %557 = arith.mulf %552, %556 : vector<16x16xf32>
    %558 = vector.extract_strided_slice %510 {offsets = [0, 16], sizes = [16, 8], strides = [1, 1]} : vector<16x32xf32> to vector<16x8xf32>
    %cst_215 = arith.constant dense<0.000000e+00> : vector<16x8xf32>
    %559 = tpu.matmul %557, %558, %cst_215 {dimension_numbers = #tpu.dot_dimension_numbers<[1], [0], [0], [1], [0, 0, 1, 1], [], []>} : vector<16x16xf32>, vector<16x8xf32>, vector<16x8xf32> -> vector<16x8xf32>
    %560 = vector.extract_strided_slice %508 {offsets = [0, 24], sizes = [16, 8], strides = [1, 1]} : vector<16x32xf32> to vector<16x8xf32>
    %561 = vector.extract_strided_slice %509 {offsets = [0, 24], sizes = [16, 8], strides = [1, 1]} : vector<16x32xf32> to vector<16x8xf32>
    %cst_216 = arith.constant dense<0.000000e+00> : vector<16x16xf32>
    %562 = tpu.matmul %560, %561, %cst_216 {dimension_numbers = #tpu.dot_dimension_numbers<[1], [1], [0], [0], [0, 0, 1, 0], [], []>} : vector<16x8xf32>, vector<16x8xf32>, vector<16x16xf32> -> vector<16x16xf32>
    %563 = arith.addf %562, %405 : vector<16x16xf32>
    %cst_217 = arith.constant dense<0xFF800000> : vector<16xf32>
    %564 = vector.multi_reduction <maximumf>, %563, %cst_217 [1] : vector<16x16xf32> to vector<16xf32>
    %565 = vector.shape_cast %564 : vector<16xf32> to vector<16x1xf32>
    %566 = vector.broadcast %565 : vector<16x1xf32> to vector<16x16xf32>
    %567 = arith.subf %563, %566 : vector<16x16xf32>
    %568 = math.exp %567 : vector<16x16xf32>
    %cst_218 = arith.constant dense<0.000000e+00> : vector<16xf32>
    %569 = vector.multi_reduction <add>, %568, %cst_218 [1] : vector<16x16xf32> to vector<16xf32>
    %570 = vector.shape_cast %569 : vector<16xf32> to vector<16x1xf32>
    %571 = tpu.reciprocal %570 {approx = true} : vector<16x1xf32> -> vector<16x1xf32>
    %572 = vector.broadcast %571 : vector<16x1xf32> to vector<16x16xf32>
    %573 = arith.mulf %568, %572 : vector<16x16xf32>
    %574 = vector.extract_strided_slice %510 {offsets = [0, 24], sizes = [16, 8], strides = [1, 1]} : vector<16x32xf32> to vector<16x8xf32>
    %cst_219 = arith.constant dense<0.000000e+00> : vector<16x8xf32>
    %575 = tpu.matmul %573, %574, %cst_219 {dimension_numbers = #tpu.dot_dimension_numbers<[1], [0], [0], [1], [0, 0, 1, 1], [], []>} : vector<16x16xf32>, vector<16x8xf32>, vector<16x8xf32> -> vector<16x8xf32>
    %576 = tpu.concatenate %527, %543, %559, %575 in 1 : vector<16x8xf32>, vector<16x8xf32>, vector<16x8xf32>, vector<16x8xf32> -> vector<16x32xf32>
    %cst_220 = arith.constant dense<0.000000e+00> : vector<16x32xf32>
    %577 = tpu.matmul %576, %511, %cst_220 {dimension_numbers = #tpu.dot_dimension_numbers<[1], [0], [0], [1], [0, 0, 1, 1], [], []>} : vector<16x32xf32>, vector<32x32xf32>, vector<16x32xf32> -> vector<16x32xf32>
    %578 = tpu.concatenate %507, %577 in 0 : vector<16x32xf32>, vector<16x32xf32> -> vector<32x32xf32>
    %c0_221 = arith.constant 0 : index
    %c0_222 = arith.constant 0 : index
    %579 = vector.load %arg36[%c0_221, %c0_222] : memref<1x32xf32, #tpu.memory_space<vmem>>, vector<1x32xf32>
    %580 = vector.broadcast %579 : vector<1x32xf32> to vector<32x32xf32>
    %581 = arith.addf %578, %580 : vector<32x32xf32>
    %582 = arith.addf %338, %581 : vector<32x32xf32>
    %c0_223 = arith.constant 0 : index
    %c0_224 = arith.constant 0 : index
    %583 = vector.load %arg37[%c0_223, %c0_224] : memref<1x32xf32, #tpu.memory_space<vmem>>, vector<1x32xf32>
    %c0_225 = arith.constant 0 : index
    %c0_226 = arith.constant 0 : index
    %584 = vector.load %arg38[%c0_225, %c0_226] : memref<1x32xf32, #tpu.memory_space<vmem>>, vector<1x32xf32>
    %cst_227 = arith.constant dense<0.000000e+00> : vector<32xf32>
    %585 = vector.multi_reduction <add>, %582, %cst_227 [1] : vector<32x32xf32> to vector<32xf32>
    %586 = vector.shape_cast %585 : vector<32xf32> to vector<32x1xf32>
    %cst_228 = arith.constant 3.200000e+01 : f32
    %587 = vector.broadcast %cst_228 : f32 to vector<32x1xf32>
    %588 = arith.divf %586, %587 : vector<32x1xf32>
    %589 = vector.broadcast %588 : vector<32x1xf32> to vector<32x32xf32>
    %590 = arith.subf %582, %589 : vector<32x32xf32>
    %591 = arith.mulf %590, %590 : vector<32x32xf32>
    %cst_229 = arith.constant dense<0.000000e+00> : vector<32xf32>
    %592 = vector.multi_reduction <add>, %591, %cst_229 [1] : vector<32x32xf32> to vector<32xf32>
    %593 = vector.shape_cast %592 : vector<32xf32> to vector<32x1xf32>
    %cst_230 = arith.constant 3.200000e+01 : f32
    %594 = vector.broadcast %cst_230 : f32 to vector<32x1xf32>
    %595 = arith.divf %593, %594 : vector<32x1xf32>
    %596 = vector.broadcast %588 : vector<32x1xf32> to vector<32x32xf32>
    %597 = arith.subf %582, %596 : vector<32x32xf32>
    %cst_231 = arith.constant 9.99999974E-6 : f32
    %598 = vector.broadcast %cst_231 : f32 to vector<32x1xf32>
    %599 = arith.addf %595, %598 : vector<32x1xf32>
    %600 = math.rsqrt %599 : vector<32x1xf32>
    %601 = vector.broadcast %600 : vector<32x1xf32> to vector<32x32xf32>
    %602 = arith.mulf %597, %601 : vector<32x32xf32>
    %603 = vector.broadcast %583 : vector<1x32xf32> to vector<32x32xf32>
    %604 = arith.mulf %602, %603 : vector<32x32xf32>
    %605 = vector.broadcast %584 : vector<1x32xf32> to vector<32x32xf32>
    %606 = arith.addf %604, %605 : vector<32x32xf32>
    %c0_232 = arith.constant 0 : index
    %c0_233 = arith.constant 0 : index
    %607 = vector.load %arg39[%c0_232, %c0_233] : memref<32x128xf32, #tpu.memory_space<vmem>>, vector<32x128xf32>
    %cst_234 = arith.constant dense<0.000000e+00> : vector<32x128xf32>
    %608 = tpu.matmul %606, %607, %cst_234 {dimension_numbers = #tpu.dot_dimension_numbers<[1], [0], [0], [1], [0, 0, 1, 1], [], []>} : vector<32x32xf32>, vector<32x128xf32>, vector<32x128xf32> -> vector<32x128xf32>
    %c0_235 = arith.constant 0 : index
    %c0_236 = arith.constant 0 : index
    %609 = vector.load %arg40[%c0_235, %c0_236] : memref<1x128xf32, #tpu.memory_space<vmem>>, vector<1x128xf32>
    %610 = vector.broadcast %609 : vector<1x128xf32> to vector<32x128xf32>
    %611 = arith.addf %608, %610 : vector<32x128xf32>
    %cst_237 = arith.constant 5.000000e-01 : f32
    %612 = vector.broadcast %cst_237 : f32 to vector<32x128xf32>
    %613 = arith.mulf %612, %611 : vector<32x128xf32>
    %cst_238 = arith.constant 0.797884583 : f32
    %614 = vector.broadcast %cst_238 : f32 to vector<32x128xf32>
    %615 = arith.mulf %614, %611 : vector<32x128xf32>
    %cst_239 = arith.constant 4.471500e-02 : f32
    %616 = vector.broadcast %cst_239 : f32 to vector<32x128xf32>
    %617 = arith.mulf %616, %611 : vector<32x128xf32>
    %618 = arith.mulf %617, %611 : vector<32x128xf32>
    %cst_240 = arith.constant 1.000000e+00 : f32
    %619 = vector.broadcast %cst_240 : f32 to vector<32x128xf32>
    %620 = arith.addf %619, %618 : vector<32x128xf32>
    %621 = arith.mulf %615, %620 : vector<32x128xf32>
    %622 = math.tanh %621 : vector<32x128xf32>
    %cst_241 = arith.constant 1.000000e+00 : f32
    %623 = vector.broadcast %cst_241 : f32 to vector<32x128xf32>
    %624 = arith.addf %623, %622 : vector<32x128xf32>
    %625 = arith.mulf %613, %624 : vector<32x128xf32>
    %c0_242 = arith.constant 0 : index
    %c0_243 = arith.constant 0 : index
    %626 = vector.load %arg41[%c0_242, %c0_243] : memref<128x32xf32, #tpu.memory_space<vmem>>, vector<128x32xf32>
    %cst_244 = arith.constant dense<0.000000e+00> : vector<32x32xf32>
    %627 = tpu.matmul %625, %626, %cst_244 {dimension_numbers = #tpu.dot_dimension_numbers<[1], [0], [0], [1], [0, 0, 1, 1], [], []>} : vector<32x128xf32>, vector<128x32xf32>, vector<32x32xf32> -> vector<32x32xf32>
    %c0_245 = arith.constant 0 : index
    %c0_246 = arith.constant 0 : index
    %628 = vector.load %arg42[%c0_245, %c0_246] : memref<1x32xf32, #tpu.memory_space<vmem>>, vector<1x32xf32>
    %629 = vector.broadcast %628 : vector<1x32xf32> to vector<32x32xf32>
    %630 = arith.addf %627, %629 : vector<32x32xf32>
    %631 = arith.addf %582, %630 : vector<32x32xf32>
    %c0_247 = arith.constant 0 : index
    %c0_248 = arith.constant 0 : index
    %632 = vector.load %arg43[%c0_247, %c0_248] : memref<1x32xf32, #tpu.memory_space<vmem>>, vector<1x32xf32>
    %c0_249 = arith.constant 0 : index
    %c0_250 = arith.constant 0 : index
    %633 = vector.load %arg44[%c0_249, %c0_250] : memref<1x32xf32, #tpu.memory_space<vmem>>, vector<1x32xf32>
    %cst_251 = arith.constant dense<0.000000e+00> : vector<32xf32>
    %634 = vector.multi_reduction <add>, %631, %cst_251 [1] : vector<32x32xf32> to vector<32xf32>
    %635 = vector.shape_cast %634 : vector<32xf32> to vector<32x1xf32>
    %cst_252 = arith.constant 3.200000e+01 : f32
    %636 = vector.broadcast %cst_252 : f32 to vector<32x1xf32>
    %637 = arith.divf %635, %636 : vector<32x1xf32>
    %638 = vector.broadcast %637 : vector<32x1xf32> to vector<32x32xf32>
    %639 = arith.subf %631, %638 : vector<32x32xf32>
    %640 = arith.mulf %639, %639 : vector<32x32xf32>
    %cst_253 = arith.constant dense<0.000000e+00> : vector<32xf32>
    %641 = vector.multi_reduction <add>, %640, %cst_253 [1] : vector<32x32xf32> to vector<32xf32>
    %642 = vector.shape_cast %641 : vector<32xf32> to vector<32x1xf32>
    %cst_254 = arith.constant 3.200000e+01 : f32
    %643 = vector.broadcast %cst_254 : f32 to vector<32x1xf32>
    %644 = arith.divf %642, %643 : vector<32x1xf32>
    %645 = vector.broadcast %637 : vector<32x1xf32> to vector<32x32xf32>
    %646 = arith.subf %631, %645 : vector<32x32xf32>
    %cst_255 = arith.constant 9.99999974E-6 : f32
    %647 = vector.broadcast %cst_255 : f32 to vector<32x1xf32>
    %648 = arith.addf %644, %647 : vector<32x1xf32>
    %649 = math.rsqrt %648 : vector<32x1xf32>
    %650 = vector.broadcast %649 : vector<32x1xf32> to vector<32x32xf32>
    %651 = arith.mulf %646, %650 : vector<32x32xf32>
    %652 = vector.broadcast %632 : vector<1x32xf32> to vector<32x32xf32>
    %653 = arith.mulf %651, %652 : vector<32x32xf32>
    %654 = vector.broadcast %633 : vector<1x32xf32> to vector<32x32xf32>
    %655 = arith.addf %653, %654 : vector<32x32xf32>
    %c0_256 = arith.constant 0 : index
    %c0_257 = arith.constant 0 : index
    %656 = vector.load %arg45[%c0_256, %c0_257] : memref<32x96xf32, #tpu.memory_space<vmem>>, vector<32x96xf32>
    %cst_258 = arith.constant dense<0.000000e+00> : vector<32x96xf32>
    %657 = tpu.matmul %655, %656, %cst_258 {dimension_numbers = #tpu.dot_dimension_numbers<[1], [0], [0], [1], [0, 0, 1, 1], [], []>} : vector<32x32xf32>, vector<32x96xf32>, vector<32x96xf32> -> vector<32x96xf32>
    %c0_259 = arith.constant 0 : index
    %c0_260 = arith.constant 0 : index
    %658 = vector.load %arg46[%c0_259, %c0_260] : memref<1x96xf32, #tpu.memory_space<vmem>>, vector<1x96xf32>
    %659 = vector.broadcast %658 : vector<1x96xf32> to vector<32x96xf32>
    %660 = arith.addf %657, %659 : vector<32x96xf32>
    %661 = vector.extract_strided_slice %660 {offsets = [0, 0], sizes = [32, 32], strides = [1, 1]} : vector<32x96xf32> to vector<32x32xf32>
    %662 = vector.extract_strided_slice %660 {offsets = [0, 32], sizes = [32, 32], strides = [1, 1]} : vector<32x96xf32> to vector<32x32xf32>
    %663 = vector.extract_strided_slice %660 {offsets = [0, 64], sizes = [32, 32], strides = [1, 1]} : vector<32x96xf32> to vector<32x32xf32>
    %664 = vector.extract_strided_slice %661 {offsets = [0, 0], sizes = [16, 32], strides = [1, 1]} : vector<32x32xf32> to vector<16x32xf32>
    %665 = vector.extract_strided_slice %662 {offsets = [0, 0], sizes = [16, 32], strides = [1, 1]} : vector<32x32xf32> to vector<16x32xf32>
    %666 = vector.extract_strided_slice %663 {offsets = [0, 0], sizes = [16, 32], strides = [1, 1]} : vector<32x32xf32> to vector<16x32xf32>
    %c0_261 = arith.constant 0 : index
    %c0_262 = arith.constant 0 : index
    %667 = vector.load %arg47[%c0_261, %c0_262] : memref<32x32xf32, #tpu.memory_space<vmem>>, vector<32x32xf32>
    %668 = vector.extract_strided_slice %664 {offsets = [0, 0], sizes = [16, 8], strides = [1, 1]} : vector<16x32xf32> to vector<16x8xf32>
    %669 = vector.extract_strided_slice %665 {offsets = [0, 0], sizes = [16, 8], strides = [1, 1]} : vector<16x32xf32> to vector<16x8xf32>
    %cst_263 = arith.constant dense<0.000000e+00> : vector<16x16xf32>
    %670 = tpu.matmul %668, %669, %cst_263 {dimension_numbers = #tpu.dot_dimension_numbers<[1], [1], [0], [0], [0, 0, 1, 0], [], []>} : vector<16x8xf32>, vector<16x8xf32>, vector<16x16xf32> -> vector<16x16xf32>
    %671 = arith.addf %670, %355 : vector<16x16xf32>
    %cst_264 = arith.constant dense<0xFF800000> : vector<16xf32>
    %672 = vector.multi_reduction <maximumf>, %671, %cst_264 [1] : vector<16x16xf32> to vector<16xf32>
    %673 = vector.shape_cast %672 : vector<16xf32> to vector<16x1xf32>
    %674 = vector.broadcast %673 : vector<16x1xf32> to vector<16x16xf32>
    %675 = arith.subf %671, %674 : vector<16x16xf32>
    %676 = math.exp %675 : vector<16x16xf32>
    %cst_265 = arith.constant dense<0.000000e+00> : vector<16xf32>
    %677 = vector.multi_reduction <add>, %676, %cst_265 [1] : vector<16x16xf32> to vector<16xf32>
    %678 = vector.shape_cast %677 : vector<16xf32> to vector<16x1xf32>
    %679 = tpu.reciprocal %678 {approx = true} : vector<16x1xf32> -> vector<16x1xf32>
    %680 = vector.broadcast %679 : vector<16x1xf32> to vector<16x16xf32>
    %681 = arith.mulf %676, %680 : vector<16x16xf32>
    %682 = vector.extract_strided_slice %666 {offsets = [0, 0], sizes = [16, 8], strides = [1, 1]} : vector<16x32xf32> to vector<16x8xf32>
    %cst_266 = arith.constant dense<0.000000e+00> : vector<16x8xf32>
    %683 = tpu.matmul %681, %682, %cst_266 {dimension_numbers = #tpu.dot_dimension_numbers<[1], [0], [0], [1], [0, 0, 1, 1], [], []>} : vector<16x16xf32>, vector<16x8xf32>, vector<16x8xf32> -> vector<16x8xf32>
    %684 = vector.extract_strided_slice %664 {offsets = [0, 8], sizes = [16, 8], strides = [1, 1]} : vector<16x32xf32> to vector<16x8xf32>
    %685 = vector.extract_strided_slice %665 {offsets = [0, 8], sizes = [16, 8], strides = [1, 1]} : vector<16x32xf32> to vector<16x8xf32>
    %cst_267 = arith.constant dense<0.000000e+00> : vector<16x16xf32>
    %686 = tpu.matmul %684, %685, %cst_267 {dimension_numbers = #tpu.dot_dimension_numbers<[1], [1], [0], [0], [0, 0, 1, 0], [], []>} : vector<16x8xf32>, vector<16x8xf32>, vector<16x16xf32> -> vector<16x16xf32>
    %687 = arith.addf %686, %361 : vector<16x16xf32>
    %cst_268 = arith.constant dense<0xFF800000> : vector<16xf32>
    %688 = vector.multi_reduction <maximumf>, %687, %cst_268 [1] : vector<16x16xf32> to vector<16xf32>
    %689 = vector.shape_cast %688 : vector<16xf32> to vector<16x1xf32>
    %690 = vector.broadcast %689 : vector<16x1xf32> to vector<16x16xf32>
    %691 = arith.subf %687, %690 : vector<16x16xf32>
    %692 = math.exp %691 : vector<16x16xf32>
    %cst_269 = arith.constant dense<0.000000e+00> : vector<16xf32>
    %693 = vector.multi_reduction <add>, %692, %cst_269 [1] : vector<16x16xf32> to vector<16xf32>
    %694 = vector.shape_cast %693 : vector<16xf32> to vector<16x1xf32>
    %695 = tpu.reciprocal %694 {approx = true} : vector<16x1xf32> -> vector<16x1xf32>
    %696 = vector.broadcast %695 : vector<16x1xf32> to vector<16x16xf32>
    %697 = arith.mulf %692, %696 : vector<16x16xf32>
    %698 = vector.extract_strided_slice %666 {offsets = [0, 8], sizes = [16, 8], strides = [1, 1]} : vector<16x32xf32> to vector<16x8xf32>
    %cst_270 = arith.constant dense<0.000000e+00> : vector<16x8xf32>
    %699 = tpu.matmul %697, %698, %cst_270 {dimension_numbers = #tpu.dot_dimension_numbers<[1], [0], [0], [1], [0, 0, 1, 1], [], []>} : vector<16x16xf32>, vector<16x8xf32>, vector<16x8xf32> -> vector<16x8xf32>
    %700 = vector.extract_strided_slice %664 {offsets = [0, 16], sizes = [16, 8], strides = [1, 1]} : vector<16x32xf32> to vector<16x8xf32>
    %701 = vector.extract_strided_slice %665 {offsets = [0, 16], sizes = [16, 8], strides = [1, 1]} : vector<16x32xf32> to vector<16x8xf32>
    %cst_271 = arith.constant dense<0.000000e+00> : vector<16x16xf32>
    %702 = tpu.matmul %700, %701, %cst_271 {dimension_numbers = #tpu.dot_dimension_numbers<[1], [1], [0], [0], [0, 0, 1, 0], [], []>} : vector<16x8xf32>, vector<16x8xf32>, vector<16x16xf32> -> vector<16x16xf32>
    %703 = arith.addf %702, %367 : vector<16x16xf32>
    %cst_272 = arith.constant dense<0xFF800000> : vector<16xf32>
    %704 = vector.multi_reduction <maximumf>, %703, %cst_272 [1] : vector<16x16xf32> to vector<16xf32>
    %705 = vector.shape_cast %704 : vector<16xf32> to vector<16x1xf32>
    %706 = vector.broadcast %705 : vector<16x1xf32> to vector<16x16xf32>
    %707 = arith.subf %703, %706 : vector<16x16xf32>
    %708 = math.exp %707 : vector<16x16xf32>
    %cst_273 = arith.constant dense<0.000000e+00> : vector<16xf32>
    %709 = vector.multi_reduction <add>, %708, %cst_273 [1] : vector<16x16xf32> to vector<16xf32>
    %710 = vector.shape_cast %709 : vector<16xf32> to vector<16x1xf32>
    %711 = tpu.reciprocal %710 {approx = true} : vector<16x1xf32> -> vector<16x1xf32>
    %712 = vector.broadcast %711 : vector<16x1xf32> to vector<16x16xf32>
    %713 = arith.mulf %708, %712 : vector<16x16xf32>
    %714 = vector.extract_strided_slice %666 {offsets = [0, 16], sizes = [16, 8], strides = [1, 1]} : vector<16x32xf32> to vector<16x8xf32>
    %cst_274 = arith.constant dense<0.000000e+00> : vector<16x8xf32>
    %715 = tpu.matmul %713, %714, %cst_274 {dimension_numbers = #tpu.dot_dimension_numbers<[1], [0], [0], [1], [0, 0, 1, 1], [], []>} : vector<16x16xf32>, vector<16x8xf32>, vector<16x8xf32> -> vector<16x8xf32>
    %716 = vector.extract_strided_slice %664 {offsets = [0, 24], sizes = [16, 8], strides = [1, 1]} : vector<16x32xf32> to vector<16x8xf32>
    %717 = vector.extract_strided_slice %665 {offsets = [0, 24], sizes = [16, 8], strides = [1, 1]} : vector<16x32xf32> to vector<16x8xf32>
    %cst_275 = arith.constant dense<0.000000e+00> : vector<16x16xf32>
    %718 = tpu.matmul %716, %717, %cst_275 {dimension_numbers = #tpu.dot_dimension_numbers<[1], [1], [0], [0], [0, 0, 1, 0], [], []>} : vector<16x8xf32>, vector<16x8xf32>, vector<16x16xf32> -> vector<16x16xf32>
    %719 = arith.addf %718, %373 : vector<16x16xf32>
    %cst_276 = arith.constant dense<0xFF800000> : vector<16xf32>
    %720 = vector.multi_reduction <maximumf>, %719, %cst_276 [1] : vector<16x16xf32> to vector<16xf32>
    %721 = vector.shape_cast %720 : vector<16xf32> to vector<16x1xf32>
    %722 = vector.broadcast %721 : vector<16x1xf32> to vector<16x16xf32>
    %723 = arith.subf %719, %722 : vector<16x16xf32>
    %724 = math.exp %723 : vector<16x16xf32>
    %cst_277 = arith.constant dense<0.000000e+00> : vector<16xf32>
    %725 = vector.multi_reduction <add>, %724, %cst_277 [1] : vector<16x16xf32> to vector<16xf32>
    %726 = vector.shape_cast %725 : vector<16xf32> to vector<16x1xf32>
    %727 = tpu.reciprocal %726 {approx = true} : vector<16x1xf32> -> vector<16x1xf32>
    %728 = vector.broadcast %727 : vector<16x1xf32> to vector<16x16xf32>
    %729 = arith.mulf %724, %728 : vector<16x16xf32>
    %730 = vector.extract_strided_slice %666 {offsets = [0, 24], sizes = [16, 8], strides = [1, 1]} : vector<16x32xf32> to vector<16x8xf32>
    %cst_278 = arith.constant dense<0.000000e+00> : vector<16x8xf32>
    %731 = tpu.matmul %729, %730, %cst_278 {dimension_numbers = #tpu.dot_dimension_numbers<[1], [0], [0], [1], [0, 0, 1, 1], [], []>} : vector<16x16xf32>, vector<16x8xf32>, vector<16x8xf32> -> vector<16x8xf32>
    %732 = tpu.concatenate %683, %699, %715, %731 in 1 : vector<16x8xf32>, vector<16x8xf32>, vector<16x8xf32>, vector<16x8xf32> -> vector<16x32xf32>
    %cst_279 = arith.constant dense<0.000000e+00> : vector<16x32xf32>
    %733 = tpu.matmul %732, %667, %cst_279 {dimension_numbers = #tpu.dot_dimension_numbers<[1], [0], [0], [1], [0, 0, 1, 1], [], []>} : vector<16x32xf32>, vector<32x32xf32>, vector<16x32xf32> -> vector<16x32xf32>
    %734 = vector.extract_strided_slice %661 {offsets = [16, 0], sizes = [16, 32], strides = [1, 1]} : vector<32x32xf32> to vector<16x32xf32>
    %735 = vector.extract_strided_slice %662 {offsets = [16, 0], sizes = [16, 32], strides = [1, 1]} : vector<32x32xf32> to vector<16x32xf32>
    %736 = vector.extract_strided_slice %663 {offsets = [16, 0], sizes = [16, 32], strides = [1, 1]} : vector<32x32xf32> to vector<16x32xf32>
    %c0_280 = arith.constant 0 : index
    %c0_281 = arith.constant 0 : index
    %737 = vector.load %arg47[%c0_280, %c0_281] : memref<32x32xf32, #tpu.memory_space<vmem>>, vector<32x32xf32>
    %738 = vector.extract_strided_slice %734 {offsets = [0, 0], sizes = [16, 8], strides = [1, 1]} : vector<16x32xf32> to vector<16x8xf32>
    %739 = vector.extract_strided_slice %735 {offsets = [0, 0], sizes = [16, 8], strides = [1, 1]} : vector<16x32xf32> to vector<16x8xf32>
    %cst_282 = arith.constant dense<0.000000e+00> : vector<16x16xf32>
    %740 = tpu.matmul %738, %739, %cst_282 {dimension_numbers = #tpu.dot_dimension_numbers<[1], [1], [0], [0], [0, 0, 1, 0], [], []>} : vector<16x8xf32>, vector<16x8xf32>, vector<16x16xf32> -> vector<16x16xf32>
    %741 = arith.addf %740, %387 : vector<16x16xf32>
    %cst_283 = arith.constant dense<0xFF800000> : vector<16xf32>
    %742 = vector.multi_reduction <maximumf>, %741, %cst_283 [1] : vector<16x16xf32> to vector<16xf32>
    %743 = vector.shape_cast %742 : vector<16xf32> to vector<16x1xf32>
    %744 = vector.broadcast %743 : vector<16x1xf32> to vector<16x16xf32>
    %745 = arith.subf %741, %744 : vector<16x16xf32>
    %746 = math.exp %745 : vector<16x16xf32>
    %cst_284 = arith.constant dense<0.000000e+00> : vector<16xf32>
    %747 = vector.multi_reduction <add>, %746, %cst_284 [1] : vector<16x16xf32> to vector<16xf32>
    %748 = vector.shape_cast %747 : vector<16xf32> to vector<16x1xf32>
    %749 = tpu.reciprocal %748 {approx = true} : vector<16x1xf32> -> vector<16x1xf32>
    %750 = vector.broadcast %749 : vector<16x1xf32> to vector<16x16xf32>
    %751 = arith.mulf %746, %750 : vector<16x16xf32>
    %752 = vector.extract_strided_slice %736 {offsets = [0, 0], sizes = [16, 8], strides = [1, 1]} : vector<16x32xf32> to vector<16x8xf32>
    %cst_285 = arith.constant dense<0.000000e+00> : vector<16x8xf32>
    %753 = tpu.matmul %751, %752, %cst_285 {dimension_numbers = #tpu.dot_dimension_numbers<[1], [0], [0], [1], [0, 0, 1, 1], [], []>} : vector<16x16xf32>, vector<16x8xf32>, vector<16x8xf32> -> vector<16x8xf32>
    %754 = vector.extract_strided_slice %734 {offsets = [0, 8], sizes = [16, 8], strides = [1, 1]} : vector<16x32xf32> to vector<16x8xf32>
    %755 = vector.extract_strided_slice %735 {offsets = [0, 8], sizes = [16, 8], strides = [1, 1]} : vector<16x32xf32> to vector<16x8xf32>
    %cst_286 = arith.constant dense<0.000000e+00> : vector<16x16xf32>
    %756 = tpu.matmul %754, %755, %cst_286 {dimension_numbers = #tpu.dot_dimension_numbers<[1], [1], [0], [0], [0, 0, 1, 0], [], []>} : vector<16x8xf32>, vector<16x8xf32>, vector<16x16xf32> -> vector<16x16xf32>
    %757 = arith.addf %756, %393 : vector<16x16xf32>
    %cst_287 = arith.constant dense<0xFF800000> : vector<16xf32>
    %758 = vector.multi_reduction <maximumf>, %757, %cst_287 [1] : vector<16x16xf32> to vector<16xf32>
    %759 = vector.shape_cast %758 : vector<16xf32> to vector<16x1xf32>
    %760 = vector.broadcast %759 : vector<16x1xf32> to vector<16x16xf32>
    %761 = arith.subf %757, %760 : vector<16x16xf32>
    %762 = math.exp %761 : vector<16x16xf32>
    %cst_288 = arith.constant dense<0.000000e+00> : vector<16xf32>
    %763 = vector.multi_reduction <add>, %762, %cst_288 [1] : vector<16x16xf32> to vector<16xf32>
    %764 = vector.shape_cast %763 : vector<16xf32> to vector<16x1xf32>
    %765 = tpu.reciprocal %764 {approx = true} : vector<16x1xf32> -> vector<16x1xf32>
    %766 = vector.broadcast %765 : vector<16x1xf32> to vector<16x16xf32>
    %767 = arith.mulf %762, %766 : vector<16x16xf32>
    %768 = vector.extract_strided_slice %736 {offsets = [0, 8], sizes = [16, 8], strides = [1, 1]} : vector<16x32xf32> to vector<16x8xf32>
    %cst_289 = arith.constant dense<0.000000e+00> : vector<16x8xf32>
    %769 = tpu.matmul %767, %768, %cst_289 {dimension_numbers = #tpu.dot_dimension_numbers<[1], [0], [0], [1], [0, 0, 1, 1], [], []>} : vector<16x16xf32>, vector<16x8xf32>, vector<16x8xf32> -> vector<16x8xf32>
    %770 = vector.extract_strided_slice %734 {offsets = [0, 16], sizes = [16, 8], strides = [1, 1]} : vector<16x32xf32> to vector<16x8xf32>
    %771 = vector.extract_strided_slice %735 {offsets = [0, 16], sizes = [16, 8], strides = [1, 1]} : vector<16x32xf32> to vector<16x8xf32>
    %cst_290 = arith.constant dense<0.000000e+00> : vector<16x16xf32>
    %772 = tpu.matmul %770, %771, %cst_290 {dimension_numbers = #tpu.dot_dimension_numbers<[1], [1], [0], [0], [0, 0, 1, 0], [], []>} : vector<16x8xf32>, vector<16x8xf32>, vector<16x16xf32> -> vector<16x16xf32>
    %773 = arith.addf %772, %399 : vector<16x16xf32>
    %cst_291 = arith.constant dense<0xFF800000> : vector<16xf32>
    %774 = vector.multi_reduction <maximumf>, %773, %cst_291 [1] : vector<16x16xf32> to vector<16xf32>
    %775 = vector.shape_cast %774 : vector<16xf32> to vector<16x1xf32>
    %776 = vector.broadcast %775 : vector<16x1xf32> to vector<16x16xf32>
    %777 = arith.subf %773, %776 : vector<16x16xf32>
    %778 = math.exp %777 : vector<16x16xf32>
    %cst_292 = arith.constant dense<0.000000e+00> : vector<16xf32>
    %779 = vector.multi_reduction <add>, %778, %cst_292 [1] : vector<16x16xf32> to vector<16xf32>
    %780 = vector.shape_cast %779 : vector<16xf32> to vector<16x1xf32>
    %781 = tpu.reciprocal %780 {approx = true} : vector<16x1xf32> -> vector<16x1xf32>
    %782 = vector.broadcast %781 : vector<16x1xf32> to vector<16x16xf32>
    %783 = arith.mulf %778, %782 : vector<16x16xf32>
    %784 = vector.extract_strided_slice %736 {offsets = [0, 16], sizes = [16, 8], strides = [1, 1]} : vector<16x32xf32> to vector<16x8xf32>
    %cst_293 = arith.constant dense<0.000000e+00> : vector<16x8xf32>
    %785 = tpu.matmul %783, %784, %cst_293 {dimension_numbers = #tpu.dot_dimension_numbers<[1], [0], [0], [1], [0, 0, 1, 1], [], []>} : vector<16x16xf32>, vector<16x8xf32>, vector<16x8xf32> -> vector<16x8xf32>
    %786 = vector.extract_strided_slice %734 {offsets = [0, 24], sizes = [16, 8], strides = [1, 1]} : vector<16x32xf32> to vector<16x8xf32>
    %787 = vector.extract_strided_slice %735 {offsets = [0, 24], sizes = [16, 8], strides = [1, 1]} : vector<16x32xf32> to vector<16x8xf32>
    %cst_294 = arith.constant dense<0.000000e+00> : vector<16x16xf32>
    %788 = tpu.matmul %786, %787, %cst_294 {dimension_numbers = #tpu.dot_dimension_numbers<[1], [1], [0], [0], [0, 0, 1, 0], [], []>} : vector<16x8xf32>, vector<16x8xf32>, vector<16x16xf32> -> vector<16x16xf32>
    %789 = arith.addf %788, %405 : vector<16x16xf32>
    %cst_295 = arith.constant dense<0xFF800000> : vector<16xf32>
    %790 = vector.multi_reduction <maximumf>, %789, %cst_295 [1] : vector<16x16xf32> to vector<16xf32>
    %791 = vector.shape_cast %790 : vector<16xf32> to vector<16x1xf32>
    %792 = vector.broadcast %791 : vector<16x1xf32> to vector<16x16xf32>
    %793 = arith.subf %789, %792 : vector<16x16xf32>
    %794 = math.exp %793 : vector<16x16xf32>
    %cst_296 = arith.constant dense<0.000000e+00> : vector<16xf32>
    %795 = vector.multi_reduction <add>, %794, %cst_296 [1] : vector<16x16xf32> to vector<16xf32>
    %796 = vector.shape_cast %795 : vector<16xf32> to vector<16x1xf32>
    %797 = tpu.reciprocal %796 {approx = true} : vector<16x1xf32> -> vector<16x1xf32>
    %798 = vector.broadcast %797 : vector<16x1xf32> to vector<16x16xf32>
    %799 = arith.mulf %794, %798 : vector<16x16xf32>
    %800 = vector.extract_strided_slice %736 {offsets = [0, 24], sizes = [16, 8], strides = [1, 1]} : vector<16x32xf32> to vector<16x8xf32>
    %cst_297 = arith.constant dense<0.000000e+00> : vector<16x8xf32>
    %801 = tpu.matmul %799, %800, %cst_297 {dimension_numbers = #tpu.dot_dimension_numbers<[1], [0], [0], [1], [0, 0, 1, 1], [], []>} : vector<16x16xf32>, vector<16x8xf32>, vector<16x8xf32> -> vector<16x8xf32>
    %802 = tpu.concatenate %753, %769, %785, %801 in 1 : vector<16x8xf32>, vector<16x8xf32>, vector<16x8xf32>, vector<16x8xf32> -> vector<16x32xf32>
    %cst_298 = arith.constant dense<0.000000e+00> : vector<16x32xf32>
    %803 = tpu.matmul %802, %737, %cst_298 {dimension_numbers = #tpu.dot_dimension_numbers<[1], [0], [0], [1], [0, 0, 1, 1], [], []>} : vector<16x32xf32>, vector<32x32xf32>, vector<16x32xf32> -> vector<16x32xf32>
    %804 = tpu.concatenate %733, %803 in 0 : vector<16x32xf32>, vector<16x32xf32> -> vector<32x32xf32>
    %c0_299 = arith.constant 0 : index
    %c0_300 = arith.constant 0 : index
    %805 = vector.load %arg48[%c0_299, %c0_300] : memref<1x32xf32, #tpu.memory_space<vmem>>, vector<1x32xf32>
    %806 = vector.broadcast %805 : vector<1x32xf32> to vector<32x32xf32>
    %807 = arith.addf %804, %806 : vector<32x32xf32>
    %808 = arith.addf %631, %807 : vector<32x32xf32>
    %c0_301 = arith.constant 0 : index
    %c0_302 = arith.constant 0 : index
    %809 = vector.load %arg49[%c0_301, %c0_302] : memref<1x32xf32, #tpu.memory_space<vmem>>, vector<1x32xf32>
    %c0_303 = arith.constant 0 : index
    %c0_304 = arith.constant 0 : index
    %810 = vector.load %arg50[%c0_303, %c0_304] : memref<1x32xf32, #tpu.memory_space<vmem>>, vector<1x32xf32>
    %cst_305 = arith.constant dense<0.000000e+00> : vector<32xf32>
    %811 = vector.multi_reduction <add>, %808, %cst_305 [1] : vector<32x32xf32> to vector<32xf32>
    %812 = vector.shape_cast %811 : vector<32xf32> to vector<32x1xf32>
    %cst_306 = arith.constant 3.200000e+01 : f32
    %813 = vector.broadcast %cst_306 : f32 to vector<32x1xf32>
    %814 = arith.divf %812, %813 : vector<32x1xf32>
    %815 = vector.broadcast %814 : vector<32x1xf32> to vector<32x32xf32>
    %816 = arith.subf %808, %815 : vector<32x32xf32>
    %817 = arith.mulf %816, %816 : vector<32x32xf32>
    %cst_307 = arith.constant dense<0.000000e+00> : vector<32xf32>
    %818 = vector.multi_reduction <add>, %817, %cst_307 [1] : vector<32x32xf32> to vector<32xf32>
    %819 = vector.shape_cast %818 : vector<32xf32> to vector<32x1xf32>
    %cst_308 = arith.constant 3.200000e+01 : f32
    %820 = vector.broadcast %cst_308 : f32 to vector<32x1xf32>
    %821 = arith.divf %819, %820 : vector<32x1xf32>
    %822 = vector.broadcast %814 : vector<32x1xf32> to vector<32x32xf32>
    %823 = arith.subf %808, %822 : vector<32x32xf32>
    %cst_309 = arith.constant 9.99999974E-6 : f32
    %824 = vector.broadcast %cst_309 : f32 to vector<32x1xf32>
    %825 = arith.addf %821, %824 : vector<32x1xf32>
    %826 = math.rsqrt %825 : vector<32x1xf32>
    %827 = vector.broadcast %826 : vector<32x1xf32> to vector<32x32xf32>
    %828 = arith.mulf %823, %827 : vector<32x32xf32>
    %829 = vector.broadcast %809 : vector<1x32xf32> to vector<32x32xf32>
    %830 = arith.mulf %828, %829 : vector<32x32xf32>
    %831 = vector.broadcast %810 : vector<1x32xf32> to vector<32x32xf32>
    %832 = arith.addf %830, %831 : vector<32x32xf32>
    %c0_310 = arith.constant 0 : index
    %c0_311 = arith.constant 0 : index
    %833 = vector.load %arg51[%c0_310, %c0_311] : memref<32x128xf32, #tpu.memory_space<vmem>>, vector<32x128xf32>
    %cst_312 = arith.constant dense<0.000000e+00> : vector<32x128xf32>
    %834 = tpu.matmul %832, %833, %cst_312 {dimension_numbers = #tpu.dot_dimension_numbers<[1], [0], [0], [1], [0, 0, 1, 1], [], []>} : vector<32x32xf32>, vector<32x128xf32>, vector<32x128xf32> -> vector<32x128xf32>
    %c0_313 = arith.constant 0 : index
    %c0_314 = arith.constant 0 : index
    %835 = vector.load %arg52[%c0_313, %c0_314] : memref<1x128xf32, #tpu.memory_space<vmem>>, vector<1x128xf32>
    %836 = vector.broadcast %835 : vector<1x128xf32> to vector<32x128xf32>
    %837 = arith.addf %834, %836 : vector<32x128xf32>
    %cst_315 = arith.constant 5.000000e-01 : f32
    %838 = vector.broadcast %cst_315 : f32 to vector<32x128xf32>
    %839 = arith.mulf %838, %837 : vector<32x128xf32>
    %cst_316 = arith.constant 0.797884583 : f32
    %840 = vector.broadcast %cst_316 : f32 to vector<32x128xf32>
    %841 = arith.mulf %840, %837 : vector<32x128xf32>
    %cst_317 = arith.constant 4.471500e-02 : f32
    %842 = vector.broadcast %cst_317 : f32 to vector<32x128xf32>
    %843 = arith.mulf %842, %837 : vector<32x128xf32>
    %844 = arith.mulf %843, %837 : vector<32x128xf32>
    %cst_318 = arith.constant 1.000000e+00 : f32
    %845 = vector.broadcast %cst_318 : f32 to vector<32x128xf32>
    %846 = arith.addf %845, %844 : vector<32x128xf32>
    %847 = arith.mulf %841, %846 : vector<32x128xf32>
    %848 = math.tanh %847 : vector<32x128xf32>
    %cst_319 = arith.constant 1.000000e+00 : f32
    %849 = vector.broadcast %cst_319 : f32 to vector<32x128xf32>
    %850 = arith.addf %849, %848 : vector<32x128xf32>
    %851 = arith.mulf %839, %850 : vector<32x128xf32>
    %c0_320 = arith.constant 0 : index
    %c0_321 = arith.constant 0 : index
    %852 = vector.load %arg53[%c0_320, %c0_321] : memref<128x32xf32, #tpu.memory_space<vmem>>, vector<128x32xf32>
    %cst_322 = arith.constant dense<0.000000e+00> : vector<32x32xf32>
    %853 = tpu.matmul %851, %852, %cst_322 {dimension_numbers = #tpu.dot_dimension_numbers<[1], [0], [0], [1], [0, 0, 1, 1], [], []>} : vector<32x128xf32>, vector<128x32xf32>, vector<32x32xf32> -> vector<32x32xf32>
    %c0_323 = arith.constant 0 : index
    %c0_324 = arith.constant 0 : index
    %854 = vector.load %arg54[%c0_323, %c0_324] : memref<1x32xf32, #tpu.memory_space<vmem>>, vector<1x32xf32>
    %855 = vector.broadcast %854 : vector<1x32xf32> to vector<32x32xf32>
    %856 = arith.addf %853, %855 : vector<32x32xf32>
    %857 = arith.addf %808, %856 : vector<32x32xf32>
    %c0_325 = arith.constant 0 : index
    %c0_326 = arith.constant 0 : index
    %858 = vector.load %arg55[%c0_325, %c0_326] : memref<1x32xf32, #tpu.memory_space<vmem>>, vector<1x32xf32>
    %c0_327 = arith.constant 0 : index
    %c0_328 = arith.constant 0 : index
    %859 = vector.load %arg56[%c0_327, %c0_328] : memref<1x32xf32, #tpu.memory_space<vmem>>, vector<1x32xf32>
    %cst_329 = arith.constant dense<0.000000e+00> : vector<32xf32>
    %860 = vector.multi_reduction <add>, %857, %cst_329 [1] : vector<32x32xf32> to vector<32xf32>
    %861 = vector.shape_cast %860 : vector<32xf32> to vector<32x1xf32>
    %cst_330 = arith.constant 3.200000e+01 : f32
    %862 = vector.broadcast %cst_330 : f32 to vector<32x1xf32>
    %863 = arith.divf %861, %862 : vector<32x1xf32>
    %864 = vector.broadcast %863 : vector<32x1xf32> to vector<32x32xf32>
    %865 = arith.subf %857, %864 : vector<32x32xf32>
    %866 = arith.mulf %865, %865 : vector<32x32xf32>
    %cst_331 = arith.constant dense<0.000000e+00> : vector<32xf32>
    %867 = vector.multi_reduction <add>, %866, %cst_331 [1] : vector<32x32xf32> to vector<32xf32>
    %868 = vector.shape_cast %867 : vector<32xf32> to vector<32x1xf32>
    %cst_332 = arith.constant 3.200000e+01 : f32
    %869 = vector.broadcast %cst_332 : f32 to vector<32x1xf32>
    %870 = arith.divf %868, %869 : vector<32x1xf32>
    %871 = vector.broadcast %863 : vector<32x1xf32> to vector<32x32xf32>
    %872 = arith.subf %857, %871 : vector<32x32xf32>
    %cst_333 = arith.constant 9.99999974E-6 : f32
    %873 = vector.broadcast %cst_333 : f32 to vector<32x1xf32>
    %874 = arith.addf %870, %873 : vector<32x1xf32>
    %875 = math.rsqrt %874 : vector<32x1xf32>
    %876 = vector.broadcast %875 : vector<32x1xf32> to vector<32x32xf32>
    %877 = arith.mulf %872, %876 : vector<32x32xf32>
    %878 = vector.broadcast %858 : vector<1x32xf32> to vector<32x32xf32>
    %879 = arith.mulf %877, %878 : vector<32x32xf32>
    %880 = vector.broadcast %859 : vector<1x32xf32> to vector<32x32xf32>
    %881 = arith.addf %879, %880 : vector<32x32xf32>
    %c0_334 = arith.constant 0 : index
    %c0_335 = arith.constant 0 : index
    %882 = vector.load %arg5[%c0_334, %c0_335] : memref<128x32xf32, #tpu.memory_space<vmem>>, vector<128x32xf32>
    %cst_336 = arith.constant dense<0.000000e+00> : vector<32x128xf32>
    %883 = tpu.matmul %881, %882, %cst_336 {dimension_numbers = #tpu.dot_dimension_numbers<[1], [1], [0], [0], [0, 0, 1, 0], [], []>} : vector<32x32xf32>, vector<128x32xf32>, vector<32x128xf32> -> vector<32x128xf32>
    %c0_337 = arith.constant 0 : index
    %c0_338 = arith.constant 0 : index
    %884 = vector.load %arg57[%c0_337, %c0_338] : memref<32x128xf32, #tpu.memory_space<vmem>>, vector<32x128xf32>
    tpu.vector_store %arg57[%c0_337, %c0_338], %883 {strides = array<i32>} : memref<32x128xf32, #tpu.memory_space<vmem>>, vector<32x128xf32>,
    return
  }
}

</mosaic_0001>

<llo_original>
// kernel: visual_bloom_forward.1
$region0: #{visual_bloom_forward.1}
  #allocation0 [shape = 'u32[]', space=smem, size = 0x4, offset = 0x4, fixed_abs, tag = 'smem constant byte address 0x4 - core index']
  #allocation1 [shape = 'u32[144,128]{1,0:T(1,128)}', space=vmem, size = 0x12000, scoped, tag = 'internal scratch']
  %s0 = inlined_call_operand.smem [shape: u32[58], index: -1, kind: input, shape index: {}]
  %s1 = sld [smem:[%s0]]
  %s2 = scalar_lea.smem %s0, 1
  %s3 = sld [smem:[%s2]]
  %s4 = scalar_lea.smem %s0, 2
  %s5 = sld [smem:[%s4]]
  %s6 = scalar_lea.smem %s0, 3
  %s7 = sld [smem:[%s6]]
  %s8 = scalar_lea.smem %s0, 4
  %s9 = sld [smem:[%s8]]
  %s10 = scalar_lea.smem %s0, 5
  %s11 = sld [smem:[%s10]]
  %s12 = scalar_lea.smem %s0, 6
  %s13 = sld [smem:[%s12]]
  %s14 = scalar_lea.smem %s0, 7
  %s15 = sld [smem:[%s14]]
  %s16 = scalar_lea.smem %s0, 8
  %s17 = sld [smem:[%s16]]
  %s18 = scalar_lea.smem %s0, 9
  %s19 = sld [smem:[%s18]]
  %s20 = scalar_lea.smem %s0, 10
  %s21 = sld [smem:[%s20]]
  %s22 = scalar_lea.smem %s0, 11
  %s23 = sld [smem:[%s22]]
  %s24 = scalar_lea.smem %s0, 12
  %s25 = sld [smem:[%s24]]
  %s26 = scalar_lea.smem %s0, 13
  %s27 = sld [smem:[%s26]]
  %s28 = scalar_lea.smem %s0, 14
  %s29 = sld [smem:[%s28]]
  %s30 = scalar_lea.smem %s0, 15
  %s31 = sld [smem:[%s30]]
  %s32 = scalar_lea.smem %s0, 16
  %s33 = sld [smem:[%s32]]
  %s34 = scalar_lea.smem %s0, 17
  %s35 = sld [smem:[%s34]]
  %s36 = scalar_lea.smem %s0, 18
  %s37 = sld [smem:[%s36]]
  %s38 = scalar_lea.smem %s0, 19
  %s39 = sld [smem:[%s38]]
  %s40 = scalar_lea.smem %s0, 20
  %s41 = sld [smem:[%s40]]
  %s42 = scalar_lea.smem %s0, 21
  %s43 = sld [smem:[%s42]]
  %s44 = scalar_lea.smem %s0, 22
  %s45 = sld [smem:[%s44]]
  %s46 = scalar_lea.smem %s0, 23
  %s47 = sld [smem:[%s46]]
  %s48 = scalar_lea.smem %s0, 24
  %s49 = sld [smem:[%s48]]
  %s50 = scalar_lea.smem %s0, 25
  %s51 = sld [smem:[%s50]]
  %s52 = scalar_lea.smem %s0, 26
  %s53 = sld [smem:[%s52]]
  %s54 = scalar_lea.smem %s0, 27
  %s55 = sld [smem:[%s54]]
  %s56 = scalar_lea.smem %s0, 28
  %s57 = sld [smem:[%s56]]
  %s58 = scalar_lea.smem %s0, 29
  %s59 = sld [smem:[%s58]]
  %s60 = scalar_lea.smem %s0, 30
  %s61 = sld [smem:[%s60]]
  %s62 = scalar_lea.smem %s0, 31
  %s63 = sld [smem:[%s62]]
  %s64 = scalar_lea.smem %s0, 32
  %s65 = sld [smem:[%s64]]
  %s66 = scalar_lea.smem %s0, 33
  %s67 = sld [smem:[%s66]]
  %s68 = scalar_lea.smem %s0, 34
  %s69 = sld [smem:[%s68]]
  %s70 = scalar_lea.smem %s0, 35
  %s71 = sld [smem:[%s70]]
  %s72 = scalar_lea.smem %s0, 36
  %s73 = sld [smem:[%s72]]
  %s74 = scalar_lea.smem %s0, 37
  %s75 = sld [smem:[%s74]]
  %s76 = scalar_lea.smem %s0, 38
  %s77 = sld [smem:[%s76]]
  %s78 = scalar_lea.smem %s0, 39
  %s79 = sld [smem:[%s78]]
  %s80 = scalar_lea.smem %s0, 40
  %s81 = sld [smem:[%s80]]
  %s82 = scalar_lea.smem %s0, 41
  %s83 = sld [smem:[%s82]]
  %s84 = scalar_lea.smem %s0, 42
  %s85 = sld [smem:[%s84]]
  %s86 = scalar_lea.smem %s0, 43
  %s87 = sld [smem:[%s86]]
  %s88 = scalar_lea.smem %s0, 44
  %s89 = sld [smem:[%s88]]
  %s90 = scalar_lea.smem %s0, 45
  %s91 = sld [smem:[%s90]]
  %s92 = scalar_lea.smem %s0, 46
  %s93 = sld [smem:[%s92]]
  %s94 = scalar_lea.smem %s0, 47
  %s95 = sld [smem:[%s94]]
  %s96 = scalar_lea.smem %s0, 48
  %s97 = sld [smem:[%s96]]
  %s98 = scalar_lea.smem %s0, 49
  %s99 = sld [smem:[%s98]]
  %s100 = scalar_lea.smem %s0, 50
  %s101 = sld [smem:[%s100]]
  %s102 = scalar_lea.smem %s0, 51
  %s103 = sld [smem:[%s102]]
  %s104 = scalar_lea.smem %s0, 52
  %s105 = sld [smem:[%s104]]
  %s106 = scalar_lea.smem %s0, 53
  %s107 = sld [smem:[%s106]]
  %s108 = scalar_lea.smem %s0, 54
  %s109 = sld [smem:[%s108]]
  %s110 = scalar_lea.smem %s0, 55
  %s111 = sld [smem:[%s110]]
  %s112 = scalar_lea.smem %s0, 56
  %s113 = sld [smem:[%s112]]
  %s114 = scalar_lea.smem %s0, 57
  %s115 = sld [smem:[%s114]]
  %s116 = sld [smem:[#allocation0]]
  $region298: #{visual_bloom_forward.1} parent=0
    _
  %s118 = ssub.s32 1, %s116
  %s119 = scalar_select 0, %s118, %s116
  $region1: #{visual_bloom_forward.1} parent=0
    #allocation2 [shape = 'u8[512]{0}', space=vmem, size = 0x400, scoped, tag = 'input window, operand 36, single buffered']
    #allocation3 [shape = 's32[1]{0}', space=sflag, size = 0x4, scoped, tag = 'scoped memory for visual_bloom_forward.1']
    #allocation4 [shape = 'u8[512]{0}', space=vmem, size = 0x400, scoped, tag = 'input window, operand 37, single buffered']
    #allocation5 [shape = 's32[1]{0}', space=sflag, size = 0x4, scoped, tag = 'scoped memory for visual_bloom_forward.1']
    #allocation6 [shape = 'u8[512]{0}', space=vmem, size = 0x400, scoped, tag = 'input window, operand 38, single buffered']
    #allocation7 [shape = 'u8[512]{0}', space=vmem, size = 0x400, scoped, tag = 'input window, operand 40, single buffered']
    #allocation8 [shape = 's32[1]{0}', space=sflag, size = 0x4, scoped, tag = 'scoped memory for visual_bloom_forward.1']
    #allocation9 [shape = 'u8[512]{0}', space=vmem, size = 0x400, scoped, tag = 'input window, operand 42, single buffered']
    #allocation10 [shape = 'u8[512]{0}', space=vmem, size = 0x400, scoped, tag = 'input window, operand 43, single buffered']
    #allocation11 [shape = 's32[1]{0}', space=sflag, size = 0x4, scoped, tag = 'scoped memory for visual_bloom_forward.1']
    #allocation12 [shape = 'u8[512]{0}', space=vmem, size = 0x400, scoped, tag = 'input window, operand 44, single buffered']
    #allocation13 [shape = 'u8[512]{0}', space=vmem, size = 0x400, scoped, tag = 'input window, operand 46, single buffered']
    #allocation14 [shape = 's32[1]{0}', space=sflag, size = 0x4, scoped, tag = 'scoped memory for visual_bloom_forward.1']
    #allocation15 [shape = 'u8[512]{0}', space=vmem, size = 0x400, scoped, tag = 'input window, operand 48, single buffered']
    #allocation16 [shape = 'u8[512]{0}', space=vmem, size = 0x400, scoped, tag = 'input window, operand 49, single buffered']
    #allocation17 [shape = 's32[1]{0}', space=sflag, size = 0x4, scoped, tag = 'scoped memory for visual_bloom_forward.1']
    #allocation18 [shape = 'u8[512]{0}', space=vmem, size = 0x400, scoped, tag = 'input window, operand 50, single buffered']
    #allocation19 [shape = 'u8[512]{0}', space=vmem, size = 0x400, scoped, tag = 'input window, operand 52, single buffered']
    #allocation20 [shape = 's32[1]{0}', space=sflag, size = 0x4, scoped, tag = 'scoped memory for visual_bloom_forward.1']
    #allocation21 [shape = 'u8[512]{0}', space=vmem, size = 0x400, scoped, tag = 'input window, operand 54, single buffered']
    #allocation22 [shape = 'u8[512]{0}', space=vmem, size = 0x400, scoped, tag = 'input window, operand 55, single buffered']
    #allocation23 [shape = 's32[1]{0}', space=sflag, size = 0x4, scoped, tag = 'scoped memory for visual_bloom_forward.1']
    #allocation24 [shape = 'u8[512]{0}', space=vmem, size = 0x400, scoped, tag = 'input window, operand 56, single buffered']
    %120 = vsyncpa [#allocation3], 0
    %121 = vsyncpa [#allocation5], 0
    %122 = vsyncpa [#allocation8], 0
    %123 = vsyncpa [#allocation11], 0
    %124 = vsyncpa [#allocation14], 0
    %125 = vsyncpa [#allocation17], 0
    %126 = vsyncpa [#allocation20], 0
    %127 = vsyncpa [#allocation23], 0
    // Predicated region
    $region2: #{visual_bloom_forward.1} parent=1 // pred_check
      _
    $region3: #{visual_bloom_forward.1} parent=1 // pred_check_branch
      %129 = sbr.rel (0) target = $region5
    $region4: #{visual_bloom_forward.1} parent=1 // pred_region
      _
    $region5: #{visual_bloom_forward.1} parent=1 // pred_fallthru
      _
    // Predicated region
    $region6: #{visual_bloom_forward.1} parent=1 // pred_check
      _
    $region7: #{visual_bloom_forward.1} parent=1 // pred_check_branch
      %131 = sbr.rel (0) target = $region9
    $region8: #{visual_bloom_forward.1} parent=1 // pred_region
      _
    $region9: #{visual_bloom_forward.1} parent=1 // pred_fallthru
      _
    // Predicated region
    $region10: #{visual_bloom_forward.1} parent=1 // pred_check
      _
    $region11: #{visual_bloom_forward.1} parent=1 // pred_check_branch
      %133 = sbr.rel (0) target = $region13
    $region12: #{visual_bloom_forward.1} parent=1 // pred_region
      _
    $region13: #{visual_bloom_forward.1} parent=1 // pred_fallthru
      _
    // Predicated region
    $region14: #{visual_bloom_forward.1} parent=1 // pred_check
      _
    $region15: #{visual_bloom_forward.1} parent=1 // pred_check_branch
      %135 = sbr.rel (0) target = $region17
    $region16: #{visual_bloom_forward.1} parent=1 // pred_region
      _
    $region17: #{visual_bloom_forward.1} parent=1 // pred_fallthru
      _
    // Predicated region
    $region18: #{visual_bloom_forward.1} parent=1 // pred_check
      _
    $region19: #{visual_bloom_forward.1} parent=1 // pred_check_branch
      %137 = sbr.rel (0) target = $region21
    $region20: #{visual_bloom_forward.1} parent=1 // pred_region
      _
    $region21: #{visual_bloom_forward.1} parent=1 // pred_fallthru
      _
    // Predicated region
    $region22: #{visual_bloom_forward.1} parent=1 // pred_check
      _
    $region23: #{visual_bloom_forward.1} parent=1 // pred_check_branch
      %139 = sbr.rel (0) target = $region25
    $region24: #{visual_bloom_forward.1} parent=1 // pred_region
      _
    $region25: #{visual_bloom_forward.1} parent=1 // pred_fallthru
      _
    // Predicated region
    $region26: #{visual_bloom_forward.1} parent=1 // pred_check
      _
    $region27: #{visual_bloom_forward.1} parent=1 // pred_check_branch
      %141 = sbr.rel (0) target = $region29
    $region28: #{visual_bloom_forward.1} parent=1 // pred_region
      _
    $region29: #{visual_bloom_forward.1} parent=1 // pred_fallthru
      _
    // Predicated region
    $region30: #{visual_bloom_forward.1} parent=1 // pred_check
      _
    $region31: #{visual_bloom_forward.1} parent=1 // pred_check_branch
      %143 = sbr.rel (0) target = $region33
    $region32: #{visual_bloom_forward.1} parent=1 // pred_region
      _
    $region33: #{visual_bloom_forward.1} parent=1 // pred_fallthru
      _
    // Predicated region
    $region34: #{visual_bloom_forward.1} parent=1 // pred_check
      _
    $region35: #{visual_bloom_forward.1} parent=1 // pred_check_branch
      %145 = sbr.rel (0) target = $region37
    $region36: #{visual_bloom_forward.1} parent=1 // pred_region
      _
    $region37: #{visual_bloom_forward.1} parent=1 // pred_fallthru
      _
    // Predicated region
    $region38: #{visual_bloom_forward.1} parent=1 // pred_check
      _
    $region39: #{visual_bloom_forward.1} parent=1 // pred_check_branch
      %147 = sbr.rel (0) target = $region41
    $region40: #{visual_bloom_forward.1} parent=1 // pred_region
      _
    $region41: #{visual_bloom_forward.1} parent=1 // pred_fallthru
      _
    // Predicated region
    $region42: #{visual_bloom_forward.1} parent=1 // pred_check
      _
    $region43: #{visual_bloom_forward.1} parent=1 // pred_check_branch
      %149 = sbr.rel (0) target = $region45
    $region44: #{visual_bloom_forward.1} parent=1 // pred_region
      _
    $region45: #{visual_bloom_forward.1} parent=1 // pred_fallthru
      _
    // Predicated region
    $region46: #{visual_bloom_forward.1} parent=1 // pred_check
      _
    $region47: #{visual_bloom_forward.1} parent=1 // pred_check_branch
      %151 = sbr.rel (0) target = $region49
    $region48: #{visual_bloom_forward.1} parent=1 // pred_region
      _
    $region49: #{visual_bloom_forward.1} parent=1 // pred_fallthru
      _
    // Predicated region
    $region50: #{visual_bloom_forward.1} parent=1 // pred_check
      _
    $region51: #{visual_bloom_forward.1} parent=1 // pred_check_branch
      %153 = sbr.rel (0) target = $region53
    $region52: #{visual_bloom_forward.1} parent=1 // pred_region
      _
    $region53: #{visual_bloom_forward.1} parent=1 // pred_fallthru
      _
    // Predicated region
    $region54: #{visual_bloom_forward.1} parent=1 // pred_check
      _
    $region55: #{visual_bloom_forward.1} parent=1 // pred_check_branch
      %155 = sbr.rel (0) target = $region57
    $region56: #{visual_bloom_forward.1} parent=1 // pred_region
      _
    $region57: #{visual_bloom_forward.1} parent=1 // pred_fallthru
      _
    // Predicated region
    $region58: #{visual_bloom_forward.1} parent=1 // pred_check
      _
    $region59: #{visual_bloom_forward.1} parent=1 // pred_check_branch
      %157 = sbr.rel (0) target = $region61
    $region60: #{visual_bloom_forward.1} parent=1 // pred_region
      _
    $region61: #{visual_bloom_forward.1} parent=1 // pred_fallthru
      _
    // Predicated region
    $region62: #{visual_bloom_forward.1} parent=1 // pred_check
      _
    $region63: #{visual_bloom_forward.1} parent=1 // pred_check_branch
      %159 = sbr.rel (0) target = $region65
    $region64: #{visual_bloom_forward.1} parent=1 // pred_region
      _
    $region65: #{visual_bloom_forward.1} parent=1 // pred_fallthru
      _
    // Predicated region
    $region66: #{visual_bloom_forward.1} parent=1 // pred_check
      _
    $region67: #{visual_bloom_forward.1} parent=1 // pred_check_branch
      %161 = sbr.rel (0) target = $region69
    $region68: #{visual_bloom_forward.1} parent=1 // pred_region
      _
    $region69: #{visual_bloom_forward.1} parent=1 // pred_fallthru
      _
    // Predicated region
    $region70: #{visual_bloom_forward.1} parent=1 // pred_check
      _
    $region71: #{visual_bloom_forward.1} parent=1 // pred_check_branch
      %163 = sbr.rel (0) target = $region73
    $region72: #{visual_bloom_forward.1} parent=1 // pred_region
      _
    $region73: #{visual_bloom_forward.1} parent=1 // pred_fallthru
      _
    // Predicated region
    $region74: #{visual_bloom_forward.1} parent=1 // pred_check
      _
    $region75: #{visual_bloom_forward.1} parent=1 // pred_check_branch
      %165 = sbr.rel (0) target = $region77
    $region76: #{visual_bloom_forward.1} parent=1 // pred_region
      _
    $region77: #{visual_bloom_forward.1} parent=1 // pred_fallthru
      _
    // Predicated region
    $region78: #{visual_bloom_forward.1} parent=1 // pred_check
      _
    $region79: #{visual_bloom_forward.1} parent=1 // pred_check_branch
      %167 = sbr.rel (0) target = $region81
    $region80: #{visual_bloom_forward.1} parent=1 // pred_region
      _
    $region81: #{visual_bloom_forward.1} parent=1 // pred_fallthru
      _
    // Predicated region
    $region82: #{visual_bloom_forward.1} parent=1 // pred_check
      _
    $region83: #{visual_bloom_forward.1} parent=1 // pred_check_branch
      %169 = sbr.rel (0) target = $region85
    $region84: #{visual_bloom_forward.1} parent=1 // pred_region
      _
    $region85: #{visual_bloom_forward.1} parent=1 // pred_fallthru
      _
    // Predicated region
    $region86: #{visual_bloom_forward.1} parent=1 // pred_check
      _
    $region87: #{visual_bloom_forward.1} parent=1 // pred_check_branch
      %171 = sbr.rel (0) target = $region89
    $region88: #{visual_bloom_forward.1} parent=1 // pred_region
      _
    $region89: #{visual_bloom_forward.1} parent=1 // pred_fallthru
      _
    // Predicated region
    $region90: #{visual_bloom_forward.1} parent=1 // pred_check
      _
    $region91: #{visual_bloom_forward.1} parent=1 // pred_check_branch
      %173 = sbr.rel (0) target = $region93
    $region92: #{visual_bloom_forward.1} parent=1 // pred_region
      _
    $region93: #{visual_bloom_forward.1} parent=1 // pred_fallthru
      _
    // Predicated region
    $region94: #{visual_bloom_forward.1} parent=1 // pred_check
      _
    $region95: #{visual_bloom_forward.1} parent=1 // pred_check_branch
      %175 = sbr.rel (0) target = $region97
    $region96: #{visual_bloom_forward.1} parent=1 // pred_region
      _
    $region97: #{visual_bloom_forward.1} parent=1 // pred_fallthru
      _
    // Predicated region
    $region98: #{visual_bloom_forward.1} parent=1 // pred_check
      _
    $region99: #{visual_bloom_forward.1} parent=1 // pred_check_branch
      %177 = sbr.rel (0) target = $region101
    $region100: #{visual_bloom_forward.1} parent=1 // pred_region
      _
    $region101: #{visual_bloom_forward.1} parent=1 // pred_fallthru
      _
    // Predicated region
    $region102: #{visual_bloom_forward.1} parent=1 // pred_check
      _
    $region103: #{visual_bloom_forward.1} parent=1 // pred_check_branch
      %179 = sbr.rel (0) target = $region105
    $region104: #{visual_bloom_forward.1} parent=1 // pred_region
      _
    $region105: #{visual_bloom_forward.1} parent=1 // pred_fallthru
      _
    // Predicated region
    $region106: #{visual_bloom_forward.1} parent=1 // pred_check
      _
    $region107: #{visual_bloom_forward.1} parent=1 // pred_check_branch
      %181 = sbr.rel (0) target = $region109
    $region108: #{visual_bloom_forward.1} parent=1 // pred_region
      _
    $region109: #{visual_bloom_forward.1} parent=1 // pred_fallthru
      _
    // Predicated region
    $region110: #{visual_bloom_forward.1} parent=1 // pred_check
      _
    $region111: #{visual_bloom_forward.1} parent=1 // pred_check_branch
      %183 = sbr.rel (0) target = $region113
    $region112: #{visual_bloom_forward.1} parent=1 // pred_region
      _
    $region113: #{visual_bloom_forward.1} parent=1 // pred_fallthru
      _
    // Predicated region
    $region114: #{visual_bloom_forward.1} parent=1 // pred_check
      _
    $region115: #{visual_bloom_forward.1} parent=1 // pred_check_branch
      %185 = sbr.rel (0) target = $region117
    $region116: #{visual_bloom_forward.1} parent=1 // pred_region
      _
    $region117: #{visual_bloom_forward.1} parent=1 // pred_fallthru
      _
    // Predicated region
    $region118: #{visual_bloom_forward.1} parent=1 // pred_check
      _
    $region119: #{visual_bloom_forward.1} parent=1 // pred_check_branch
      %187 = sbr.rel (0) target = $region121
    $region120: #{visual_bloom_forward.1} parent=1 // pred_region
      _
    $region121: #{visual_bloom_forward.1} parent=1 // pred_fallthru
      _
    // Predicated region
    $region122: #{visual_bloom_forward.1} parent=1 // pred_check
      _
    $region123: #{visual_bloom_forward.1} parent=1 // pred_check_branch
      %189 = sbr.rel (0) target = $region125
    $region124: #{visual_bloom_forward.1} parent=1 // pred_region
      _
    $region125: #{visual_bloom_forward.1} parent=1 // pred_fallthru
      _
    // Predicated region
    $region126: #{visual_bloom_forward.1} parent=1 // pred_check
      _
    $region127: #{visual_bloom_forward.1} parent=1 // pred_check_branch
      %191 = sbr.rel (0) target = $region129
    $region128: #{visual_bloom_forward.1} parent=1 // pred_region
      _
    $region129: #{visual_bloom_forward.1} parent=1 // pred_fallthru
      _
    // Predicated region
    $region130: #{visual_bloom_forward.1} parent=1 // pred_check
      _
    $region131: #{visual_bloom_forward.1} parent=1 // pred_check_branch
      %193 = sbr.rel (0) target = $region133
    $region132: #{visual_bloom_forward.1} parent=1 // pred_region
      _
    $region133: #{visual_bloom_forward.1} parent=1 // pred_fallthru
      _
    // Predicated region
    $region134: #{visual_bloom_forward.1} parent=1 // pred_check
      _
    $region135: #{visual_bloom_forward.1} parent=1 // pred_check_branch
      %195 = sbr.rel (0) target = $region137
    $region136: #{visual_bloom_forward.1} parent=1 // pred_region
      _
    $region137: #{visual_bloom_forward.1} parent=1 // pred_fallthru
      _
    // Predicated region
    $region138: #{visual_bloom_forward.1} parent=1 // pred_check
      _
    $region139: #{visual_bloom_forward.1} parent=1 // pred_check_branch
      %197 = sbr.rel (0) target = $region141
    $region140: #{visual_bloom_forward.1} parent=1 // pred_region
      _
    $region141: #{visual_bloom_forward.1} parent=1 // pred_fallthru
      _
    // Predicated region
    $region142: #{visual_bloom_forward.1} parent=1 // pred_check
      _
    $region143: #{visual_bloom_forward.1} parent=1 // pred_check_branch
      %199 = sbr.rel (0) target = $region145
    $region144: #{visual_bloom_forward.1} parent=1 // pred_region
      _
    $region145: #{visual_bloom_forward.1} parent=1 // pred_fallthru
      _
    // Predicated region
    $region146: #{visual_bloom_forward.1} parent=1 // pred_check
      _
    $region147: #{visual_bloom_forward.1} parent=1 // pred_check_branch
      %201 = sbr.rel (0) target = $region149
    $region148: #{visual_bloom_forward.1} parent=1 // pred_region
      %s203 = ssub.s32 16, 16
      %204 = vsyncadd [#allocation3], %s203
      %s206 = sshll.u32 [#allocation2], 4
      %s207 = int_to_ptr.vmem [resolvable:$true] %s206
      %209 = dma.hbm_to_vmem [thread:$0]  %s73, 16, %s207, [#allocation3]
    $region149: #{visual_bloom_forward.1} parent=1 // pred_fallthru
      _
    // Predicated region
    $region150: #{visual_bloom_forward.1} parent=1 // pred_check
      _
    $region151: #{visual_bloom_forward.1} parent=1 // pred_check_branch
      %211 = sbr.rel (0) target = $region153
    $region152: #{visual_bloom_forward.1} parent=1 // pred_region
      %s213 = ssub.s32 16, 16
      %214 = vsyncadd [#allocation5], %s213
      %s216 = sshll.u32 [#allocation4], 4
      %s217 = int_to_ptr.vmem [resolvable:$true] %s216
      %219 = dma.hbm_to_vmem [thread:$0]  %s75, 16, %s217, [#allocation5]
    $region153: #{visual_bloom_forward.1} parent=1 // pred_fallthru
      _
    // Predicated region
    $region154: #{visual_bloom_forward.1} parent=1 // pred_check
      _
    $region155: #{visual_bloom_forward.1} parent=1 // pred_check_branch
      %221 = sbr.rel (0) target = $region157
    $region156: #{visual_bloom_forward.1} parent=1 // pred_region
      %s223 = ssub.s32 16, 16
      %224 = vsyncadd [#allocation5], %s223
      %s226 = sshll.u32 [#allocation6], 4
      %s227 = int_to_ptr.vmem [resolvable:$true] %s226
      %229 = dma.hbm_to_vmem [thread:$0]  %s77, 16, %s227, [#allocation5]
    $region157: #{visual_bloom_forward.1} parent=1 // pred_fallthru
      _
    // Predicated region
    $region158: #{visual_bloom_forward.1} parent=1 // pred_check
      _
    $region159: #{visual_bloom_forward.1} parent=1 // pred_check_branch
      %231 = sbr.rel (0) target = $region161
    $region160: #{visual_bloom_forward.1} parent=1 // pred_region
      _
    $region161: #{visual_bloom_forward.1} parent=1 // pred_fallthru
      _
    // Predicated region
    $region162: #{visual_bloom_forward.1} parent=1 // pred_check
      _
    $region163: #{visual_bloom_forward.1} parent=1 // pred_check_branch
      %233 = sbr.rel (0) target = $region165
    $region164: #{visual_bloom_forward.1} parent=1 // pred_region
      %s235 = ssub.s32 16, 16
      %236 = vsyncadd [#allocation8], %s235
      %s238 = sshll.u32 [#allocation7], 4
      %s239 = int_to_ptr.vmem [resolvable:$true] %s238
      %241 = dma.hbm_to_vmem [thread:$0]  %s81, 16, %s239, [#allocation8]
    $region165: #{visual_bloom_forward.1} parent=1 // pred_fallthru
      _
    // Predicated region
    $region166: #{visual_bloom_forward.1} parent=1 // pred_check
      _
    $region167: #{visual_bloom_forward.1} parent=1 // pred_check_branch
      %243 = sbr.rel (0) target = $region169
    $region168: #{visual_bloom_forward.1} parent=1 // pred_region
      _
    $region169: #{visual_bloom_forward.1} parent=1 // pred_fallthru
      _
    // Predicated region
    $region170: #{visual_bloom_forward.1} parent=1 // pred_check
      _
    $region171: #{visual_bloom_forward.1} parent=1 // pred_check_branch
      %245 = sbr.rel (0) target = $region173
    $region172: #{visual_bloom_forward.1} parent=1 // pred_region
      %s247 = ssub.s32 16, 16
      %248 = vsyncadd [#allocation8], %s247
      %s250 = sshll.u32 [#allocation9], 4
      %s251 = int_to_ptr.vmem [resolvable:$true] %s250
      %253 = dma.hbm_to_vmem [thread:$0]  %s85, 16, %s251, [#allocation8]
    $region173: #{visual_bloom_forward.1} parent=1 // pred_fallthru
      _
    // Predicated region
    $region174: #{visual_bloom_forward.1} parent=1 // pred_check
      _
    $region175: #{visual_bloom_forward.1} parent=1 // pred_check_branch
      %255 = sbr.rel (0) target = $region177
    $region176: #{visual_bloom_forward.1} parent=1 // pred_region
      %s257 = ssub.s32 16, 16
      %258 = vsyncadd [#allocation11], %s257
      %s260 = sshll.u32 [#allocation10], 4
      %s261 = int_to_ptr.vmem [resolvable:$true] %s260
      %263 = dma.hbm_to_vmem [thread:$0]  %s87, 16, %s261, [#allocation11]
    $region177: #{visual_bloom_forward.1} parent=1 // pred_fallthru
      _
    // Predicated region
    $region178: #{visual_bloom_forward.1} parent=1 // pred_check
      _
    $region179: #{visual_bloom_forward.1} parent=1 // pred_check_branch
      %265 = sbr.rel (0) target = $region181
    $region180: #{visual_bloom_forward.1} parent=1 // pred_region
      %s267 = ssub.s32 16, 16
      %268 = vsyncadd [#allocation11], %s267
      %s270 = sshll.u32 [#allocation12], 4
      %s271 = int_to_ptr.vmem [resolvable:$true] %s270
      %273 = dma.hbm_to_vmem [thread:$0]  %s89, 16, %s271, [#allocation11]
    $region181: #{visual_bloom_forward.1} parent=1 // pred_fallthru
      _
    // Predicated region
    $region182: #{visual_bloom_forward.1} parent=1 // pred_check
      _
    $region183: #{visual_bloom_forward.1} parent=1 // pred_check_branch
      %275 = sbr.rel (0) target = $region185
    $region184: #{visual_bloom_forward.1} parent=1 // pred_region
      _
    $region185: #{visual_bloom_forward.1} parent=1 // pred_fallthru
      _
    // Predicated region
    $region186: #{visual_bloom_forward.1} parent=1 // pred_check
      _
    $region187: #{visual_bloom_forward.1} parent=1 // pred_check_branch
      %277 = sbr.rel (0) target = $region189
    $region188: #{visual_bloom_forward.1} parent=1 // pred_region
      %s279 = ssub.s32 16, 16
      %280 = vsyncadd [#allocation14], %s279
      %s282 = sshll.u32 [#allocation13], 4
      %s283 = int_to_ptr.vmem [resolvable:$true] %s282
      %285 = dma.hbm_to_vmem [thread:$0]  %s93, 16, %s283, [#allocation14]
    $region189: #{visual_bloom_forward.1} parent=1 // pred_fallthru
      _
    // Predicated region
    $region190: #{visual_bloom_forward.1} parent=1 // pred_check
      _
    $region191: #{visual_bloom_forward.1} parent=1 // pred_check_branch
      %287 = sbr.rel (0) target = $region193
    $region192: #{visual_bloom_forward.1} parent=1 // pred_region
      _
    $region193: #{visual_bloom_forward.1} parent=1 // pred_fallthru
      _
    // Predicated region
    $region194: #{visual_bloom_forward.1} parent=1 // pred_check
      _
    $region195: #{visual_bloom_forward.1} parent=1 // pred_check_branch
      %289 = sbr.rel (0) target = $region197
    $region196: #{visual_bloom_forward.1} parent=1 // pred_region
      %s291 = ssub.s32 16, 16
      %292 = vsyncadd [#allocation14], %s291
      %s294 = sshll.u32 [#allocation15], 4
      %s295 = int_to_ptr.vmem [resolvable:$true] %s294
      %297 = dma.hbm_to_vmem [thread:$0]  %s97, 16, %s295, [#allocation14]
    $region197: #{visual_bloom_forward.1} parent=1 // pred_fallthru
      _
    // Predicated region
    $region198: #{visual_bloom_forward.1} parent=1 // pred_check
      _
    $region199: #{visual_bloom_forward.1} parent=1 // pred_check_branch
      %299 = sbr.rel (0) target = $region201
    $region200: #{visual_bloom_forward.1} parent=1 // pred_region
      %s301 = ssub.s32 16, 16
      %302 = vsyncadd [#allocation17], %s301
      %s304 = sshll.u32 [#allocation16], 4
      %s305 = int_to_ptr.vmem [resolvable:$true] %s304
      %307 = dma.hbm_to_vmem [thread:$0]  %s99, 16, %s305, [#allocation17]
    $region201: #{visual_bloom_forward.1} parent=1 // pred_fallthru
      _
    // Predicated region
    $region202: #{visual_bloom_forward.1} parent=1 // pred_check
      _
    $region203: #{visual_bloom_forward.1} parent=1 // pred_check_branch
      %309 = sbr.rel (0) target = $region205
    $region204: #{visual_bloom_forward.1} parent=1 // pred_region
      %s311 = ssub.s32 16, 16
      %312 = vsyncadd [#allocation17], %s311
      %s314 = sshll.u32 [#allocation18], 4
      %s315 = int_to_ptr.vmem [resolvable:$true] %s314
      %317 = dma.hbm_to_vmem [thread:$0]  %s101, 16, %s315, [#allocation17]
    $region205: #{visual_bloom_forward.1} parent=1 // pred_fallthru
      _
    // Predicated region
    $region206: #{visual_bloom_forward.1} parent=1 // pred_check
      _
    $region207: #{visual_bloom_forward.1} parent=1 // pred_check_branch
      %319 = sbr.rel (0) target = $region209
    $region208: #{visual_bloom_forward.1} parent=1 // pred_region
      _
    $region209: #{visual_bloom_forward.1} parent=1 // pred_fallthru
      _
    // Predicated region
    $region210: #{visual_bloom_forward.1} parent=1 // pred_check
      _
    $region211: #{visual_bloom_forward.1} parent=1 // pred_check_branch
      %321 = sbr.rel (0) target = $region213
    $region212: #{visual_bloom_forward.1} parent=1 // pred_region
      %s323 = ssub.s32 16, 16
      %324 = vsyncadd [#allocation20], %s323
      %s326 = sshll.u32 [#allocation19], 4
      %s327 = int_to_ptr.vmem [resolvable:$true] %s326
      %329 = dma.hbm_to_vmem [thread:$0]  %s105, 16, %s327, [#allocation20]
    $region213: #{visual_bloom_forward.1} parent=1 // pred_fallthru
      _
    // Predicated region
    $region214: #{visual_bloom_forward.1} parent=1 // pred_check
      _
    $region215: #{visual_bloom_forward.1} parent=1 // pred_check_branch
      %331 = sbr.rel (0) target = $region217
    $region216: #{visual_bloom_forward.1} parent=1 // pred_region
      _
    $region217: #{visual_bloom_forward.1} parent=1 // pred_fallthru
      _
    // Predicated region
    $region218: #{visual_bloom_forward.1} parent=1 // pred_check
      _
    $region219: #{visual_bloom_forward.1} parent=1 // pred_check_branch
      %333 = sbr.rel (0) target = $region221
    $region220: #{visual_bloom_forward.1} parent=1 // pred_region
      %s335 = ssub.s32 16, 16
      %336 = vsyncadd [#allocation20], %s335
      %s338 = sshll.u32 [#allocation21], 4
      %s339 = int_to_ptr.vmem [resolvable:$true] %s338
      %341 = dma.hbm_to_vmem [thread:$0]  %s109, 16, %s339, [#allocation20]
    $region221: #{visual_bloom_forward.1} parent=1 // pred_fallthru
      _
    // Predicated region
    $region222: #{visual_bloom_forward.1} parent=1 // pred_check
      _
    $region223: #{visual_bloom_forward.1} parent=1 // pred_check_branch
      %343 = sbr.rel (0) target = $region225
    $region224: #{visual_bloom_forward.1} parent=1 // pred_region
      %s345 = ssub.s32 16, 16
      %346 = vsyncadd [#allocation23], %s345
      %s348 = sshll.u32 [#allocation22], 4
      %s349 = int_to_ptr.vmem [resolvable:$true] %s348
      %351 = dma.hbm_to_vmem [thread:$0]  %s111, 16, %s349, [#allocation23]
    $region225: #{visual_bloom_forward.1} parent=1 // pred_fallthru
      _
    // Predicated region
    $region226: #{visual_bloom_forward.1} parent=1 // pred_check
      _
    $region227: #{visual_bloom_forward.1} parent=1 // pred_check_branch
      %353 = sbr.rel (0) target = $region229
    $region228: #{visual_bloom_forward.1} parent=1 // pred_region
      %s355 = ssub.s32 16, 16
      %356 = vsyncadd [#allocation23], %s355
      %s358 = sshll.u32 [#allocation24], 4
      %s359 = int_to_ptr.vmem [resolvable:$true] %s358
      %361 = dma.hbm_to_vmem [thread:$0]  %s113, 16, %s359, [#allocation23]
    $region229: #{visual_bloom_forward.1} parent=1 // pred_fallthru
      _
    // Predicated region
    $region230: #{visual_bloom_forward.1} parent=1 // pred_check
      _
    $region231: #{visual_bloom_forward.1} parent=1 // pred_check_branch
      %363 = sbr.rel (0) target = $region233
    $region232: #{visual_bloom_forward.1} parent=1 // pred_region
      %364 = dma.done [#allocation3], 16
    $region233: #{visual_bloom_forward.1} parent=1 // pred_fallthru
      _
    // Predicated region
    $region234: #{visual_bloom_forward.1} parent=1 // pred_check
      _
    $region235: #{visual_bloom_forward.1} parent=1 // pred_check_branch
      %366 = sbr.rel (0) target = $region237
    $region236: #{visual_bloom_forward.1} parent=1 // pred_region
      %367 = dma.done [#allocation5], 16
    $region237: #{visual_bloom_forward.1} parent=1 // pred_fallthru
      _
    // Predicated region
    $region238: #{visual_bloom_forward.1} parent=1 // pred_check
      _
    $region239: #{visual_bloom_forward.1} parent=1 // pred_check_branch
      %369 = sbr.rel (0) target = $region241
    $region240: #{visual_bloom_forward.1} parent=1 // pred_region
      %370 = dma.done [#allocation5], 16
    $region241: #{visual_bloom_forward.1} parent=1 // pred_fallthru
      _
    // Predicated region
    $region242: #{visual_bloom_forward.1} parent=1 // pred_check
      _
    $region243: #{visual_bloom_forward.1} parent=1 // pred_check_branch
      %372 = sbr.rel (0) target = $region245
    $region244: #{visual_bloom_forward.1} parent=1 // pred_region
      %373 = dma.done [#allocation8], 16
    $region245: #{visual_bloom_forward.1} parent=1 // pred_fallthru
      _
    // Predicated region
    $region246: #{visual_bloom_forward.1} parent=1 // pred_check
      _
    $region247: #{visual_bloom_forward.1} parent=1 // pred_check_branch
      %375 = sbr.rel (0) target = $region249
    $region248: #{visual_bloom_forward.1} parent=1 // pred_region
      %376 = dma.done [#allocation8], 16
    $region249: #{visual_bloom_forward.1} parent=1 // pred_fallthru
      _
    // Predicated region
    $region250: #{visual_bloom_forward.1} parent=1 // pred_check
      _
    $region251: #{visual_bloom_forward.1} parent=1 // pred_check_branch
      %378 = sbr.rel (0) target = $region253
    $region252: #{visual_bloom_forward.1} parent=1 // pred_region
      %379 = dma.done [#allocation11], 16
    $region253: #{visual_bloom_forward.1} parent=1 // pred_fallthru
      _
    // Predicated region
    $region254: #{visual_bloom_forward.1} parent=1 // pred_check
      _
    $region255: #{visual_bloom_forward.1} parent=1 // pred_check_branch
      %381 = sbr.rel (0) target = $region257
    $region256: #{visual_bloom_forward.1} parent=1 // pred_region
      %382 = dma.done [#allocation11], 16
    $region257: #{visual_bloom_forward.1} parent=1 // pred_fallthru
      _
    // Predicated region
    $region258: #{visual_bloom_forward.1} parent=1 // pred_check
      _
    $region259: #{visual_bloom_forward.1} parent=1 // pred_check_branch
      %384 = sbr.rel (0) target = $region261
    $region260: #{visual_bloom_forward.1} parent=1 // pred_region
      %385 = dma.done [#allocation14], 16
    $region261: #{visual_bloom_forward.1} parent=1 // pred_fallthru
      _
    // Predicated region
    $region262: #{visual_bloom_forward.1} parent=1 // pred_check
      _
    $region263: #{visual_bloom_forward.1} parent=1 // pred_check_branch
      %387 = sbr.rel (0) target = $region265
    $region264: #{visual_bloom_forward.1} parent=1 // pred_region
      %388 = dma.done [#allocation14], 16
    $region265: #{visual_bloom_forward.1} parent=1 // pred_fallthru
      _
    // Predicated region
    $region266: #{visual_bloom_forward.1} parent=1 // pred_check
      _
    $region267: #{visual_bloom_forward.1} parent=1 // pred_check_branch
      %390 = sbr.rel (0) target = $region269
    $region268: #{visual_bloom_forward.1} parent=1 // pred_region
      %391 = dma.done [#allocation17], 16
    $region269: #{visual_bloom_forward.1} parent=1 // pred_fallthru
      _
    // Predicated region
    $region270: #{visual_bloom_forward.1} parent=1 // pred_check
      _
    $region271: #{visual_bloom_forward.1} parent=1 // pred_check_branch
      %393 = sbr.rel (0) target = $region273
    $region272: #{visual_bloom_forward.1} parent=1 // pred_region
      %394 = dma.done [#allocation17], 16
    $region273: #{visual_bloom_forward.1} parent=1 // pred_fallthru
      _
    // Predicated region
    $region274: #{visual_bloom_forward.1} parent=1 // pred_check
      _
    $region275: #{visual_bloom_forward.1} parent=1 // pred_check_branch
      %396 = sbr.rel (0) target = $region277
    $region276: #{visual_bloom_forward.1} parent=1 // pred_region
      %397 = dma.done [#allocation20], 16
    $region277: #{visual_bloom_forward.1} parent=1 // pred_fallthru
      _
    // Predicated region
    $region278: #{visual_bloom_forward.1} parent=1 // pred_check
      _
    $region279: #{visual_bloom_forward.1} parent=1 // pred_check_branch
      %399 = sbr.rel (0) target = $region281
    $region280: #{visual_bloom_forward.1} parent=1 // pred_region
      %400 = dma.done [#allocation20], 16
    $region281: #{visual_bloom_forward.1} parent=1 // pred_fallthru
      _
    // Predicated region
    $region282: #{visual_bloom_forward.1} parent=1 // pred_check
      _
    $region283: #{visual_bloom_forward.1} parent=1 // pred_check_branch
      %402 = sbr.rel (0) target = $region285
    $region284: #{visual_bloom_forward.1} parent=1 // pred_region
      %403 = dma.done [#allocation23], 16
    $region285: #{visual_bloom_forward.1} parent=1 // pred_fallthru
      _
    // Predicated region
    $region286: #{visual_bloom_forward.1} parent=1 // pred_check
      _
    $region287: #{visual_bloom_forward.1} parent=1 // pred_check_branch
      %405 = sbr.rel (0) target = $region289
    $region288: #{visual_bloom_forward.1} parent=1 // pred_region
      %406 = dma.done [#allocation23], 16
    $region289: #{visual_bloom_forward.1} parent=1 // pred_fallthru
      _
    %v407 = vld [vmem:[%s3] sm:$0xff]
    %v408 = vld [vmem:[%s3 + $0x8] sm:$0xff]
    %v409 = vld [vmem:[%s3 + $0x10] sm:$0xff]
    %v410 = vld [vmem:[%s3 + $0x18] sm:$0xff]
    %v411 = vlaneseq
    %v412 = vand.u32 %v411, 127
    %413 = vset.pattern.permute.xlu0 0
    %414 = vperm.xlu0 %413, %v407
    %v415 = vpop.permute.xlu0 %414
    %416 = vset.pattern.permute.xlu0 0
    %417 = vperm.xlu0 %416, %v408
    %v418 = vpop.permute.xlu0 %417
    %419 = vset.pattern.permute.xlu0 0
    %420 = vperm.xlu0 %419, %v409
    %v421 = vpop.permute.xlu0 %420
    %422 = vset.pattern.permute.xlu0 0
    %423 = vperm.xlu0 %422, %v410
    %v424 = vpop.permute.xlu0 %423
    %vm425 = vcmp.eq.s32.totalorder %v415, %v412
    %vm426 = vcmp.eq.s32.totalorder %v418, %v412
    %vm427 = vcmp.eq.s32.totalorder %v421, %v412
    %vm428 = vcmp.eq.s32.totalorder %v424, %v412
    %v429 = vsel %vm425, 1, 0
    %v430 = vsel %vm426, 1, 0
    %v431 = vsel %vm427, 1, 0
    %v432 = vsel %vm428, 1, 0
    %v433 = vcvt.s32.f32 %v429
    %v434 = vcvt.s32.f32 %v430
    %v435 = vcvt.s32.f32 %v431
    %v436 = vcvt.s32.f32 %v432
    %v437 = vld [vmem:[%s11] sm:$0xff]
    %v438 = vld [vmem:[%s11 + $0x8] sm:$0xff]
    %v439 = vld [vmem:[%s11 + $0x10] sm:$0xff]
    %v440 = vld [vmem:[%s11 + $0x18] sm:$0xff]
    %v441 = vld [vmem:[%s11 + $0x20] sm:$0xff]
    %v442 = vld [vmem:[%s11 + $0x28] sm:$0xff]
    %v443 = vld [vmem:[%s11 + $0x30] sm:$0xff]
    %v444 = vld [vmem:[%s11 + $0x38] sm:$0xff]
    %v445 = vld [vmem:[%s11 + $0x40] sm:$0xff]
    %v446 = vld [vmem:[%s11 + $0x48] sm:$0xff]
    %v447 = vld [vmem:[%s11 + $0x50] sm:$0xff]
    %v448 = vld [vmem:[%s11 + $0x58] sm:$0xff]
    %v449 = vld [vmem:[%s11 + $0x60] sm:$0xff]
    %v450 = vld [vmem:[%s11 + $0x68] sm:$0xff]
    %v451 = vld [vmem:[%s11 + $0x70] sm:$0xff]
    %v452 = vld [vmem:[%s11 + $0x78] sm:$0xff]
    %453 = vmatprep.subr.mxu0 0.0
    %454 = vmatpush1.msra.mxu0 %v437
    %455 = vmatprep.subr.mxu0 0.0
    %456 = vmatpush1.msra.mxu0 %v438
    %457 = vmatprep.subr.mxu0 0.0
    %458 = vmatpush1.msra.mxu0 %v439
    %459 = vmatprep.subr.mxu0 0.0
    %460 = vmatpush1.msra.mxu0 %v440
    %461 = vmatprep.subr.mxu0 0.0
    %462 = vmatpush1.msra.mxu0 %v441
    %463 = vmatprep.subr.mxu0 0.0
    %464 = vmatpush1.msra.mxu0 %v442
    %465 = vmatprep.subr.mxu0 0.0
    %466 = vmatpush1.msra.mxu0 %v443
    %467 = vmatprep.subr.mxu0 0.0
    %468 = vmatpush1.msra.mxu0 %v444
    %469 = vmatprep.subr.mxu0 0.0
    %470 = vmatpush1.msra.mxu0 %v445
    %471 = vmatprep.subr.mxu0 0.0
    %472 = vmatpush1.msra.mxu0 %v446
    %473 = vmatprep.subr.mxu0 0.0
    %474 = vmatpush1.msra.mxu0 %v447
    %475 = vmatprep.subr.mxu0 0.0
    %476 = vmatpush1.msra.mxu0 %v448
    %477 = vmatprep.subr.mxu0 0.0
    %478 = vmatpush1.msra.mxu0 %v449
    %479 = vmatprep.subr.mxu0 0.0
    %480 = vmatpush1.msra.mxu0 %v450
    %481 = vmatprep.subr.mxu0 0.0
    %482 = vmatpush1.msra.mxu0 %v451
    %483 = vmatprep.subr.mxu0 0.0
    %484 = vmatpush1.msra.mxu0 %v452
    %485 = vmatprep.subr.mxu0 0.0
    %486 = vmatpush1.msra.mxu0 0.0
    %487 = vmatprep.subr.mxu0 0.0
    %488 = vmatpush1.msra.mxu0 0.0
    %489 = vmatprep.subr.mxu0 0.0
    %490 = vmatpush1.msra.mxu0 0.0
    %491 = vmatprep.subr.mxu0 0.0
    %492 = vmatpush1.msra.mxu0 0.0
    %493 = vmatprep.subr.mxu0 0.0
    %494 = vmatpush1.msra.mxu0 0.0
    %495 = vmatprep.subr.mxu0 0.0
    %496 = vmatpush1.msra.mxu0 0.0
    %497 = vmatprep.subr.mxu0 0.0
    %498 = vmatpush1.msra.mxu0 0.0
    %499 = vmatprep.subr.mxu0 0.0
    %500 = vmatpush1.msra.mxu0 0.0
    %501 = vmatprep.subr.mxu0 0.0
    %502 = vmatpush1.msra.mxu0 0.0
    %503 = vmatprep.subr.mxu0 0.0
    %504 = vmatpush1.msra.mxu0 0.0
    %505 = vmatprep.subr.mxu0 0.0
    %506 = vmatpush1.msra.mxu0 0.0
    %507 = vmatprep.subr.mxu0 0.0
    %508 = vmatpush1.msra.mxu0 0.0
    %509 = vmatprep.subr.mxu0 0.0
    %510 = vmatpush1.msra.mxu0 0.0
    %511 = vmatprep.subr.mxu0 0.0
    %512 = vmatpush1.msra.mxu0 0.0
    %513 = vmatprep.subr.mxu0 0.0
    %514 = vmatpush1.msra.mxu0 0.0
    %515 = vmatprep.subr.mxu0 0.0
    %516 = vmatpush1.msra.mxu0 0.0
    %517 = vmatprep.mubr.f32.mxu0 0.0
    %518 = vmatmul.mubr.f32.gmra.mrb[0].mxu0 %v433
    %v519 = vpop.f32.mrb[0].mxu0
    %v520 = vadd.f32 0.0, %v519
    %v521 = vpop.f32.mrb[0].mxu0
    %522 = vmatprep.mubr.f32.mxu0 0.0
    %523 = vmatmul.mubr.f32.gmra.mrb[0].mxu0 %v434
    %v524 = vpop.f32.mrb[0].mxu0
    %v525 = vadd.f32 0.0, %v524
    %v526 = vpop.f32.mrb[0].mxu0
    %527 = vmatprep.mubr.f32.mxu0 0.0
    %528 = vmatmul.mubr.f32.gmra.mrb[0].mxu0 %v435
    %v529 = vpop.f32.mrb[0].mxu0
    %v530 = vadd.f32 0.0, %v529
    %v531 = vpop.f32.mrb[0].mxu0
    %532 = vmatprep.mubr.f32.mxu0 0.0
    %533 = vmatmul.mubr.f32.gmra.mrb[0].mxu0 %v436
    %v534 = vpop.f32.mrb[0].mxu0
    %v535 = vadd.f32 0.0, %v534
    %v536 = vpop.f32.mrb[0].mxu0
    %537 = vdwg.mxu0
    %v538 = vld [vmem:[%s13] sm:$0x1]
    %v539 = vld [vmem:[%s15] sm:$0x1]
    %vm540 = vcmask 261120
    %v541 = vsel %vm540, %v520, 0.0
    %542 = vadd.xlane.f32.xlu0 %v541
    %v543 = vpop.xlane.xlu0 %542
    %v544 = vsel %vm540, %v525, 0.0
    %545 = vadd.xlane.f32.xlu0 %v544
    %v546 = vpop.xlane.xlu0 %545
    %v547 = vsel %vm540, %v530, 0.0
    %548 = vadd.xlane.f32.xlu0 %v547
    %v549 = vpop.xlane.xlu0 %548
    %v550 = vsel %vm540, %v535, 0.0
    %551 = vadd.xlane.f32.xlu0 %v550
    %v552 = vpop.xlane.xlu0 %551
    %v553 = vrcp.pop 32.0
    %v554 = vmul.f32 %v543, %v553
    %v555 = vmul.f32 %v546, %v553
    %v556 = vmul.f32 %v549, %v553
    %v557 = vmul.f32 %v552, %v553
    %v558 = vsub.f32 %v520, %v554
    %v559 = vsub.f32 %v525, %v555
    %v560 = vsub.f32 %v530, %v556
    %v561 = vsub.f32 %v535, %v557
    %v562 = vmul.f32 %v558, %v558
    %v563 = vmul.f32 %v559, %v559
    %v564 = vmul.f32 %v560, %v560
    %v565 = vmul.f32 %v561, %v561
    %v566 = vsel %vm540, %v562, 0.0
    %567 = vadd.xlane.f32.xlu0 %v566
    %v568 = vpop.xlane.xlu0 %567
    %v569 = vsel %vm540, %v563, 0.0
    %570 = vadd.xlane.f32.xlu0 %v569
    %v571 = vpop.xlane.xlu0 %570
    %v572 = vsel %vm540, %v564, 0.0
    %573 = vadd.xlane.f32.xlu0 %v572
    %v574 = vpop.xlane.xlu0 %573
    %v575 = vsel %vm540, %v565, 0.0
    %576 = vadd.xlane.f32.xlu0 %v575
    %v577 = vpop.xlane.xlu0 %576
    %v578 = vmul.f32 %v568, %v553
    %v579 = vmul.f32 %v571, %v553
    %v580 = vmul.f32 %v574, %v553
    %v581 = vmul.f32 %v577, %v553
    %v582 = vadd.f32 %v578, 1e-05
    %v583 = vadd.f32 %v579, 1e-05
    %v584 = vadd.f32 %v580, 1e-05
    %v585 = vadd.f32 %v581, 1e-05
    %v586 = vrsqrt.pop %v582
    %v587 = vrsqrt.pop %v583
    %v588 = vrsqrt.pop %v584
    %v589 = vrsqrt.pop %v585
    %v590 = vmul.f32 %v558, %v586
    %v591 = vmul.f32 %v559, %v587
    %v592 = vmul.f32 %v560, %v588
    %v593 = vmul.f32 %v561, %v589
    %v595 = vlaneseq
    %v596 = vshrl.u32 %v595, 7
    %v597 = vsub.s32 0, %v596
    %v598 = vrot.slane %v538, %v597
    %v600 = vmul.f32 %v590, %v598
    %v601 = vmul.f32 %v591, %v598
    %v602 = vmul.f32 %v592, %v598
    %v603 = vmul.f32 %v593, %v598
    %v605 = vlaneseq
    %v606 = vshrl.u32 %v605, 7
    %v607 = vsub.s32 0, %v606
    %v608 = vrot.slane %v539, %v607
    %v610 = vadd.f32 %v600, %v608
    %v611 = vadd.f32 %v601, %v608
    %v612 = vadd.f32 %v602, %v608
    %v613 = vadd.f32 %v603, %v608
    %v614 = vld [vmem:[%s1] sm:$0xff]
    %v615 = vld [vmem:[%s1 + $0x8] sm:$0xff]
    %v616 = vld [vmem:[%s1 + $0x10] sm:$0xff]
    %v617 = vld [vmem:[%s1 + $0x18] sm:$0xff]
    %v618 = vld [vmem:[%s21] sm:$0xff]
    %v619 = vld [vmem:[%s21 + $0x8] sm:$0xff]
    %v620 = vld [vmem:[%s21 + $0x10] sm:$0xff]
    %v621 = vld [vmem:[%s21 + $0x18] sm:$0xff]
    %v622 = vld [vmem:[%s21 + $0x20] sm:$0xff]
    %v623 = vld [vmem:[%s23] sm:$0x1]
    %v625 = vlaneseq
    %v626 = vshrl.u32 %v625, 7
    %v627 = vsub.s32 0, %v626
    %v628 = vrot.slane %v623, %v627
    %vm630 = vcmask 326656
    %v632 = vsel %vm630, %v614, 0
    %v635 = vsel %vm630, %v615, 0
    %v638 = vsel %vm630, %v616, 0
    %v641 = vsel %vm630, %v617, 0
    %643 = vmatprep.subr.mxu0 0.0
    %644 = vmatpush1.msra.mxu0 %v618
    %645 = vmatprep.subr.mxu0 0.0
    %646 = vmatpush1.msra.mxu0 %v619
    %647 = vmatprep.subr.mxu0 0.0
    %648 = vmatpush1.msra.mxu0 %v620
    %649 = vmatprep.subr.mxu0 0.0
    %650 = vmatpush1.msra.mxu0 %v621
    %651 = vmatprep.subr.mxu0 0.0
    %652 = vmatpush1.msra.mxu0 %v622
    %653 = vmatprep.subr.mxu0 0.0
    %654 = vmatpush1.msra.mxu0 0.0
    %655 = vmatprep.subr.mxu0 0.0
    %656 = vmatpush1.msra.mxu0 0.0
    %657 = vmatprep.subr.mxu0 0.0
    %658 = vmatpush1.msra.mxu0 0.0
    %659 = vmatprep.subr.mxu0 0.0
    %660 = vmatpush1.msra.mxu0 0.0
    %661 = vmatprep.subr.mxu0 0.0
    %662 = vmatpush1.msra.mxu0 0.0
    %663 = vmatprep.subr.mxu0 0.0
    %664 = vmatpush1.msra.mxu0 0.0
    %665 = vmatprep.subr.mxu0 0.0
    %666 = vmatpush1.msra.mxu0 0.0
    %667 = vmatprep.subr.mxu0 0.0
    %668 = vmatpush1.msra.mxu0 0.0
    %669 = vmatprep.subr.mxu0 0.0
    %670 = vmatpush1.msra.mxu0 0.0
    %671 = vmatprep.subr.mxu0 0.0
    %672 = vmatpush1.msra.mxu0 0.0
    %673 = vmatprep.subr.mxu0 0.0
    %674 = vmatpush1.msra.mxu0 0.0
    %675 = vmatprep.subr.mxu0 0.0
    %676 = vmatpush1.msra.mxu0 0.0
    %677 = vmatprep.subr.mxu0 0.0
    %678 = vmatpush1.msra.mxu0 0.0
    %679 = vmatprep.subr.mxu0 0.0
    %680 = vmatpush1.msra.mxu0 0.0
    %681 = vmatprep.subr.mxu0 0.0
    %682 = vmatpush1.msra.mxu0 0.0
    %683 = vmatprep.subr.mxu0 0.0
    %684 = vmatpush1.msra.mxu0 0.0
    %685 = vmatprep.subr.mxu0 0.0
    %686 = vmatpush1.msra.mxu0 0.0
    %687 = vmatprep.subr.mxu0 0.0
    %688 = vmatpush1.msra.mxu0 0.0
    %689 = vmatprep.subr.mxu0 0.0
    %690 = vmatpush1.msra.mxu0 0.0
    %691 = vmatprep.subr.mxu0 0.0
    %692 = vmatpush1.msra.mxu0 0.0
    %693 = vmatprep.subr.mxu0 0.0
    %694 = vmatpush1.msra.mxu0 0.0
    %695 = vmatprep.subr.mxu0 0.0
    %696 = vmatpush1.msra.mxu0 0.0
    %697 = vmatprep.subr.mxu0 0.0
    %698 = vmatpush1.msra.mxu0 0.0
    %699 = vmatprep.subr.mxu0 0.0
    %700 = vmatpush1.msra.mxu0 0.0
    %701 = vmatprep.subr.mxu0 0.0
    %702 = vmatpush1.msra.mxu0 0.0
    %703 = vmatprep.subr.mxu0 0.0
    %704 = vmatpush1.msra.mxu0 0.0
    %705 = vmatprep.subr.mxu0 0.0
    %706 = vmatpush1.msra.mxu0 0.0
    %707 = vmatprep.mubr.f32.mxu0 0.0
    %708 = vmatmul.mubr.f32.gmra.mrb[0].mxu0 %v632
    %v709 = vpop.f32.mrb[0].mxu0
    %v710 = vadd.f32 %v628, %v709
    %v711 = vpop.f32.mrb[0].mxu0
    %712 = vmatprep.mubr.f32.mxu0 0.0
    %713 = vmatmul.mubr.f32.gmra.mrb[0].mxu0 %v635
    %v714 = vpop.f32.mrb[0].mxu0
    %v715 = vadd.f32 %v628, %v714
    %v716 = vpop.f32.mrb[0].mxu0
    %717 = vmatprep.mubr.f32.mxu0 0.0
    %718 = vmatmul.mubr.f32.gmra.mrb[0].mxu0 %v638
    %v719 = vpop.f32.mrb[0].mxu0
    %v720 = vadd.f32 %v628, %v719
    %v721 = vpop.f32.mrb[0].mxu0
    %722 = vmatprep.mubr.f32.mxu0 0.0
    %723 = vmatmul.mubr.f32.gmra.mrb[0].mxu0 %v641
    %v724 = vpop.f32.mrb[0].mxu0
    %v725 = vadd.f32 %v628, %v724
    %v726 = vpop.f32.mrb[0].mxu0
    %727 = vdwg.mxu0
    %v728 = vld [vmem:[%s17] sm:$0xff]
    %v729 = vld [vmem:[%s17 + $0x8] sm:$0xff]
    %v730 = vld [vmem:[%s17 + $0x10] sm:$0xff]
    %v731 = vld [vmem:[%s17 + $0x18] sm:$0xff]
    %v732 = vld [vmem:[%s19] sm:$0x1]
    %v734 = vlaneseq
    %v735 = vshrl.u32 %v734, 7
    %v736 = vsub.s32 0, %v735
    %v737 = vrot.slane %v732, %v736
    %v740 = vsel %vm540, %v610, 0
    %v743 = vsel %vm540, %v611, 0
    %745 = vmatprep.subr.mxu0 0.0
    %746 = vmatpush1.msra.mxu0 %v728
    %747 = vmatprep.subr.mxu0 0.0
    %748 = vmatpush1.msra.mxu0 %v729
    %749 = vmatprep.subr.mxu0 0.0
    %750 = vmatpush1.msra.mxu0 %v730
    %751 = vmatprep.subr.mxu0 0.0
    %752 = vmatpush1.msra.mxu0 %v731
    %753 = vmatprep.subr.mxu0 0.0
    %754 = vmatpush1.msra.mxu0 0.0
    %755 = vmatprep.subr.mxu0 0.0
    %756 = vmatpush1.msra.mxu0 0.0
    %757 = vmatprep.subr.mxu0 0.0
    %758 = vmatpush1.msra.mxu0 0.0
    %759 = vmatprep.subr.mxu0 0.0
    %760 = vmatpush1.msra.mxu0 0.0
    %761 = vmatprep.subr.mxu0 0.0
    %762 = vmatpush1.msra.mxu0 0.0
    %763 = vmatprep.subr.mxu0 0.0
    %764 = vmatpush1.msra.mxu0 0.0
    %765 = vmatprep.subr.mxu0 0.0
    %766 = vmatpush1.msra.mxu0 0.0
    %767 = vmatprep.subr.mxu0 0.0
    %768 = vmatpush1.msra.mxu0 0.0
    %769 = vmatprep.subr.mxu0 0.0
    %770 = vmatpush1.msra.mxu0 0.0
    %771 = vmatprep.subr.mxu0 0.0
    %772 = vmatpush1.msra.mxu0 0.0
    %773 = vmatprep.subr.mxu0 0.0
    %774 = vmatpush1.msra.mxu0 0.0
    %775 = vmatprep.subr.mxu0 0.0
    %776 = vmatpush1.msra.mxu0 0.0
    %777 = vmatprep.subr.mxu0 0.0
    %778 = vmatpush1.msra.mxu0 0.0
    %779 = vmatprep.subr.mxu0 0.0
    %780 = vmatpush1.msra.mxu0 0.0
    %781 = vmatprep.subr.mxu0 0.0
    %782 = vmatpush1.msra.mxu0 0.0
    %783 = vmatprep.subr.mxu0 0.0
    %784 = vmatpush1.msra.mxu0 0.0
    %785 = vmatprep.subr.mxu0 0.0
    %786 = vmatpush1.msra.mxu0 0.0
    %787 = vmatprep.subr.mxu0 0.0
    %788 = vmatpush1.msra.mxu0 0.0
    %789 = vmatprep.subr.mxu0 0.0
    %790 = vmatpush1.msra.mxu0 0.0
    %791 = vmatprep.subr.mxu0 0.0
    %792 = vmatpush1.msra.mxu0 0.0
    %793 = vmatprep.subr.mxu0 0.0
    %794 = vmatpush1.msra.mxu0 0.0
    %795 = vmatprep.subr.mxu0 0.0
    %796 = vmatpush1.msra.mxu0 0.0
    %797 = vmatprep.subr.mxu0 0.0
    %798 = vmatpush1.msra.mxu0 0.0
    %799 = vmatprep.subr.mxu0 0.0
    %800 = vmatpush1.msra.mxu0 0.0
    %801 = vmatprep.subr.mxu0 0.0
    %802 = vmatpush1.msra.mxu0 0.0
    %803 = vmatprep.subr.mxu0 0.0
    %804 = vmatpush1.msra.mxu0 0.0
    %805 = vmatprep.subr.mxu0 0.0
    %806 = vmatpush1.msra.mxu0 0.0
    %807 = vmatprep.subr.mxu0 0.0
    %808 = vmatpush1.msra.mxu0 0.0
    %809 = vmatprep.mubr.f32.mxu0 0.0
    %810 = vmatmul.mubr.f32.gmra.mrb[0].mxu0 %v740
    %v811 = vpop.f32.mrb[0].mxu0
    %v812 = vadd.f32 %v737, %v811
    %v813 = vpop.f32.mrb[0].mxu0
    %814 = vmatprep.mubr.f32.mxu0 0.0
    %815 = vmatmul.mubr.f32.gmra.mrb[0].mxu0 %v743
    %v816 = vpop.f32.mrb[0].mxu0
    %v817 = vadd.f32 %v737, %v816
    %v818 = vpop.f32.mrb[0].mxu0
    %819 = vdwg.mxu0
    %v820 = vld [vmem:[%s31] sm:$0xff]
    %v821 = vld [vmem:[%s31 + $0x8] sm:$0xff]
    %v822 = vld [vmem:[%s31 + $0x10] sm:$0xff]
    %v823 = vld [vmem:[%s33] sm:$0x1]
    %v825 = vlaneseq
    %v826 = vshrl.u32 %v825, 7
    %v827 = vsub.s32 0, %v826
    %v828 = vrot.slane %v823, %v827
    %vm830 = vcmask 195584
    %v832 = vsel %vm830, %v710, 0
    %v835 = vsel %vm830, %v715, 0
    %v838 = vsel %vm830, %v812, 0
    %v841 = vsel %vm830, %v720, 0
    %v844 = vsel %vm830, %v725, 0
    %v847 = vsel %vm830, %v817, 0
    %849 = vmatprep.subr.mxu0 0.0
    %850 = vmatpush1.msra.mxu0 %v820
    %851 = vmatprep.subr.mxu0 0.0
    %852 = vmatpush1.msra.mxu0 %v821
    %853 = vmatprep.subr.mxu0 0.0
    %854 = vmatpush1.msra.mxu0 %v822
    %855 = vmatprep.subr.mxu0 0.0
    %856 = vmatpush1.msra.mxu0 0.0
    %857 = vmatprep.subr.mxu0 0.0
    %858 = vmatpush1.msra.mxu0 0.0
    %859 = vmatprep.subr.mxu0 0.0
    %860 = vmatpush1.msra.mxu0 0.0
    %861 = vmatprep.subr.mxu0 0.0
    %862 = vmatpush1.msra.mxu0 0.0
    %863 = vmatprep.subr.mxu0 0.0
    %864 = vmatpush1.msra.mxu0 0.0
    %865 = vmatprep.subr.mxu0 0.0
    %866 = vmatpush1.msra.mxu0 0.0
    %867 = vmatprep.subr.mxu0 0.0
    %868 = vmatpush1.msra.mxu0 0.0
    %869 = vmatprep.subr.mxu0 0.0
    %870 = vmatpush1.msra.mxu0 0.0
    %871 = vmatprep.subr.mxu0 0.0
    %872 = vmatpush1.msra.mxu0 0.0
    %873 = vmatprep.subr.mxu0 0.0
    %874 = vmatpush1.msra.mxu0 0.0
    %875 = vmatprep.subr.mxu0 0.0
    %876 = vmatpush1.msra.mxu0 0.0
    %877 = vmatprep.subr.mxu0 0.0
    %878 = vmatpush1.msra.mxu0 0.0
    %879 = vmatprep.subr.mxu0 0.0
    %880 = vmatpush1.msra.mxu0 0.0
    %881 = vmatprep.subr.mxu0 0.0
    %882 = vmatpush1.msra.mxu0 0.0
    %883 = vmatprep.subr.mxu0 0.0
    %884 = vmatpush1.msra.mxu0 0.0
    %885 = vmatprep.subr.mxu0 0.0
    %886 = vmatpush1.msra.mxu0 0.0
    %887 = vmatprep.subr.mxu0 0.0
    %888 = vmatpush1.msra.mxu0 0.0
    %889 = vmatprep.subr.mxu0 0.0
    %890 = vmatpush1.msra.mxu0 0.0
    %891 = vmatprep.subr.mxu0 0.0
    %892 = vmatpush1.msra.mxu0 0.0
    %893 = vmatprep.subr.mxu0 0.0
    %894 = vmatpush1.msra.mxu0 0.0
    %895 = vmatprep.subr.mxu0 0.0
    %896 = vmatpush1.msra.mxu0 0.0
    %897 = vmatprep.subr.mxu0 0.0
    %898 = vmatpush1.msra.mxu0 0.0
    %899 = vmatprep.subr.mxu0 0.0
    %900 = vmatpush1.msra.mxu0 0.0
    %901 = vmatprep.subr.mxu0 0.0
    %902 = vmatpush1.msra.mxu0 0.0
    %903 = vmatprep.subr.mxu0 0.0
    %904 = vmatpush1.msra.mxu0 0.0
    %905 = vmatprep.subr.mxu0 0.0
    %906 = vmatpush1.msra.mxu0 0.0
    %907 = vmatprep.subr.mxu0 0.0
    %908 = vmatpush1.msra.mxu0 0.0
    %909 = vmatprep.subr.mxu0 0.0
    %910 = vmatpush1.msra.mxu0 0.0
    %911 = vmatprep.subr.mxu0 0.0
    %912 = vmatpush1.msra.mxu0 0.0
    %913 = vmatprep.mubr.f32.mxu0 0.0
    %914 = vmatmul.mubr.f32.gmra.mrb[0].mxu0 %v832
    %v915 = vpop.f32.mrb[0].mxu0
    %v916 = vadd.f32 %v828, %v915
    %v917 = vpop.f32.mrb[0].mxu0
    %918 = vmatprep.mubr.f32.mxu0 0.0
    %919 = vmatmul.mubr.f32.gmra.mrb[0].mxu0 %v835
    %v920 = vpop.f32.mrb[0].mxu0
    %v921 = vadd.f32 %v828, %v920
    %v922 = vpop.f32.mrb[0].mxu0
    %923 = vmatprep.mubr.f32.mxu0 0.0
    %924 = vmatmul.mubr.f32.gmra.mrb[0].mxu0 %v838
    %v925 = vpop.f32.mrb[0].mxu0
    %v926 = vadd.f32 %v828, %v925
    %v927 = vpop.f32.mrb[0].mxu0
    %928 = vmatprep.mubr.f32.mxu0 0.0
    %929 = vmatmul.mubr.f32.gmra.mrb[0].mxu0 %v841
    %v930 = vpop.f32.mrb[0].mxu0
    %v931 = vadd.f32 %v828, %v930
    %v932 = vpop.f32.mrb[0].mxu0
    %933 = vmatprep.mubr.f32.mxu0 0.0
    %934 = vmatmul.mubr.f32.gmra.mrb[0].mxu0 %v844
    %v935 = vpop.f32.mrb[0].mxu0
    %v936 = vadd.f32 %v828, %v935
    %v937 = vpop.f32.mrb[0].mxu0
    %938 = vmatprep.mubr.f32.mxu0 0.0
    %939 = vmatmul.mubr.f32.gmra.mrb[0].mxu0 %v847
    %v940 = vpop.f32.mrb[0].mxu0
    %v941 = vadd.f32 %v828, %v940
    %v942 = vpop.f32.mrb[0].mxu0
    %943 = vdwg.mxu0
    %v944 = vld [vmem:[%s35] sm:$0xff]
    %v945 = vld [vmem:[%s35 + $0x8] sm:$0xff]
    %v946 = vld [vmem:[%s35 + $0x10] sm:$0xff]
    %v947 = vld [vmem:[%s37] sm:$0x1]
    %v949 = vlaneseq
    %v950 = vshrl.u32 %v949, 7
    %v951 = vsub.s32 0, %v950
    %v952 = vrot.slane %v947, %v951
    %954 = vmatprep.subr.mxu0 0.0
    %955 = vmatpush1.msra.mxu0 %v944
    %956 = vmatprep.subr.mxu0 0.0
    %957 = vmatpush1.msra.mxu0 %v945
    %958 = vmatprep.subr.mxu0 0.0
    %959 = vmatpush1.msra.mxu0 %v946
    %960 = vmatprep.subr.mxu0 0.0
    %961 = vmatpush1.msra.mxu0 0.0
    %962 = vmatprep.subr.mxu0 0.0
    %963 = vmatpush1.msra.mxu0 0.0
    %964 = vmatprep.subr.mxu0 0.0
    %965 = vmatpush1.msra.mxu0 0.0
    %966 = vmatprep.subr.mxu0 0.0
    %967 = vmatpush1.msra.mxu0 0.0
    %968 = vmatprep.subr.mxu0 0.0
    %969 = vmatpush1.msra.mxu0 0.0
    %970 = vmatprep.subr.mxu0 0.0
    %971 = vmatpush1.msra.mxu0 0.0
    %972 = vmatprep.subr.mxu0 0.0
    %973 = vmatpush1.msra.mxu0 0.0
    %974 = vmatprep.subr.mxu0 0.0
    %975 = vmatpush1.msra.mxu0 0.0
    %976 = vmatprep.subr.mxu0 0.0
    %977 = vmatpush1.msra.mxu0 0.0
    %978 = vmatprep.subr.mxu0 0.0
    %979 = vmatpush1.msra.mxu0 0.0
    %980 = vmatprep.subr.mxu0 0.0
    %981 = vmatpush1.msra.mxu0 0.0
    %982 = vmatprep.subr.mxu0 0.0
    %983 = vmatpush1.msra.mxu0 0.0
    %984 = vmatprep.subr.mxu0 0.0
    %985 = vmatpush1.msra.mxu0 0.0
    %986 = vmatprep.subr.mxu0 0.0
    %987 = vmatpush1.msra.mxu0 0.0
    %988 = vmatprep.subr.mxu0 0.0
    %989 = vmatpush1.msra.mxu0 0.0
    %990 = vmatprep.subr.mxu0 0.0
    %991 = vmatpush1.msra.mxu0 0.0
    %992 = vmatprep.subr.mxu0 0.0
    %993 = vmatpush1.msra.mxu0 0.0
    %994 = vmatprep.subr.mxu0 0.0
    %995 = vmatpush1.msra.mxu0 0.0
    %996 = vmatprep.subr.mxu0 0.0
    %997 = vmatpush1.msra.mxu0 0.0
    %998 = vmatprep.subr.mxu0 0.0
    %999 = vmatpush1.msra.mxu0 0.0
    %1000 = vmatprep.subr.mxu0 0.0
    %1001 = vmatpush1.msra.mxu0 0.0
    %1002 = vmatprep.subr.mxu0 0.0
    %1003 = vmatpush1.msra.mxu0 0.0
    %1004 = vmatprep.subr.mxu0 0.0
    %1005 = vmatpush1.msra.mxu0 0.0
    %1006 = vmatprep.subr.mxu0 0.0
    %1007 = vmatpush1.msra.mxu0 0.0
    %1008 = vmatprep.subr.mxu0 0.0
    %1009 = vmatpush1.msra.mxu0 0.0
    %1010 = vmatprep.subr.mxu0 0.0
    %1011 = vmatpush1.msra.mxu0 0.0
    %1012 = vmatprep.subr.mxu0 0.0
    %1013 = vmatpush1.msra.mxu0 0.0
    %1014 = vmatprep.subr.mxu0 0.0
    %1015 = vmatpush1.msra.mxu0 0.0
    %1016 = vmatprep.subr.mxu0 0.0
    %1017 = vmatpush1.msra.mxu0 0.0
    %1018 = vmatprep.mubr.f32.mxu0 0.0
    %1019 = vmatmul.mubr.f32.gmra.mrb[0].mxu0 %v832
    %v1020 = vpop.f32.mrb[0].mxu0
    %v1021 = vadd.f32 %v952, %v1020
    %v1022 = vpop.f32.mrb[0].mxu0
    %1023 = vmatprep.mubr.f32.mxu0 0.0
    %1024 = vmatmul.mubr.f32.gmra.mrb[0].mxu0 %v835
    %v1025 = vpop.f32.mrb[0].mxu0
    %v1026 = vadd.f32 %v952, %v1025
    %v1027 = vpop.f32.mrb[0].mxu0
    %1028 = vmatprep.mubr.f32.mxu0 0.0
    %1029 = vmatmul.mubr.f32.gmra.mrb[0].mxu0 %v838
    %v1030 = vpop.f32.mrb[0].mxu0
    %v1031 = vadd.f32 %v952, %v1030
    %v1032 = vpop.f32.mrb[0].mxu0
    %1033 = vmatprep.mubr.f32.mxu0 0.0
    %1034 = vmatmul.mubr.f32.gmra.mrb[0].mxu0 %v841
    %v1035 = vpop.f32.mrb[0].mxu0
    %v1036 = vadd.f32 %v952, %v1035
    %v1037 = vpop.f32.mrb[0].mxu0
    %1038 = vmatprep.mubr.f32.mxu0 0.0
    %1039 = vmatmul.mubr.f32.gmra.mrb[0].mxu0 %v844
    %v1040 = vpop.f32.mrb[0].mxu0
    %v1041 = vadd.f32 %v952, %v1040
    %v1042 = vpop.f32.mrb[0].mxu0
    %1043 = vmatprep.mubr.f32.mxu0 0.0
    %1044 = vmatmul.mubr.f32.gmra.mrb[0].mxu0 %v847
    %v1045 = vpop.f32.mrb[0].mxu0
    %v1046 = vadd.f32 %v952, %v1045
    %v1047 = vpop.f32.mrb[0].mxu0
    %1048 = vdwg.mxu0
    %v1049 = vld [vmem:[%s25] sm:$0xff]
    %v1050 = vld [vmem:[%s27] sm:$0xff]
    %v1051 = vld [vmem:[%s27 + $0x8] sm:$0xff]
    %v1052 = vld [vmem:[%s27 + $0x10] sm:$0xff]
    %v1053 = vld [vmem:[%s29] sm:$0x1]
    %v1055 = vlaneseq
    %v1056 = vshrl.u32 %v1055, 7
    %v1057 = vsub.s32 0, %v1056
    %v1058 = vrot.slane %v1053, %v1057
    %v1061 = vsel %vm830, %v1049, 0
    %1063 = vmatprep.subr.mxu0 0.0
    %1064 = vmatpush1.msra.mxu0 %v1050
    %1065 = vmatprep.subr.mxu0 0.0
    %1066 = vmatpush1.msra.mxu0 %v1051
    %1067 = vmatprep.subr.mxu0 0.0
    %1068 = vmatpush1.msra.mxu0 %v1052
    %1069 = vmatprep.subr.mxu0 0.0
    %1070 = vmatpush1.msra.mxu0 0.0
    %1071 = vmatprep.subr.mxu0 0.0
    %1072 = vmatpush1.msra.mxu0 0.0
    %1073 = vmatprep.subr.mxu0 0.0
    %1074 = vmatpush1.msra.mxu0 0.0
    %1075 = vmatprep.subr.mxu0 0.0
    %1076 = vmatpush1.msra.mxu0 0.0
    %1077 = vmatprep.subr.mxu0 0.0
    %1078 = vmatpush1.msra.mxu0 0.0
    %1079 = vmatprep.subr.mxu0 0.0
    %1080 = vmatpush1.msra.mxu0 0.0
    %1081 = vmatprep.subr.mxu0 0.0
    %1082 = vmatpush1.msra.mxu0 0.0
    %1083 = vmatprep.subr.mxu0 0.0
    %1084 = vmatpush1.msra.mxu0 0.0
    %1085 = vmatprep.subr.mxu0 0.0
    %1086 = vmatpush1.msra.mxu0 0.0
    %1087 = vmatprep.subr.mxu0 0.0
    %1088 = vmatpush1.msra.mxu0 0.0
    %1089 = vmatprep.subr.mxu0 0.0
    %1090 = vmatpush1.msra.mxu0 0.0
    %1091 = vmatprep.subr.mxu0 0.0
    %1092 = vmatpush1.msra.mxu0 0.0
    %1093 = vmatprep.subr.mxu0 0.0
    %1094 = vmatpush1.msra.mxu0 0.0
    %1095 = vmatprep.subr.mxu0 0.0
    %1096 = vmatpush1.msra.mxu0 0.0
    %1097 = vmatprep.subr.mxu0 0.0
    %1098 = vmatpush1.msra.mxu0 0.0
    %1099 = vmatprep.subr.mxu0 0.0
    %1100 = vmatpush1.msra.mxu0 0.0
    %1101 = vmatprep.subr.mxu0 0.0
    %1102 = vmatpush1.msra.mxu0 0.0
    %1103 = vmatprep.subr.mxu0 0.0
    %1104 = vmatpush1.msra.mxu0 0.0
    %1105 = vmatprep.subr.mxu0 0.0
    %1106 = vmatpush1.msra.mxu0 0.0
    %1107 = vmatprep.subr.mxu0 0.0
    %1108 = vmatpush1.msra.mxu0 0.0
    %1109 = vmatprep.subr.mxu0 0.0
    %1110 = vmatpush1.msra.mxu0 0.0
    %1111 = vmatprep.subr.mxu0 0.0
    %1112 = vmatpush1.msra.mxu0 0.0
    %1113 = vmatprep.subr.mxu0 0.0
    %1114 = vmatpush1.msra.mxu0 0.0
    %1115 = vmatprep.subr.mxu0 0.0
    %1116 = vmatpush1.msra.mxu0 0.0
    %1117 = vmatprep.subr.mxu0 0.0
    %1118 = vmatpush1.msra.mxu0 0.0
    %1119 = vmatprep.subr.mxu0 0.0
    %1120 = vmatpush1.msra.mxu0 0.0
    %1121 = vmatprep.subr.mxu0 0.0
    %1122 = vmatpush1.msra.mxu0 0.0
    %1123 = vmatprep.subr.mxu0 0.0
    %1124 = vmatpush1.msra.mxu0 0.0
    %1125 = vmatprep.subr.mxu0 0.0
    %1126 = vmatpush1.msra.mxu0 0.0
    %1127 = vmatprep.mubr.f32.mxu0 0.0
    %1128 = vmatmul.mubr.f32.gmra.mrb[0].mxu0 %v1061
    %v1129 = vpop.f32.mrb[0].mxu0
    %v1130 = vadd.f32 %v1058, %v1129
    %v1131 = vpop.f32.mrb[0].mxu0
    %1132 = vdwg.mxu0
    %v1133 = vld [vmem:[%s5] sm:$0x1]
    %vm1134 = vcmp.gt.f32.partialorder %v1133, 0.0
    %v1135 = vsel %vm1134, 0.0, -1e+09
    %v1136 = vld [vmem:[%s39] sm:$0xff]
    %v1137 = vld [vmem:[%s39 + $0x8] sm:$0xff]
    %v1138 = vld [vmem:[%s39 + $0x10] sm:$0xff]
    %v1140 = vlaneseq
    %v1141 = vshrl.u32 %v1140, 7
    %v1142 = vsub.s32 0, %v1141
    %v1143 = vrot.slane %v1135, %v1142
    %vm1145 = vcmask 48128
    %v1147 = vsel %vm1145, %v1130, 0
    %v1150 = vsel %vm1145, %v916, 0
    %v1153 = vsel %vm1145, %v921, 0
    %v1156 = vsel %vm1145, %v926, 0
    %1158 = vmatprep.subr.mxu0 0.0
    %1159 = vmatpush1.xpose.msra.mxu0 %v1150
    %1160 = vmatprep.subr.mxu0 0.0
    %1161 = vmatpush1.xpose.msra.mxu0 %v1153
    %1162 = vmatprep.subr.mxu0 0.0
    %1163 = vmatpush1.xpose.msra.mxu0 %v1156
    %1164 = vmatprep.subr.mxu0 0.0
    %1165 = vmatpush1.xpose.msra.mxu0 0.0
    %1166 = vmatprep.subr.mxu0 0.0
    %1167 = vmatpush1.xpose.msra.mxu0 0.0
    %1168 = vmatprep.subr.mxu0 0.0
    %1169 = vmatpush1.xpose.msra.mxu0 0.0
    %1170 = vmatprep.subr.mxu0 0.0
    %1171 = vmatpush1.xpose.msra.mxu0 0.0
    %1172 = vmatprep.subr.mxu0 0.0
    %1173 = vmatpush1.xpose.msra.mxu0 0.0
    %1174 = vmatprep.subr.mxu0 0.0
    %1175 = vmatpush1.xpose.msra.mxu0 0.0
    %1176 = vmatprep.subr.mxu0 0.0
    %1177 = vmatpush1.xpose.msra.mxu0 0.0
    %1178 = vmatprep.subr.mxu0 0.0
    %1179 = vmatpush1.xpose.msra.mxu0 0.0
    %1180 = vmatprep.subr.mxu0 0.0
    %1181 = vmatpush1.xpose.msra.mxu0 0.0
    %1182 = vmatprep.subr.mxu0 0.0
    %1183 = vmatpush1.xpose.msra.mxu0 0.0
    %1184 = vmatprep.subr.mxu0 0.0
    %1185 = vmatpush1.xpose.msra.mxu0 0.0
    %1186 = vmatprep.subr.mxu0 0.0
    %1187 = vmatpush1.xpose.msra.mxu0 0.0
    %1188 = vmatprep.subr.mxu0 0.0
    %1189 = vmatpush1.xpose.msra.mxu0 0.0
    %1190 = vmatprep.subr.mxu0 0.0
    %1191 = vmatpush1.xpose.msra.mxu0 0.0
    %1192 = vmatprep.subr.mxu0 0.0
    %1193 = vmatpush1.xpose.msra.mxu0 0.0
    %1194 = vmatprep.subr.mxu0 0.0
    %1195 = vmatpush1.xpose.msra.mxu0 0.0
    %1196 = vmatprep.subr.mxu0 0.0
    %1197 = vmatpush1.xpose.msra.mxu0 0.0
    %1198 = vmatprep.subr.mxu0 0.0
    %1199 = vmatpush1.xpose.msra.mxu0 0.0
    %1200 = vmatprep.subr.mxu0 0.0
    %1201 = vmatpush1.xpose.msra.mxu0 0.0
    %1202 = vmatprep.subr.mxu0 0.0
    %1203 = vmatpush1.xpose.msra.mxu0 0.0
    %1204 = vmatprep.subr.mxu0 0.0
    %1205 = vmatpush1.xpose.msra.mxu0 0.0
    %1206 = vmatprep.subr.mxu0 0.0
    %1207 = vmatpush1.xpose.msra.mxu0 0.0
    %1208 = vmatprep.subr.mxu0 0.0
    %1209 = vmatpush1.xpose.msra.mxu0 0.0
    %1210 = vmatprep.subr.mxu0 0.0
    %1211 = vmatpush1.xpose.msra.mxu0 0.0
    %1212 = vmatprep.subr.mxu0 0.0
    %1213 = vmatpush1.xpose.msra.mxu0 0.0
    %1214 = vmatprep.subr.mxu0 0.0
    %1215 = vmatpush1.xpose.msra.mxu0 0.0
    %1216 = vmatprep.subr.mxu0 0.0
    %1217 = vmatpush1.xpose.msra.mxu0 0.0
    %1218 = vmatprep.subr.mxu0 0.0
    %1219 = vmatpush1.xpose.msra.mxu0 0.0
    %1220 = vmatprep.subr.mxu0 0.0
    %1221 = vmatpush1.xpose.msra.mxu0 0.0
    %1222 = vmatprep.mubr.f32.mxu0 0.0
    %1223 = vmatmul.mubr.f32.gmra.mrb[0].mxu0 %v1147
    %v1224 = vpop.f32.mrb[0].mxu0
    %v1225 = vadd.f32 %v1143, %v1224
    %v1226 = vpop.f32.mrb[0].mxu0
    %1227 = vdwg.mxu0
    %v1228 = vsel %vm830, %v1225, -inf
    %1229 = vmax.xlane.f32.xlu0 %v1228
    %v1230 = vpop.xlane.xlu0 %1229
    %v1231 = vsub.f32 %v1225, %v1230
    %v1232 = vmul.f32 %v1231, 1.442695
    %v1233 = vpow.pop %v1232
    %v1234 = vsel %vm830, %v1233, 0.0
    %1235 = vadd.xlane.f32.xlu0 %v1234
    %v1236 = vpop.xlane.xlu0 %1235
    %v1237 = vrcp.pop %v1236
    %v1238 = vmul.f32 %v1233, %v1237
    %v1240 = vsel %vm830, %v1238, 0
    %1242 = vmatprep.subr.mxu0 0.0
    %1243 = vmatpush1.msra.mxu0 %v1021
    %1244 = vmatprep.subr.mxu0 0.0
    %1245 = vmatpush1.msra.mxu0 %v1026
    %1246 = vmatprep.subr.mxu0 0.0
    %1247 = vmatpush1.msra.mxu0 %v1031
    %1248 = vmatprep.subr.mxu0 0.0
    %1249 = vmatpush1.msra.mxu0 0.0
    %1250 = vmatprep.subr.mxu0 0.0
    %1251 = vmatpush1.msra.mxu0 0.0
    %1252 = vmatprep.subr.mxu0 0.0
    %1253 = vmatpush1.msra.mxu0 0.0
    %1254 = vmatprep.subr.mxu0 0.0
    %1255 = vmatpush1.msra.mxu0 0.0
    %1256 = vmatprep.subr.mxu0 0.0
    %1257 = vmatpush1.msra.mxu0 0.0
    %1258 = vmatprep.subr.mxu0 0.0
    %1259 = vmatpush1.msra.mxu0 0.0
    %1260 = vmatprep.subr.mxu0 0.0
    %1261 = vmatpush1.msra.mxu0 0.0
    %1262 = vmatprep.subr.mxu0 0.0
    %1263 = vmatpush1.msra.mxu0 0.0
    %1264 = vmatprep.subr.mxu0 0.0
    %1265 = vmatpush1.msra.mxu0 0.0
    %1266 = vmatprep.subr.mxu0 0.0
    %1267 = vmatpush1.msra.mxu0 0.0
    %1268 = vmatprep.subr.mxu0 0.0
    %1269 = vmatpush1.msra.mxu0 0.0
    %1270 = vmatprep.subr.mxu0 0.0
    %1271 = vmatpush1.msra.mxu0 0.0
    %1272 = vmatprep.subr.mxu0 0.0
    %1273 = vmatpush1.msra.mxu0 0.0
    %1274 = vmatprep.subr.mxu0 0.0
    %1275 = vmatpush1.msra.mxu0 0.0
    %1276 = vmatprep.subr.mxu0 0.0
    %1277 = vmatpush1.msra.mxu0 0.0
    %1278 = vmatprep.subr.mxu0 0.0
    %1279 = vmatpush1.msra.mxu0 0.0
    %1280 = vmatprep.subr.mxu0 0.0
    %1281 = vmatpush1.msra.mxu0 0.0
    %1282 = vmatprep.subr.mxu0 0.0
    %1283 = vmatpush1.msra.mxu0 0.0
    %1284 = vmatprep.subr.mxu0 0.0
    %1285 = vmatpush1.msra.mxu0 0.0
    %1286 = vmatprep.subr.mxu0 0.0
    %1287 = vmatpush1.msra.mxu0 0.0
    %1288 = vmatprep.subr.mxu0 0.0
    %1289 = vmatpush1.msra.mxu0 0.0
    %1290 = vmatprep.subr.mxu0 0.0
    %1291 = vmatpush1.msra.mxu0 0.0
    %1292 = vmatprep.subr.mxu0 0.0
    %1293 = vmatpush1.msra.mxu0 0.0
    %1294 = vmatprep.subr.mxu0 0.0
    %1295 = vmatpush1.msra.mxu0 0.0
    %1296 = vmatprep.subr.mxu0 0.0
    %1297 = vmatpush1.msra.mxu0 0.0
    %1298 = vmatprep.subr.mxu0 0.0
    %1299 = vmatpush1.msra.mxu0 0.0
    %1300 = vmatprep.subr.mxu0 0.0
    %1301 = vmatpush1.msra.mxu0 0.0
    %1302 = vmatprep.subr.mxu0 0.0
    %1303 = vmatpush1.msra.mxu0 0.0
    %1304 = vmatprep.subr.mxu0 0.0
    %1305 = vmatpush1.msra.mxu0 0.0
    %1306 = vmatprep.mubr.f32.mxu0 0.0
    %1307 = vmatmul.mubr.f32.gmra.mrb[0].mxu0 %v1240
    %v1308 = vpop.f32.mrb[0].mxu0
    %v1309 = vadd.f32 0.0, %v1308
    %v1310 = vpop.f32.mrb[0].mxu0
    %1311 = vdwg.mxu0
    %1312 = vrot.lane.b32.xlu0 %v1130, 122
    %v1313 = vpop.permute.xlu0 %1312
    %1314 = vrot.lane.b32.xlu0 %v916, 122
    %v1315 = vpop.permute.xlu0 %1314
    %1316 = vrot.lane.b32.xlu0 %v921, 122
    %v1317 = vpop.permute.xlu0 %1316
    %1318 = vrot.lane.b32.xlu0 %v926, 122
    %v1319 = vpop.permute.xlu0 %1318
    %v1320 = vsel %vm1145, %v1313, 0
    %v1322 = vsel %vm1145, %v1315, 0
    %v1324 = vsel %vm1145, %v1317, 0
    %v1326 = vsel %vm1145, %v1319, 0
    %1328 = vmatprep.subr.mxu0 0.0
    %1329 = vmatpush1.xpose.msra.mxu0 %v1322
    %1330 = vmatprep.subr.mxu0 0.0
    %1331 = vmatpush1.xpose.msra.mxu0 %v1324
    %1332 = vmatprep.subr.mxu0 0.0
    %1333 = vmatpush1.xpose.msra.mxu0 %v1326
    %1334 = vmatprep.subr.mxu0 0.0
    %1335 = vmatpush1.xpose.msra.mxu0 0.0
    %1336 = vmatprep.subr.mxu0 0.0
    %1337 = vmatpush1.xpose.msra.mxu0 0.0
    %1338 = vmatprep.subr.mxu0 0.0
    %1339 = vmatpush1.xpose.msra.mxu0 0.0
    %1340 = vmatprep.subr.mxu0 0.0
    %1341 = vmatpush1.xpose.msra.mxu0 0.0
    %1342 = vmatprep.subr.mxu0 0.0
    %1343 = vmatpush1.xpose.msra.mxu0 0.0
    %1344 = vmatprep.subr.mxu0 0.0
    %1345 = vmatpush1.xpose.msra.mxu0 0.0
    %1346 = vmatprep.subr.mxu0 0.0
    %1347 = vmatpush1.xpose.msra.mxu0 0.0
    %1348 = vmatprep.subr.mxu0 0.0
    %1349 = vmatpush1.xpose.msra.mxu0 0.0
    %1350 = vmatprep.subr.mxu0 0.0
    %1351 = vmatpush1.xpose.msra.mxu0 0.0
    %1352 = vmatprep.subr.mxu0 0.0
    %1353 = vmatpush1.xpose.msra.mxu0 0.0
    %1354 = vmatprep.subr.mxu0 0.0
    %1355 = vmatpush1.xpose.msra.mxu0 0.0
    %1356 = vmatprep.subr.mxu0 0.0
    %1357 = vmatpush1.xpose.msra.mxu0 0.0
    %1358 = vmatprep.subr.mxu0 0.0
    %1359 = vmatpush1.xpose.msra.mxu0 0.0
    %1360 = vmatprep.subr.mxu0 0.0
    %1361 = vmatpush1.xpose.msra.mxu0 0.0
    %1362 = vmatprep.subr.mxu0 0.0
    %1363 = vmatpush1.xpose.msra.mxu0 0.0
    %1364 = vmatprep.subr.mxu0 0.0
    %1365 = vmatpush1.xpose.msra.mxu0 0.0
    %1366 = vmatprep.subr.mxu0 0.0
    %1367 = vmatpush1.xpose.msra.mxu0 0.0
    %1368 = vmatprep.subr.mxu0 0.0
    %1369 = vmatpush1.xpose.msra.mxu0 0.0
    %1370 = vmatprep.subr.mxu0 0.0
    %1371 = vmatpush1.xpose.msra.mxu0 0.0
    %1372 = vmatprep.subr.mxu0 0.0
    %1373 = vmatpush1.xpose.msra.mxu0 0.0
    %1374 = vmatprep.subr.mxu0 0.0
    %1375 = vmatpush1.xpose.msra.mxu0 0.0
    %1376 = vmatprep.subr.mxu0 0.0
    %1377 = vmatpush1.xpose.msra.mxu0 0.0
    %1378 = vmatprep.subr.mxu0 0.0
    %1379 = vmatpush1.xpose.msra.mxu0 0.0
    %1380 = vmatprep.subr.mxu0 0.0
    %1381 = vmatpush1.xpose.msra.mxu0 0.0
    %1382 = vmatprep.subr.mxu0 0.0
    %1383 = vmatpush1.xpose.msra.mxu0 0.0
    %1384 = vmatprep.subr.mxu0 0.0
    %1385 = vmatpush1.xpose.msra.mxu0 0.0
    %1386 = vmatprep.subr.mxu0 0.0
    %1387 = vmatpush1.xpose.msra.mxu0 0.0
    %1388 = vmatprep.subr.mxu0 0.0
    %1389 = vmatpush1.xpose.msra.mxu0 0.0
    %1390 = vmatprep.subr.mxu0 0.0
    %1391 = vmatpush1.xpose.msra.mxu0 0.0
    %1392 = vmatprep.mubr.f32.mxu0 0.0
    %1393 = vmatmul.mubr.f32.gmra.mrb[0].mxu0 %v1320
    %v1394 = vpop.f32.mrb[0].mxu0
    %v1395 = vadd.f32 %v1143, %v1394
    %v1396 = vpop.f32.mrb[0].mxu0
    %1397 = vdwg.mxu0
    %v1398 = vsel %vm830, %v1395, -inf
    %1399 = vmax.xlane.f32.xlu0 %v1398
    %v1400 = vpop.xlane.xlu0 %1399
    %v1401 = vsub.f32 %v1395, %v1400
    %v1402 = vmul.f32 %v1401, 1.442695
    %v1403 = vpow.pop %v1402
    %v1404 = vsel %vm830, %v1403, 0.0
    %1405 = vadd.xlane.f32.xlu0 %v1404
    %v1406 = vpop.xlane.xlu0 %1405
    %v1407 = vrcp.pop %v1406
    %v1408 = vmul.f32 %v1403, %v1407
    %1412 = vrot.lane.b32.xlu0 %v1021, 122
    %v1413 = vpop.permute.xlu0 %1412
    %1414 = vrot.lane.b32.xlu0 %v1026, 122
    %v1415 = vpop.permute.xlu0 %1414
    %1416 = vrot.lane.b32.xlu0 %v1031, 122
    %v1417 = vpop.permute.xlu0 %1416
    %v1422 = vsel %vm830, %v1408, 0
    %1424 = vmatprep.subr.mxu0 0.0
    %1425 = vmatpush1.msra.mxu0 %v1413
    %1426 = vmatprep.subr.mxu0 0.0
    %1427 = vmatpush1.msra.mxu0 %v1415
    %1428 = vmatprep.subr.mxu0 0.0
    %1429 = vmatpush1.msra.mxu0 %v1417
    %1430 = vmatprep.subr.mxu0 0.0
    %1431 = vmatpush1.msra.mxu0 0.0
    %1432 = vmatprep.subr.mxu0 0.0
    %1433 = vmatpush1.msra.mxu0 0.0
    %1434 = vmatprep.subr.mxu0 0.0
    %1435 = vmatpush1.msra.mxu0 0.0
    %1436 = vmatprep.subr.mxu0 0.0
    %1437 = vmatpush1.msra.mxu0 0.0
    %1438 = vmatprep.subr.mxu0 0.0
    %1439 = vmatpush1.msra.mxu0 0.0
    %1440 = vmatprep.subr.mxu0 0.0
    %1441 = vmatpush1.msra.mxu0 0.0
    %1442 = vmatprep.subr.mxu0 0.0
    %1443 = vmatpush1.msra.mxu0 0.0
    %1444 = vmatprep.subr.mxu0 0.0
    %1445 = vmatpush1.msra.mxu0 0.0
    %1446 = vmatprep.subr.mxu0 0.0
    %1447 = vmatpush1.msra.mxu0 0.0
    %1448 = vmatprep.subr.mxu0 0.0
    %1449 = vmatpush1.msra.mxu0 0.0
    %1450 = vmatprep.subr.mxu0 0.0
    %1451 = vmatpush1.msra.mxu0 0.0
    %1452 = vmatprep.subr.mxu0 0.0
    %1453 = vmatpush1.msra.mxu0 0.0
    %1454 = vmatprep.subr.mxu0 0.0
    %1455 = vmatpush1.msra.mxu0 0.0
    %1456 = vmatprep.subr.mxu0 0.0
    %1457 = vmatpush1.msra.mxu0 0.0
    %1458 = vmatprep.subr.mxu0 0.0
    %1459 = vmatpush1.msra.mxu0 0.0
    %1460 = vmatprep.subr.mxu0 0.0
    %1461 = vmatpush1.msra.mxu0 0.0
    %1462 = vmatprep.subr.mxu0 0.0
    %1463 = vmatpush1.msra.mxu0 0.0
    %1464 = vmatprep.subr.mxu0 0.0
    %1465 = vmatpush1.msra.mxu0 0.0
    %1466 = vmatprep.subr.mxu0 0.0
    %1467 = vmatpush1.msra.mxu0 0.0
    %1468 = vmatprep.subr.mxu0 0.0
    %1469 = vmatpush1.msra.mxu0 0.0
    %1470 = vmatprep.subr.mxu0 0.0
    %1471 = vmatpush1.msra.mxu0 0.0
    %1472 = vmatprep.subr.mxu0 0.0
    %1473 = vmatpush1.msra.mxu0 0.0
    %1474 = vmatprep.subr.mxu0 0.0
    %1475 = vmatpush1.msra.mxu0 0.0
    %1476 = vmatprep.subr.mxu0 0.0
    %1477 = vmatpush1.msra.mxu0 0.0
    %1478 = vmatprep.subr.mxu0 0.0
    %1479 = vmatpush1.msra.mxu0 0.0
    %1480 = vmatprep.subr.mxu0 0.0
    %1481 = vmatpush1.msra.mxu0 0.0
    %1482 = vmatprep.subr.mxu0 0.0
    %1483 = vmatpush1.msra.mxu0 0.0
    %1484 = vmatprep.subr.mxu0 0.0
    %1485 = vmatpush1.msra.mxu0 0.0
    %1486 = vmatprep.subr.mxu0 0.0
    %1487 = vmatpush1.msra.mxu0 0.0
    %1488 = vmatprep.mubr.f32.mxu0 0.0
    %1489 = vmatmul.mubr.f32.gmra.mrb[0].mxu0 %v1422
    %v1490 = vpop.f32.mrb[0].mxu0
    %v1491 = vadd.f32 0.0, %v1490
    %v1492 = vpop.f32.mrb[0].mxu0
    %1493 = vdwg.mxu0
    %1494 = vrot.lane.b32.xlu0 %v1130, 116
    %v1495 = vpop.permute.xlu0 %1494
    %1496 = vrot.lane.b32.xlu0 %v916, 116
    %v1497 = vpop.permute.xlu0 %1496
    %1498 = vrot.lane.b32.xlu0 %v921, 116
    %v1499 = vpop.permute.xlu0 %1498
    %1500 = vrot.lane.b32.xlu0 %v926, 116
    %v1501 = vpop.permute.xlu0 %1500
    %v1502 = vsel %vm1145, %v1495, 0
    %v1504 = vsel %vm1145, %v1497, 0
    %v1506 = vsel %vm1145, %v1499, 0
    %v1508 = vsel %vm1145, %v1501, 0
    %1510 = vmatprep.subr.mxu0 0.0
    %1511 = vmatpush1.xpose.msra.mxu0 %v1504
    %1512 = vmatprep.subr.mxu0 0.0
    %1513 = vmatpush1.xpose.msra.mxu0 %v1506
    %1514 = vmatprep.subr.mxu0 0.0
    %1515 = vmatpush1.xpose.msra.mxu0 %v1508
    %1516 = vmatprep.subr.mxu0 0.0
    %1517 = vmatpush1.xpose.msra.mxu0 0.0
    %1518 = vmatprep.subr.mxu0 0.0
    %1519 = vmatpush1.xpose.msra.mxu0 0.0
    %1520 = vmatprep.subr.mxu0 0.0
    %1521 = vmatpush1.xpose.msra.mxu0 0.0
    %1522 = vmatprep.subr.mxu0 0.0
    %1523 = vmatpush1.xpose.msra.mxu0 0.0
    %1524 = vmatprep.subr.mxu0 0.0
    %1525 = vmatpush1.xpose.msra.mxu0 0.0
    %1526 = vmatprep.subr.mxu0 0.0
    %1527 = vmatpush1.xpose.msra.mxu0 0.0
    %1528 = vmatprep.subr.mxu0 0.0
    %1529 = vmatpush1.xpose.msra.mxu0 0.0
    %1530 = vmatprep.subr.mxu0 0.0
    %1531 = vmatpush1.xpose.msra.mxu0 0.0
    %1532 = vmatprep.subr.mxu0 0.0
    %1533 = vmatpush1.xpose.msra.mxu0 0.0
    %1534 = vmatprep.subr.mxu0 0.0
    %1535 = vmatpush1.xpose.msra.mxu0 0.0
    %1536 = vmatprep.subr.mxu0 0.0
    %1537 = vmatpush1.xpose.msra.mxu0 0.0
    %1538 = vmatprep.subr.mxu0 0.0
    %1539 = vmatpush1.xpose.msra.mxu0 0.0
    %1540 = vmatprep.subr.mxu0 0.0
    %1541 = vmatpush1.xpose.msra.mxu0 0.0
    %1542 = vmatprep.subr.mxu0 0.0
    %1543 = vmatpush1.xpose.msra.mxu0 0.0
    %1544 = vmatprep.subr.mxu0 0.0
    %1545 = vmatpush1.xpose.msra.mxu0 0.0
    %1546 = vmatprep.subr.mxu0 0.0
    %1547 = vmatpush1.xpose.msra.mxu0 0.0
    %1548 = vmatprep.subr.mxu0 0.0
    %1549 = vmatpush1.xpose.msra.mxu0 0.0
    %1550 = vmatprep.subr.mxu0 0.0
    %1551 = vmatpush1.xpose.msra.mxu0 0.0
    %1552 = vmatprep.subr.mxu0 0.0
    %1553 = vmatpush1.xpose.msra.mxu0 0.0
    %1554 = vmatprep.subr.mxu0 0.0
    %1555 = vmatpush1.xpose.msra.mxu0 0.0
    %1556 = vmatprep.subr.mxu0 0.0
    %1557 = vmatpush1.xpose.msra.mxu0 0.0
    %1558 = vmatprep.subr.mxu0 0.0
    %1559 = vmatpush1.xpose.msra.mxu0 0.0
    %1560 = vmatprep.subr.mxu0 0.0
    %1561 = vmatpush1.xpose.msra.mxu0 0.0
    %1562 = vmatprep.subr.mxu0 0.0
    %1563 = vmatpush1.xpose.msra.mxu0 0.0
    %1564 = vmatprep.subr.mxu0 0.0
    %1565 = vmatpush1.xpose.msra.mxu0 0.0
    %1566 = vmatprep.subr.mxu0 0.0
    %1567 = vmatpush1.xpose.msra.mxu0 0.0
    %1568 = vmatprep.subr.mxu0 0.0
    %1569 = vmatpush1.xpose.msra.mxu0 0.0
    %1570 = vmatprep.subr.mxu0 0.0
    %1571 = vmatpush1.xpose.msra.mxu0 0.0
    %1572 = vmatprep.subr.mxu0 0.0
    %1573 = vmatpush1.xpose.msra.mxu0 0.0
    %1574 = vmatprep.mubr.f32.mxu0 0.0
    %1575 = vmatmul.mubr.f32.gmra.mrb[0].mxu0 %v1502
    %v1576 = vpop.f32.mrb[0].mxu0
    %v1577 = vadd.f32 %v1143, %v1576
    %v1578 = vpop.f32.mrb[0].mxu0
    %1579 = vdwg.mxu0
    %v1580 = vsel %vm830, %v1577, -inf
    %1581 = vmax.xlane.f32.xlu0 %v1580
    %v1582 = vpop.xlane.xlu0 %1581
    %v1583 = vsub.f32 %v1577, %v1582
    %v1584 = vmul.f32 %v1583, 1.442695
    %v1585 = vpow.pop %v1584
    %v1586 = vsel %vm830, %v1585, 0.0
    %1587 = vadd.xlane.f32.xlu0 %v1586
    %v1588 = vpop.xlane.xlu0 %1587
    %v1589 = vrcp.pop %v1588
    %v1590 = vmul.f32 %v1585, %v1589
    %1591 = vrot.lane.b32.xlu0 %v1021, 116
    %v1592 = vpop.permute.xlu0 %1591
    %1593 = vrot.lane.b32.xlu0 %v1026, 116
    %v1594 = vpop.permute.xlu0 %1593
    %1595 = vrot.lane.b32.xlu0 %v1031, 116
    %v1596 = vpop.permute.xlu0 %1595
    %v1601 = vsel %vm830, %v1590, 0
    %1603 = vmatprep.subr.mxu0 0.0
    %1604 = vmatpush1.msra.mxu0 %v1592
    %1605 = vmatprep.subr.mxu0 0.0
    %1606 = vmatpush1.msra.mxu0 %v1594
    %1607 = vmatprep.subr.mxu0 0.0
    %1608 = vmatpush1.msra.mxu0 %v1596
    %1609 = vmatprep.subr.mxu0 0.0
    %1610 = vmatpush1.msra.mxu0 0.0
    %1611 = vmatprep.subr.mxu0 0.0
    %1612 = vmatpush1.msra.mxu0 0.0
    %1613 = vmatprep.subr.mxu0 0.0
    %1614 = vmatpush1.msra.mxu0 0.0
    %1615 = vmatprep.subr.mxu0 0.0
    %1616 = vmatpush1.msra.mxu0 0.0
    %1617 = vmatprep.subr.mxu0 0.0
    %1618 = vmatpush1.msra.mxu0 0.0
    %1619 = vmatprep.subr.mxu0 0.0
    %1620 = vmatpush1.msra.mxu0 0.0
    %1621 = vmatprep.subr.mxu0 0.0
    %1622 = vmatpush1.msra.mxu0 0.0
    %1623 = vmatprep.subr.mxu0 0.0
    %1624 = vmatpush1.msra.mxu0 0.0
    %1625 = vmatprep.subr.mxu0 0.0
    %1626 = vmatpush1.msra.mxu0 0.0
    %1627 = vmatprep.subr.mxu0 0.0
    %1628 = vmatpush1.msra.mxu0 0.0
    %1629 = vmatprep.subr.mxu0 0.0
    %1630 = vmatpush1.msra.mxu0 0.0
    %1631 = vmatprep.subr.mxu0 0.0
    %1632 = vmatpush1.msra.mxu0 0.0
    %1633 = vmatprep.subr.mxu0 0.0
    %1634 = vmatpush1.msra.mxu0 0.0
    %1635 = vmatprep.subr.mxu0 0.0
    %1636 = vmatpush1.msra.mxu0 0.0
    %1637 = vmatprep.subr.mxu0 0.0
    %1638 = vmatpush1.msra.mxu0 0.0
    %1639 = vmatprep.subr.mxu0 0.0
    %1640 = vmatpush1.msra.mxu0 0.0
    %1641 = vmatprep.subr.mxu0 0.0
    %1642 = vmatpush1.msra.mxu0 0.0
    %1643 = vmatprep.subr.mxu0 0.0
    %1644 = vmatpush1.msra.mxu0 0.0
    %1645 = vmatprep.subr.mxu0 0.0
    %1646 = vmatpush1.msra.mxu0 0.0
    %1647 = vmatprep.subr.mxu0 0.0
    %1648 = vmatpush1.msra.mxu0 0.0
    %1649 = vmatprep.subr.mxu0 0.0
    %1650 = vmatpush1.msra.mxu0 0.0
    %1651 = vmatprep.subr.mxu0 0.0
    %1652 = vmatpush1.msra.mxu0 0.0
    %1653 = vmatprep.subr.mxu0 0.0
    %1654 = vmatpush1.msra.mxu0 0.0
    %1655 = vmatprep.subr.mxu0 0.0
    %1656 = vmatpush1.msra.mxu0 0.0
    %1657 = vmatprep.subr.mxu0 0.0
    %1658 = vmatpush1.msra.mxu0 0.0
    %1659 = vmatprep.subr.mxu0 0.0
    %1660 = vmatpush1.msra.mxu0 0.0
    %1661 = vmatprep.subr.mxu0 0.0
    %1662 = vmatpush1.msra.mxu0 0.0
    %1663 = vmatprep.subr.mxu0 0.0
    %1664 = vmatpush1.msra.mxu0 0.0
    %1665 = vmatprep.subr.mxu0 0.0
    %1666 = vmatpush1.msra.mxu0 0.0
    %1667 = vmatprep.mubr.f32.mxu0 0.0
    %1668 = vmatmul.mubr.f32.gmra.mrb[0].mxu0 %v1601
    %v1669 = vpop.f32.mrb[0].mxu0
    %v1670 = vadd.f32 0.0, %v1669
    %v1671 = vpop.f32.mrb[0].mxu0
    %1672 = vdwg.mxu0
    %1673 = vrot.lane.b32.xlu0 %v1130, 110
    %v1674 = vpop.permute.xlu0 %1673
    %1675 = vrot.lane.b32.xlu0 %v916, 110
    %v1676 = vpop.permute.xlu0 %1675
    %1677 = vrot.lane.b32.xlu0 %v921, 110
    %v1678 = vpop.permute.xlu0 %1677
    %1679 = vrot.lane.b32.xlu0 %v926, 110
    %v1680 = vpop.permute.xlu0 %1679
    %v1681 = vsel %vm1145, %v1674, 0
    %v1683 = vsel %vm1145, %v1676, 0
    %v1685 = vsel %vm1145, %v1678, 0
    %v1687 = vsel %vm1145, %v1680, 0
    %1689 = vmatprep.subr.mxu0 0.0
    %1690 = vmatpush1.xpose.msra.mxu0 %v1683
    %1691 = vmatprep.subr.mxu0 0.0
    %1692 = vmatpush1.xpose.msra.mxu0 %v1685
    %1693 = vmatprep.subr.mxu0 0.0
    %1694 = vmatpush1.xpose.msra.mxu0 %v1687
    %1695 = vmatprep.subr.mxu0 0.0
    %1696 = vmatpush1.xpose.msra.mxu0 0.0
    %1697 = vmatprep.subr.mxu0 0.0
    %1698 = vmatpush1.xpose.msra.mxu0 0.0
    %1699 = vmatprep.subr.mxu0 0.0
    %1700 = vmatpush1.xpose.msra.mxu0 0.0
    %1701 = vmatprep.subr.mxu0 0.0
    %1702 = vmatpush1.xpose.msra.mxu0 0.0
    %1703 = vmatprep.subr.mxu0 0.0
    %1704 = vmatpush1.xpose.msra.mxu0 0.0
    %1705 = vmatprep.subr.mxu0 0.0
    %1706 = vmatpush1.xpose.msra.mxu0 0.0
    %1707 = vmatprep.subr.mxu0 0.0
    %1708 = vmatpush1.xpose.msra.mxu0 0.0
    %1709 = vmatprep.subr.mxu0 0.0
    %1710 = vmatpush1.xpose.msra.mxu0 0.0
    %1711 = vmatprep.subr.mxu0 0.0
    %1712 = vmatpush1.xpose.msra.mxu0 0.0
    %1713 = vmatprep.subr.mxu0 0.0
    %1714 = vmatpush1.xpose.msra.mxu0 0.0
    %1715 = vmatprep.subr.mxu0 0.0
    %1716 = vmatpush1.xpose.msra.mxu0 0.0
    %1717 = vmatprep.subr.mxu0 0.0
    %1718 = vmatpush1.xpose.msra.mxu0 0.0
    %1719 = vmatprep.subr.mxu0 0.0
    %1720 = vmatpush1.xpose.msra.mxu0 0.0
    %1721 = vmatprep.subr.mxu0 0.0
    %1722 = vmatpush1.xpose.msra.mxu0 0.0
    %1723 = vmatprep.subr.mxu0 0.0
    %1724 = vmatpush1.xpose.msra.mxu0 0.0
    %1725 = vmatprep.subr.mxu0 0.0
    %1726 = vmatpush1.xpose.msra.mxu0 0.0
    %1727 = vmatprep.subr.mxu0 0.0
    %1728 = vmatpush1.xpose.msra.mxu0 0.0
    %1729 = vmatprep.subr.mxu0 0.0
    %1730 = vmatpush1.xpose.msra.mxu0 0.0
    %1731 = vmatprep.subr.mxu0 0.0
    %1732 = vmatpush1.xpose.msra.mxu0 0.0
    %1733 = vmatprep.subr.mxu0 0.0
    %1734 = vmatpush1.xpose.msra.mxu0 0.0
    %1735 = vmatprep.subr.mxu0 0.0
    %1736 = vmatpush1.xpose.msra.mxu0 0.0
    %1737 = vmatprep.subr.mxu0 0.0
    %1738 = vmatpush1.xpose.msra.mxu0 0.0
    %1739 = vmatprep.subr.mxu0 0.0
    %1740 = vmatpush1.xpose.msra.mxu0 0.0
    %1741 = vmatprep.subr.mxu0 0.0
    %1742 = vmatpush1.xpose.msra.mxu0 0.0
    %1743 = vmatprep.subr.mxu0 0.0
    %1744 = vmatpush1.xpose.msra.mxu0 0.0
    %1745 = vmatprep.subr.mxu0 0.0
    %1746 = vmatpush1.xpose.msra.mxu0 0.0
    %1747 = vmatprep.subr.mxu0 0.0
    %1748 = vmatpush1.xpose.msra.mxu0 0.0
    %1749 = vmatprep.subr.mxu0 0.0
    %1750 = vmatpush1.xpose.msra.mxu0 0.0
    %1751 = vmatprep.subr.mxu0 0.0
    %1752 = vmatpush1.xpose.msra.mxu0 0.0
    %1753 = vmatprep.mubr.f32.mxu0 0.0
    %1754 = vmatmul.mubr.f32.gmra.mrb[0].mxu0 %v1681
    %v1755 = vpop.f32.mrb[0].mxu0
    %v1756 = vadd.f32 %v1143, %v1755
    %v1757 = vpop.f32.mrb[0].mxu0
    %1758 = vdwg.mxu0
    %v1759 = vsel %vm830, %v1756, -inf
    %1760 = vmax.xlane.f32.xlu0 %v1759
    %v1761 = vpop.xlane.xlu0 %1760
    %v1762 = vsub.f32 %v1756, %v1761
    %v1763 = vmul.f32 %v1762, 1.442695
    %v1764 = vpow.pop %v1763
    %v1765 = vsel %vm830, %v1764, 0.0
    %1766 = vadd.xlane.f32.xlu0 %v1765
    %v1767 = vpop.xlane.xlu0 %1766
    %v1768 = vrcp.pop %v1767
    %v1769 = vmul.f32 %v1764, %v1768
    %1770 = vrot.lane.b32.xlu0 %v1021, 110
    %v1771 = vpop.permute.xlu0 %1770
    %1772 = vrot.lane.b32.xlu0 %v1026, 110
    %v1773 = vpop.permute.xlu0 %1772
    %1774 = vrot.lane.b32.xlu0 %v1031, 110
    %v1775 = vpop.permute.xlu0 %1774
    %v1780 = vsel %vm830, %v1769, 0
    %1782 = vmatprep.subr.mxu0 0.0
    %1783 = vmatpush1.msra.mxu0 %v1771
    %1784 = vmatprep.subr.mxu0 0.0
    %1785 = vmatpush1.msra.mxu0 %v1773
    %1786 = vmatprep.subr.mxu0 0.0
    %1787 = vmatpush1.msra.mxu0 %v1775
    %1788 = vmatprep.subr.mxu0 0.0
    %1789 = vmatpush1.msra.mxu0 0.0
    %1790 = vmatprep.subr.mxu0 0.0
    %1791 = vmatpush1.msra.mxu0 0.0
    %1792 = vmatprep.subr.mxu0 0.0
    %1793 = vmatpush1.msra.mxu0 0.0
    %1794 = vmatprep.subr.mxu0 0.0
    %1795 = vmatpush1.msra.mxu0 0.0
    %1796 = vmatprep.subr.mxu0 0.0
    %1797 = vmatpush1.msra.mxu0 0.0
    %1798 = vmatprep.subr.mxu0 0.0
    %1799 = vmatpush1.msra.mxu0 0.0
    %1800 = vmatprep.subr.mxu0 0.0
    %1801 = vmatpush1.msra.mxu0 0.0
    %1802 = vmatprep.subr.mxu0 0.0
    %1803 = vmatpush1.msra.mxu0 0.0
    %1804 = vmatprep.subr.mxu0 0.0
    %1805 = vmatpush1.msra.mxu0 0.0
    %1806 = vmatprep.subr.mxu0 0.0
    %1807 = vmatpush1.msra.mxu0 0.0
    %1808 = vmatprep.subr.mxu0 0.0
    %1809 = vmatpush1.msra.mxu0 0.0
    %1810 = vmatprep.subr.mxu0 0.0
    %1811 = vmatpush1.msra.mxu0 0.0
    %1812 = vmatprep.subr.mxu0 0.0
    %1813 = vmatpush1.msra.mxu0 0.0
    %1814 = vmatprep.subr.mxu0 0.0
    %1815 = vmatpush1.msra.mxu0 0.0
    %1816 = vmatprep.subr.mxu0 0.0
    %1817 = vmatpush1.msra.mxu0 0.0
    %1818 = vmatprep.subr.mxu0 0.0
    %1819 = vmatpush1.msra.mxu0 0.0
    %1820 = vmatprep.subr.mxu0 0.0
    %1821 = vmatpush1.msra.mxu0 0.0
    %1822 = vmatprep.subr.mxu0 0.0
    %1823 = vmatpush1.msra.mxu0 0.0
    %1824 = vmatprep.subr.mxu0 0.0
    %1825 = vmatpush1.msra.mxu0 0.0
    %1826 = vmatprep.subr.mxu0 0.0
    %1827 = vmatpush1.msra.mxu0 0.0
    %1828 = vmatprep.subr.mxu0 0.0
    %1829 = vmatpush1.msra.mxu0 0.0
    %1830 = vmatprep.subr.mxu0 0.0
    %1831 = vmatpush1.msra.mxu0 0.0
    %1832 = vmatprep.subr.mxu0 0.0
    %1833 = vmatpush1.msra.mxu0 0.0
    %1834 = vmatprep.subr.mxu0 0.0
    %1835 = vmatpush1.msra.mxu0 0.0
    %1836 = vmatprep.subr.mxu0 0.0
    %1837 = vmatpush1.msra.mxu0 0.0
    %1838 = vmatprep.subr.mxu0 0.0
    %1839 = vmatpush1.msra.mxu0 0.0
    %1840 = vmatprep.subr.mxu0 0.0
    %1841 = vmatpush1.msra.mxu0 0.0
    %1842 = vmatprep.subr.mxu0 0.0
    %1843 = vmatpush1.msra.mxu0 0.0
    %1844 = vmatprep.subr.mxu0 0.0
    %1845 = vmatpush1.msra.mxu0 0.0
    %1846 = vmatprep.mubr.f32.mxu0 0.0
    %1847 = vmatmul.mubr.f32.gmra.mrb[0].mxu0 %v1780
    %v1848 = vpop.f32.mrb[0].mxu0
    %v1849 = vadd.f32 0.0, %v1848
    %v1850 = vpop.f32.mrb[0].mxu0
    %1851 = vdwg.mxu0
    %1853 = vrot.lane.b32.xlu0 %v1491, 6
    %v1854 = vpop.permute.xlu0 %1853
    %1857 = vrot.lane.b32.xlu0 %v1670, 12
    %v1858 = vpop.permute.xlu0 %1857
    %1861 = vrot.lane.b32.xlu0 %v1849, 18
    %v1862 = vpop.permute.xlu0 %1861
    %v1864 = vsel %vm1145, %v1309, %v1854
    %vm1865 = vcmask 97280
    %v1866 = vsel %vm1865, %v1864, %v1858
    %vm1867 = vcmask 146432
    %v1868 = vsel %vm1867, %v1866, %v1862
    %v1870 = vsel %vm830, %v1868, 0
    %1872 = vmatprep.subr.mxu0 0.0
    %1873 = vmatpush1.msra.mxu0 %v1136
    %1874 = vmatprep.subr.mxu0 0.0
    %1875 = vmatpush1.msra.mxu0 %v1137
    %1876 = vmatprep.subr.mxu0 0.0
    %1877 = vmatpush1.msra.mxu0 %v1138
    %1878 = vmatprep.subr.mxu0 0.0
    %1879 = vmatpush1.msra.mxu0 0.0
    %1880 = vmatprep.subr.mxu0 0.0
    %1881 = vmatpush1.msra.mxu0 0.0
    %1882 = vmatprep.subr.mxu0 0.0
    %1883 = vmatpush1.msra.mxu0 0.0
    %1884 = vmatprep.subr.mxu0 0.0
    %1885 = vmatpush1.msra.mxu0 0.0
    %1886 = vmatprep.subr.mxu0 0.0
    %1887 = vmatpush1.msra.mxu0 0.0
    %1888 = vmatprep.subr.mxu0 0.0
    %1889 = vmatpush1.msra.mxu0 0.0
    %1890 = vmatprep.subr.mxu0 0.0
    %1891 = vmatpush1.msra.mxu0 0.0
    %1892 = vmatprep.subr.mxu0 0.0
    %1893 = vmatpush1.msra.mxu0 0.0
    %1894 = vmatprep.subr.mxu0 0.0
    %1895 = vmatpush1.msra.mxu0 0.0
    %1896 = vmatprep.subr.mxu0 0.0
    %1897 = vmatpush1.msra.mxu0 0.0
    %1898 = vmatprep.subr.mxu0 0.0
    %1899 = vmatpush1.msra.mxu0 0.0
    %1900 = vmatprep.subr.mxu0 0.0
    %1901 = vmatpush1.msra.mxu0 0.0
    %1902 = vmatprep.subr.mxu0 0.0
    %1903 = vmatpush1.msra.mxu0 0.0
    %1904 = vmatprep.subr.mxu0 0.0
    %1905 = vmatpush1.msra.mxu0 0.0
    %1906 = vmatprep.subr.mxu0 0.0
    %1907 = vmatpush1.msra.mxu0 0.0
    %1908 = vmatprep.subr.mxu0 0.0
    %1909 = vmatpush1.msra.mxu0 0.0
    %1910 = vmatprep.subr.mxu0 0.0
    %1911 = vmatpush1.msra.mxu0 0.0
    %1912 = vmatprep.subr.mxu0 0.0
    %1913 = vmatpush1.msra.mxu0 0.0
    %1914 = vmatprep.subr.mxu0 0.0
    %1915 = vmatpush1.msra.mxu0 0.0
    %1916 = vmatprep.subr.mxu0 0.0
    %1917 = vmatpush1.msra.mxu0 0.0
    %1918 = vmatprep.subr.mxu0 0.0
    %1919 = vmatpush1.msra.mxu0 0.0
    %1920 = vmatprep.subr.mxu0 0.0
    %1921 = vmatpush1.msra.mxu0 0.0
    %1922 = vmatprep.subr.mxu0 0.0
    %1923 = vmatpush1.msra.mxu0 0.0
    %1924 = vmatprep.subr.mxu0 0.0
    %1925 = vmatpush1.msra.mxu0 0.0
    %1926 = vmatprep.subr.mxu0 0.0
    %1927 = vmatpush1.msra.mxu0 0.0
    %1928 = vmatprep.subr.mxu0 0.0
    %1929 = vmatpush1.msra.mxu0 0.0
    %1930 = vmatprep.subr.mxu0 0.0
    %1931 = vmatpush1.msra.mxu0 0.0
    %1932 = vmatprep.subr.mxu0 0.0
    %1933 = vmatpush1.msra.mxu0 0.0
    %1934 = vmatprep.subr.mxu0 0.0
    %1935 = vmatpush1.msra.mxu0 0.0
    %1936 = vmatprep.mubr.f32.mxu0 0.0
    %1937 = vmatmul.mubr.f32.gmra.mrb[0].mxu0 %v1870
    %v1938 = vpop.f32.mrb[0].mxu0
    %v1939 = vadd.f32 0.0, %v1938
    %v1940 = vpop.f32.mrb[0].mxu0
    %1941 = vdwg.mxu0
    %s1942 = scalar_lea.vmem %s5, 1
    %v1943 = vld [vmem:[%s1942] sm:$0x1]
    %vm1944 = vcmp.gt.f32.partialorder %v1943, 0.0
    %v1945 = vsel %vm1944, 0.0, -1e+09
    %v1947 = vlaneseq
    %v1948 = vshrl.u32 %v1947, 7
    %v1949 = vsub.s32 0, %v1948
    %v1950 = vrot.slane %v1945, %v1949
    %v1953 = vsel %vm1145, %v931, 0
    %v1956 = vsel %vm1145, %v936, 0
    %v1959 = vsel %vm1145, %v941, 0
    %1961 = vmatprep.subr.mxu0 0.0
    %1962 = vmatpush1.xpose.msra.mxu0 %v1953
    %1963 = vmatprep.subr.mxu0 0.0
    %1964 = vmatpush1.xpose.msra.mxu0 %v1956
    %1965 = vmatprep.subr.mxu0 0.0
    %1966 = vmatpush1.xpose.msra.mxu0 %v1959
    %1967 = vmatprep.subr.mxu0 0.0
    %1968 = vmatpush1.xpose.msra.mxu0 0.0
    %1969 = vmatprep.subr.mxu0 0.0
    %1970 = vmatpush1.xpose.msra.mxu0 0.0
    %1971 = vmatprep.subr.mxu0 0.0
    %1972 = vmatpush1.xpose.msra.mxu0 0.0
    %1973 = vmatprep.subr.mxu0 0.0
    %1974 = vmatpush1.xpose.msra.mxu0 0.0
    %1975 = vmatprep.subr.mxu0 0.0
    %1976 = vmatpush1.xpose.msra.mxu0 0.0
    %1977 = vmatprep.subr.mxu0 0.0
    %1978 = vmatpush1.xpose.msra.mxu0 0.0
    %1979 = vmatprep.subr.mxu0 0.0
    %1980 = vmatpush1.xpose.msra.mxu0 0.0
    %1981 = vmatprep.subr.mxu0 0.0
    %1982 = vmatpush1.xpose.msra.mxu0 0.0
    %1983 = vmatprep.subr.mxu0 0.0
    %1984 = vmatpush1.xpose.msra.mxu0 0.0
    %1985 = vmatprep.subr.mxu0 0.0
    %1986 = vmatpush1.xpose.msra.mxu0 0.0
    %1987 = vmatprep.subr.mxu0 0.0
    %1988 = vmatpush1.xpose.msra.mxu0 0.0
    %1989 = vmatprep.subr.mxu0 0.0
    %1990 = vmatpush1.xpose.msra.mxu0 0.0
    %1991 = vmatprep.subr.mxu0 0.0
    %1992 = vmatpush1.xpose.msra.mxu0 0.0
    %1993 = vmatprep.subr.mxu0 0.0
    %1994 = vmatpush1.xpose.msra.mxu0 0.0
    %1995 = vmatprep.subr.mxu0 0.0
    %1996 = vmatpush1.xpose.msra.mxu0 0.0
    %1997 = vmatprep.subr.mxu0 0.0
    %1998 = vmatpush1.xpose.msra.mxu0 0.0
    %1999 = vmatprep.subr.mxu0 0.0
    %2000 = vmatpush1.xpose.msra.mxu0 0.0
    %2001 = vmatprep.subr.mxu0 0.0
    %2002 = vmatpush1.xpose.msra.mxu0 0.0
    %2003 = vmatprep.subr.mxu0 0.0
    %2004 = vmatpush1.xpose.msra.mxu0 0.0
    %2005 = vmatprep.subr.mxu0 0.0
    %2006 = vmatpush1.xpose.msra.mxu0 0.0
    %2007 = vmatprep.subr.mxu0 0.0
    %2008 = vmatpush1.xpose.msra.mxu0 0.0
    %2009 = vmatprep.subr.mxu0 0.0
    %2010 = vmatpush1.xpose.msra.mxu0 0.0
    %2011 = vmatprep.subr.mxu0 0.0
    %2012 = vmatpush1.xpose.msra.mxu0 0.0
    %2013 = vmatprep.subr.mxu0 0.0
    %2014 = vmatpush1.xpose.msra.mxu0 0.0
    %2015 = vmatprep.subr.mxu0 0.0
    %2016 = vmatpush1.xpose.msra.mxu0 0.0
    %2017 = vmatprep.subr.mxu0 0.0
    %2018 = vmatpush1.xpose.msra.mxu0 0.0
    %2019 = vmatprep.subr.mxu0 0.0
    %2020 = vmatpush1.xpose.msra.mxu0 0.0
    %2021 = vmatprep.subr.mxu0 0.0
    %2022 = vmatpush1.xpose.msra.mxu0 0.0
    %2023 = vmatprep.subr.mxu0 0.0
    %2024 = vmatpush1.xpose.msra.mxu0 0.0
    %2025 = vmatprep.mubr.f32.mxu0 0.0
    %2026 = vmatmul.mubr.f32.gmra.mrb[0].mxu0 %v1147
    %v2027 = vpop.f32.mrb[0].mxu0
    %v2028 = vadd.f32 %v1950, %v2027
    %v2029 = vpop.f32.mrb[0].mxu0
    %2030 = vdwg.mxu0
    %v2031 = vsel %vm830, %v2028, -inf
    %2032 = vmax.xlane.f32.xlu0 %v2031
    %v2033 = vpop.xlane.xlu0 %2032
    %v2034 = vsub.f32 %v2028, %v2033
    %v2035 = vmul.f32 %v2034, 1.442695
    %v2036 = vpow.pop %v2035
    %v2037 = vsel %vm830, %v2036, 0.0
    %2038 = vadd.xlane.f32.xlu0 %v2037
    %v2039 = vpop.xlane.xlu0 %2038
    %v2040 = vrcp.pop %v2039
    %v2041 = vmul.f32 %v2036, %v2040
    %v2043 = vsel %vm830, %v2041, 0
    %2045 = vmatprep.subr.mxu0 0.0
    %2046 = vmatpush1.msra.mxu0 %v1036
    %2047 = vmatprep.subr.mxu0 0.0
    %2048 = vmatpush1.msra.mxu0 %v1041
    %2049 = vmatprep.subr.mxu0 0.0
    %2050 = vmatpush1.msra.mxu0 %v1046
    %2051 = vmatprep.subr.mxu0 0.0
    %2052 = vmatpush1.msra.mxu0 0.0
    %2053 = vmatprep.subr.mxu0 0.0
    %2054 = vmatpush1.msra.mxu0 0.0
    %2055 = vmatprep.subr.mxu0 0.0
    %2056 = vmatpush1.msra.mxu0 0.0
    %2057 = vmatprep.subr.mxu0 0.0
    %2058 = vmatpush1.msra.mxu0 0.0
    %2059 = vmatprep.subr.mxu0 0.0
    %2060 = vmatpush1.msra.mxu0 0.0
    %2061 = vmatprep.subr.mxu0 0.0
    %2062 = vmatpush1.msra.mxu0 0.0
    %2063 = vmatprep.subr.mxu0 0.0
    %2064 = vmatpush1.msra.mxu0 0.0
    %2065 = vmatprep.subr.mxu0 0.0
    %2066 = vmatpush1.msra.mxu0 0.0
    %2067 = vmatprep.subr.mxu0 0.0
    %2068 = vmatpush1.msra.mxu0 0.0
    %2069 = vmatprep.subr.mxu0 0.0
    %2070 = vmatpush1.msra.mxu0 0.0
    %2071 = vmatprep.subr.mxu0 0.0
    %2072 = vmatpush1.msra.mxu0 0.0
    %2073 = vmatprep.subr.mxu0 0.0
    %2074 = vmatpush1.msra.mxu0 0.0
    %2075 = vmatprep.subr.mxu0 0.0
    %2076 = vmatpush1.msra.mxu0 0.0
    %2077 = vmatprep.subr.mxu0 0.0
    %2078 = vmatpush1.msra.mxu0 0.0
    %2079 = vmatprep.subr.mxu0 0.0
    %2080 = vmatpush1.msra.mxu0 0.0
    %2081 = vmatprep.subr.mxu0 0.0
    %2082 = vmatpush1.msra.mxu0 0.0
    %2083 = vmatprep.subr.mxu0 0.0
    %2084 = vmatpush1.msra.mxu0 0.0
    %2085 = vmatprep.subr.mxu0 0.0
    %2086 = vmatpush1.msra.mxu0 0.0
    %2087 = vmatprep.subr.mxu0 0.0
    %2088 = vmatpush1.msra.mxu0 0.0
    %2089 = vmatprep.subr.mxu0 0.0
    %2090 = vmatpush1.msra.mxu0 0.0
    %2091 = vmatprep.subr.mxu0 0.0
    %2092 = vmatpush1.msra.mxu0 0.0
    %2093 = vmatprep.subr.mxu0 0.0
    %2094 = vmatpush1.msra.mxu0 0.0
    %2095 = vmatprep.subr.mxu0 0.0
    %2096 = vmatpush1.msra.mxu0 0.0
    %2097 = vmatprep.subr.mxu0 0.0
    %2098 = vmatpush1.msra.mxu0 0.0
    %2099 = vmatprep.subr.mxu0 0.0
    %2100 = vmatpush1.msra.mxu0 0.0
    %2101 = vmatprep.subr.mxu0 0.0
    %2102 = vmatpush1.msra.mxu0 0.0
    %2103 = vmatprep.subr.mxu0 0.0
    %2104 = vmatpush1.msra.mxu0 0.0
    %2105 = vmatprep.subr.mxu0 0.0
    %2106 = vmatpush1.msra.mxu0 0.0
    %2107 = vmatprep.subr.mxu0 0.0
    %2108 = vmatpush1.msra.mxu0 0.0
    %2109 = vmatprep.mubr.f32.mxu0 0.0
    %2110 = vmatmul.mubr.f32.gmra.mrb[0].mxu0 %v2043
    %v2111 = vpop.f32.mrb[0].mxu0
    %v2112 = vadd.f32 0.0, %v2111
    %v2113 = vpop.f32.mrb[0].mxu0
    %2114 = vdwg.mxu0
    %2115 = vrot.lane.b32.xlu0 %v931, 122
    %v2116 = vpop.permute.xlu0 %2115
    %2117 = vrot.lane.b32.xlu0 %v936, 122
    %v2118 = vpop.permute.xlu0 %2117
    %2119 = vrot.lane.b32.xlu0 %v941, 122
    %v2120 = vpop.permute.xlu0 %2119
    %v2121 = vsel %vm1145, %v2116, 0
    %v2123 = vsel %vm1145, %v2118, 0
    %v2125 = vsel %vm1145, %v2120, 0
    %2127 = vmatprep.subr.mxu0 0.0
    %2128 = vmatpush1.xpose.msra.mxu0 %v2121
    %2129 = vmatprep.subr.mxu0 0.0
    %2130 = vmatpush1.xpose.msra.mxu0 %v2123
    %2131 = vmatprep.subr.mxu0 0.0
    %2132 = vmatpush1.xpose.msra.mxu0 %v2125
    %2133 = vmatprep.subr.mxu0 0.0
    %2134 = vmatpush1.xpose.msra.mxu0 0.0
    %2135 = vmatprep.subr.mxu0 0.0
    %2136 = vmatpush1.xpose.msra.mxu0 0.0
    %2137 = vmatprep.subr.mxu0 0.0
    %2138 = vmatpush1.xpose.msra.mxu0 0.0
    %2139 = vmatprep.subr.mxu0 0.0
    %2140 = vmatpush1.xpose.msra.mxu0 0.0
    %2141 = vmatprep.subr.mxu0 0.0
    %2142 = vmatpush1.xpose.msra.mxu0 0.0
    %2143 = vmatprep.subr.mxu0 0.0
    %2144 = vmatpush1.xpose.msra.mxu0 0.0
    %2145 = vmatprep.subr.mxu0 0.0
    %2146 = vmatpush1.xpose.msra.mxu0 0.0
    %2147 = vmatprep.subr.mxu0 0.0
    %2148 = vmatpush1.xpose.msra.mxu0 0.0
    %2149 = vmatprep.subr.mxu0 0.0
    %2150 = vmatpush1.xpose.msra.mxu0 0.0
    %2151 = vmatprep.subr.mxu0 0.0
    %2152 = vmatpush1.xpose.msra.mxu0 0.0
    %2153 = vmatprep.subr.mxu0 0.0
    %2154 = vmatpush1.xpose.msra.mxu0 0.0
    %2155 = vmatprep.subr.mxu0 0.0
    %2156 = vmatpush1.xpose.msra.mxu0 0.0
    %2157 = vmatprep.subr.mxu0 0.0
    %2158 = vmatpush1.xpose.msra.mxu0 0.0
    %2159 = vmatprep.subr.mxu0 0.0
    %2160 = vmatpush1.xpose.msra.mxu0 0.0
    %2161 = vmatprep.subr.mxu0 0.0
    %2162 = vmatpush1.xpose.msra.mxu0 0.0
    %2163 = vmatprep.subr.mxu0 0.0
    %2164 = vmatpush1.xpose.msra.mxu0 0.0
    %2165 = vmatprep.subr.mxu0 0.0
    %2166 = vmatpush1.xpose.msra.mxu0 0.0
    %2167 = vmatprep.subr.mxu0 0.0
    %2168 = vmatpush1.xpose.msra.mxu0 0.0
    %2169 = vmatprep.subr.mxu0 0.0
    %2170 = vmatpush1.xpose.msra.mxu0 0.0
    %2171 = vmatprep.subr.mxu0 0.0
    %2172 = vmatpush1.xpose.msra.mxu0 0.0
    %2173 = vmatprep.subr.mxu0 0.0
    %2174 = vmatpush1.xpose.msra.mxu0 0.0
    %2175 = vmatprep.subr.mxu0 0.0
    %2176 = vmatpush1.xpose.msra.mxu0 0.0
    %2177 = vmatprep.subr.mxu0 0.0
    %2178 = vmatpush1.xpose.msra.mxu0 0.0
    %2179 = vmatprep.subr.mxu0 0.0
    %2180 = vmatpush1.xpose.msra.mxu0 0.0
    %2181 = vmatprep.subr.mxu0 0.0
    %2182 = vmatpush1.xpose.msra.mxu0 0.0
    %2183 = vmatprep.subr.mxu0 0.0
    %2184 = vmatpush1.xpose.msra.mxu0 0.0
    %2185 = vmatprep.subr.mxu0 0.0
    %2186 = vmatpush1.xpose.msra.mxu0 0.0
    %2187 = vmatprep.subr.mxu0 0.0
    %2188 = vmatpush1.xpose.msra.mxu0 0.0
    %2189 = vmatprep.subr.mxu0 0.0
    %2190 = vmatpush1.xpose.msra.mxu0 0.0
    %2191 = vmatprep.mubr.f32.mxu0 0.0
    %2192 = vmatmul.mubr.f32.gmra.mrb[0].mxu0 %v1320
    %v2193 = vpop.f32.mrb[0].mxu0
    %v2194 = vadd.f32 %v1950, %v2193
    %v2195 = vpop.f32.mrb[0].mxu0
    %2196 = vdwg.mxu0
    %v2197 = vsel %vm830, %v2194, -inf
    %2198 = vmax.xlane.f32.xlu0 %v2197
    %v2199 = vpop.xlane.xlu0 %2198
    %v2200 = vsub.f32 %v2194, %v2199
    %v2201 = vmul.f32 %v2200, 1.442695
    %v2202 = vpow.pop %v2201
    %v2203 = vsel %vm830, %v2202, 0.0
    %2204 = vadd.xlane.f32.xlu0 %v2203
    %v2205 = vpop.xlane.xlu0 %2204
    %v2206 = vrcp.pop %v2205
    %v2207 = vmul.f32 %v2202, %v2206
    %2211 = vrot.lane.b32.xlu0 %v1036, 122
    %v2212 = vpop.permute.xlu0 %2211
    %2213 = vrot.lane.b32.xlu0 %v1041, 122
    %v2214 = vpop.permute.xlu0 %2213
    %2215 = vrot.lane.b32.xlu0 %v1046, 122
    %v2216 = vpop.permute.xlu0 %2215
    %v2221 = vsel %vm830, %v2207, 0
    %2223 = vmatprep.subr.mxu0 0.0
    %2224 = vmatpush1.msra.mxu0 %v2212
    %2225 = vmatprep.subr.mxu0 0.0
    %2226 = vmatpush1.msra.mxu0 %v2214
    %2227 = vmatprep.subr.mxu0 0.0
    %2228 = vmatpush1.msra.mxu0 %v2216
    %2229 = vmatprep.subr.mxu0 0.0
    %2230 = vmatpush1.msra.mxu0 0.0
    %2231 = vmatprep.subr.mxu0 0.0
    %2232 = vmatpush1.msra.mxu0 0.0
    %2233 = vmatprep.subr.mxu0 0.0
    %2234 = vmatpush1.msra.mxu0 0.0
    %2235 = vmatprep.subr.mxu0 0.0
    %2236 = vmatpush1.msra.mxu0 0.0
    %2237 = vmatprep.subr.mxu0 0.0
    %2238 = vmatpush1.msra.mxu0 0.0
    %2239 = vmatprep.subr.mxu0 0.0
    %2240 = vmatpush1.msra.mxu0 0.0
    %2241 = vmatprep.subr.mxu0 0.0
    %2242 = vmatpush1.msra.mxu0 0.0
    %2243 = vmatprep.subr.mxu0 0.0
    %2244 = vmatpush1.msra.mxu0 0.0
    %2245 = vmatprep.subr.mxu0 0.0
    %2246 = vmatpush1.msra.mxu0 0.0
    %2247 = vmatprep.subr.mxu0 0.0
    %2248 = vmatpush1.msra.mxu0 0.0
    %2249 = vmatprep.subr.mxu0 0.0
    %2250 = vmatpush1.msra.mxu0 0.0
    %2251 = vmatprep.subr.mxu0 0.0
    %2252 = vmatpush1.msra.mxu0 0.0
    %2253 = vmatprep.subr.mxu0 0.0
    %2254 = vmatpush1.msra.mxu0 0.0
    %2255 = vmatprep.subr.mxu0 0.0
    %2256 = vmatpush1.msra.mxu0 0.0
    %2257 = vmatprep.subr.mxu0 0.0
    %2258 = vmatpush1.msra.mxu0 0.0
    %2259 = vmatprep.subr.mxu0 0.0
    %2260 = vmatpush1.msra.mxu0 0.0
    %2261 = vmatprep.subr.mxu0 0.0
    %2262 = vmatpush1.msra.mxu0 0.0
    %2263 = vmatprep.subr.mxu0 0.0
    %2264 = vmatpush1.msra.mxu0 0.0
    %2265 = vmatprep.subr.mxu0 0.0
    %2266 = vmatpush1.msra.mxu0 0.0
    %2267 = vmatprep.subr.mxu0 0.0
    %2268 = vmatpush1.msra.mxu0 0.0
    %2269 = vmatprep.subr.mxu0 0.0
    %2270 = vmatpush1.msra.mxu0 0.0
    %2271 = vmatprep.subr.mxu0 0.0
    %2272 = vmatpush1.msra.mxu0 0.0
    %2273 = vmatprep.subr.mxu0 0.0
    %2274 = vmatpush1.msra.mxu0 0.0
    %2275 = vmatprep.subr.mxu0 0.0
    %2276 = vmatpush1.msra.mxu0 0.0
    %2277 = vmatprep.subr.mxu0 0.0
    %2278 = vmatpush1.msra.mxu0 0.0
    %2279 = vmatprep.subr.mxu0 0.0
    %2280 = vmatpush1.msra.mxu0 0.0
    %2281 = vmatprep.subr.mxu0 0.0
    %2282 = vmatpush1.msra.mxu0 0.0
    %2283 = vmatprep.subr.mxu0 0.0
    %2284 = vmatpush1.msra.mxu0 0.0
    %2285 = vmatprep.subr.mxu0 0.0
    %2286 = vmatpush1.msra.mxu0 0.0
    %2287 = vmatprep.mubr.f32.mxu0 0.0
    %2288 = vmatmul.mubr.f32.gmra.mrb[0].mxu0 %v2221
    %v2289 = vpop.f32.mrb[0].mxu0
    %v2290 = vadd.f32 0.0, %v2289
    %v2291 = vpop.f32.mrb[0].mxu0
    %2292 = vdwg.mxu0
    %2293 = vrot.lane.b32.xlu0 %v931, 116
    %v2294 = vpop.permute.xlu0 %2293
    %2295 = vrot.lane.b32.xlu0 %v936, 116
    %v2296 = vpop.permute.xlu0 %2295
    %2297 = vrot.lane.b32.xlu0 %v941, 116
    %v2298 = vpop.permute.xlu0 %2297
    %v2299 = vsel %vm1145, %v2294, 0
    %v2301 = vsel %vm1145, %v2296, 0
    %v2303 = vsel %vm1145, %v2298, 0
    %2305 = vmatprep.subr.mxu0 0.0
    %2306 = vmatpush1.xpose.msra.mxu0 %v2299
    %2307 = vmatprep.subr.mxu0 0.0
    %2308 = vmatpush1.xpose.msra.mxu0 %v2301
    %2309 = vmatprep.subr.mxu0 0.0
    %2310 = vmatpush1.xpose.msra.mxu0 %v2303
    %2311 = vmatprep.subr.mxu0 0.0
    %2312 = vmatpush1.xpose.msra.mxu0 0.0
    %2313 = vmatprep.subr.mxu0 0.0
    %2314 = vmatpush1.xpose.msra.mxu0 0.0
    %2315 = vmatprep.subr.mxu0 0.0
    %2316 = vmatpush1.xpose.msra.mxu0 0.0
    %2317 = vmatprep.subr.mxu0 0.0
    %2318 = vmatpush1.xpose.msra.mxu0 0.0
    %2319 = vmatprep.subr.mxu0 0.0
    %2320 = vmatpush1.xpose.msra.mxu0 0.0
    %2321 = vmatprep.subr.mxu0 0.0
    %2322 = vmatpush1.xpose.msra.mxu0 0.0
    %2323 = vmatprep.subr.mxu0 0.0
    %2324 = vmatpush1.xpose.msra.mxu0 0.0
    %2325 = vmatprep.subr.mxu0 0.0
    %2326 = vmatpush1.xpose.msra.mxu0 0.0
    %2327 = vmatprep.subr.mxu0 0.0
    %2328 = vmatpush1.xpose.msra.mxu0 0.0
    %2329 = vmatprep.subr.mxu0 0.0
    %2330 = vmatpush1.xpose.msra.mxu0 0.0
    %2331 = vmatprep.subr.mxu0 0.0
    %2332 = vmatpush1.xpose.msra.mxu0 0.0
    %2333 = vmatprep.subr.mxu0 0.0
    %2334 = vmatpush1.xpose.msra.mxu0 0.0
    %2335 = vmatprep.subr.mxu0 0.0
    %2336 = vmatpush1.xpose.msra.mxu0 0.0
    %2337 = vmatprep.subr.mxu0 0.0
    %2338 = vmatpush1.xpose.msra.mxu0 0.0
    %2339 = vmatprep.subr.mxu0 0.0
    %2340 = vmatpush1.xpose.msra.mxu0 0.0
    %2341 = vmatprep.subr.mxu0 0.0
    %2342 = vmatpush1.xpose.msra.mxu0 0.0
    %2343 = vmatprep.subr.mxu0 0.0
    %2344 = vmatpush1.xpose.msra.mxu0 0.0
    %2345 = vmatprep.subr.mxu0 0.0
    %2346 = vmatpush1.xpose.msra.mxu0 0.0
    %2347 = vmatprep.subr.mxu0 0.0
    %2348 = vmatpush1.xpose.msra.mxu0 0.0
    %2349 = vmatprep.subr.mxu0 0.0
    %2350 = vmatpush1.xpose.msra.mxu0 0.0
    %2351 = vmatprep.subr.mxu0 0.0
    %2352 = vmatpush1.xpose.msra.mxu0 0.0
    %2353 = vmatprep.subr.mxu0 0.0
    %2354 = vmatpush1.xpose.msra.mxu0 0.0
    %2355 = vmatprep.subr.mxu0 0.0
    %2356 = vmatpush1.xpose.msra.mxu0 0.0
    %2357 = vmatprep.subr.mxu0 0.0
    %2358 = vmatpush1.xpose.msra.mxu0 0.0
    %2359 = vmatprep.subr.mxu0 0.0
    %2360 = vmatpush1.xpose.msra.mxu0 0.0
    %2361 = vmatprep.subr.mxu0 0.0
    %2362 = vmatpush1.xpose.msra.mxu0 0.0
    %2363 = vmatprep.subr.mxu0 0.0
    %2364 = vmatpush1.xpose.msra.mxu0 0.0
    %2365 = vmatprep.subr.mxu0 0.0
    %2366 = vmatpush1.xpose.msra.mxu0 0.0
    %2367 = vmatprep.subr.mxu0 0.0
    %2368 = vmatpush1.xpose.msra.mxu0 0.0
    %2369 = vmatprep.mubr.f32.mxu0 0.0
    %2370 = vmatmul.mubr.f32.gmra.mrb[0].mxu0 %v1502
    %v2371 = vpop.f32.mrb[0].mxu0
    %v2372 = vadd.f32 %v1950, %v2371
    %v2373 = vpop.f32.mrb[0].mxu0
    %2374 = vdwg.mxu0
    %v2375 = vsel %vm830, %v2372, -inf
    %2376 = vmax.xlane.f32.xlu0 %v2375
    %v2377 = vpop.xlane.xlu0 %2376
    %v2378 = vsub.f32 %v2372, %v2377
    %v2379 = vmul.f32 %v2378, 1.442695
    %v2380 = vpow.pop %v2379
    %v2381 = vsel %vm830, %v2380, 0.0
    %2382 = vadd.xlane.f32.xlu0 %v2381
    %v2383 = vpop.xlane.xlu0 %2382
    %v2384 = vrcp.pop %v2383
    %v2385 = vmul.f32 %v2380, %v2384
    %2386 = vrot.lane.b32.xlu0 %v1036, 116
    %v2387 = vpop.permute.xlu0 %2386
    %2388 = vrot.lane.b32.xlu0 %v1041, 116
    %v2389 = vpop.permute.xlu0 %2388
    %2390 = vrot.lane.b32.xlu0 %v1046, 116
    %v2391 = vpop.permute.xlu0 %2390
    %v2396 = vsel %vm830, %v2385, 0
    %2398 = vmatprep.subr.mxu0 0.0
    %2399 = vmatpush1.msra.mxu0 %v2387
    %2400 = vmatprep.subr.mxu0 0.0
    %2401 = vmatpush1.msra.mxu0 %v2389
    %2402 = vmatprep.subr.mxu0 0.0
    %2403 = vmatpush1.msra.mxu0 %v2391
    %2404 = vmatprep.subr.mxu0 0.0
    %2405 = vmatpush1.msra.mxu0 0.0
    %2406 = vmatprep.subr.mxu0 0.0
    %2407 = vmatpush1.msra.mxu0 0.0
    %2408 = vmatprep.subr.mxu0 0.0
    %2409 = vmatpush1.msra.mxu0 0.0
    %2410 = vmatprep.subr.mxu0 0.0
    %2411 = vmatpush1.msra.mxu0 0.0
    %2412 = vmatprep.subr.mxu0 0.0
    %2413 = vmatpush1.msra.mxu0 0.0
    %2414 = vmatprep.subr.mxu0 0.0
    %2415 = vmatpush1.msra.mxu0 0.0
    %2416 = vmatprep.subr.mxu0 0.0
    %2417 = vmatpush1.msra.mxu0 0.0
    %2418 = vmatprep.subr.mxu0 0.0
    %2419 = vmatpush1.msra.mxu0 0.0
    %2420 = vmatprep.subr.mxu0 0.0
    %2421 = vmatpush1.msra.mxu0 0.0
    %2422 = vmatprep.subr.mxu0 0.0
    %2423 = vmatpush1.msra.mxu0 0.0
    %2424 = vmatprep.subr.mxu0 0.0
    %2425 = vmatpush1.msra.mxu0 0.0
    %2426 = vmatprep.subr.mxu0 0.0
    %2427 = vmatpush1.msra.mxu0 0.0
    %2428 = vmatprep.subr.mxu0 0.0
    %2429 = vmatpush1.msra.mxu0 0.0
    %2430 = vmatprep.subr.mxu0 0.0
    %2431 = vmatpush1.msra.mxu0 0.0
    %2432 = vmatprep.subr.mxu0 0.0
    %2433 = vmatpush1.msra.mxu0 0.0
    %2434 = vmatprep.subr.mxu0 0.0
    %2435 = vmatpush1.msra.mxu0 0.0
    %2436 = vmatprep.subr.mxu0 0.0
    %2437 = vmatpush1.msra.mxu0 0.0
    %2438 = vmatprep.subr.mxu0 0.0
    %2439 = vmatpush1.msra.mxu0 0.0
    %2440 = vmatprep.subr.mxu0 0.0
    %2441 = vmatpush1.msra.mxu0 0.0
    %2442 = vmatprep.subr.mxu0 0.0
    %2443 = vmatpush1.msra.mxu0 0.0
    %2444 = vmatprep.subr.mxu0 0.0
    %2445 = vmatpush1.msra.mxu0 0.0
    %2446 = vmatprep.subr.mxu0 0.0
    %2447 = vmatpush1.msra.mxu0 0.0
    %2448 = vmatprep.subr.mxu0 0.0
    %2449 = vmatpush1.msra.mxu0 0.0
    %2450 = vmatprep.subr.mxu0 0.0
    %2451 = vmatpush1.msra.mxu0 0.0
    %2452 = vmatprep.subr.mxu0 0.0
    %2453 = vmatpush1.msra.mxu0 0.0
    %2454 = vmatprep.subr.mxu0 0.0
    %2455 = vmatpush1.msra.mxu0 0.0
    %2456 = vmatprep.subr.mxu0 0.0
    %2457 = vmatpush1.msra.mxu0 0.0
    %2458 = vmatprep.subr.mxu0 0.0
    %2459 = vmatpush1.msra.mxu0 0.0
    %2460 = vmatprep.subr.mxu0 0.0
    %2461 = vmatpush1.msra.mxu0 0.0
    %2462 = vmatprep.mubr.f32.mxu0 0.0
    %2463 = vmatmul.mubr.f32.gmra.mrb[0].mxu0 %v2396
    %v2464 = vpop.f32.mrb[0].mxu0
    %v2465 = vadd.f32 0.0, %v2464
    %v2466 = vpop.f32.mrb[0].mxu0
    %2467 = vdwg.mxu0
    %2468 = vrot.lane.b32.xlu0 %v931, 110
    %v2469 = vpop.permute.xlu0 %2468
    %2470 = vrot.lane.b32.xlu0 %v936, 110
    %v2471 = vpop.permute.xlu0 %2470
    %2472 = vrot.lane.b32.xlu0 %v941, 110
    %v2473 = vpop.permute.xlu0 %2472
    %v2474 = vsel %vm1145, %v2469, 0
    %v2476 = vsel %vm1145, %v2471, 0
    %v2478 = vsel %vm1145, %v2473, 0
    %2480 = vmatprep.subr.mxu0 0.0
    %2481 = vmatpush1.xpose.msra.mxu0 %v2474
    %2482 = vmatprep.subr.mxu0 0.0
    %2483 = vmatpush1.xpose.msra.mxu0 %v2476
    %2484 = vmatprep.subr.mxu0 0.0
    %2485 = vmatpush1.xpose.msra.mxu0 %v2478
    %2486 = vmatprep.subr.mxu0 0.0
    %2487 = vmatpush1.xpose.msra.mxu0 0.0
    %2488 = vmatprep.subr.mxu0 0.0
    %2489 = vmatpush1.xpose.msra.mxu0 0.0
    %2490 = vmatprep.subr.mxu0 0.0
    %2491 = vmatpush1.xpose.msra.mxu0 0.0
    %2492 = vmatprep.subr.mxu0 0.0
    %2493 = vmatpush1.xpose.msra.mxu0 0.0
    %2494 = vmatprep.subr.mxu0 0.0
    %2495 = vmatpush1.xpose.msra.mxu0 0.0
    %2496 = vmatprep.subr.mxu0 0.0
    %2497 = vmatpush1.xpose.msra.mxu0 0.0
    %2498 = vmatprep.subr.mxu0 0.0
    %2499 = vmatpush1.xpose.msra.mxu0 0.0
    %2500 = vmatprep.subr.mxu0 0.0
    %2501 = vmatpush1.xpose.msra.mxu0 0.0
    %2502 = vmatprep.subr.mxu0 0.0
    %2503 = vmatpush1.xpose.msra.mxu0 0.0
    %2504 = vmatprep.subr.mxu0 0.0
    %2505 = vmatpush1.xpose.msra.mxu0 0.0
    %2506 = vmatprep.subr.mxu0 0.0
    %2507 = vmatpush1.xpose.msra.mxu0 0.0
    %2508 = vmatprep.subr.mxu0 0.0
    %2509 = vmatpush1.xpose.msra.mxu0 0.0
    %2510 = vmatprep.subr.mxu0 0.0
    %2511 = vmatpush1.xpose.msra.mxu0 0.0
    %2512 = vmatprep.subr.mxu0 0.0
    %2513 = vmatpush1.xpose.msra.mxu0 0.0
    %2514 = vmatprep.subr.mxu0 0.0
    %2515 = vmatpush1.xpose.msra.mxu0 0.0
    %2516 = vmatprep.subr.mxu0 0.0
    %2517 = vmatpush1.xpose.msra.mxu0 0.0
    %2518 = vmatprep.subr.mxu0 0.0
    %2519 = vmatpush1.xpose.msra.mxu0 0.0
    %2520 = vmatprep.subr.mxu0 0.0
    %2521 = vmatpush1.xpose.msra.mxu0 0.0
    %2522 = vmatprep.subr.mxu0 0.0
    %2523 = vmatpush1.xpose.msra.mxu0 0.0
    %2524 = vmatprep.subr.mxu0 0.0
    %2525 = vmatpush1.xpose.msra.mxu0 0.0
    %2526 = vmatprep.subr.mxu0 0.0
    %2527 = vmatpush1.xpose.msra.mxu0 0.0
    %2528 = vmatprep.subr.mxu0 0.0
    %2529 = vmatpush1.xpose.msra.mxu0 0.0
    %2530 = vmatprep.subr.mxu0 0.0
    %2531 = vmatpush1.xpose.msra.mxu0 0.0
    %2532 = vmatprep.subr.mxu0 0.0
    %2533 = vmatpush1.xpose.msra.mxu0 0.0
    %2534 = vmatprep.subr.mxu0 0.0
    %2535 = vmatpush1.xpose.msra.mxu0 0.0
    %2536 = vmatprep.subr.mxu0 0.0
    %2537 = vmatpush1.xpose.msra.mxu0 0.0
    %2538 = vmatprep.subr.mxu0 0.0
    %2539 = vmatpush1.xpose.msra.mxu0 0.0
    %2540 = vmatprep.subr.mxu0 0.0
    %2541 = vmatpush1.xpose.msra.mxu0 0.0
    %2542 = vmatprep.subr.mxu0 0.0
    %2543 = vmatpush1.xpose.msra.mxu0 0.0
    %2544 = vmatprep.mubr.f32.mxu0 0.0
    %2545 = vmatmul.mubr.f32.gmra.mrb[0].mxu0 %v1681
    %v2546 = vpop.f32.mrb[0].mxu0
    %v2547 = vadd.f32 %v1950, %v2546
    %v2548 = vpop.f32.mrb[0].mxu0
    %2549 = vdwg.mxu0
    %v2550 = vsel %vm830, %v2547, -inf
    %2551 = vmax.xlane.f32.xlu0 %v2550
    %v2552 = vpop.xlane.xlu0 %2551
    %v2553 = vsub.f32 %v2547, %v2552
    %v2554 = vmul.f32 %v2553, 1.442695
    %v2555 = vpow.pop %v2554
    %v2556 = vsel %vm830, %v2555, 0.0
    %2557 = vadd.xlane.f32.xlu0 %v2556
    %v2558 = vpop.xlane.xlu0 %2557
    %v2559 = vrcp.pop %v2558
    %v2560 = vmul.f32 %v2555, %v2559
    %2561 = vrot.lane.b32.xlu0 %v1036, 110
    %v2562 = vpop.permute.xlu0 %2561
    %2563 = vrot.lane.b32.xlu0 %v1041, 110
    %v2564 = vpop.permute.xlu0 %2563
    %2565 = vrot.lane.b32.xlu0 %v1046, 110
    %v2566 = vpop.permute.xlu0 %2565
    %v2571 = vsel %vm830, %v2560, 0
    %2573 = vmatprep.subr.mxu0 0.0
    %2574 = vmatpush1.msra.mxu0 %v2562
    %2575 = vmatprep.subr.mxu0 0.0
    %2576 = vmatpush1.msra.mxu0 %v2564
    %2577 = vmatprep.subr.mxu0 0.0
    %2578 = vmatpush1.msra.mxu0 %v2566
    %2579 = vmatprep.subr.mxu0 0.0
    %2580 = vmatpush1.msra.mxu0 0.0
    %2581 = vmatprep.subr.mxu0 0.0
    %2582 = vmatpush1.msra.mxu0 0.0
    %2583 = vmatprep.subr.mxu0 0.0
    %2584 = vmatpush1.msra.mxu0 0.0
    %2585 = vmatprep.subr.mxu0 0.0
    %2586 = vmatpush1.msra.mxu0 0.0
    %2587 = vmatprep.subr.mxu0 0.0
    %2588 = vmatpush1.msra.mxu0 0.0
    %2589 = vmatprep.subr.mxu0 0.0
    %2590 = vmatpush1.msra.mxu0 0.0
    %2591 = vmatprep.subr.mxu0 0.0
    %2592 = vmatpush1.msra.mxu0 0.0
    %2593 = vmatprep.subr.mxu0 0.0
    %2594 = vmatpush1.msra.mxu0 0.0
    %2595 = vmatprep.subr.mxu0 0.0
    %2596 = vmatpush1.msra.mxu0 0.0
    %2597 = vmatprep.subr.mxu0 0.0
    %2598 = vmatpush1.msra.mxu0 0.0
    %2599 = vmatprep.subr.mxu0 0.0
    %2600 = vmatpush1.msra.mxu0 0.0
    %2601 = vmatprep.subr.mxu0 0.0
    %2602 = vmatpush1.msra.mxu0 0.0
    %2603 = vmatprep.subr.mxu0 0.0
    %2604 = vmatpush1.msra.mxu0 0.0
    %2605 = vmatprep.subr.mxu0 0.0
    %2606 = vmatpush1.msra.mxu0 0.0
    %2607 = vmatprep.subr.mxu0 0.0
    %2608 = vmatpush1.msra.mxu0 0.0
    %2609 = vmatprep.subr.mxu0 0.0
    %2610 = vmatpush1.msra.mxu0 0.0
    %2611 = vmatprep.subr.mxu0 0.0
    %2612 = vmatpush1.msra.mxu0 0.0
    %2613 = vmatprep.subr.mxu0 0.0
    %2614 = vmatpush1.msra.mxu0 0.0
    %2615 = vmatprep.subr.mxu0 0.0
    %2616 = vmatpush1.msra.mxu0 0.0
    %2617 = vmatprep.subr.mxu0 0.0
    %2618 = vmatpush1.msra.mxu0 0.0
    %2619 = vmatprep.subr.mxu0 0.0
    %2620 = vmatpush1.msra.mxu0 0.0
    %2621 = vmatprep.subr.mxu0 0.0
    %2622 = vmatpush1.msra.mxu0 0.0
    %2623 = vmatprep.subr.mxu0 0.0
    %2624 = vmatpush1.msra.mxu0 0.0
    %2625 = vmatprep.subr.mxu0 0.0
    %2626 = vmatpush1.msra.mxu0 0.0
    %2627 = vmatprep.subr.mxu0 0.0
    %2628 = vmatpush1.msra.mxu0 0.0
    %2629 = vmatprep.subr.mxu0 0.0
    %2630 = vmatpush1.msra.mxu0 0.0
    %2631 = vmatprep.subr.mxu0 0.0
    %2632 = vmatpush1.msra.mxu0 0.0
    %2633 = vmatprep.subr.mxu0 0.0
    %2634 = vmatpush1.msra.mxu0 0.0
    %2635 = vmatprep.subr.mxu0 0.0
    %2636 = vmatpush1.msra.mxu0 0.0
    %2637 = vmatprep.mubr.f32.mxu0 0.0
    %2638 = vmatmul.mubr.f32.gmra.mrb[0].mxu0 %v2571
    %v2639 = vpop.f32.mrb[0].mxu0
    %v2640 = vadd.f32 0.0, %v2639
    %v2641 = vpop.f32.mrb[0].mxu0
    %2642 = vdwg.mxu0
    %2644 = vrot.lane.b32.xlu0 %v2290, 6
    %v2645 = vpop.permute.xlu0 %2644
    %2648 = vrot.lane.b32.xlu0 %v2465, 12
    %v2649 = vpop.permute.xlu0 %2648
    %2652 = vrot.lane.b32.xlu0 %v2640, 18
    %v2653 = vpop.permute.xlu0 %2652
    %v2655 = vsel %vm1145, %v2112, %v2645
    %v2656 = vsel %vm1865, %v2655, %v2649
    %v2657 = vsel %vm1867, %v2656, %v2653
    %v2659 = vsel %vm830, %v2657, 0
    %2661 = vmatprep.subr.mxu0 0.0
    %2662 = vmatpush1.msra.mxu0 %v1136
    %2663 = vmatprep.subr.mxu0 0.0
    %2664 = vmatpush1.msra.mxu0 %v1137
    %2665 = vmatprep.subr.mxu0 0.0
    %2666 = vmatpush1.msra.mxu0 %v1138
    %2667 = vmatprep.subr.mxu0 0.0
    %2668 = vmatpush1.msra.mxu0 0.0
    %2669 = vmatprep.subr.mxu0 0.0
    %2670 = vmatpush1.msra.mxu0 0.0
    %2671 = vmatprep.subr.mxu0 0.0
    %2672 = vmatpush1.msra.mxu0 0.0
    %2673 = vmatprep.subr.mxu0 0.0
    %2674 = vmatpush1.msra.mxu0 0.0
    %2675 = vmatprep.subr.mxu0 0.0
    %2676 = vmatpush1.msra.mxu0 0.0
    %2677 = vmatprep.subr.mxu0 0.0
    %2678 = vmatpush1.msra.mxu0 0.0
    %2679 = vmatprep.subr.mxu0 0.0
    %2680 = vmatpush1.msra.mxu0 0.0
    %2681 = vmatprep.subr.mxu0 0.0
    %2682 = vmatpush1.msra.mxu0 0.0
    %2683 = vmatprep.subr.mxu0 0.0
    %2684 = vmatpush1.msra.mxu0 0.0
    %2685 = vmatprep.subr.mxu0 0.0
    %2686 = vmatpush1.msra.mxu0 0.0
    %2687 = vmatprep.subr.mxu0 0.0
    %2688 = vmatpush1.msra.mxu0 0.0
    %2689 = vmatprep.subr.mxu0 0.0
    %2690 = vmatpush1.msra.mxu0 0.0
    %2691 = vmatprep.subr.mxu0 0.0
    %2692 = vmatpush1.msra.mxu0 0.0
    %2693 = vmatprep.subr.mxu0 0.0
    %2694 = vmatpush1.msra.mxu0 0.0
    %2695 = vmatprep.subr.mxu0 0.0
    %2696 = vmatpush1.msra.mxu0 0.0
    %2697 = vmatprep.subr.mxu0 0.0
    %2698 = vmatpush1.msra.mxu0 0.0
    %2699 = vmatprep.subr.mxu0 0.0
    %2700 = vmatpush1.msra.mxu0 0.0
    %2701 = vmatprep.subr.mxu0 0.0
    %2702 = vmatpush1.msra.mxu0 0.0
    %2703 = vmatprep.subr.mxu0 0.0
    %2704 = vmatpush1.msra.mxu0 0.0
    %2705 = vmatprep.subr.mxu0 0.0
    %2706 = vmatpush1.msra.mxu0 0.0
    %2707 = vmatprep.subr.mxu0 0.0
    %2708 = vmatpush1.msra.mxu0 0.0
    %2709 = vmatprep.subr.mxu0 0.0
    %2710 = vmatpush1.msra.mxu0 0.0
    %2711 = vmatprep.subr.mxu0 0.0
    %2712 = vmatpush1.msra.mxu0 0.0
    %2713 = vmatprep.subr.mxu0 0.0
    %2714 = vmatpush1.msra.mxu0 0.0
    %2715 = vmatprep.subr.mxu0 0.0
    %2716 = vmatpush1.msra.mxu0 0.0
    %2717 = vmatprep.subr.mxu0 0.0
    %2718 = vmatpush1.msra.mxu0 0.0
    %2719 = vmatprep.subr.mxu0 0.0
    %2720 = vmatpush1.msra.mxu0 0.0
    %2721 = vmatprep.subr.mxu0 0.0
    %2722 = vmatpush1.msra.mxu0 0.0
    %2723 = vmatprep.subr.mxu0 0.0
    %2724 = vmatpush1.msra.mxu0 0.0
    %2725 = vmatprep.mubr.f32.mxu0 0.0
    %2726 = vmatmul.mubr.f32.gmra.mrb[0].mxu0 %v2659
    %v2727 = vpop.f32.mrb[0].mxu0
    %v2728 = vadd.f32 0.0, %v2727
    %v2729 = vpop.f32.mrb[0].mxu0
    %2730 = vdwg.mxu0
    %v2731 = vld [vmem:[%s41] sm:$0x1]
    %v2733 = vlaneseq
    %v2734 = vshrl.u32 %v2733, 7
    %v2735 = vsub.s32 0, %v2734
    %v2736 = vrot.slane %v2731, %v2735
    %v2738 = vadd.f32 %v1939, %v2736
    %v2739 = vadd.f32 %v2728, %v2736
    %v2740 = vadd.f32 %v1049, %v2738
    %v2741 = vadd.f32 %v1049, %v2739
    %v2742 = vld [vmem:[%s43] sm:$0x1]
    %v2743 = vld [vmem:[%s45] sm:$0x1]
    %v2744 = vsel %vm830, %v2740, 0.0
    %2745 = vadd.xlane.f32.xlu0 %v2744
    %v2746 = vpop.xlane.xlu0 %2745
    %v2747 = vsel %vm830, %v2741, 0.0
    %2748 = vadd.xlane.f32.xlu0 %v2747
    %v2749 = vpop.xlane.xlu0 %2748
    %v2750 = vrcp.pop 24.0
    %v2751 = vmul.f32 %v2746, %v2750
    %v2752 = vmul.f32 %v2749, %v2750
    %v2753 = vsub.f32 %v2740, %v2751
    %v2754 = vsub.f32 %v2741, %v2752
    %v2755 = vmul.f32 %v2753, %v2753
    %v2756 = vmul.f32 %v2754, %v2754
    %v2757 = vsel %vm830, %v2755, 0.0
    %2758 = vadd.xlane.f32.xlu0 %v2757
    %v2759 = vpop.xlane.xlu0 %2758
    %v2760 = vsel %vm830, %v2756, 0.0
    %2761 = vadd.xlane.f32.xlu0 %v2760
    %v2762 = vpop.xlane.xlu0 %2761
    %v2763 = vmul.f32 %v2759, %v2750
    %v2764 = vmul.f32 %v2762, %v2750
    %v2765 = vadd.f32 %v2763, 1e-12
    %v2766 = vadd.f32 %v2764, 1e-12
    %v2767 = vrsqrt.pop %v2765
    %v2768 = vrsqrt.pop %v2766
    %v2769 = vmul.f32 %v2753, %v2767
    %v2770 = vmul.f32 %v2754, %v2768
    %v2772 = vlaneseq
    %v2773 = vshrl.u32 %v2772, 7
    %v2774 = vsub.s32 0, %v2773
    %v2775 = vrot.slane %v2742, %v2774
    %v2777 = vmul.f32 %v2769, %v2775
    %v2778 = vmul.f32 %v2770, %v2775
    %v2780 = vlaneseq
    %v2781 = vshrl.u32 %v2780, 7
    %v2782 = vsub.s32 0, %v2781
    %v2783 = vrot.slane %v2743, %v2782
    %v2785 = vadd.f32 %v2777, %v2783
    %v2786 = vadd.f32 %v2778, %v2783
    %v2787 = vld [vmem:[%s47] sm:$0xff]
    %v2788 = vld [vmem:[%s47 + $0x8] sm:$0xff]
    %v2789 = vld [vmem:[%s47 + $0x10] sm:$0xff]
    %v2790 = vld [vmem:[%s49] sm:$0x1]
    %v2792 = vlaneseq
    %v2793 = vshrl.u32 %v2792, 7
    %v2794 = vsub.s32 0, %v2793
    %v2795 = vrot.slane %v2790, %v2794
    %v2798 = vsel %vm830, %v2785, 0
    %v2801 = vsel %vm830, %v2786, 0
    %2803 = vmatprep.subr.mxu0 0.0
    %2804 = vmatpush1.msra.mxu0 %v2787
    %2805 = vmatprep.subr.mxu0 0.0
    %2806 = vmatpush1.msra.mxu0 %v2788
    %2807 = vmatprep.subr.mxu0 0.0
    %2808 = vmatpush1.msra.mxu0 %v2789
    %2809 = vmatprep.subr.mxu0 0.0
    %2810 = vmatpush1.msra.mxu0 0.0
    %2811 = vmatprep.subr.mxu0 0.0
    %2812 = vmatpush1.msra.mxu0 0.0
    %2813 = vmatprep.subr.mxu0 0.0
    %2814 = vmatpush1.msra.mxu0 0.0
    %2815 = vmatprep.subr.mxu0 0.0
    %2816 = vmatpush1.msra.mxu0 0.0
    %2817 = vmatprep.subr.mxu0 0.0
    %2818 = vmatpush1.msra.mxu0 0.0
    %2819 = vmatprep.subr.mxu0 0.0
    %2820 = vmatpush1.msra.mxu0 0.0
    %2821 = vmatprep.subr.mxu0 0.0
    %2822 = vmatpush1.msra.mxu0 0.0
    %2823 = vmatprep.subr.mxu0 0.0
    %2824 = vmatpush1.msra.mxu0 0.0
    %2825 = vmatprep.subr.mxu0 0.0
    %2826 = vmatpush1.msra.mxu0 0.0
    %2827 = vmatprep.subr.mxu0 0.0
    %2828 = vmatpush1.msra.mxu0 0.0
    %2829 = vmatprep.subr.mxu0 0.0
    %2830 = vmatpush1.msra.mxu0 0.0
    %2831 = vmatprep.subr.mxu0 0.0
    %2832 = vmatpush1.msra.mxu0 0.0
    %2833 = vmatprep.subr.mxu0 0.0
    %2834 = vmatpush1.msra.mxu0 0.0
    %2835 = vmatprep.subr.mxu0 0.0
    %2836 = vmatpush1.msra.mxu0 0.0
    %2837 = vmatprep.subr.mxu0 0.0
    %2838 = vmatpush1.msra.mxu0 0.0
    %2839 = vmatprep.subr.mxu0 0.0
    %2840 = vmatpush1.msra.mxu0 0.0
    %2841 = vmatprep.subr.mxu0 0.0
    %2842 = vmatpush1.msra.mxu0 0.0
    %2843 = vmatprep.subr.mxu0 0.0
    %2844 = vmatpush1.msra.mxu0 0.0
    %2845 = vmatprep.subr.mxu0 0.0
    %2846 = vmatpush1.msra.mxu0 0.0
    %2847 = vmatprep.subr.mxu0 0.0
    %2848 = vmatpush1.msra.mxu0 0.0
    %2849 = vmatprep.subr.mxu0 0.0
    %2850 = vmatpush1.msra.mxu0 0.0
    %2851 = vmatprep.subr.mxu0 0.0
    %2852 = vmatpush1.msra.mxu0 0.0
    %2853 = vmatprep.subr.mxu0 0.0
    %2854 = vmatpush1.msra.mxu0 0.0
    %2855 = vmatprep.subr.mxu0 0.0
    %2856 = vmatpush1.msra.mxu0 0.0
    %2857 = vmatprep.subr.mxu0 0.0
    %2858 = vmatpush1.msra.mxu0 0.0
    %2859 = vmatprep.subr.mxu0 0.0
    %2860 = vmatpush1.msra.mxu0 0.0
    %2861 = vmatprep.subr.mxu0 0.0
    %2862 = vmatpush1.msra.mxu0 0.0
    %2863 = vmatprep.subr.mxu0 0.0
    %2864 = vmatpush1.msra.mxu0 0.0
    %2865 = vmatprep.subr.mxu0 0.0
    %2866 = vmatpush1.msra.mxu0 0.0
    %2867 = vmatprep.mubr.f32.mxu0 0.0
    %2868 = vmatmul.mubr.f32.gmra.mrb[0].mxu0 %v2798
    %v2869 = vpop.f32.mrb[0].mxu0
    %v2870 = vadd.f32 %v2795, %v2869
    %v2871 = vpop.f32.mrb[0].mxu0
    %2872 = vmatprep.mubr.f32.mxu0 0.0
    %2873 = vmatmul.mubr.f32.gmra.mrb[0].mxu0 %v2801
    %v2874 = vpop.f32.mrb[0].mxu0
    %v2875 = vadd.f32 %v2795, %v2874
    %v2876 = vpop.f32.mrb[0].mxu0
    %2877 = vdwg.mxu0
    %v2878 = vmul.f32 %v2870, 0.5
    %v2879 = vmul.f32 %v2875, 0.5
    %v2880 = vmul.f32 %v2870, 0.7978846
    %v2881 = vmul.f32 %v2875, 0.7978846
    %v2882 = vmul.f32 %v2870, 0.044715
    %v2883 = vmul.f32 %v2875, 0.044715
    %v2884 = vmul.f32 %v2882, %v2870
    %v2885 = vmul.f32 %v2883, %v2875
    %v2886 = vadd.f32 %v2884, 1.0
    %v2887 = vadd.f32 %v2885, 1.0
    %v2888 = vmul.f32 %v2880, %v2886
    %v2889 = vmul.f32 %v2881, %v2887
    %v2890 = vtanh.pop %v2888
    %v2891 = vtanh.pop %v2889
    %v2892 = vadd.f32 %v2890, 1.0
    %v2893 = vadd.f32 %v2891, 1.0
    %v2894 = vmul.f32 %v2878, %v2892
    %v2895 = vmul.f32 %v2879, %v2893
    %v2896 = vld [vmem:[%s51] sm:$0xff]
    %v2897 = vld [vmem:[%s51 + $0x8] sm:$0xff]
    %v2898 = vld [vmem:[%s51 + $0x10] sm:$0xff]
    %v2899 = vld [vmem:[%s51 + $0x18] sm:$0xff]
    %v2900 = vld [vmem:[%s51 + $0x20] sm:$0xff]
    %v2901 = vld [vmem:[%s51 + $0x28] sm:$0xff]
    %v2902 = vld [vmem:[%s51 + $0x30] sm:$0xff]
    %v2903 = vld [vmem:[%s51 + $0x38] sm:$0xff]
    %v2904 = vld [vmem:[%s51 + $0x40] sm:$0xff]
    %v2905 = vld [vmem:[%s51 + $0x48] sm:$0xff]
    %v2906 = vld [vmem:[%s51 + $0x50] sm:$0xff]
    %v2907 = vld [vmem:[%s51 + $0x58] sm:$0xff]
    %v2908 = vld [vmem:[%s53] sm:$0x1]
    %v2910 = vlaneseq
    %v2911 = vshrl.u32 %v2910, 7
    %v2912 = vsub.s32 0, %v2911
    %v2913 = vrot.slane %v2908, %v2912
    %vm2915 = vcmask 785408
    %v2917 = vsel %vm2915, %v2894, 0
    %v2920 = vsel %vm2915, %v2895, 0
    %2922 = vmatprep.subr.mxu0 0.0
    %2923 = vmatpush1.msra.mxu0 %v2896
    %2924 = vmatprep.subr.mxu0 0.0
    %2925 = vmatpush1.msra.mxu0 %v2897
    %2926 = vmatprep.subr.mxu0 0.0
    %2927 = vmatpush1.msra.mxu0 %v2898
    %2928 = vmatprep.subr.mxu0 0.0
    %2929 = vmatpush1.msra.mxu0 %v2899
    %2930 = vmatprep.subr.mxu0 0.0
    %2931 = vmatpush1.msra.mxu0 %v2900
    %2932 = vmatprep.subr.mxu0 0.0
    %2933 = vmatpush1.msra.mxu0 %v2901
    %2934 = vmatprep.subr.mxu0 0.0
    %2935 = vmatpush1.msra.mxu0 %v2902
    %2936 = vmatprep.subr.mxu0 0.0
    %2937 = vmatpush1.msra.mxu0 %v2903
    %2938 = vmatprep.subr.mxu0 0.0
    %2939 = vmatpush1.msra.mxu0 %v2904
    %2940 = vmatprep.subr.mxu0 0.0
    %2941 = vmatpush1.msra.mxu0 %v2905
    %2942 = vmatprep.subr.mxu0 0.0
    %2943 = vmatpush1.msra.mxu0 %v2906
    %2944 = vmatprep.subr.mxu0 0.0
    %2945 = vmatpush1.msra.mxu0 %v2907
    %2946 = vmatprep.subr.mxu0 0.0
    %2947 = vmatpush1.msra.mxu0 0.0
    %2948 = vmatprep.subr.mxu0 0.0
    %2949 = vmatpush1.msra.mxu0 0.0
    %2950 = vmatprep.subr.mxu0 0.0
    %2951 = vmatpush1.msra.mxu0 0.0
    %2952 = vmatprep.subr.mxu0 0.0
    %2953 = vmatpush1.msra.mxu0 0.0
    %2954 = vmatprep.subr.mxu0 0.0
    %2955 = vmatpush1.msra.mxu0 0.0
    %2956 = vmatprep.subr.mxu0 0.0
    %2957 = vmatpush1.msra.mxu0 0.0
    %2958 = vmatprep.subr.mxu0 0.0
    %2959 = vmatpush1.msra.mxu0 0.0
    %2960 = vmatprep.subr.mxu0 0.0
    %2961 = vmatpush1.msra.mxu0 0.0
    %2962 = vmatprep.subr.mxu0 0.0
    %2963 = vmatpush1.msra.mxu0 0.0
    %2964 = vmatprep.subr.mxu0 0.0
    %2965 = vmatpush1.msra.mxu0 0.0
    %2966 = vmatprep.subr.mxu0 0.0
    %2967 = vmatpush1.msra.mxu0 0.0
    %2968 = vmatprep.subr.mxu0 0.0
    %2969 = vmatpush1.msra.mxu0 0.0
    %2970 = vmatprep.subr.mxu0 0.0
    %2971 = vmatpush1.msra.mxu0 0.0
    %2972 = vmatprep.subr.mxu0 0.0
    %2973 = vmatpush1.msra.mxu0 0.0
    %2974 = vmatprep.subr.mxu0 0.0
    %2975 = vmatpush1.msra.mxu0 0.0
    %2976 = vmatprep.subr.mxu0 0.0
    %2977 = vmatpush1.msra.mxu0 0.0
    %2978 = vmatprep.subr.mxu0 0.0
    %2979 = vmatpush1.msra.mxu0 0.0
    %2980 = vmatprep.subr.mxu0 0.0
    %2981 = vmatpush1.msra.mxu0 0.0
    %2982 = vmatprep.subr.mxu0 0.0
    %2983 = vmatpush1.msra.mxu0 0.0
    %2984 = vmatprep.subr.mxu0 0.0
    %2985 = vmatpush1.msra.mxu0 0.0
    %2986 = vmatprep.mubr.f32.mxu0 0.0
    %2987 = vmatmul.mubr.f32.gmra.mrb[0].mxu0 %v2917
    %v2988 = vpop.f32.mrb[0].mxu0
    %v2989 = vadd.f32 %v2913, %v2988
    %v2990 = vpop.f32.mrb[0].mxu0
    %2991 = vmatprep.mubr.f32.mxu0 0.0
    %2992 = vmatmul.mubr.f32.gmra.mrb[0].mxu0 %v2920
    %v2993 = vpop.f32.mrb[0].mxu0
    %v2994 = vadd.f32 %v2913, %v2993
    %v2995 = vpop.f32.mrb[0].mxu0
    %2996 = vdwg.mxu0
    %v2997 = vadd.f32 %v2785, %v2989
    %v2998 = vadd.f32 %v2786, %v2994
    %v2999 = vld [vmem:[%s55] sm:$0x1]
    %v3000 = vld [vmem:[%s57] sm:$0x1]
    %v3001 = vsel %vm830, %v2997, 0.0
    %3002 = vadd.xlane.f32.xlu0 %v3001
    %v3003 = vpop.xlane.xlu0 %3002
    %v3004 = vsel %vm830, %v2998, 0.0
    %3005 = vadd.xlane.f32.xlu0 %v3004
    %v3006 = vpop.xlane.xlu0 %3005
    %v3007 = vmul.f32 %v3003, %v2750
    %v3008 = vmul.f32 %v3006, %v2750
    %v3009 = vsub.f32 %v2997, %v3007
    %v3010 = vsub.f32 %v2998, %v3008
    %v3011 = vmul.f32 %v3009, %v3009
    %v3012 = vmul.f32 %v3010, %v3010
    %v3013 = vsel %vm830, %v3011, 0.0
    %3014 = vadd.xlane.f32.xlu0 %v3013
    %v3015 = vpop.xlane.xlu0 %3014
    %v3016 = vsel %vm830, %v3012, 0.0
    %3017 = vadd.xlane.f32.xlu0 %v3016
    %v3018 = vpop.xlane.xlu0 %3017
    %v3019 = vmul.f32 %v3015, %v2750
    %v3020 = vmul.f32 %v3018, %v2750
    %v3021 = vadd.f32 %v3019, 1e-12
    %v3022 = vadd.f32 %v3020, 1e-12
    %v3023 = vrsqrt.pop %v3021
    %v3024 = vrsqrt.pop %v3022
    %v3025 = vmul.f32 %v3009, %v3023
    %v3026 = vmul.f32 %v3010, %v3024
    %v3028 = vlaneseq
    %v3029 = vshrl.u32 %v3028, 7
    %v3030 = vsub.s32 0, %v3029
    %v3031 = vrot.slane %v2999, %v3030
    %v3033 = vmul.f32 %v3025, %v3031
    %v3034 = vmul.f32 %v3026, %v3031
    %v3036 = vlaneseq
    %v3037 = vshrl.u32 %v3036, 7
    %v3038 = vsub.s32 0, %v3037
    %v3039 = vrot.slane %v3000, %v3038
    %v3041 = vadd.f32 %v3033, %v3039
    %v3042 = vadd.f32 %v3034, %v3039
    %v3043 = vld [vmem:[%s59] sm:$0xff]
    %v3044 = vld [vmem:[%s59 + $0x8] sm:$0xff]
    %v3045 = vld [vmem:[%s59 + $0x10] sm:$0xff]
    %v3046 = vld [vmem:[%s61] sm:$0x1]
    %v3048 = vlaneseq
    %v3049 = vshrl.u32 %v3048, 7
    %v3050 = vsub.s32 0, %v3049
    %v3051 = vrot.slane %v3046, %v3050
    %v3054 = vsel %vm830, %v3041, 0
    %v3057 = vsel %vm830, %v3042, 0
    %3059 = vmatprep.subr.mxu0 0.0
    %3060 = vmatpush1.msra.mxu0 %v3043
    %3061 = vmatprep.subr.mxu0 0.0
    %3062 = vmatpush1.msra.mxu0 %v3044
    %3063 = vmatprep.subr.mxu0 0.0
    %3064 = vmatpush1.msra.mxu0 %v3045
    %3065 = vmatprep.subr.mxu0 0.0
    %3066 = vmatpush1.msra.mxu0 0.0
    %3067 = vmatprep.subr.mxu0 0.0
    %3068 = vmatpush1.msra.mxu0 0.0
    %3069 = vmatprep.subr.mxu0 0.0
    %3070 = vmatpush1.msra.mxu0 0.0
    %3071 = vmatprep.subr.mxu0 0.0
    %3072 = vmatpush1.msra.mxu0 0.0
    %3073 = vmatprep.subr.mxu0 0.0
    %3074 = vmatpush1.msra.mxu0 0.0
    %3075 = vmatprep.subr.mxu0 0.0
    %3076 = vmatpush1.msra.mxu0 0.0
    %3077 = vmatprep.subr.mxu0 0.0
    %3078 = vmatpush1.msra.mxu0 0.0
    %3079 = vmatprep.subr.mxu0 0.0
    %3080 = vmatpush1.msra.mxu0 0.0
    %3081 = vmatprep.subr.mxu0 0.0
    %3082 = vmatpush1.msra.mxu0 0.0
    %3083 = vmatprep.subr.mxu0 0.0
    %3084 = vmatpush1.msra.mxu0 0.0
    %3085 = vmatprep.subr.mxu0 0.0
    %3086 = vmatpush1.msra.mxu0 0.0
    %3087 = vmatprep.subr.mxu0 0.0
    %3088 = vmatpush1.msra.mxu0 0.0
    %3089 = vmatprep.subr.mxu0 0.0
    %3090 = vmatpush1.msra.mxu0 0.0
    %3091 = vmatprep.subr.mxu0 0.0
    %3092 = vmatpush1.msra.mxu0 0.0
    %3093 = vmatprep.subr.mxu0 0.0
    %3094 = vmatpush1.msra.mxu0 0.0
    %3095 = vmatprep.subr.mxu0 0.0
    %3096 = vmatpush1.msra.mxu0 0.0
    %3097 = vmatprep.subr.mxu0 0.0
    %3098 = vmatpush1.msra.mxu0 0.0
    %3099 = vmatprep.subr.mxu0 0.0
    %3100 = vmatpush1.msra.mxu0 0.0
    %3101 = vmatprep.subr.mxu0 0.0
    %3102 = vmatpush1.msra.mxu0 0.0
    %3103 = vmatprep.subr.mxu0 0.0
    %3104 = vmatpush1.msra.mxu0 0.0
    %3105 = vmatprep.subr.mxu0 0.0
    %3106 = vmatpush1.msra.mxu0 0.0
    %3107 = vmatprep.subr.mxu0 0.0
    %3108 = vmatpush1.msra.mxu0 0.0
    %3109 = vmatprep.subr.mxu0 0.0
    %3110 = vmatpush1.msra.mxu0 0.0
    %3111 = vmatprep.subr.mxu0 0.0
    %3112 = vmatpush1.msra.mxu0 0.0
    %3113 = vmatprep.subr.mxu0 0.0
    %3114 = vmatpush1.msra.mxu0 0.0
    %3115 = vmatprep.subr.mxu0 0.0
    %3116 = vmatpush1.msra.mxu0 0.0
    %3117 = vmatprep.subr.mxu0 0.0
    %3118 = vmatpush1.msra.mxu0 0.0
    %3119 = vmatprep.subr.mxu0 0.0
    %3120 = vmatpush1.msra.mxu0 0.0
    %3121 = vmatprep.subr.mxu0 0.0
    %3122 = vmatpush1.msra.mxu0 0.0
    %3123 = vmatprep.mubr.f32.mxu0 0.0
    %3124 = vmatmul.mubr.f32.gmra.mrb[0].mxu0 %v3054
    %v3125 = vpop.f32.mrb[0].mxu0
    %v3126 = vadd.f32 %v3051, %v3125
    %v3127 = vpop.f32.mrb[0].mxu0
    %3128 = vmatprep.mubr.f32.mxu0 0.0
    %3129 = vmatmul.mubr.f32.gmra.mrb[0].mxu0 %v3057
    %v3130 = vpop.f32.mrb[0].mxu0
    %v3131 = vadd.f32 %v3051, %v3130
    %v3132 = vpop.f32.mrb[0].mxu0
    %3133 = vdwg.mxu0
    %v3134 = vsel %vm540, %v3126, 0.0
    %3135 = vadd.xlane.f32.xlu0 %v3134
    %v3136 = vpop.xlane.xlu0 %3135
    %v3137 = vsel %vm540, %v612, 0.0
    %3138 = vadd.xlane.f32.xlu0 %v3137
    %v3139 = vpop.xlane.xlu0 %3138
    %v3140 = vsel %vm540, %v3131, 0.0
    %3141 = vadd.xlane.f32.xlu0 %v3140
    %v3142 = vpop.xlane.xlu0 %3141
    %v3143 = vsel %vm540, %v613, 0.0
    %3144 = vadd.xlane.f32.xlu0 %v3143
    %v3145 = vpop.xlane.xlu0 %3144
    %v3146 = vmul.f32 %v3136, %v553
    %v3147 = vmul.f32 %v3139, %v553
    %v3148 = vmul.f32 %v3142, %v553
    %v3149 = vmul.f32 %v3145, %v553
    %v3150 = vsub.f32 %v3126, %v3146
    %v3151 = vsub.f32 %v612, %v3147
    %v3152 = vsub.f32 %v3131, %v3148
    %v3153 = vsub.f32 %v613, %v3149
    %v3154 = vmul.f32 %v3150, %v3150
    %v3155 = vmul.f32 %v3151, %v3151
    %v3156 = vmul.f32 %v3152, %v3152
    %v3157 = vmul.f32 %v3153, %v3153
    %v3158 = vsel %vm540, %v3154, 0.0
    %3159 = vadd.xlane.f32.xlu0 %v3158
    %v3160 = vpop.xlane.xlu0 %3159
    %v3161 = vsel %vm540, %v3155, 0.0
    %3162 = vadd.xlane.f32.xlu0 %v3161
    %v3163 = vpop.xlane.xlu0 %3162
    %v3164 = vsel %vm540, %v3156, 0.0
    %3165 = vadd.xlane.f32.xlu0 %v3164
    %v3166 = vpop.xlane.xlu0 %3165
    %v3167 = vsel %vm540, %v3157, 0.0
    %3168 = vadd.xlane.f32.xlu0 %v3167
    %v3169 = vpop.xlane.xlu0 %3168
    %v3170 = vmul.f32 %v3160, %v553
    %v3171 = vmul.f32 %v3163, %v553
    %v3172 = vmul.f32 %v3166, %v553
    %v3173 = vmul.f32 %v3169, %v553
    %v3174 = vadd.f32 %v3170, 1e-05
    %v3175 = vadd.f32 %v3171, 1e-05
    %v3176 = vadd.f32 %v3172, 1e-05
    %v3177 = vadd.f32 %v3173, 1e-05
    %v3178 = vrsqrt.pop %v3174
    %v3179 = vrsqrt.pop %v3175
    %v3180 = vrsqrt.pop %v3176
    %v3181 = vrsqrt.pop %v3177
    %v3182 = vmul.f32 %v3150, %v3178
    %v3183 = vmul.f32 %v3151, %v3179
    %v3184 = vmul.f32 %v3152, %v3180
    %v3185 = vmul.f32 %v3153, %v3181
    %v3186 = vmul.f32 %v3182, %v598
    %v3187 = vmul.f32 %v3183, %v598
    %v3188 = vmul.f32 %v3184, %v598
    %v3189 = vmul.f32 %v3185, %v598
    %v3190 = vadd.f32 %v3186, %v608
    %v3191 = vadd.f32 %v3187, %v608
    %v3192 = vadd.f32 %v3188, %v608
    %v3193 = vadd.f32 %v3189, %v608
    %v3194 = vlaneseq
    %v3195 = vshrl.u32 %v3194, 7
    %v3196 = vadd.s32 %v3195, 8
    %vm3197 = vcmp.gt.s32.totalorder %v412, %v3195
    %vm3198 = vcmp.gt.s32.totalorder %v412, %v3196
    %v3199 = vld [vmem:[%s7] sm:$0x1]
    %vm3200 = vcmp.le.f32.partialorder %v3199, 0.0
    %v3201 = vsel %vm3200, 1, 0
    %v3202 = vlaneseq
    %v3203 = vshrl.u32 %v3202, 7
    %v3204 = vsub.s32 0, %v3203
    %v3205 = vrot.slane %v3201, %v3204
    %vm3206 = vcmp.eq.s32.totalorder %v3205, 1
    %vm3207 = vmor %vm3197, %vm3206
    %vm3208 = vmor %vm3198, %vm3206
    %v3209 = vld [vmem:[%s9] sm:$0x1]
    %v3210 = vmul.f32 %v3209, 0.25
    %v3212 = vlaneseq
    %v3213 = vshrl.u32 %v3212, 7
    %v3214 = vsub.s32 0, %v3213
    %v3215 = vrot.slane %v3210, %v3214
    %v3217 = vsel %vm3207, -1e+09, %v3215
    %v3218 = vsel %vm3208, -1e+09, %v3215
    %v3219 = vmul.f32 %v3209, 0.0625
    %v3221 = vlaneseq
    %v3222 = vshrl.u32 %v3221, 7
    %v3223 = vsub.s32 0, %v3222
    %v3224 = vrot.slane %v3219, %v3223
    %v3226 = vsel %vm3207, -1e+09, %v3224
    %v3227 = vsel %vm3208, -1e+09, %v3224
    %v3228 = vmul.f32 %v3209, 0.015625
    %v3230 = vlaneseq
    %v3231 = vshrl.u32 %v3230, 7
    %v3232 = vsub.s32 0, %v3231
    %v3233 = vrot.slane %v3228, %v3232
    %v3235 = vsel %vm3207, -1e+09, %v3233
    %v3236 = vsel %vm3208, -1e+09, %v3233
    %v3237 = vmul.f32 %v3209, 0.00390625
    %v3239 = vlaneseq
    %v3240 = vshrl.u32 %v3239, 7
    %v3241 = vsub.s32 0, %v3240
    %v3242 = vrot.slane %v3237, %v3241
    %v3244 = vsel %vm3207, -1e+09, %v3242
    %v3245 = vsel %vm3208, -1e+09, %v3242
    %s3246 = scalar_lea.vmem %s7, 1
    %v3247 = vld [vmem:[%s3246] sm:$0x1]
    %vm3248 = vcmp.le.f32.partialorder %v3247, 0.0
    %v3249 = vsel %vm3248, 1, 0
    %v3250 = vlaneseq
    %v3251 = vshrl.u32 %v3250, 7
    %v3252 = vsub.s32 0, %v3251
    %v3253 = vrot.slane %v3249, %v3252
    %vm3254 = vcmp.eq.s32.totalorder %v3253, 1
    %vm3255 = vmor %vm3197, %vm3254
    %vm3256 = vmor %vm3198, %vm3254
    %s3257 = scalar_lea.vmem %s9, 1
    %v3258 = vld [vmem:[%s3257] sm:$0x1]
    %v3259 = vmul.f32 %v3258, 0.25
    %v3261 = vlaneseq
    %v3262 = vshrl.u32 %v3261, 7
    %v3263 = vsub.s32 0, %v3262
    %v3264 = vrot.slane %v3259, %v3263
    %v3266 = vsel %vm3255, -1e+09, %v3264
    %v3267 = vsel %vm3256, -1e+09, %v3264
    %v3268 = vmul.f32 %v3258, 0.0625
    %v3270 = vlaneseq
    %v3271 = vshrl.u32 %v3270, 7
    %v3272 = vsub.s32 0, %v3271
    %v3273 = vrot.slane %v3268, %v3272
    %v3275 = vsel %vm3255, -1e+09, %v3273
    %v3276 = vsel %vm3256, -1e+09, %v3273
    %v3277 = vmul.f32 %v3258, 0.015625
    %v3279 = vlaneseq
    %v3280 = vshrl.u32 %v3279, 7
    %v3281 = vsub.s32 0, %v3280
    %v3282 = vrot.slane %v3277, %v3281
    %v3284 = vsel %vm3255, -1e+09, %v3282
    %v3285 = vsel %vm3256, -1e+09, %v3282
    %v3286 = vmul.f32 %v3258, 0.00390625
    %v3288 = vlaneseq
    %v3289 = vshrl.u32 %v3288, 7
    %v3290 = vsub.s32 0, %v3289
    %v3291 = vrot.slane %v3286, %v3290
    %v3293 = vsel %vm3255, -1e+09, %v3291
    %v3294 = vsel %vm3256, -1e+09, %v3291
    %v3295 = vld [vmem:[%s63] sm:$0x1]
    %v3296 = vld [vmem:[%s65] sm:$0x1]
    %v3297 = vsel %vm540, %v3190, 0.0
    %3298 = vadd.xlane.f32.xlu0 %v3297
    %v3299 = vpop.xlane.xlu0 %3298
    %v3300 = vsel %vm540, %v3191, 0.0
    %3301 = vadd.xlane.f32.xlu0 %v3300
    %v3302 = vpop.xlane.xlu0 %3301
    %v3303 = vsel %vm540, %v3192, 0.0
    %3304 = vadd.xlane.f32.xlu0 %v3303
    %v3305 = vpop.xlane.xlu0 %3304
    %v3306 = vsel %vm540, %v3193, 0.0
    %3307 = vadd.xlane.f32.xlu0 %v3306
    %v3308 = vpop.xlane.xlu0 %3307
    %v3309 = vmul.f32 %v3299, %v553
    %v3310 = vmul.f32 %v3302, %v553
    %v3311 = vmul.f32 %v3305, %v553
    %v3312 = vmul.f32 %v3308, %v553
    %v3313 = vsub.f32 %v3190, %v3309
    %v3314 = vsub.f32 %v3191, %v3310
    %v3315 = vsub.f32 %v3192, %v3311
    %v3316 = vsub.f32 %v3193, %v3312
    %v3317 = vmul.f32 %v3313, %v3313
    %v3318 = vmul.f32 %v3314, %v3314
    %v3319 = vmul.f32 %v3315, %v3315
    %v3320 = vmul.f32 %v3316, %v3316
    %v3321 = vsel %vm540, %v3317, 0.0
    %3322 = vadd.xlane.f32.xlu0 %v3321
    %v3323 = vpop.xlane.xlu0 %3322
    %v3324 = vsel %vm540, %v3318, 0.0
    %3325 = vadd.xlane.f32.xlu0 %v3324
    %v3326 = vpop.xlane.xlu0 %3325
    %v3327 = vsel %vm540, %v3319, 0.0
    %3328 = vadd.xlane.f32.xlu0 %v3327
    %v3329 = vpop.xlane.xlu0 %3328
    %v3330 = vsel %vm540, %v3320, 0.0
    %3331 = vadd.xlane.f32.xlu0 %v3330
    %v3332 = vpop.xlane.xlu0 %3331
    %v3333 = vmul.f32 %v3323, %v553
    %v3334 = vmul.f32 %v3326, %v553
    %v3335 = vmul.f32 %v3329, %v553
    %v3336 = vmul.f32 %v3332, %v553
    %v3337 = vadd.f32 %v3333, 1e-05
    %v3338 = vadd.f32 %v3334, 1e-05
    %v3339 = vadd.f32 %v3335, 1e-05
    %v3340 = vadd.f32 %v3336, 1e-05
    %v3341 = vrsqrt.pop %v3337
    %v3342 = vrsqrt.pop %v3338
    %v3343 = vrsqrt.pop %v3339
    %v3344 = vrsqrt.pop %v3340
    %v3345 = vmul.f32 %v3313, %v3341
    %v3346 = vmul.f32 %v3314, %v3342
    %v3347 = vmul.f32 %v3315, %v3343
    %v3348 = vmul.f32 %v3316, %v3344
    %v3350 = vlaneseq
    %v3351 = vshrl.u32 %v3350, 7
    %v3352 = vsub.s32 0, %v3351
    %v3353 = vrot.slane %v3295, %v3352
    %v3355 = vmul.f32 %v3345, %v3353
    %v3356 = vmul.f32 %v3346, %v3353
    %v3357 = vmul.f32 %v3347, %v3353
    %v3358 = vmul.f32 %v3348, %v3353
    %v3360 = vlaneseq
    %v3361 = vshrl.u32 %v3360, 7
    %v3362 = vsub.s32 0, %v3361
    %v3363 = vrot.slane %v3296, %v3362
    %v3365 = vadd.f32 %v3355, %v3363
    %v3366 = vadd.f32 %v3356, %v3363
    %v3367 = vadd.f32 %v3357, %v3363
    %v3368 = vadd.f32 %v3358, %v3363
    %v3369 = vld [vmem:[%s67] sm:$0xff]
    %v3370 = vld [vmem:[%s67 + $0x8] sm:$0xff]
    %v3371 = vld [vmem:[%s67 + $0x10] sm:$0xff]
    %v3372 = vld [vmem:[%s67 + $0x18] sm:$0xff]
    %v3373 = vld [vmem:[%s69] sm:$0x1]
    %v3375 = vlaneseq
    %v3376 = vshrl.u32 %v3375, 7
    %v3377 = vsub.s32 0, %v3376
    %v3378 = vrot.slane %v3373, %v3377
    %v3381 = vsel %vm540, %v3365, 0
    %v3384 = vsel %vm540, %v3366, 0
    %v3387 = vsel %vm540, %v3367, 0
    %v3390 = vsel %vm540, %v3368, 0
    %3392 = vmatprep.subr.mxu0 0.0
    %3393 = vmatpush1.msra.mxu0 %v3369
    %3394 = vmatprep.subr.mxu0 0.0
    %3395 = vmatpush1.msra.mxu0 %v3370
    %3396 = vmatprep.subr.mxu0 0.0
    %3397 = vmatpush1.msra.mxu0 %v3371
    %3398 = vmatprep.subr.mxu0 0.0
    %3399 = vmatpush1.msra.mxu0 %v3372
    %3400 = vmatprep.subr.mxu0 0.0
    %3401 = vmatpush1.msra.mxu0 0.0
    %3402 = vmatprep.subr.mxu0 0.0
    %3403 = vmatpush1.msra.mxu0 0.0
    %3404 = vmatprep.subr.mxu0 0.0
    %3405 = vmatpush1.msra.mxu0 0.0
    %3406 = vmatprep.subr.mxu0 0.0
    %3407 = vmatpush1.msra.mxu0 0.0
    %3408 = vmatprep.subr.mxu0 0.0
    %3409 = vmatpush1.msra.mxu0 0.0
    %3410 = vmatprep.subr.mxu0 0.0
    %3411 = vmatpush1.msra.mxu0 0.0
    %3412 = vmatprep.subr.mxu0 0.0
    %3413 = vmatpush1.msra.mxu0 0.0
    %3414 = vmatprep.subr.mxu0 0.0
    %3415 = vmatpush1.msra.mxu0 0.0
    %3416 = vmatprep.subr.mxu0 0.0
    %3417 = vmatpush1.msra.mxu0 0.0
    %3418 = vmatprep.subr.mxu0 0.0
    %3419 = vmatpush1.msra.mxu0 0.0
    %3420 = vmatprep.subr.mxu0 0.0
    %3421 = vmatpush1.msra.mxu0 0.0
    %3422 = vmatprep.subr.mxu0 0.0
    %3423 = vmatpush1.msra.mxu0 0.0
    %3424 = vmatprep.subr.mxu0 0.0
    %3425 = vmatpush1.msra.mxu0 0.0
    %3426 = vmatprep.subr.mxu0 0.0
    %3427 = vmatpush1.msra.mxu0 0.0
    %3428 = vmatprep.subr.mxu0 0.0
    %3429 = vmatpush1.msra.mxu0 0.0
    %3430 = vmatprep.subr.mxu0 0.0
    %3431 = vmatpush1.msra.mxu0 0.0
    %3432 = vmatprep.subr.mxu0 0.0
    %3433 = vmatpush1.msra.mxu0 0.0
    %3434 = vmatprep.subr.mxu0 0.0
    %3435 = vmatpush1.msra.mxu0 0.0
    %3436 = vmatprep.subr.mxu0 0.0
    %3437 = vmatpush1.msra.mxu0 0.0
    %3438 = vmatprep.subr.mxu0 0.0
    %3439 = vmatpush1.msra.mxu0 0.0
    %3440 = vmatprep.subr.mxu0 0.0
    %3441 = vmatpush1.msra.mxu0 0.0
    %3442 = vmatprep.subr.mxu0 0.0
    %3443 = vmatpush1.msra.mxu0 0.0
    %3444 = vmatprep.subr.mxu0 0.0
    %3445 = vmatpush1.msra.mxu0 0.0
    %3446 = vmatprep.subr.mxu0 0.0
    %3447 = vmatpush1.msra.mxu0 0.0
    %3448 = vmatprep.subr.mxu0 0.0
    %3449 = vmatpush1.msra.mxu0 0.0
    %3450 = vmatprep.subr.mxu0 0.0
    %3451 = vmatpush1.msra.mxu0 0.0
    %3452 = vmatprep.subr.mxu0 0.0
    %3453 = vmatpush1.msra.mxu0 0.0
    %3454 = vmatprep.subr.mxu0 0.0
    %3455 = vmatpush1.msra.mxu0 0.0
    %3456 = vmatprep.mubr.f32.mxu0 0.0
    %3457 = vmatmul.mubr.f32.gmra.mrb[0].mxu0 %v3381
    %v3458 = vpop.f32.mrb[0].mxu0
    %v3459 = vadd.f32 %v3378, %v3458
    %v3460 = vpop.f32.mrb[0].mxu0
    %3461 = vmatprep.mubr.f32.mxu0 0.0
    %3462 = vmatmul.mubr.f32.gmra.mrb[0].mxu0 %v3384
    %v3463 = vpop.f32.mrb[0].mxu0
    %v3464 = vadd.f32 %v3378, %v3463
    %v3465 = vpop.f32.mrb[0].mxu0
    %3466 = vmatprep.mubr.f32.mxu0 0.0
    %3467 = vmatmul.mubr.f32.gmra.mrb[0].mxu0 %v3387
    %v3468 = vpop.f32.mrb[0].mxu0
    %v3469 = vadd.f32 %v3378, %v3468
    %v3470 = vpop.f32.mrb[0].mxu0
    %3471 = vmatprep.mubr.f32.mxu0 0.0
    %3472 = vmatmul.mubr.f32.gmra.mrb[0].mxu0 %v3390
    %v3473 = vpop.f32.mrb[0].mxu0
    %v3474 = vadd.f32 %v3378, %v3473
    %v3475 = vpop.f32.mrb[0].mxu0
    %3476 = vdwg.mxu0
    %v3477 = vld [vmem:[%s71] sm:$0xff]
    %v3478 = vld [vmem:[%s71 + $0x8] sm:$0xff]
    %v3479 = vld [vmem:[%s71 + $0x10] sm:$0xff]
    %v3480 = vld [vmem:[%s71 + $0x18] sm:$0xff]
    %3483 = vrot.lane.b32.xlu0 %v3459, 96
    %v3484 = vpop.permute.xlu0 %3483
    %3485 = vrot.lane.b32.xlu0 %v3464, 96
    %v3486 = vpop.permute.xlu0 %3485
    %vm3487 = vcmask 64512
    %v3488 = vsel %vm3487, %v3459, 0
    %v3490 = vsel %vm3487, %v3464, 0
    %v3492 = vsel %vm3487, %v3484, 0
    %v3494 = vsel %vm3487, %v3486, 0
    %3496 = vmatprep.subr.mxu0 0.0
    %3497 = vmatpush1.xpose.msra.mxu0 %v3492
    %3498 = vmatprep.subr.mxu0 0.0
    %3499 = vmatpush1.xpose.msra.mxu0 %v3494
    %3500 = vmatprep.subr.mxu0 0.0
    %3501 = vmatpush1.xpose.msra.mxu0 0.0
    %3502 = vmatprep.subr.mxu0 0.0
    %3503 = vmatpush1.xpose.msra.mxu0 0.0
    %3504 = vmatprep.subr.mxu0 0.0
    %3505 = vmatpush1.xpose.msra.mxu0 0.0
    %3506 = vmatprep.subr.mxu0 0.0
    %3507 = vmatpush1.xpose.msra.mxu0 0.0
    %3508 = vmatprep.subr.mxu0 0.0
    %3509 = vmatpush1.xpose.msra.mxu0 0.0
    %3510 = vmatprep.subr.mxu0 0.0
    %3511 = vmatpush1.xpose.msra.mxu0 0.0
    %3512 = vmatprep.subr.mxu0 0.0
    %3513 = vmatpush1.xpose.msra.mxu0 0.0
    %3514 = vmatprep.subr.mxu0 0.0
    %3515 = vmatpush1.xpose.msra.mxu0 0.0
    %3516 = vmatprep.subr.mxu0 0.0
    %3517 = vmatpush1.xpose.msra.mxu0 0.0
    %3518 = vmatprep.subr.mxu0 0.0
    %3519 = vmatpush1.xpose.msra.mxu0 0.0
    %3520 = vmatprep.subr.mxu0 0.0
    %3521 = vmatpush1.xpose.msra.mxu0 0.0
    %3522 = vmatprep.subr.mxu0 0.0
    %3523 = vmatpush1.xpose.msra.mxu0 0.0
    %3524 = vmatprep.subr.mxu0 0.0
    %3525 = vmatpush1.xpose.msra.mxu0 0.0
    %3526 = vmatprep.subr.mxu0 0.0
    %3527 = vmatpush1.xpose.msra.mxu0 0.0
    %3528 = vmatprep.subr.mxu0 0.0
    %3529 = vmatpush1.xpose.msra.mxu0 0.0
    %3530 = vmatprep.subr.mxu0 0.0
    %3531 = vmatpush1.xpose.msra.mxu0 0.0
    %3532 = vmatprep.subr.mxu0 0.0
    %3533 = vmatpush1.xpose.msra.mxu0 0.0
    %3534 = vmatprep.subr.mxu0 0.0
    %3535 = vmatpush1.xpose.msra.mxu0 0.0
    %3536 = vmatprep.subr.mxu0 0.0
    %3537 = vmatpush1.xpose.msra.mxu0 0.0
    %3538 = vmatprep.subr.mxu0 0.0
    %3539 = vmatpush1.xpose.msra.mxu0 0.0
    %3540 = vmatprep.subr.mxu0 0.0
    %3541 = vmatpush1.xpose.msra.mxu0 0.0
    %3542 = vmatprep.subr.mxu0 0.0
    %3543 = vmatpush1.xpose.msra.mxu0 0.0
    %3544 = vmatprep.subr.mxu0 0.0
    %3545 = vmatpush1.xpose.msra.mxu0 0.0
    %3546 = vmatprep.subr.mxu0 0.0
    %3547 = vmatpush1.xpose.msra.mxu0 0.0
    %3548 = vmatprep.subr.mxu0 0.0
    %3549 = vmatpush1.xpose.msra.mxu0 0.0
    %3550 = vmatprep.subr.mxu0 0.0
    %3551 = vmatpush1.xpose.msra.mxu0 0.0
    %3552 = vmatprep.subr.mxu0 0.0
    %3553 = vmatpush1.xpose.msra.mxu0 0.0
    %3554 = vmatprep.subr.mxu0 0.0
    %3555 = vmatpush1.xpose.msra.mxu0 0.0
    %3556 = vmatprep.subr.mxu0 0.0
    %3557 = vmatpush1.xpose.msra.mxu0 0.0
    %3558 = vmatprep.subr.mxu0 0.0
    %3559 = vmatpush1.xpose.msra.mxu0 0.0
    %3560 = vmatprep.mubr.f32.mxu0 0.0
    %3561 = vmatmul.mubr.f32.gmra.mrb[0].mxu0 %v3488
    %v3562 = vpop.f32.mrb[0].mxu0
    %v3563 = vadd.f32 %v3217, %v3562
    %v3564 = vpop.f32.mrb[0].mxu0
    %3565 = vmatprep.mubr.f32.mxu0 0.0
    %3566 = vmatmul.mubr.f32.gmra.mrb[0].mxu0 %v3490
    %v3567 = vpop.f32.mrb[0].mxu0
    %v3568 = vadd.f32 %v3218, %v3567
    %v3569 = vpop.f32.mrb[0].mxu0
    %3570 = vdwg.mxu0
    %vm3571 = vcmask 130048
    %v3572 = vsel %vm3571, %v3563, -inf
    %3573 = vmax.xlane.f32.xlu0 %v3572
    %v3574 = vpop.xlane.xlu0 %3573
    %v3575 = vsel %vm3571, %v3568, -inf
    %3576 = vmax.xlane.f32.xlu0 %v3575
    %v3577 = vpop.xlane.xlu0 %3576
    %v3578 = vsub.f32 %v3563, %v3574
    %v3579 = vsub.f32 %v3568, %v3577
    %v3580 = vmul.f32 %v3578, 1.442695
    %v3581 = vpow.pop %v3580
    %v3582 = vmul.f32 %v3579, 1.442695
    %v3583 = vpow.pop %v3582
    %v3584 = vsel %vm3571, %v3581, 0.0
    %3585 = vadd.xlane.f32.xlu0 %v3584
    %v3586 = vpop.xlane.xlu0 %3585
    %v3587 = vsel %vm3571, %v3583, 0.0
    %3588 = vadd.xlane.f32.xlu0 %v3587
    %v3589 = vpop.xlane.xlu0 %3588
    %v3590 = vrcp.pop %v3586
    %v3591 = vrcp.pop %v3589
    %v3592 = vmul.f32 %v3581, %v3590
    %v3593 = vmul.f32 %v3583, %v3591
    %3594 = vrot.lane.b32.xlu0 %v3459, 64
    %v3595 = vpop.permute.xlu0 %3594
    %3596 = vrot.lane.b32.xlu0 %v3464, 64
    %v3597 = vpop.permute.xlu0 %3596
    %v3601 = vsel %vm3571, %v3592, 0
    %v3604 = vsel %vm3571, %v3593, 0
    %3606 = vmatprep.subr.mxu0 0.0
    %3607 = vmatpush1.msra.mxu0 %v3595
    %3608 = vmatprep.subr.mxu0 0.0
    %3609 = vmatpush1.msra.mxu0 %v3597
    %3610 = vmatprep.subr.mxu0 0.0
    %3611 = vmatpush1.msra.mxu0 0.0
    %3612 = vmatprep.subr.mxu0 0.0
    %3613 = vmatpush1.msra.mxu0 0.0
    %3614 = vmatprep.subr.mxu0 0.0
    %3615 = vmatpush1.msra.mxu0 0.0
    %3616 = vmatprep.subr.mxu0 0.0
    %3617 = vmatpush1.msra.mxu0 0.0
    %3618 = vmatprep.subr.mxu0 0.0
    %3619 = vmatpush1.msra.mxu0 0.0
    %3620 = vmatprep.subr.mxu0 0.0
    %3621 = vmatpush1.msra.mxu0 0.0
    %3622 = vmatprep.subr.mxu0 0.0
    %3623 = vmatpush1.msra.mxu0 0.0
    %3624 = vmatprep.subr.mxu0 0.0
    %3625 = vmatpush1.msra.mxu0 0.0
    %3626 = vmatprep.subr.mxu0 0.0
    %3627 = vmatpush1.msra.mxu0 0.0
    %3628 = vmatprep.subr.mxu0 0.0
    %3629 = vmatpush1.msra.mxu0 0.0
    %3630 = vmatprep.subr.mxu0 0.0
    %3631 = vmatpush1.msra.mxu0 0.0
    %3632 = vmatprep.subr.mxu0 0.0
    %3633 = vmatpush1.msra.mxu0 0.0
    %3634 = vmatprep.subr.mxu0 0.0
    %3635 = vmatpush1.msra.mxu0 0.0
    %3636 = vmatprep.subr.mxu0 0.0
    %3637 = vmatpush1.msra.mxu0 0.0
    %3638 = vmatprep.subr.mxu0 0.0
    %3639 = vmatpush1.msra.mxu0 0.0
    %3640 = vmatprep.subr.mxu0 0.0
    %3641 = vmatpush1.msra.mxu0 0.0
    %3642 = vmatprep.subr.mxu0 0.0
    %3643 = vmatpush1.msra.mxu0 0.0
    %3644 = vmatprep.subr.mxu0 0.0
    %3645 = vmatpush1.msra.mxu0 0.0
    %3646 = vmatprep.subr.mxu0 0.0
    %3647 = vmatpush1.msra.mxu0 0.0
    %3648 = vmatprep.subr.mxu0 0.0
    %3649 = vmatpush1.msra.mxu0 0.0
    %3650 = vmatprep.subr.mxu0 0.0
    %3651 = vmatpush1.msra.mxu0 0.0
    %3652 = vmatprep.subr.mxu0 0.0
    %3653 = vmatpush1.msra.mxu0 0.0
    %3654 = vmatprep.subr.mxu0 0.0
    %3655 = vmatpush1.msra.mxu0 0.0
    %3656 = vmatprep.subr.mxu0 0.0
    %3657 = vmatpush1.msra.mxu0 0.0
    %3658 = vmatprep.subr.mxu0 0.0
    %3659 = vmatpush1.msra.mxu0 0.0
    %3660 = vmatprep.subr.mxu0 0.0
    %3661 = vmatpush1.msra.mxu0 0.0
    %3662 = vmatprep.subr.mxu0 0.0
    %3663 = vmatpush1.msra.mxu0 0.0
    %3664 = vmatprep.subr.mxu0 0.0
    %3665 = vmatpush1.msra.mxu0 0.0
    %3666 = vmatprep.subr.mxu0 0.0
    %3667 = vmatpush1.msra.mxu0 0.0
    %3668 = vmatprep.subr.mxu0 0.0
    %3669 = vmatpush1.msra.mxu0 0.0
    %3670 = vmatprep.mubr.f32.mxu0 0.0
    %3671 = vmatmul.mubr.f32.gmra.mrb[0].mxu0 %v3601
    %v3672 = vpop.f32.mrb[0].mxu0
    %v3673 = vadd.f32 0.0, %v3672
    %v3674 = vpop.f32.mrb[0].mxu0
    %3675 = vmatprep.mubr.f32.mxu0 0.0
    %3676 = vmatmul.mubr.f32.gmra.mrb[0].mxu0 %v3604
    %v3677 = vpop.f32.mrb[0].mxu0
    %v3678 = vadd.f32 0.0, %v3677
    %v3679 = vpop.f32.mrb[0].mxu0
    %3680 = vdwg.mxu0
    %3681 = vrot.lane.b32.xlu0 %v3459, 120
    %v3682 = vpop.permute.xlu0 %3681
    %3683 = vrot.lane.b32.xlu0 %v3464, 120
    %v3684 = vpop.permute.xlu0 %3683
    %3685 = vrot.lane.b32.xlu0 %v3459, 88
    %v3686 = vpop.permute.xlu0 %3685
    %3687 = vrot.lane.b32.xlu0 %v3464, 88
    %v3688 = vpop.permute.xlu0 %3687
    %v3689 = vsel %vm3487, %v3682, 0
    %v3691 = vsel %vm3487, %v3684, 0
    %v3693 = vsel %vm3487, %v3686, 0
    %v3695 = vsel %vm3487, %v3688, 0
    %3697 = vmatprep.subr.mxu0 0.0
    %3698 = vmatpush1.xpose.msra.mxu0 %v3693
    %3699 = vmatprep.subr.mxu0 0.0
    %3700 = vmatpush1.xpose.msra.mxu0 %v3695
    %3701 = vmatprep.subr.mxu0 0.0
    %3702 = vmatpush1.xpose.msra.mxu0 0.0
    %3703 = vmatprep.subr.mxu0 0.0
    %3704 = vmatpush1.xpose.msra.mxu0 0.0
    %3705 = vmatprep.subr.mxu0 0.0
    %3706 = vmatpush1.xpose.msra.mxu0 0.0
    %3707 = vmatprep.subr.mxu0 0.0
    %3708 = vmatpush1.xpose.msra.mxu0 0.0
    %3709 = vmatprep.subr.mxu0 0.0
    %3710 = vmatpush1.xpose.msra.mxu0 0.0
    %3711 = vmatprep.subr.mxu0 0.0
    %3712 = vmatpush1.xpose.msra.mxu0 0.0
    %3713 = vmatprep.subr.mxu0 0.0
    %3714 = vmatpush1.xpose.msra.mxu0 0.0
    %3715 = vmatprep.subr.mxu0 0.0
    %3716 = vmatpush1.xpose.msra.mxu0 0.0
    %3717 = vmatprep.subr.mxu0 0.0
    %3718 = vmatpush1.xpose.msra.mxu0 0.0
    %3719 = vmatprep.subr.mxu0 0.0
    %3720 = vmatpush1.xpose.msra.mxu0 0.0
    %3721 = vmatprep.subr.mxu0 0.0
    %3722 = vmatpush1.xpose.msra.mxu0 0.0
    %3723 = vmatprep.subr.mxu0 0.0
    %3724 = vmatpush1.xpose.msra.mxu0 0.0
    %3725 = vmatprep.subr.mxu0 0.0
    %3726 = vmatpush1.xpose.msra.mxu0 0.0
    %3727 = vmatprep.subr.mxu0 0.0
    %3728 = vmatpush1.xpose.msra.mxu0 0.0
    %3729 = vmatprep.subr.mxu0 0.0
    %3730 = vmatpush1.xpose.msra.mxu0 0.0
    %3731 = vmatprep.subr.mxu0 0.0
    %3732 = vmatpush1.xpose.msra.mxu0 0.0
    %3733 = vmatprep.subr.mxu0 0.0
    %3734 = vmatpush1.xpose.msra.mxu0 0.0
    %3735 = vmatprep.subr.mxu0 0.0
    %3736 = vmatpush1.xpose.msra.mxu0 0.0
    %3737 = vmatprep.subr.mxu0 0.0
    %3738 = vmatpush1.xpose.msra.mxu0 0.0
    %3739 = vmatprep.subr.mxu0 0.0
    %3740 = vmatpush1.xpose.msra.mxu0 0.0
    %3741 = vmatprep.subr.mxu0 0.0
    %3742 = vmatpush1.xpose.msra.mxu0 0.0
    %3743 = vmatprep.subr.mxu0 0.0
    %3744 = vmatpush1.xpose.msra.mxu0 0.0
    %3745 = vmatprep.subr.mxu0 0.0
    %3746 = vmatpush1.xpose.msra.mxu0 0.0
    %3747 = vmatprep.subr.mxu0 0.0
    %3748 = vmatpush1.xpose.msra.mxu0 0.0
    %3749 = vmatprep.subr.mxu0 0.0
    %3750 = vmatpush1.xpose.msra.mxu0 0.0
    %3751 = vmatprep.subr.mxu0 0.0
    %3752 = vmatpush1.xpose.msra.mxu0 0.0
    %3753 = vmatprep.subr.mxu0 0.0
    %3754 = vmatpush1.xpose.msra.mxu0 0.0
    %3755 = vmatprep.subr.mxu0 0.0
    %3756 = vmatpush1.xpose.msra.mxu0 0.0
    %3757 = vmatprep.subr.mxu0 0.0
    %3758 = vmatpush1.xpose.msra.mxu0 0.0
    %3759 = vmatprep.subr.mxu0 0.0
    %3760 = vmatpush1.xpose.msra.mxu0 0.0
    %3761 = vmatprep.mubr.f32.mxu0 0.0
    %3762 = vmatmul.mubr.f32.gmra.mrb[0].mxu0 %v3689
    %v3763 = vpop.f32.mrb[0].mxu0
    %v3764 = vadd.f32 %v3226, %v3763
    %v3765 = vpop.f32.mrb[0].mxu0
    %3766 = vmatprep.mubr.f32.mxu0 0.0
    %3767 = vmatmul.mubr.f32.gmra.mrb[0].mxu0 %v3691
    %v3768 = vpop.f32.mrb[0].mxu0
    %v3769 = vadd.f32 %v3227, %v3768
    %v3770 = vpop.f32.mrb[0].mxu0
    %3771 = vdwg.mxu0
    %v3772 = vsel %vm3571, %v3764, -inf
    %3773 = vmax.xlane.f32.xlu0 %v3772
    %v3774 = vpop.xlane.xlu0 %3773
    %v3775 = vsel %vm3571, %v3769, -inf
    %3776 = vmax.xlane.f32.xlu0 %v3775
    %v3777 = vpop.xlane.xlu0 %3776
    %v3778 = vsub.f32 %v3764, %v3774
    %v3779 = vsub.f32 %v3769, %v3777
    %v3780 = vmul.f32 %v3778, 1.442695
    %v3781 = vpow.pop %v3780
    %v3782 = vmul.f32 %v3779, 1.442695
    %v3783 = vpow.pop %v3782
    %v3784 = vsel %vm3571, %v3781, 0.0
    %3785 = vadd.xlane.f32.xlu0 %v3784
    %v3786 = vpop.xlane.xlu0 %3785
    %v3787 = vsel %vm3571, %v3783, 0.0
    %3788 = vadd.xlane.f32.xlu0 %v3787
    %v3789 = vpop.xlane.xlu0 %3788
    %v3790 = vrcp.pop %v3786
    %v3791 = vrcp.pop %v3789
    %v3792 = vmul.f32 %v3781, %v3790
    %v3793 = vmul.f32 %v3783, %v3791
    %3794 = vrot.lane.b32.xlu0 %v3459, 56
    %v3795 = vpop.permute.xlu0 %3794
    %3796 = vrot.lane.b32.xlu0 %v3464, 56
    %v3797 = vpop.permute.xlu0 %3796
    %v3801 = vsel %vm3571, %v3792, 0
    %v3804 = vsel %vm3571, %v3793, 0
    %3806 = vmatprep.subr.mxu0 0.0
    %3807 = vmatpush1.msra.mxu0 %v3795
    %3808 = vmatprep.subr.mxu0 0.0
    %3809 = vmatpush1.msra.mxu0 %v3797
    %3810 = vmatprep.subr.mxu0 0.0
    %3811 = vmatpush1.msra.mxu0 0.0
    %3812 = vmatprep.subr.mxu0 0.0
    %3813 = vmatpush1.msra.mxu0 0.0
    %3814 = vmatprep.subr.mxu0 0.0
    %3815 = vmatpush1.msra.mxu0 0.0
    %3816 = vmatprep.subr.mxu0 0.0
    %3817 = vmatpush1.msra.mxu0 0.0
    %3818 = vmatprep.subr.mxu0 0.0
    %3819 = vmatpush1.msra.mxu0 0.0
    %3820 = vmatprep.subr.mxu0 0.0
    %3821 = vmatpush1.msra.mxu0 0.0
    %3822 = vmatprep.subr.mxu0 0.0
    %3823 = vmatpush1.msra.mxu0 0.0
    %3824 = vmatprep.subr.mxu0 0.0
    %3825 = vmatpush1.msra.mxu0 0.0
    %3826 = vmatprep.subr.mxu0 0.0
    %3827 = vmatpush1.msra.mxu0 0.0
    %3828 = vmatprep.subr.mxu0 0.0
    %3829 = vmatpush1.msra.mxu0 0.0
    %3830 = vmatprep.subr.mxu0 0.0
    %3831 = vmatpush1.msra.mxu0 0.0
    %3832 = vmatprep.subr.mxu0 0.0
    %3833 = vmatpush1.msra.mxu0 0.0
    %3834 = vmatprep.subr.mxu0 0.0
    %3835 = vmatpush1.msra.mxu0 0.0
    %3836 = vmatprep.subr.mxu0 0.0
    %3837 = vmatpush1.msra.mxu0 0.0
    %3838 = vmatprep.subr.mxu0 0.0
    %3839 = vmatpush1.msra.mxu0 0.0
    %3840 = vmatprep.subr.mxu0 0.0
    %3841 = vmatpush1.msra.mxu0 0.0
    %3842 = vmatprep.subr.mxu0 0.0
    %3843 = vmatpush1.msra.mxu0 0.0
    %3844 = vmatprep.subr.mxu0 0.0
    %3845 = vmatpush1.msra.mxu0 0.0
    %3846 = vmatprep.subr.mxu0 0.0
    %3847 = vmatpush1.msra.mxu0 0.0
    %3848 = vmatprep.subr.mxu0 0.0
    %3849 = vmatpush1.msra.mxu0 0.0
    %3850 = vmatprep.subr.mxu0 0.0
    %3851 = vmatpush1.msra.mxu0 0.0
    %3852 = vmatprep.subr.mxu0 0.0
    %3853 = vmatpush1.msra.mxu0 0.0
    %3854 = vmatprep.subr.mxu0 0.0
    %3855 = vmatpush1.msra.mxu0 0.0
    %3856 = vmatprep.subr.mxu0 0.0
    %3857 = vmatpush1.msra.mxu0 0.0
    %3858 = vmatprep.subr.mxu0 0.0
    %3859 = vmatpush1.msra.mxu0 0.0
    %3860 = vmatprep.subr.mxu0 0.0
    %3861 = vmatpush1.msra.mxu0 0.0
    %3862 = vmatprep.subr.mxu0 0.0
    %3863 = vmatpush1.msra.mxu0 0.0
    %3864 = vmatprep.subr.mxu0 0.0
    %3865 = vmatpush1.msra.mxu0 0.0
    %3866 = vmatprep.subr.mxu0 0.0
    %3867 = vmatpush1.msra.mxu0 0.0
    %3868 = vmatprep.subr.mxu0 0.0
    %3869 = vmatpush1.msra.mxu0 0.0
    %3870 = vmatprep.mubr.f32.mxu0 0.0
    %3871 = vmatmul.mubr.f32.gmra.mrb[0].mxu0 %v3801
    %v3872 = vpop.f32.mrb[0].mxu0
    %v3873 = vadd.f32 0.0, %v3872
    %v3874 = vpop.f32.mrb[0].mxu0
    %3875 = vmatprep.mubr.f32.mxu0 0.0
    %3876 = vmatmul.mubr.f32.gmra.mrb[0].mxu0 %v3804
    %v3877 = vpop.f32.mrb[0].mxu0
    %v3878 = vadd.f32 0.0, %v3877
    %v3879 = vpop.f32.mrb[0].mxu0
    %3880 = vdwg.mxu0
    %3881 = vrot.lane.b32.xlu0 %v3459, 112
    %v3882 = vpop.permute.xlu0 %3881
    %3883 = vrot.lane.b32.xlu0 %v3464, 112
    %v3884 = vpop.permute.xlu0 %3883
    %3885 = vrot.lane.b32.xlu0 %v3459, 80
    %v3886 = vpop.permute.xlu0 %3885
    %3887 = vrot.lane.b32.xlu0 %v3464, 80
    %v3888 = vpop.permute.xlu0 %3887
    %v3889 = vsel %vm3487, %v3882, 0
    %v3891 = vsel %vm3487, %v3884, 0
    %v3893 = vsel %vm3487, %v3886, 0
    %v3895 = vsel %vm3487, %v3888, 0
    %3897 = vmatprep.subr.mxu0 0.0
    %3898 = vmatpush1.xpose.msra.mxu0 %v3893
    %3899 = vmatprep.subr.mxu0 0.0
    %3900 = vmatpush1.xpose.msra.mxu0 %v3895
    %3901 = vmatprep.subr.mxu0 0.0
    %3902 = vmatpush1.xpose.msra.mxu0 0.0
    %3903 = vmatprep.subr.mxu0 0.0
    %3904 = vmatpush1.xpose.msra.mxu0 0.0
    %3905 = vmatprep.subr.mxu0 0.0
    %3906 = vmatpush1.xpose.msra.mxu0 0.0
    %3907 = vmatprep.subr.mxu0 0.0
    %3908 = vmatpush1.xpose.msra.mxu0 0.0
    %3909 = vmatprep.subr.mxu0 0.0
    %3910 = vmatpush1.xpose.msra.mxu0 0.0
    %3911 = vmatprep.subr.mxu0 0.0
    %3912 = vmatpush1.xpose.msra.mxu0 0.0
    %3913 = vmatprep.subr.mxu0 0.0
    %3914 = vmatpush1.xpose.msra.mxu0 0.0
    %3915 = vmatprep.subr.mxu0 0.0
    %3916 = vmatpush1.xpose.msra.mxu0 0.0
    %3917 = vmatprep.subr.mxu0 0.0
    %3918 = vmatpush1.xpose.msra.mxu0 0.0
    %3919 = vmatprep.subr.mxu0 0.0
    %3920 = vmatpush1.xpose.msra.mxu0 0.0
    %3921 = vmatprep.subr.mxu0 0.0
    %3922 = vmatpush1.xpose.msra.mxu0 0.0
    %3923 = vmatprep.subr.mxu0 0.0
    %3924 = vmatpush1.xpose.msra.mxu0 0.0
    %3925 = vmatprep.subr.mxu0 0.0
    %3926 = vmatpush1.xpose.msra.mxu0 0.0
    %3927 = vmatprep.subr.mxu0 0.0
    %3928 = vmatpush1.xpose.msra.mxu0 0.0
    %3929 = vmatprep.subr.mxu0 0.0
    %3930 = vmatpush1.xpose.msra.mxu0 0.0
    %3931 = vmatprep.subr.mxu0 0.0
    %3932 = vmatpush1.xpose.msra.mxu0 0.0
    %3933 = vmatprep.subr.mxu0 0.0
    %3934 = vmatpush1.xpose.msra.mxu0 0.0
    %3935 = vmatprep.subr.mxu0 0.0
    %3936 = vmatpush1.xpose.msra.mxu0 0.0
    %3937 = vmatprep.subr.mxu0 0.0
    %3938 = vmatpush1.xpose.msra.mxu0 0.0
    %3939 = vmatprep.subr.mxu0 0.0
    %3940 = vmatpush1.xpose.msra.mxu0 0.0
    %3941 = vmatprep.subr.mxu0 0.0
    %3942 = vmatpush1.xpose.msra.mxu0 0.0
    %3943 = vmatprep.subr.mxu0 0.0
    %3944 = vmatpush1.xpose.msra.mxu0 0.0
    %3945 = vmatprep.subr.mxu0 0.0
    %3946 = vmatpush1.xpose.msra.mxu0 0.0
    %3947 = vmatprep.subr.mxu0 0.0
    %3948 = vmatpush1.xpose.msra.mxu0 0.0
    %3949 = vmatprep.subr.mxu0 0.0
    %3950 = vmatpush1.xpose.msra.mxu0 0.0
    %3951 = vmatprep.subr.mxu0 0.0
    %3952 = vmatpush1.xpose.msra.mxu0 0.0
    %3953 = vmatprep.subr.mxu0 0.0
    %3954 = vmatpush1.xpose.msra.mxu0 0.0
    %3955 = vmatprep.subr.mxu0 0.0
    %3956 = vmatpush1.xpose.msra.mxu0 0.0
    %3957 = vmatprep.subr.mxu0 0.0
    %3958 = vmatpush1.xpose.msra.mxu0 0.0
    %3959 = vmatprep.subr.mxu0 0.0
    %3960 = vmatpush1.xpose.msra.mxu0 0.0
    %3961 = vmatprep.mubr.f32.mxu0 0.0
    %3962 = vmatmul.mubr.f32.gmra.mrb[0].mxu0 %v3889
    %v3963 = vpop.f32.mrb[0].mxu0
    %v3964 = vadd.f32 %v3235, %v3963
    %v3965 = vpop.f32.mrb[0].mxu0
    %3966 = vmatprep.mubr.f32.mxu0 0.0
    %3967 = vmatmul.mubr.f32.gmra.mrb[0].mxu0 %v3891
    %v3968 = vpop.f32.mrb[0].mxu0
    %v3969 = vadd.f32 %v3236, %v3968
    %v3970 = vpop.f32.mrb[0].mxu0
    %3971 = vdwg.mxu0
    %v3972 = vsel %vm3571, %v3964, -inf
    %3973 = vmax.xlane.f32.xlu0 %v3972
    %v3974 = vpop.xlane.xlu0 %3973
    %v3975 = vsel %vm3571, %v3969, -inf
    %3976 = vmax.xlane.f32.xlu0 %v3975
    %v3977 = vpop.xlane.xlu0 %3976
    %v3978 = vsub.f32 %v3964, %v3974
    %v3979 = vsub.f32 %v3969, %v3977
    %v3980 = vmul.f32 %v3978, 1.442695
    %v3981 = vpow.pop %v3980
    %v3982 = vmul.f32 %v3979, 1.442695
    %v3983 = vpow.pop %v3982
    %v3984 = vsel %vm3571, %v3981, 0.0
    %3985 = vadd.xlane.f32.xlu0 %v3984
    %v3986 = vpop.xlane.xlu0 %3985
    %v3987 = vsel %vm3571, %v3983, 0.0
    %3988 = vadd.xlane.f32.xlu0 %v3987
    %v3989 = vpop.xlane.xlu0 %3988
    %v3990 = vrcp.pop %v3986
    %v3991 = vrcp.pop %v3989
    %v3992 = vmul.f32 %v3981, %v3990
    %v3993 = vmul.f32 %v3983, %v3991
    %3994 = vrot.lane.b32.xlu0 %v3459, 48
    %v3995 = vpop.permute.xlu0 %3994
    %3996 = vrot.lane.b32.xlu0 %v3464, 48
    %v3997 = vpop.permute.xlu0 %3996
    %v4001 = vsel %vm3571, %v3992, 0
    %v4004 = vsel %vm3571, %v3993, 0
    %4006 = vmatprep.subr.mxu0 0.0
    %4007 = vmatpush1.msra.mxu0 %v3995
    %4008 = vmatprep.subr.mxu0 0.0
    %4009 = vmatpush1.msra.mxu0 %v3997
    %4010 = vmatprep.subr.mxu0 0.0
    %4011 = vmatpush1.msra.mxu0 0.0
    %4012 = vmatprep.subr.mxu0 0.0
    %4013 = vmatpush1.msra.mxu0 0.0
    %4014 = vmatprep.subr.mxu0 0.0
    %4015 = vmatpush1.msra.mxu0 0.0
    %4016 = vmatprep.subr.mxu0 0.0
    %4017 = vmatpush1.msra.mxu0 0.0
    %4018 = vmatprep.subr.mxu0 0.0
    %4019 = vmatpush1.msra.mxu0 0.0
    %4020 = vmatprep.subr.mxu0 0.0
    %4021 = vmatpush1.msra.mxu0 0.0
    %4022 = vmatprep.subr.mxu0 0.0
    %4023 = vmatpush1.msra.mxu0 0.0
    %4024 = vmatprep.subr.mxu0 0.0
    %4025 = vmatpush1.msra.mxu0 0.0
    %4026 = vmatprep.subr.mxu0 0.0
    %4027 = vmatpush1.msra.mxu0 0.0
    %4028 = vmatprep.subr.mxu0 0.0
    %4029 = vmatpush1.msra.mxu0 0.0
    %4030 = vmatprep.subr.mxu0 0.0
    %4031 = vmatpush1.msra.mxu0 0.0
    %4032 = vmatprep.subr.mxu0 0.0
    %4033 = vmatpush1.msra.mxu0 0.0
    %4034 = vmatprep.subr.mxu0 0.0
    %4035 = vmatpush1.msra.mxu0 0.0
    %4036 = vmatprep.subr.mxu0 0.0
    %4037 = vmatpush1.msra.mxu0 0.0
    %4038 = vmatprep.subr.mxu0 0.0
    %4039 = vmatpush1.msra.mxu0 0.0
    %4040 = vmatprep.subr.mxu0 0.0
    %4041 = vmatpush1.msra.mxu0 0.0
    %4042 = vmatprep.subr.mxu0 0.0
    %4043 = vmatpush1.msra.mxu0 0.0
    %4044 = vmatprep.subr.mxu0 0.0
    %4045 = vmatpush1.msra.mxu0 0.0
    %4046 = vmatprep.subr.mxu0 0.0
    %4047 = vmatpush1.msra.mxu0 0.0
    %4048 = vmatprep.subr.mxu0 0.0
    %4049 = vmatpush1.msra.mxu0 0.0
    %4050 = vmatprep.subr.mxu0 0.0
    %4051 = vmatpush1.msra.mxu0 0.0
    %4052 = vmatprep.subr.mxu0 0.0
    %4053 = vmatpush1.msra.mxu0 0.0
    %4054 = vmatprep.subr.mxu0 0.0
    %4055 = vmatpush1.msra.mxu0 0.0
    %4056 = vmatprep.subr.mxu0 0.0
    %4057 = vmatpush1.msra.mxu0 0.0
    %4058 = vmatprep.subr.mxu0 0.0
    %4059 = vmatpush1.msra.mxu0 0.0
    %4060 = vmatprep.subr.mxu0 0.0
    %4061 = vmatpush1.msra.mxu0 0.0
    %4062 = vmatprep.subr.mxu0 0.0
    %4063 = vmatpush1.msra.mxu0 0.0
    %4064 = vmatprep.subr.mxu0 0.0
    %4065 = vmatpush1.msra.mxu0 0.0
    %4066 = vmatprep.subr.mxu0 0.0
    %4067 = vmatpush1.msra.mxu0 0.0
    %4068 = vmatprep.subr.mxu0 0.0
    %4069 = vmatpush1.msra.mxu0 0.0
    %4070 = vmatprep.mubr.f32.mxu0 0.0
    %4071 = vmatmul.mubr.f32.gmra.mrb[0].mxu0 %v4001
    %v4072 = vpop.f32.mrb[0].mxu0
    %v4073 = vadd.f32 0.0, %v4072
    %v4074 = vpop.f32.mrb[0].mxu0
    %4075 = vmatprep.mubr.f32.mxu0 0.0
    %4076 = vmatmul.mubr.f32.gmra.mrb[0].mxu0 %v4004
    %v4077 = vpop.f32.mrb[0].mxu0
    %v4078 = vadd.f32 0.0, %v4077
    %v4079 = vpop.f32.mrb[0].mxu0
    %4080 = vdwg.mxu0
    %4081 = vrot.lane.b32.xlu0 %v3459, 104
    %v4082 = vpop.permute.xlu0 %4081
    %4083 = vrot.lane.b32.xlu0 %v3464, 104
    %v4084 = vpop.permute.xlu0 %4083
    %4085 = vrot.lane.b32.xlu0 %v3459, 72
    %v4086 = vpop.permute.xlu0 %4085
    %4087 = vrot.lane.b32.xlu0 %v3464, 72
    %v4088 = vpop.permute.xlu0 %4087
    %v4089 = vsel %vm3487, %v4082, 0
    %v4091 = vsel %vm3487, %v4084, 0
    %v4093 = vsel %vm3487, %v4086, 0
    %v4095 = vsel %vm3487, %v4088, 0
    %4097 = vmatprep.subr.mxu0 0.0
    %4098 = vmatpush1.xpose.msra.mxu0 %v4093
    %4099 = vmatprep.subr.mxu0 0.0
    %4100 = vmatpush1.xpose.msra.mxu0 %v4095
    %4101 = vmatprep.subr.mxu0 0.0
    %4102 = vmatpush1.xpose.msra.mxu0 0.0
    %4103 = vmatprep.subr.mxu0 0.0
    %4104 = vmatpush1.xpose.msra.mxu0 0.0
    %4105 = vmatprep.subr.mxu0 0.0
    %4106 = vmatpush1.xpose.msra.mxu0 0.0
    %4107 = vmatprep.subr.mxu0 0.0
    %4108 = vmatpush1.xpose.msra.mxu0 0.0
    %4109 = vmatprep.subr.mxu0 0.0
    %4110 = vmatpush1.xpose.msra.mxu0 0.0
    %4111 = vmatprep.subr.mxu0 0.0
    %4112 = vmatpush1.xpose.msra.mxu0 0.0
    %4113 = vmatprep.subr.mxu0 0.0
    %4114 = vmatpush1.xpose.msra.mxu0 0.0
    %4115 = vmatprep.subr.mxu0 0.0
    %4116 = vmatpush1.xpose.msra.mxu0 0.0
    %4117 = vmatprep.subr.mxu0 0.0
    %4118 = vmatpush1.xpose.msra.mxu0 0.0
    %4119 = vmatprep.subr.mxu0 0.0
    %4120 = vmatpush1.xpose.msra.mxu0 0.0
    %4121 = vmatprep.subr.mxu0 0.0
    %4122 = vmatpush1.xpose.msra.mxu0 0.0
    %4123 = vmatprep.subr.mxu0 0.0
    %4124 = vmatpush1.xpose.msra.mxu0 0.0
    %4125 = vmatprep.subr.mxu0 0.0
    %4126 = vmatpush1.xpose.msra.mxu0 0.0
    %4127 = vmatprep.subr.mxu0 0.0
    %4128 = vmatpush1.xpose.msra.mxu0 0.0
    %4129 = vmatprep.subr.mxu0 0.0
    %4130 = vmatpush1.xpose.msra.mxu0 0.0
    %4131 = vmatprep.subr.mxu0 0.0
    %4132 = vmatpush1.xpose.msra.mxu0 0.0
    %4133 = vmatprep.subr.mxu0 0.0
    %4134 = vmatpush1.xpose.msra.mxu0 0.0
    %4135 = vmatprep.subr.mxu0 0.0
    %4136 = vmatpush1.xpose.msra.mxu0 0.0
    %4137 = vmatprep.subr.mxu0 0.0
    %4138 = vmatpush1.xpose.msra.mxu0 0.0
    %4139 = vmatprep.subr.mxu0 0.0
    %4140 = vmatpush1.xpose.msra.mxu0 0.0
    %4141 = vmatprep.subr.mxu0 0.0
    %4142 = vmatpush1.xpose.msra.mxu0 0.0
    %4143 = vmatprep.subr.mxu0 0.0
    %4144 = vmatpush1.xpose.msra.mxu0 0.0
    %4145 = vmatprep.subr.mxu0 0.0
    %4146 = vmatpush1.xpose.msra.mxu0 0.0
    %4147 = vmatprep.subr.mxu0 0.0
    %4148 = vmatpush1.xpose.msra.mxu0 0.0
    %4149 = vmatprep.subr.mxu0 0.0
    %4150 = vmatpush1.xpose.msra.mxu0 0.0
    %4151 = vmatprep.subr.mxu0 0.0
    %4152 = vmatpush1.xpose.msra.mxu0 0.0
    %4153 = vmatprep.subr.mxu0 0.0
    %4154 = vmatpush1.xpose.msra.mxu0 0.0
    %4155 = vmatprep.subr.mxu0 0.0
    %4156 = vmatpush1.xpose.msra.mxu0 0.0
    %4157 = vmatprep.subr.mxu0 0.0
    %4158 = vmatpush1.xpose.msra.mxu0 0.0
    %4159 = vmatprep.subr.mxu0 0.0
    %4160 = vmatpush1.xpose.msra.mxu0 0.0
    %4161 = vmatprep.mubr.f32.mxu0 0.0
    %4162 = vmatmul.mubr.f32.gmra.mrb[0].mxu0 %v4089
    %v4163 = vpop.f32.mrb[0].mxu0
    %v4164 = vadd.f32 %v3244, %v4163
    %v4165 = vpop.f32.mrb[0].mxu0
    %4166 = vmatprep.mubr.f32.mxu0 0.0
    %4167 = vmatmul.mubr.f32.gmra.mrb[0].mxu0 %v4091
    %v4168 = vpop.f32.mrb[0].mxu0
    %v4169 = vadd.f32 %v3245, %v4168
    %v4170 = vpop.f32.mrb[0].mxu0
    %4171 = vdwg.mxu0
    %v4172 = vsel %vm3571, %v4164, -inf
    %4173 = vmax.xlane.f32.xlu0 %v4172
    %v4174 = vpop.xlane.xlu0 %4173
    %v4175 = vsel %vm3571, %v4169, -inf
    %4176 = vmax.xlane.f32.xlu0 %v4175
    %v4177 = vpop.xlane.xlu0 %4176
    %v4178 = vsub.f32 %v4164, %v4174
    %v4179 = vsub.f32 %v4169, %v4177
    %v4180 = vmul.f32 %v4178, 1.442695
    %v4181 = vpow.pop %v4180
    %v4182 = vmul.f32 %v4179, 1.442695
    %v4183 = vpow.pop %v4182
    %v4184 = vsel %vm3571, %v4181, 0.0
    %4185 = vadd.xlane.f32.xlu0 %v4184
    %v4186 = vpop.xlane.xlu0 %4185
    %v4187 = vsel %vm3571, %v4183, 0.0
    %4188 = vadd.xlane.f32.xlu0 %v4187
    %v4189 = vpop.xlane.xlu0 %4188
    %v4190 = vrcp.pop %v4186
    %v4191 = vrcp.pop %v4189
    %v4192 = vmul.f32 %v4181, %v4190
    %v4193 = vmul.f32 %v4183, %v4191
    %4194 = vrot.lane.b32.xlu0 %v3459, 40
    %v4195 = vpop.permute.xlu0 %4194
    %4196 = vrot.lane.b32.xlu0 %v3464, 40
    %v4197 = vpop.permute.xlu0 %4196
    %v4201 = vsel %vm3571, %v4192, 0
    %v4204 = vsel %vm3571, %v4193, 0
    %4206 = vmatprep.subr.mxu0 0.0
    %4207 = vmatpush1.msra.mxu0 %v4195
    %4208 = vmatprep.subr.mxu0 0.0
    %4209 = vmatpush1.msra.mxu0 %v4197
    %4210 = vmatprep.subr.mxu0 0.0
    %4211 = vmatpush1.msra.mxu0 0.0
    %4212 = vmatprep.subr.mxu0 0.0
    %4213 = vmatpush1.msra.mxu0 0.0
    %4214 = vmatprep.subr.mxu0 0.0
    %4215 = vmatpush1.msra.mxu0 0.0
    %4216 = vmatprep.subr.mxu0 0.0
    %4217 = vmatpush1.msra.mxu0 0.0
    %4218 = vmatprep.subr.mxu0 0.0
    %4219 = vmatpush1.msra.mxu0 0.0
    %4220 = vmatprep.subr.mxu0 0.0
    %4221 = vmatpush1.msra.mxu0 0.0
    %4222 = vmatprep.subr.mxu0 0.0
    %4223 = vmatpush1.msra.mxu0 0.0
    %4224 = vmatprep.subr.mxu0 0.0
    %4225 = vmatpush1.msra.mxu0 0.0
    %4226 = vmatprep.subr.mxu0 0.0
    %4227 = vmatpush1.msra.mxu0 0.0
    %4228 = vmatprep.subr.mxu0 0.0
    %4229 = vmatpush1.msra.mxu0 0.0
    %4230 = vmatprep.subr.mxu0 0.0
    %4231 = vmatpush1.msra.mxu0 0.0
    %4232 = vmatprep.subr.mxu0 0.0
    %4233 = vmatpush1.msra.mxu0 0.0
    %4234 = vmatprep.subr.mxu0 0.0
    %4235 = vmatpush1.msra.mxu0 0.0
    %4236 = vmatprep.subr.mxu0 0.0
    %4237 = vmatpush1.msra.mxu0 0.0
    %4238 = vmatprep.subr.mxu0 0.0
    %4239 = vmatpush1.msra.mxu0 0.0
    %4240 = vmatprep.subr.mxu0 0.0
    %4241 = vmatpush1.msra.mxu0 0.0
    %4242 = vmatprep.subr.mxu0 0.0
    %4243 = vmatpush1.msra.mxu0 0.0
    %4244 = vmatprep.subr.mxu0 0.0
    %4245 = vmatpush1.msra.mxu0 0.0
    %4246 = vmatprep.subr.mxu0 0.0
    %4247 = vmatpush1.msra.mxu0 0.0
    %4248 = vmatprep.subr.mxu0 0.0
    %4249 = vmatpush1.msra.mxu0 0.0
    %4250 = vmatprep.subr.mxu0 0.0
    %4251 = vmatpush1.msra.mxu0 0.0
    %4252 = vmatprep.subr.mxu0 0.0
    %4253 = vmatpush1.msra.mxu0 0.0
    %4254 = vmatprep.subr.mxu0 0.0
    %4255 = vmatpush1.msra.mxu0 0.0
    %4256 = vmatprep.subr.mxu0 0.0
    %4257 = vmatpush1.msra.mxu0 0.0
    %4258 = vmatprep.subr.mxu0 0.0
    %4259 = vmatpush1.msra.mxu0 0.0
    %4260 = vmatprep.subr.mxu0 0.0
    %4261 = vmatpush1.msra.mxu0 0.0
    %4262 = vmatprep.subr.mxu0 0.0
    %4263 = vmatpush1.msra.mxu0 0.0
    %4264 = vmatprep.subr.mxu0 0.0
    %4265 = vmatpush1.msra.mxu0 0.0
    %4266 = vmatprep.subr.mxu0 0.0
    %4267 = vmatpush1.msra.mxu0 0.0
    %4268 = vmatprep.subr.mxu0 0.0
    %4269 = vmatpush1.msra.mxu0 0.0
    %4270 = vmatprep.mubr.f32.mxu0 0.0
    %4271 = vmatmul.mubr.f32.gmra.mrb[0].mxu0 %v4201
    %v4272 = vpop.f32.mrb[0].mxu0
    %v4273 = vadd.f32 0.0, %v4272
    %v4274 = vpop.f32.mrb[0].mxu0
    %4275 = vmatprep.mubr.f32.mxu0 0.0
    %4276 = vmatmul.mubr.f32.gmra.mrb[0].mxu0 %v4204
    %v4277 = vpop.f32.mrb[0].mxu0
    %v4278 = vadd.f32 0.0, %v4277
    %v4279 = vpop.f32.mrb[0].mxu0
    %4280 = vdwg.mxu0
    %4283 = vrot.lane.b32.xlu0 %v3873, 8
    %v4284 = vpop.permute.xlu0 %4283
    %4285 = vrot.lane.b32.xlu0 %v3878, 8
    %v4286 = vpop.permute.xlu0 %4285
    %4291 = vrot.lane.b32.xlu0 %v4073, 16
    %v4292 = vpop.permute.xlu0 %4291
    %4293 = vrot.lane.b32.xlu0 %v4078, 16
    %v4294 = vpop.permute.xlu0 %4293
    %4299 = vrot.lane.b32.xlu0 %v4273, 24
    %v4300 = vpop.permute.xlu0 %4299
    %4301 = vrot.lane.b32.xlu0 %v4278, 24
    %v4302 = vpop.permute.xlu0 %4301
    %v4305 = vsel %vm3487, %v3673, %v4284
    %v4306 = vsel %vm3487, %v3678, %v4286
    %v4307 = vsel %vm3571, %v4305, %v4292
    %v4308 = vsel %vm3571, %v4306, %v4294
    %v4309 = vsel %vm830, %v4307, %v4300
    %v4310 = vsel %vm830, %v4308, %v4302
    %v4312 = vsel %vm540, %v4309, 0
    %v4315 = vsel %vm540, %v4310, 0
    %4317 = vmatprep.subr.mxu0 0.0
    %4318 = vmatpush1.msra.mxu0 %v3477
    %4319 = vmatprep.subr.mxu0 0.0
    %4320 = vmatpush1.msra.mxu0 %v3478
    %4321 = vmatprep.subr.mxu0 0.0
    %4322 = vmatpush1.msra.mxu0 %v3479
    %4323 = vmatprep.subr.mxu0 0.0
    %4324 = vmatpush1.msra.mxu0 %v3480
    %4325 = vmatprep.subr.mxu0 0.0
    %4326 = vmatpush1.msra.mxu0 0.0
    %4327 = vmatprep.subr.mxu0 0.0
    %4328 = vmatpush1.msra.mxu0 0.0
    %4329 = vmatprep.subr.mxu0 0.0
    %4330 = vmatpush1.msra.mxu0 0.0
    %4331 = vmatprep.subr.mxu0 0.0
    %4332 = vmatpush1.msra.mxu0 0.0
    %4333 = vmatprep.subr.mxu0 0.0
    %4334 = vmatpush1.msra.mxu0 0.0
    %4335 = vmatprep.subr.mxu0 0.0
    %4336 = vmatpush1.msra.mxu0 0.0
    %4337 = vmatprep.subr.mxu0 0.0
    %4338 = vmatpush1.msra.mxu0 0.0
    %4339 = vmatprep.subr.mxu0 0.0
    %4340 = vmatpush1.msra.mxu0 0.0
    %4341 = vmatprep.subr.mxu0 0.0
    %4342 = vmatpush1.msra.mxu0 0.0
    %4343 = vmatprep.subr.mxu0 0.0
    %4344 = vmatpush1.msra.mxu0 0.0
    %4345 = vmatprep.subr.mxu0 0.0
    %4346 = vmatpush1.msra.mxu0 0.0
    %4347 = vmatprep.subr.mxu0 0.0
    %4348 = vmatpush1.msra.mxu0 0.0
    %4349 = vmatprep.subr.mxu0 0.0
    %4350 = vmatpush1.msra.mxu0 0.0
    %4351 = vmatprep.subr.mxu0 0.0
    %4352 = vmatpush1.msra.mxu0 0.0
    %4353 = vmatprep.subr.mxu0 0.0
    %4354 = vmatpush1.msra.mxu0 0.0
    %4355 = vmatprep.subr.mxu0 0.0
    %4356 = vmatpush1.msra.mxu0 0.0
    %4357 = vmatprep.subr.mxu0 0.0
    %4358 = vmatpush1.msra.mxu0 0.0
    %4359 = vmatprep.subr.mxu0 0.0
    %4360 = vmatpush1.msra.mxu0 0.0
    %4361 = vmatprep.subr.mxu0 0.0
    %4362 = vmatpush1.msra.mxu0 0.0
    %4363 = vmatprep.subr.mxu0 0.0
    %4364 = vmatpush1.msra.mxu0 0.0
    %4365 = vmatprep.subr.mxu0 0.0
    %4366 = vmatpush1.msra.mxu0 0.0
    %4367 = vmatprep.subr.mxu0 0.0
    %4368 = vmatpush1.msra.mxu0 0.0
    %4369 = vmatprep.subr.mxu0 0.0
    %4370 = vmatpush1.msra.mxu0 0.0
    %4371 = vmatprep.subr.mxu0 0.0
    %4372 = vmatpush1.msra.mxu0 0.0
    %4373 = vmatprep.subr.mxu0 0.0
    %4374 = vmatpush1.msra.mxu0 0.0
    %4375 = vmatprep.subr.mxu0 0.0
    %4376 = vmatpush1.msra.mxu0 0.0
    %4377 = vmatprep.subr.mxu0 0.0
    %4378 = vmatpush1.msra.mxu0 0.0
    %4379 = vmatprep.subr.mxu0 0.0
    %4380 = vmatpush1.msra.mxu0 0.0
    %4381 = vmatprep.mubr.f32.mxu0 0.0
    %4382 = vmatmul.mubr.f32.gmra.mrb[0].mxu0 %v4312
    %v4383 = vpop.f32.mrb[0].mxu0
    %v4384 = vadd.f32 0.0, %v4383
    %v4385 = vpop.f32.mrb[0].mxu0
    %4386 = vmatprep.mubr.f32.mxu0 0.0
    %4387 = vmatmul.mubr.f32.gmra.mrb[0].mxu0 %v4315
    %v4388 = vpop.f32.mrb[0].mxu0
    %v4389 = vadd.f32 0.0, %v4388
    %v4390 = vpop.f32.mrb[0].mxu0
    %4391 = vdwg.mxu0
    %4394 = vrot.lane.b32.xlu0 %v3469, 96
    %v4395 = vpop.permute.xlu0 %4394
    %4396 = vrot.lane.b32.xlu0 %v3474, 96
    %v4397 = vpop.permute.xlu0 %4396
    %v4398 = vsel %vm3487, %v3469, 0
    %v4400 = vsel %vm3487, %v3474, 0
    %v4402 = vsel %vm3487, %v4395, 0
    %v4404 = vsel %vm3487, %v4397, 0
    %4406 = vmatprep.subr.mxu0 0.0
    %4407 = vmatpush1.xpose.msra.mxu0 %v4402
    %4408 = vmatprep.subr.mxu0 0.0
    %4409 = vmatpush1.xpose.msra.mxu0 %v4404
    %4410 = vmatprep.subr.mxu0 0.0
    %4411 = vmatpush1.xpose.msra.mxu0 0.0
    %4412 = vmatprep.subr.mxu0 0.0
    %4413 = vmatpush1.xpose.msra.mxu0 0.0
    %4414 = vmatprep.subr.mxu0 0.0
    %4415 = vmatpush1.xpose.msra.mxu0 0.0
    %4416 = vmatprep.subr.mxu0 0.0
    %4417 = vmatpush1.xpose.msra.mxu0 0.0
    %4418 = vmatprep.subr.mxu0 0.0
    %4419 = vmatpush1.xpose.msra.mxu0 0.0
    %4420 = vmatprep.subr.mxu0 0.0
    %4421 = vmatpush1.xpose.msra.mxu0 0.0
    %4422 = vmatprep.subr.mxu0 0.0
    %4423 = vmatpush1.xpose.msra.mxu0 0.0
    %4424 = vmatprep.subr.mxu0 0.0
    %4425 = vmatpush1.xpose.msra.mxu0 0.0
    %4426 = vmatprep.subr.mxu0 0.0
    %4427 = vmatpush1.xpose.msra.mxu0 0.0
    %4428 = vmatprep.subr.mxu0 0.0
    %4429 = vmatpush1.xpose.msra.mxu0 0.0
    %4430 = vmatprep.subr.mxu0 0.0
    %4431 = vmatpush1.xpose.msra.mxu0 0.0
    %4432 = vmatprep.subr.mxu0 0.0
    %4433 = vmatpush1.xpose.msra.mxu0 0.0
    %4434 = vmatprep.subr.mxu0 0.0
    %4435 = vmatpush1.xpose.msra.mxu0 0.0
    %4436 = vmatprep.subr.mxu0 0.0
    %4437 = vmatpush1.xpose.msra.mxu0 0.0
    %4438 = vmatprep.subr.mxu0 0.0
    %4439 = vmatpush1.xpose.msra.mxu0 0.0
    %4440 = vmatprep.subr.mxu0 0.0
    %4441 = vmatpush1.xpose.msra.mxu0 0.0
    %4442 = vmatprep.subr.mxu0 0.0
    %4443 = vmatpush1.xpose.msra.mxu0 0.0
    %4444 = vmatprep.subr.mxu0 0.0
    %4445 = vmatpush1.xpose.msra.mxu0 0.0
    %4446 = vmatprep.subr.mxu0 0.0
    %4447 = vmatpush1.xpose.msra.mxu0 0.0
    %4448 = vmatprep.subr.mxu0 0.0
    %4449 = vmatpush1.xpose.msra.mxu0 0.0
    %4450 = vmatprep.subr.mxu0 0.0
    %4451 = vmatpush1.xpose.msra.mxu0 0.0
    %4452 = vmatprep.subr.mxu0 0.0
    %4453 = vmatpush1.xpose.msra.mxu0 0.0
    %4454 = vmatprep.subr.mxu0 0.0
    %4455 = vmatpush1.xpose.msra.mxu0 0.0
    %4456 = vmatprep.subr.mxu0 0.0
    %4457 = vmatpush1.xpose.msra.mxu0 0.0
    %4458 = vmatprep.subr.mxu0 0.0
    %4459 = vmatpush1.xpose.msra.mxu0 0.0
    %4460 = vmatprep.subr.mxu0 0.0
    %4461 = vmatpush1.xpose.msra.mxu0 0.0
    %4462 = vmatprep.subr.mxu0 0.0
    %4463 = vmatpush1.xpose.msra.mxu0 0.0
    %4464 = vmatprep.subr.mxu0 0.0
    %4465 = vmatpush1.xpose.msra.mxu0 0.0
    %4466 = vmatprep.subr.mxu0 0.0
    %4467 = vmatpush1.xpose.msra.mxu0 0.0
    %4468 = vmatprep.subr.mxu0 0.0
    %4469 = vmatpush1.xpose.msra.mxu0 0.0
    %4470 = vmatprep.mubr.f32.mxu0 0.0
    %4471 = vmatmul.mubr.f32.gmra.mrb[0].mxu0 %v4398
    %v4472 = vpop.f32.mrb[0].mxu0
    %v4473 = vadd.f32 %v3266, %v4472
    %v4474 = vpop.f32.mrb[0].mxu0
    %4475 = vmatprep.mubr.f32.mxu0 0.0
    %4476 = vmatmul.mubr.f32.gmra.mrb[0].mxu0 %v4400
    %v4477 = vpop.f32.mrb[0].mxu0
    %v4478 = vadd.f32 %v3267, %v4477
    %v4479 = vpop.f32.mrb[0].mxu0
    %4480 = vdwg.mxu0
    %v4481 = vsel %vm3571, %v4473, -inf
    %4482 = vmax.xlane.f32.xlu0 %v4481
    %v4483 = vpop.xlane.xlu0 %4482
    %v4484 = vsel %vm3571, %v4478, -inf
    %4485 = vmax.xlane.f32.xlu0 %v4484
    %v4486 = vpop.xlane.xlu0 %4485
    %v4487 = vsub.f32 %v4473, %v4483
    %v4488 = vsub.f32 %v4478, %v4486
    %v4489 = vmul.f32 %v4487, 1.442695
    %v4490 = vpow.pop %v4489
    %v4491 = vmul.f32 %v4488, 1.442695
    %v4492 = vpow.pop %v4491
    %v4493 = vsel %vm3571, %v4490, 0.0
    %4494 = vadd.xlane.f32.xlu0 %v4493
    %v4495 = vpop.xlane.xlu0 %4494
    %v4496 = vsel %vm3571, %v4492, 0.0
    %4497 = vadd.xlane.f32.xlu0 %v4496
    %v4498 = vpop.xlane.xlu0 %4497
    %v4499 = vrcp.pop %v4495
    %v4500 = vrcp.pop %v4498
    %v4501 = vmul.f32 %v4490, %v4499
    %v4502 = vmul.f32 %v4492, %v4500
    %4503 = vrot.lane.b32.xlu0 %v3469, 64
    %v4504 = vpop.permute.xlu0 %4503
    %4505 = vrot.lane.b32.xlu0 %v3474, 64
    %v4506 = vpop.permute.xlu0 %4505
    %v4510 = vsel %vm3571, %v4501, 0
    %v4513 = vsel %vm3571, %v4502, 0
    %4515 = vmatprep.subr.mxu0 0.0
    %4516 = vmatpush1.msra.mxu0 %v4504
    %4517 = vmatprep.subr.mxu0 0.0
    %4518 = vmatpush1.msra.mxu0 %v4506
    %4519 = vmatprep.subr.mxu0 0.0
    %4520 = vmatpush1.msra.mxu0 0.0
    %4521 = vmatprep.subr.mxu0 0.0
    %4522 = vmatpush1.msra.mxu0 0.0
    %4523 = vmatprep.subr.mxu0 0.0
    %4524 = vmatpush1.msra.mxu0 0.0
    %4525 = vmatprep.subr.mxu0 0.0
    %4526 = vmatpush1.msra.mxu0 0.0
    %4527 = vmatprep.subr.mxu0 0.0
    %4528 = vmatpush1.msra.mxu0 0.0
    %4529 = vmatprep.subr.mxu0 0.0
    %4530 = vmatpush1.msra.mxu0 0.0
    %4531 = vmatprep.subr.mxu0 0.0
    %4532 = vmatpush1.msra.mxu0 0.0
    %4533 = vmatprep.subr.mxu0 0.0
    %4534 = vmatpush1.msra.mxu0 0.0
    %4535 = vmatprep.subr.mxu0 0.0
    %4536 = vmatpush1.msra.mxu0 0.0
    %4537 = vmatprep.subr.mxu0 0.0
    %4538 = vmatpush1.msra.mxu0 0.0
    %4539 = vmatprep.subr.mxu0 0.0
    %4540 = vmatpush1.msra.mxu0 0.0
    %4541 = vmatprep.subr.mxu0 0.0
    %4542 = vmatpush1.msra.mxu0 0.0
    %4543 = vmatprep.subr.mxu0 0.0
    %4544 = vmatpush1.msra.mxu0 0.0
    %4545 = vmatprep.subr.mxu0 0.0
    %4546 = vmatpush1.msra.mxu0 0.0
    %4547 = vmatprep.subr.mxu0 0.0
    %4548 = vmatpush1.msra.mxu0 0.0
    %4549 = vmatprep.subr.mxu0 0.0
    %4550 = vmatpush1.msra.mxu0 0.0
    %4551 = vmatprep.subr.mxu0 0.0
    %4552 = vmatpush1.msra.mxu0 0.0
    %4553 = vmatprep.subr.mxu0 0.0
    %4554 = vmatpush1.msra.mxu0 0.0
    %4555 = vmatprep.subr.mxu0 0.0
    %4556 = vmatpush1.msra.mxu0 0.0
    %4557 = vmatprep.subr.mxu0 0.0
    %4558 = vmatpush1.msra.mxu0 0.0
    %4559 = vmatprep.subr.mxu0 0.0
    %4560 = vmatpush1.msra.mxu0 0.0
    %4561 = vmatprep.subr.mxu0 0.0
    %4562 = vmatpush1.msra.mxu0 0.0
    %4563 = vmatprep.subr.mxu0 0.0
    %4564 = vmatpush1.msra.mxu0 0.0
    %4565 = vmatprep.subr.mxu0 0.0
    %4566 = vmatpush1.msra.mxu0 0.0
    %4567 = vmatprep.subr.mxu0 0.0
    %4568 = vmatpush1.msra.mxu0 0.0
    %4569 = vmatprep.subr.mxu0 0.0
    %4570 = vmatpush1.msra.mxu0 0.0
    %4571 = vmatprep.subr.mxu0 0.0
    %4572 = vmatpush1.msra.mxu0 0.0
    %4573 = vmatprep.subr.mxu0 0.0
    %4574 = vmatpush1.msra.mxu0 0.0
    %4575 = vmatprep.subr.mxu0 0.0
    %4576 = vmatpush1.msra.mxu0 0.0
    %4577 = vmatprep.subr.mxu0 0.0
    %4578 = vmatpush1.msra.mxu0 0.0
    %4579 = vmatprep.mubr.f32.mxu0 0.0
    %4580 = vmatmul.mubr.f32.gmra.mrb[0].mxu0 %v4510
    %v4581 = vpop.f32.mrb[0].mxu0
    %v4582 = vadd.f32 0.0, %v4581
    %v4583 = vpop.f32.mrb[0].mxu0
    %4584 = vmatprep.mubr.f32.mxu0 0.0
    %4585 = vmatmul.mubr.f32.gmra.mrb[0].mxu0 %v4513
    %v4586 = vpop.f32.mrb[0].mxu0
    %v4587 = vadd.f32 0.0, %v4586
    %v4588 = vpop.f32.mrb[0].mxu0
    %4589 = vdwg.mxu0
    %4590 = vrot.lane.b32.xlu0 %v3469, 120
    %v4591 = vpop.permute.xlu0 %4590
    %4592 = vrot.lane.b32.xlu0 %v3474, 120
    %v4593 = vpop.permute.xlu0 %4592
    %4594 = vrot.lane.b32.xlu0 %v3469, 88
    %v4595 = vpop.permute.xlu0 %4594
    %4596 = vrot.lane.b32.xlu0 %v3474, 88
    %v4597 = vpop.permute.xlu0 %4596
    %v4598 = vsel %vm3487, %v4591, 0
    %v4600 = vsel %vm3487, %v4593, 0
    %v4602 = vsel %vm3487, %v4595, 0
    %v4604 = vsel %vm3487, %v4597, 0
    %4606 = vmatprep.subr.mxu0 0.0
    %4607 = vmatpush1.xpose.msra.mxu0 %v4602
    %4608 = vmatprep.subr.mxu0 0.0
    %4609 = vmatpush1.xpose.msra.mxu0 %v4604
    %4610 = vmatprep.subr.mxu0 0.0
    %4611 = vmatpush1.xpose.msra.mxu0 0.0
    %4612 = vmatprep.subr.mxu0 0.0
    %4613 = vmatpush1.xpose.msra.mxu0 0.0
    %4614 = vmatprep.subr.mxu0 0.0
    %4615 = vmatpush1.xpose.msra.mxu0 0.0
    %4616 = vmatprep.subr.mxu0 0.0
    %4617 = vmatpush1.xpose.msra.mxu0 0.0
    %4618 = vmatprep.subr.mxu0 0.0
    %4619 = vmatpush1.xpose.msra.mxu0 0.0
    %4620 = vmatprep.subr.mxu0 0.0
    %4621 = vmatpush1.xpose.msra.mxu0 0.0
    %4622 = vmatprep.subr.mxu0 0.0
    %4623 = vmatpush1.xpose.msra.mxu0 0.0
    %4624 = vmatprep.subr.mxu0 0.0
    %4625 = vmatpush1.xpose.msra.mxu0 0.0
    %4626 = vmatprep.subr.mxu0 0.0
    %4627 = vmatpush1.xpose.msra.mxu0 0.0
    %4628 = vmatprep.subr.mxu0 0.0
    %4629 = vmatpush1.xpose.msra.mxu0 0.0
    %4630 = vmatprep.subr.mxu0 0.0
    %4631 = vmatpush1.xpose.msra.mxu0 0.0
    %4632 = vmatprep.subr.mxu0 0.0
    %4633 = vmatpush1.xpose.msra.mxu0 0.0
    %4634 = vmatprep.subr.mxu0 0.0
    %4635 = vmatpush1.xpose.msra.mxu0 0.0
    %4636 = vmatprep.subr.mxu0 0.0
    %4637 = vmatpush1.xpose.msra.mxu0 0.0
    %4638 = vmatprep.subr.mxu0 0.0
    %4639 = vmatpush1.xpose.msra.mxu0 0.0
    %4640 = vmatprep.subr.mxu0 0.0
    %4641 = vmatpush1.xpose.msra.mxu0 0.0
    %4642 = vmatprep.subr.mxu0 0.0
    %4643 = vmatpush1.xpose.msra.mxu0 0.0
    %4644 = vmatprep.subr.mxu0 0.0
    %4645 = vmatpush1.xpose.msra.mxu0 0.0
    %4646 = vmatprep.subr.mxu0 0.0
    %4647 = vmatpush1.xpose.msra.mxu0 0.0
    %4648 = vmatprep.subr.mxu0 0.0
    %4649 = vmatpush1.xpose.msra.mxu0 0.0
    %4650 = vmatprep.subr.mxu0 0.0
    %4651 = vmatpush1.xpose.msra.mxu0 0.0
    %4652 = vmatprep.subr.mxu0 0.0
    %4653 = vmatpush1.xpose.msra.mxu0 0.0
    %4654 = vmatprep.subr.mxu0 0.0
    %4655 = vmatpush1.xpose.msra.mxu0 0.0
    %4656 = vmatprep.subr.mxu0 0.0
    %4657 = vmatpush1.xpose.msra.mxu0 0.0
    %4658 = vmatprep.subr.mxu0 0.0
    %4659 = vmatpush1.xpose.msra.mxu0 0.0
    %4660 = vmatprep.subr.mxu0 0.0
    %4661 = vmatpush1.xpose.msra.mxu0 0.0
    %4662 = vmatprep.subr.mxu0 0.0
    %4663 = vmatpush1.xpose.msra.mxu0 0.0
    %4664 = vmatprep.subr.mxu0 0.0
    %4665 = vmatpush1.xpose.msra.mxu0 0.0
    %4666 = vmatprep.subr.mxu0 0.0
    %4667 = vmatpush1.xpose.msra.mxu0 0.0
    %4668 = vmatprep.subr.mxu0 0.0
    %4669 = vmatpush1.xpose.msra.mxu0 0.0
    %4670 = vmatprep.mubr.f32.mxu0 0.0
    %4671 = vmatmul.mubr.f32.gmra.mrb[0].mxu0 %v4598
    %v4672 = vpop.f32.mrb[0].mxu0
    %v4673 = vadd.f32 %v3275, %v4672
    %v4674 = vpop.f32.mrb[0].mxu0
    %4675 = vmatprep.mubr.f32.mxu0 0.0
    %4676 = vmatmul.mubr.f32.gmra.mrb[0].mxu0 %v4600
    %v4677 = vpop.f32.mrb[0].mxu0
    %v4678 = vadd.f32 %v3276, %v4677
    %v4679 = vpop.f32.mrb[0].mxu0
    %4680 = vdwg.mxu0
    %v4681 = vsel %vm3571, %v4673, -inf
    %4682 = vmax.xlane.f32.xlu0 %v4681
    %v4683 = vpop.xlane.xlu0 %4682
    %v4684 = vsel %vm3571, %v4678, -inf
    %4685 = vmax.xlane.f32.xlu0 %v4684
    %v4686 = vpop.xlane.xlu0 %4685
    %v4687 = vsub.f32 %v4673, %v4683
    %v4688 = vsub.f32 %v4678, %v4686
    %v4689 = vmul.f32 %v4687, 1.442695
    %v4690 = vpow.pop %v4689
    %v4691 = vmul.f32 %v4688, 1.442695
    %v4692 = vpow.pop %v4691
    %v4693 = vsel %vm3571, %v4690, 0.0
    %4694 = vadd.xlane.f32.xlu0 %v4693
    %v4695 = vpop.xlane.xlu0 %4694
    %v4696 = vsel %vm3571, %v4692, 0.0
    %4697 = vadd.xlane.f32.xlu0 %v4696
    %v4698 = vpop.xlane.xlu0 %4697
    %v4699 = vrcp.pop %v4695
    %v4700 = vrcp.pop %v4698
    %v4701 = vmul.f32 %v4690, %v4699
    %v4702 = vmul.f32 %v4692, %v4700
    %4703 = vrot.lane.b32.xlu0 %v3469, 56
    %v4704 = vpop.permute.xlu0 %4703
    %4705 = vrot.lane.b32.xlu0 %v3474, 56
    %v4706 = vpop.permute.xlu0 %4705
    %v4710 = vsel %vm3571, %v4701, 0
    %v4713 = vsel %vm3571, %v4702, 0
    %4715 = vmatprep.subr.mxu0 0.0
    %4716 = vmatpush1.msra.mxu0 %v4704
    %4717 = vmatprep.subr.mxu0 0.0
    %4718 = vmatpush1.msra.mxu0 %v4706
    %4719 = vmatprep.subr.mxu0 0.0
    %4720 = vmatpush1.msra.mxu0 0.0
    %4721 = vmatprep.subr.mxu0 0.0
    %4722 = vmatpush1.msra.mxu0 0.0
    %4723 = vmatprep.subr.mxu0 0.0
    %4724 = vmatpush1.msra.mxu0 0.0
    %4725 = vmatprep.subr.mxu0 0.0
    %4726 = vmatpush1.msra.mxu0 0.0
    %4727 = vmatprep.subr.mxu0 0.0
    %4728 = vmatpush1.msra.mxu0 0.0
    %4729 = vmatprep.subr.mxu0 0.0
    %4730 = vmatpush1.msra.mxu0 0.0
    %4731 = vmatprep.subr.mxu0 0.0
    %4732 = vmatpush1.msra.mxu0 0.0
    %4733 = vmatprep.subr.mxu0 0.0
    %4734 = vmatpush1.msra.mxu0 0.0
    %4735 = vmatprep.subr.mxu0 0.0
    %4736 = vmatpush1.msra.mxu0 0.0
    %4737 = vmatprep.subr.mxu0 0.0
    %4738 = vmatpush1.msra.mxu0 0.0
    %4739 = vmatprep.subr.mxu0 0.0
    %4740 = vmatpush1.msra.mxu0 0.0
    %4741 = vmatprep.subr.mxu0 0.0
    %4742 = vmatpush1.msra.mxu0 0.0
    %4743 = vmatprep.subr.mxu0 0.0
    %4744 = vmatpush1.msra.mxu0 0.0
    %4745 = vmatprep.subr.mxu0 0.0
    %4746 = vmatpush1.msra.mxu0 0.0
    %4747 = vmatprep.subr.mxu0 0.0
    %4748 = vmatpush1.msra.mxu0 0.0
    %4749 = vmatprep.subr.mxu0 0.0
    %4750 = vmatpush1.msra.mxu0 0.0
    %4751 = vmatprep.subr.mxu0 0.0
    %4752 = vmatpush1.msra.mxu0 0.0
    %4753 = vmatprep.subr.mxu0 0.0
    %4754 = vmatpush1.msra.mxu0 0.0
    %4755 = vmatprep.subr.mxu0 0.0
    %4756 = vmatpush1.msra.mxu0 0.0
    %4757 = vmatprep.subr.mxu0 0.0
    %4758 = vmatpush1.msra.mxu0 0.0
    %4759 = vmatprep.subr.mxu0 0.0
    %4760 = vmatpush1.msra.mxu0 0.0
    %4761 = vmatprep.subr.mxu0 0.0
    %4762 = vmatpush1.msra.mxu0 0.0
    %4763 = vmatprep.subr.mxu0 0.0
    %4764 = vmatpush1.msra.mxu0 0.0
    %4765 = vmatprep.subr.mxu0 0.0
    %4766 = vmatpush1.msra.mxu0 0.0
    %4767 = vmatprep.subr.mxu0 0.0
    %4768 = vmatpush1.msra.mxu0 0.0
    %4769 = vmatprep.subr.mxu0 0.0
    %4770 = vmatpush1.msra.mxu0 0.0
    %4771 = vmatprep.subr.mxu0 0.0
    %4772 = vmatpush1.msra.mxu0 0.0
    %4773 = vmatprep.subr.mxu0 0.0
    %4774 = vmatpush1.msra.mxu0 0.0
    %4775 = vmatprep.subr.mxu0 0.0
    %4776 = vmatpush1.msra.mxu0 0.0
    %4777 = vmatprep.subr.mxu0 0.0
    %4778 = vmatpush1.msra.mxu0 0.0
    %4779 = vmatprep.mubr.f32.mxu0 0.0
    %4780 = vmatmul.mubr.f32.gmra.mrb[0].mxu0 %v4710
    %v4781 = vpop.f32.mrb[0].mxu0
    %v4782 = vadd.f32 0.0, %v4781
    %v4783 = vpop.f32.mrb[0].mxu0
    %4784 = vmatprep.mubr.f32.mxu0 0.0
    %4785 = vmatmul.mubr.f32.gmra.mrb[0].mxu0 %v4713
    %v4786 = vpop.f32.mrb[0].mxu0
    %v4787 = vadd.f32 0.0, %v4786
    %v4788 = vpop.f32.mrb[0].mxu0
    %4789 = vdwg.mxu0
    %4790 = vrot.lane.b32.xlu0 %v3469, 112
    %v4791 = vpop.permute.xlu0 %4790
    %4792 = vrot.lane.b32.xlu0 %v3474, 112
    %v4793 = vpop.permute.xlu0 %4792
    %4794 = vrot.lane.b32.xlu0 %v3469, 80
    %v4795 = vpop.permute.xlu0 %4794
    %4796 = vrot.lane.b32.xlu0 %v3474, 80
    %v4797 = vpop.permute.xlu0 %4796
    %v4798 = vsel %vm3487, %v4791, 0
    %v4800 = vsel %vm3487, %v4793, 0
    %v4802 = vsel %vm3487, %v4795, 0
    %v4804 = vsel %vm3487, %v4797, 0
    %4806 = vmatprep.subr.mxu0 0.0
    %4807 = vmatpush1.xpose.msra.mxu0 %v4802
    %4808 = vmatprep.subr.mxu0 0.0
    %4809 = vmatpush1.xpose.msra.mxu0 %v4804
    %4810 = vmatprep.subr.mxu0 0.0
    %4811 = vmatpush1.xpose.msra.mxu0 0.0
    %4812 = vmatprep.subr.mxu0 0.0
    %4813 = vmatpush1.xpose.msra.mxu0 0.0
    %4814 = vmatprep.subr.mxu0 0.0
    %4815 = vmatpush1.xpose.msra.mxu0 0.0
    %4816 = vmatprep.subr.mxu0 0.0
    %4817 = vmatpush1.xpose.msra.mxu0 0.0
    %4818 = vmatprep.subr.mxu0 0.0
    %4819 = vmatpush1.xpose.msra.mxu0 0.0
    %4820 = vmatprep.subr.mxu0 0.0
    %4821 = vmatpush1.xpose.msra.mxu0 0.0
    %4822 = vmatprep.subr.mxu0 0.0
    %4823 = vmatpush1.xpose.msra.mxu0 0.0
    %4824 = vmatprep.subr.mxu0 0.0
    %4825 = vmatpush1.xpose.msra.mxu0 0.0
    %4826 = vmatprep.subr.mxu0 0.0
    %4827 = vmatpush1.xpose.msra.mxu0 0.0
    %4828 = vmatprep.subr.mxu0 0.0
    %4829 = vmatpush1.xpose.msra.mxu0 0.0
    %4830 = vmatprep.subr.mxu0 0.0
    %4831 = vmatpush1.xpose.msra.mxu0 0.0
    %4832 = vmatprep.subr.mxu0 0.0
    %4833 = vmatpush1.xpose.msra.mxu0 0.0
    %4834 = vmatprep.subr.mxu0 0.0
    %4835 = vmatpush1.xpose.msra.mxu0 0.0
    %4836 = vmatprep.subr.mxu0 0.0
    %4837 = vmatpush1.xpose.msra.mxu0 0.0
    %4838 = vmatprep.subr.mxu0 0.0
    %4839 = vmatpush1.xpose.msra.mxu0 0.0
    %4840 = vmatprep.subr.mxu0 0.0
    %4841 = vmatpush1.xpose.msra.mxu0 0.0
    %4842 = vmatprep.subr.mxu0 0.0
    %4843 = vmatpush1.xpose.msra.mxu0 0.0
    %4844 = vmatprep.subr.mxu0 0.0
    %4845 = vmatpush1.xpose.msra.mxu0 0.0
    %4846 = vmatprep.subr.mxu0 0.0
    %4847 = vmatpush1.xpose.msra.mxu0 0.0
    %4848 = vmatprep.subr.mxu0 0.0
    %4849 = vmatpush1.xpose.msra.mxu0 0.0
    %4850 = vmatprep.subr.mxu0 0.0
    %4851 = vmatpush1.xpose.msra.mxu0 0.0
    %4852 = vmatprep.subr.mxu0 0.0
    %4853 = vmatpush1.xpose.msra.mxu0 0.0
    %4854 = vmatprep.subr.mxu0 0.0
    %4855 = vmatpush1.xpose.msra.mxu0 0.0
    %4856 = vmatprep.subr.mxu0 0.0
    %4857 = vmatpush1.xpose.msra.mxu0 0.0
    %4858 = vmatprep.subr.mxu0 0.0
    %4859 = vmatpush1.xpose.msra.mxu0 0.0
    %4860 = vmatprep.subr.mxu0 0.0
    %4861 = vmatpush1.xpose.msra.mxu0 0.0
    %4862 = vmatprep.subr.mxu0 0.0
    %4863 = vmatpush1.xpose.msra.mxu0 0.0
    %4864 = vmatprep.subr.mxu0 0.0
    %4865 = vmatpush1.xpose.msra.mxu0 0.0
    %4866 = vmatprep.subr.mxu0 0.0
    %4867 = vmatpush1.xpose.msra.mxu0 0.0
    %4868 = vmatprep.subr.mxu0 0.0
    %4869 = vmatpush1.xpose.msra.mxu0 0.0
    %4870 = vmatprep.mubr.f32.mxu0 0.0
    %4871 = vmatmul.mubr.f32.gmra.mrb[0].mxu0 %v4798
    %v4872 = vpop.f32.mrb[0].mxu0
    %v4873 = vadd.f32 %v3284, %v4872
    %v4874 = vpop.f32.mrb[0].mxu0
    %4875 = vmatprep.mubr.f32.mxu0 0.0
    %4876 = vmatmul.mubr.f32.gmra.mrb[0].mxu0 %v4800
    %v4877 = vpop.f32.mrb[0].mxu0
    %v4878 = vadd.f32 %v3285, %v4877
    %v4879 = vpop.f32.mrb[0].mxu0
    %4880 = vdwg.mxu0
    %v4881 = vsel %vm3571, %v4873, -inf
    %4882 = vmax.xlane.f32.xlu0 %v4881
    %v4883 = vpop.xlane.xlu0 %4882
    %v4884 = vsel %vm3571, %v4878, -inf
    %4885 = vmax.xlane.f32.xlu0 %v4884
    %v4886 = vpop.xlane.xlu0 %4885
    %v4887 = vsub.f32 %v4873, %v4883
    %v4888 = vsub.f32 %v4878, %v4886
    %v4889 = vmul.f32 %v4887, 1.442695
    %v4890 = vpow.pop %v4889
    %v4891 = vmul.f32 %v4888, 1.442695
    %v4892 = vpow.pop %v4891
    %v4893 = vsel %vm3571, %v4890, 0.0
    %4894 = vadd.xlane.f32.xlu0 %v4893
    %v4895 = vpop.xlane.xlu0 %4894
    %v4896 = vsel %vm3571, %v4892, 0.0
    %4897 = vadd.xlane.f32.xlu0 %v4896
    %v4898 = vpop.xlane.xlu0 %4897
    %v4899 = vrcp.pop %v4895
    %v4900 = vrcp.pop %v4898
    %v4901 = vmul.f32 %v4890, %v4899
    %v4902 = vmul.f32 %v4892, %v4900
    %4903 = vrot.lane.b32.xlu0 %v3469, 48
    %v4904 = vpop.permute.xlu0 %4903
    %4905 = vrot.lane.b32.xlu0 %v3474, 48
    %v4906 = vpop.permute.xlu0 %4905
    %v4910 = vsel %vm3571, %v4901, 0
    %v4913 = vsel %vm3571, %v4902, 0
    %4915 = vmatprep.subr.mxu0 0.0
    %4916 = vmatpush1.msra.mxu0 %v4904
    %4917 = vmatprep.subr.mxu0 0.0
    %4918 = vmatpush1.msra.mxu0 %v4906
    %4919 = vmatprep.subr.mxu0 0.0
    %4920 = vmatpush1.msra.mxu0 0.0
    %4921 = vmatprep.subr.mxu0 0.0
    %4922 = vmatpush1.msra.mxu0 0.0
    %4923 = vmatprep.subr.mxu0 0.0
    %4924 = vmatpush1.msra.mxu0 0.0
    %4925 = vmatprep.subr.mxu0 0.0
    %4926 = vmatpush1.msra.mxu0 0.0
    %4927 = vmatprep.subr.mxu0 0.0
    %4928 = vmatpush1.msra.mxu0 0.0
    %4929 = vmatprep.subr.mxu0 0.0
    %4930 = vmatpush1.msra.mxu0 0.0
    %4931 = vmatprep.subr.mxu0 0.0
    %4932 = vmatpush1.msra.mxu0 0.0
    %4933 = vmatprep.subr.mxu0 0.0
    %4934 = vmatpush1.msra.mxu0 0.0
    %4935 = vmatprep.subr.mxu0 0.0
    %4936 = vmatpush1.msra.mxu0 0.0
    %4937 = vmatprep.subr.mxu0 0.0
    %4938 = vmatpush1.msra.mxu0 0.0
    %4939 = vmatprep.subr.mxu0 0.0
    %4940 = vmatpush1.msra.mxu0 0.0
    %4941 = vmatprep.subr.mxu0 0.0
    %4942 = vmatpush1.msra.mxu0 0.0
    %4943 = vmatprep.subr.mxu0 0.0
    %4944 = vmatpush1.msra.mxu0 0.0
    %4945 = vmatprep.subr.mxu0 0.0
    %4946 = vmatpush1.msra.mxu0 0.0
    %4947 = vmatprep.subr.mxu0 0.0
    %4948 = vmatpush1.msra.mxu0 0.0
    %4949 = vmatprep.subr.mxu0 0.0
    %4950 = vmatpush1.msra.mxu0 0.0
    %4951 = vmatprep.subr.mxu0 0.0
    %4952 = vmatpush1.msra.mxu0 0.0
    %4953 = vmatprep.subr.mxu0 0.0
    %4954 = vmatpush1.msra.mxu0 0.0
    %4955 = vmatprep.subr.mxu0 0.0
    %4956 = vmatpush1.msra.mxu0 0.0
    %4957 = vmatprep.subr.mxu0 0.0
    %4958 = vmatpush1.msra.mxu0 0.0
    %4959 = vmatprep.subr.mxu0 0.0
    %4960 = vmatpush1.msra.mxu0 0.0
    %4961 = vmatprep.subr.mxu0 0.0
    %4962 = vmatpush1.msra.mxu0 0.0
    %4963 = vmatprep.subr.mxu0 0.0
    %4964 = vmatpush1.msra.mxu0 0.0
    %4965 = vmatprep.subr.mxu0 0.0
    %4966 = vmatpush1.msra.mxu0 0.0
    %4967 = vmatprep.subr.mxu0 0.0
    %4968 = vmatpush1.msra.mxu0 0.0
    %4969 = vmatprep.subr.mxu0 0.0
    %4970 = vmatpush1.msra.mxu0 0.0
    %4971 = vmatprep.subr.mxu0 0.0
    %4972 = vmatpush1.msra.mxu0 0.0
    %4973 = vmatprep.subr.mxu0 0.0
    %4974 = vmatpush1.msra.mxu0 0.0
    %4975 = vmatprep.subr.mxu0 0.0
    %4976 = vmatpush1.msra.mxu0 0.0
    %4977 = vmatprep.subr.mxu0 0.0
    %4978 = vmatpush1.msra.mxu0 0.0
    %4979 = vmatprep.mubr.f32.mxu0 0.0
    %4980 = vmatmul.mubr.f32.gmra.mrb[0].mxu0 %v4910
    %v4981 = vpop.f32.mrb[0].mxu0
    %v4982 = vadd.f32 0.0, %v4981
    %v4983 = vpop.f32.mrb[0].mxu0
    %4984 = vmatprep.mubr.f32.mxu0 0.0
    %4985 = vmatmul.mubr.f32.gmra.mrb[0].mxu0 %v4913
    %v4986 = vpop.f32.mrb[0].mxu0
    %v4987 = vadd.f32 0.0, %v4986
    %v4988 = vpop.f32.mrb[0].mxu0
    %4989 = vdwg.mxu0
    %4990 = vrot.lane.b32.xlu0 %v3469, 104
    %v4991 = vpop.permute.xlu0 %4990
    %4992 = vrot.lane.b32.xlu0 %v3474, 104
    %v4993 = vpop.permute.xlu0 %4992
    %4994 = vrot.lane.b32.xlu0 %v3469, 72
    %v4995 = vpop.permute.xlu0 %4994
    %4996 = vrot.lane.b32.xlu0 %v3474, 72
    %v4997 = vpop.permute.xlu0 %4996
    %v4998 = vsel %vm3487, %v4991, 0
    %v5000 = vsel %vm3487, %v4993, 0
    %v5002 = vsel %vm3487, %v4995, 0
    %v5004 = vsel %vm3487, %v4997, 0
    %5006 = vmatprep.subr.mxu0 0.0
    %5007 = vmatpush1.xpose.msra.mxu0 %v5002
    %5008 = vmatprep.subr.mxu0 0.0
    %5009 = vmatpush1.xpose.msra.mxu0 %v5004
    %5010 = vmatprep.subr.mxu0 0.0
    %5011 = vmatpush1.xpose.msra.mxu0 0.0
    %5012 = vmatprep.subr.mxu0 0.0
    %5013 = vmatpush1.xpose.msra.mxu0 0.0
    %5014 = vmatprep.subr.mxu0 0.0
    %5015 = vmatpush1.xpose.msra.mxu0 0.0
    %5016 = vmatprep.subr.mxu0 0.0
    %5017 = vmatpush1.xpose.msra.mxu0 0.0
    %5018 = vmatprep.subr.mxu0 0.0
    %5019 = vmatpush1.xpose.msra.mxu0 0.0
    %5020 = vmatprep.subr.mxu0 0.0
    %5021 = vmatpush1.xpose.msra.mxu0 0.0
    %5022 = vmatprep.subr.mxu0 0.0
    %5023 = vmatpush1.xpose.msra.mxu0 0.0
    %5024 = vmatprep.subr.mxu0 0.0
    %5025 = vmatpush1.xpose.msra.mxu0 0.0
    %5026 = vmatprep.subr.mxu0 0.0
    %5027 = vmatpush1.xpose.msra.mxu0 0.0
    %5028 = vmatprep.subr.mxu0 0.0
    %5029 = vmatpush1.xpose.msra.mxu0 0.0
    %5030 = vmatprep.subr.mxu0 0.0
    %5031 = vmatpush1.xpose.msra.mxu0 0.0
    %5032 = vmatprep.subr.mxu0 0.0
    %5033 = vmatpush1.xpose.msra.mxu0 0.0
    %5034 = vmatprep.subr.mxu0 0.0
    %5035 = vmatpush1.xpose.msra.mxu0 0.0
    %5036 = vmatprep.subr.mxu0 0.0
    %5037 = vmatpush1.xpose.msra.mxu0 0.0
    %5038 = vmatprep.subr.mxu0 0.0
    %5039 = vmatpush1.xpose.msra.mxu0 0.0
    %5040 = vmatprep.subr.mxu0 0.0
    %5041 = vmatpush1.xpose.msra.mxu0 0.0
    %5042 = vmatprep.subr.mxu0 0.0
    %5043 = vmatpush1.xpose.msra.mxu0 0.0
    %5044 = vmatprep.subr.mxu0 0.0
    %5045 = vmatpush1.xpose.msra.mxu0 0.0
    %5046 = vmatprep.subr.mxu0 0.0
    %5047 = vmatpush1.xpose.msra.mxu0 0.0
    %5048 = vmatprep.subr.mxu0 0.0
    %5049 = vmatpush1.xpose.msra.mxu0 0.0
    %5050 = vmatprep.subr.mxu0 0.0
    %5051 = vmatpush1.xpose.msra.mxu0 0.0
    %5052 = vmatprep.subr.mxu0 0.0
    %5053 = vmatpush1.xpose.msra.mxu0 0.0
    %5054 = vmatprep.subr.mxu0 0.0
    %5055 = vmatpush1.xpose.msra.mxu0 0.0
    %5056 = vmatprep.subr.mxu0 0.0
    %5057 = vmatpush1.xpose.msra.mxu0 0.0
    %5058 = vmatprep.subr.mxu0 0.0
    %5059 = vmatpush1.xpose.msra.mxu0 0.0
    %5060 = vmatprep.subr.mxu0 0.0
    %5061 = vmatpush1.xpose.msra.mxu0 0.0
    %5062 = vmatprep.subr.mxu0 0.0
    %5063 = vmatpush1.xpose.msra.mxu0 0.0
    %5064 = vmatprep.subr.mxu0 0.0
    %5065 = vmatpush1.xpose.msra.mxu0 0.0
    %5066 = vmatprep.subr.mxu0 0.0
    %5067 = vmatpush1.xpose.msra.mxu0 0.0
    %5068 = vmatprep.subr.mxu0 0.0
    %5069 = vmatpush1.xpose.msra.mxu0 0.0
    %5070 = vmatprep.mubr.f32.mxu0 0.0
    %5071 = vmatmul.mubr.f32.gmra.mrb[0].mxu0 %v4998
    %v5072 = vpop.f32.mrb[0].mxu0
    %v5073 = vadd.f32 %v3293, %v5072
    %v5074 = vpop.f32.mrb[0].mxu0
    %5075 = vmatprep.mubr.f32.mxu0 0.0
    %5076 = vmatmul.mubr.f32.gmra.mrb[0].mxu0 %v5000
    %v5077 = vpop.f32.mrb[0].mxu0
    %v5078 = vadd.f32 %v3294, %v5077
    %v5079 = vpop.f32.mrb[0].mxu0
    %5080 = vdwg.mxu0
    %v5081 = vsel %vm3571, %v5073, -inf
    %5082 = vmax.xlane.f32.xlu0 %v5081
    %v5083 = vpop.xlane.xlu0 %5082
    %v5084 = vsel %vm3571, %v5078, -inf
    %5085 = vmax.xlane.f32.xlu0 %v5084
    %v5086 = vpop.xlane.xlu0 %5085
    %v5087 = vsub.f32 %v5073, %v5083
    %v5088 = vsub.f32 %v5078, %v5086
    %v5089 = vmul.f32 %v5087, 1.442695
    %v5090 = vpow.pop %v5089
    %v5091 = vmul.f32 %v5088, 1.442695
    %v5092 = vpow.pop %v5091
    %v5093 = vsel %vm3571, %v5090, 0.0
    %5094 = vadd.xlane.f32.xlu0 %v5093
    %v5095 = vpop.xlane.xlu0 %5094
    %v5096 = vsel %vm3571, %v5092, 0.0
    %5097 = vadd.xlane.f32.xlu0 %v5096
    %v5098 = vpop.xlane.xlu0 %5097
    %v5099 = vrcp.pop %v5095
    %v5100 = vrcp.pop %v5098
    %v5101 = vmul.f32 %v5090, %v5099
    %v5102 = vmul.f32 %v5092, %v5100
    %5103 = vrot.lane.b32.xlu0 %v3469, 40
    %v5104 = vpop.permute.xlu0 %5103
    %5105 = vrot.lane.b32.xlu0 %v3474, 40
    %v5106 = vpop.permute.xlu0 %5105
    %v5110 = vsel %vm3571, %v5101, 0
    %v5113 = vsel %vm3571, %v5102, 0
    %5115 = vmatprep.subr.mxu0 0.0
    %5116 = vmatpush1.msra.mxu0 %v5104
    %5117 = vmatprep.subr.mxu0 0.0
    %5118 = vmatpush1.msra.mxu0 %v5106
    %5119 = vmatprep.subr.mxu0 0.0
    %5120 = vmatpush1.msra.mxu0 0.0
    %5121 = vmatprep.subr.mxu0 0.0
    %5122 = vmatpush1.msra.mxu0 0.0
    %5123 = vmatprep.subr.mxu0 0.0
    %5124 = vmatpush1.msra.mxu0 0.0
    %5125 = vmatprep.subr.mxu0 0.0
    %5126 = vmatpush1.msra.mxu0 0.0
    %5127 = vmatprep.subr.mxu0 0.0
    %5128 = vmatpush1.msra.mxu0 0.0
    %5129 = vmatprep.subr.mxu0 0.0
    %5130 = vmatpush1.msra.mxu0 0.0
    %5131 = vmatprep.subr.mxu0 0.0
    %5132 = vmatpush1.msra.mxu0 0.0
    %5133 = vmatprep.subr.mxu0 0.0
    %5134 = vmatpush1.msra.mxu0 0.0
    %5135 = vmatprep.subr.mxu0 0.0
    %5136 = vmatpush1.msra.mxu0 0.0
    %5137 = vmatprep.subr.mxu0 0.0
    %5138 = vmatpush1.msra.mxu0 0.0
    %5139 = vmatprep.subr.mxu0 0.0
    %5140 = vmatpush1.msra.mxu0 0.0
    %5141 = vmatprep.subr.mxu0 0.0
    %5142 = vmatpush1.msra.mxu0 0.0
    %5143 = vmatprep.subr.mxu0 0.0
    %5144 = vmatpush1.msra.mxu0 0.0
    %5145 = vmatprep.subr.mxu0 0.0
    %5146 = vmatpush1.msra.mxu0 0.0
    %5147 = vmatprep.subr.mxu0 0.0
    %5148 = vmatpush1.msra.mxu0 0.0
    %5149 = vmatprep.subr.mxu0 0.0
    %5150 = vmatpush1.msra.mxu0 0.0
    %5151 = vmatprep.subr.mxu0 0.0
    %5152 = vmatpush1.msra.mxu0 0.0
    %5153 = vmatprep.subr.mxu0 0.0
    %5154 = vmatpush1.msra.mxu0 0.0
    %5155 = vmatprep.subr.mxu0 0.0
    %5156 = vmatpush1.msra.mxu0 0.0
    %5157 = vmatprep.subr.mxu0 0.0
    %5158 = vmatpush1.msra.mxu0 0.0
    %5159 = vmatprep.subr.mxu0 0.0
    %5160 = vmatpush1.msra.mxu0 0.0
    %5161 = vmatprep.subr.mxu0 0.0
    %5162 = vmatpush1.msra.mxu0 0.0
    %5163 = vmatprep.subr.mxu0 0.0
    %5164 = vmatpush1.msra.mxu0 0.0
    %5165 = vmatprep.subr.mxu0 0.0
    %5166 = vmatpush1.msra.mxu0 0.0
    %5167 = vmatprep.subr.mxu0 0.0
    %5168 = vmatpush1.msra.mxu0 0.0
    %5169 = vmatprep.subr.mxu0 0.0
    %5170 = vmatpush1.msra.mxu0 0.0
    %5171 = vmatprep.subr.mxu0 0.0
    %5172 = vmatpush1.msra.mxu0 0.0
    %5173 = vmatprep.subr.mxu0 0.0
    %5174 = vmatpush1.msra.mxu0 0.0
    %5175 = vmatprep.subr.mxu0 0.0
    %5176 = vmatpush1.msra.mxu0 0.0
    %5177 = vmatprep.subr.mxu0 0.0
    %5178 = vmatpush1.msra.mxu0 0.0
    %5179 = vmatprep.mubr.f32.mxu0 0.0
    %5180 = vmatmul.mubr.f32.gmra.mrb[0].mxu0 %v5110
    %v5181 = vpop.f32.mrb[0].mxu0
    %v5182 = vadd.f32 0.0, %v5181
    %v5183 = vpop.f32.mrb[0].mxu0
    %5184 = vmatprep.mubr.f32.mxu0 0.0
    %5185 = vmatmul.mubr.f32.gmra.mrb[0].mxu0 %v5113
    %v5186 = vpop.f32.mrb[0].mxu0
    %v5187 = vadd.f32 0.0, %v5186
    %v5188 = vpop.f32.mrb[0].mxu0
    %5189 = vdwg.mxu0
    %5192 = vrot.lane.b32.xlu0 %v4782, 8
    %v5193 = vpop.permute.xlu0 %5192
    %5194 = vrot.lane.b32.xlu0 %v4787, 8
    %v5195 = vpop.permute.xlu0 %5194
    %5200 = vrot.lane.b32.xlu0 %v4982, 16
    %v5201 = vpop.permute.xlu0 %5200
    %5202 = vrot.lane.b32.xlu0 %v4987, 16
    %v5203 = vpop.permute.xlu0 %5202
    %5208 = vrot.lane.b32.xlu0 %v5182, 24
    %v5209 = vpop.permute.xlu0 %5208
    %5210 = vrot.lane.b32.xlu0 %v5187, 24
    %v5211 = vpop.permute.xlu0 %5210
    %v5214 = vsel %vm3487, %v4582, %v5193
    %v5215 = vsel %vm3487, %v4587, %v5195
    %v5216 = vsel %vm3571, %v5214, %v5201
    %v5217 = vsel %vm3571, %v5215, %v5203
    %v5218 = vsel %vm830, %v5216, %v5209
    %v5219 = vsel %vm830, %v5217, %v5211
    %v5221 = vsel %vm540, %v5218, 0
    %v5224 = vsel %vm540, %v5219, 0
    %5226 = vmatprep.subr.mxu0 0.0
    %5227 = vmatpush1.msra.mxu0 %v3477
    %5228 = vmatprep.subr.mxu0 0.0
    %5229 = vmatpush1.msra.mxu0 %v3478
    %5230 = vmatprep.subr.mxu0 0.0
    %5231 = vmatpush1.msra.mxu0 %v3479
    %5232 = vmatprep.subr.mxu0 0.0
    %5233 = vmatpush1.msra.mxu0 %v3480
    %5234 = vmatprep.subr.mxu0 0.0
    %5235 = vmatpush1.msra.mxu0 0.0
    %5236 = vmatprep.subr.mxu0 0.0
    %5237 = vmatpush1.msra.mxu0 0.0
    %5238 = vmatprep.subr.mxu0 0.0
    %5239 = vmatpush1.msra.mxu0 0.0
    %5240 = vmatprep.subr.mxu0 0.0
    %5241 = vmatpush1.msra.mxu0 0.0
    %5242 = vmatprep.subr.mxu0 0.0
    %5243 = vmatpush1.msra.mxu0 0.0
    %5244 = vmatprep.subr.mxu0 0.0
    %5245 = vmatpush1.msra.mxu0 0.0
    %5246 = vmatprep.subr.mxu0 0.0
    %5247 = vmatpush1.msra.mxu0 0.0
    %5248 = vmatprep.subr.mxu0 0.0
    %5249 = vmatpush1.msra.mxu0 0.0
    %5250 = vmatprep.subr.mxu0 0.0
    %5251 = vmatpush1.msra.mxu0 0.0
    %5252 = vmatprep.subr.mxu0 0.0
    %5253 = vmatpush1.msra.mxu0 0.0
    %5254 = vmatprep.subr.mxu0 0.0
    %5255 = vmatpush1.msra.mxu0 0.0
    %5256 = vmatprep.subr.mxu0 0.0
    %5257 = vmatpush1.msra.mxu0 0.0
    %5258 = vmatprep.subr.mxu0 0.0
    %5259 = vmatpush1.msra.mxu0 0.0
    %5260 = vmatprep.subr.mxu0 0.0
    %5261 = vmatpush1.msra.mxu0 0.0
    %5262 = vmatprep.subr.mxu0 0.0
    %5263 = vmatpush1.msra.mxu0 0.0
    %5264 = vmatprep.subr.mxu0 0.0
    %5265 = vmatpush1.msra.mxu0 0.0
    %5266 = vmatprep.subr.mxu0 0.0
    %5267 = vmatpush1.msra.mxu0 0.0
    %5268 = vmatprep.subr.mxu0 0.0
    %5269 = vmatpush1.msra.mxu0 0.0
    %5270 = vmatprep.subr.mxu0 0.0
    %5271 = vmatpush1.msra.mxu0 0.0
    %5272 = vmatprep.subr.mxu0 0.0
    %5273 = vmatpush1.msra.mxu0 0.0
    %5274 = vmatprep.subr.mxu0 0.0
    %5275 = vmatpush1.msra.mxu0 0.0
    %5276 = vmatprep.subr.mxu0 0.0
    %5277 = vmatpush1.msra.mxu0 0.0
    %5278 = vmatprep.subr.mxu0 0.0
    %5279 = vmatpush1.msra.mxu0 0.0
    %5280 = vmatprep.subr.mxu0 0.0
    %5281 = vmatpush1.msra.mxu0 0.0
    %5282 = vmatprep.subr.mxu0 0.0
    %5283 = vmatpush1.msra.mxu0 0.0
    %5284 = vmatprep.subr.mxu0 0.0
    %5285 = vmatpush1.msra.mxu0 0.0
    %5286 = vmatprep.subr.mxu0 0.0
    %5287 = vmatpush1.msra.mxu0 0.0
    %5288 = vmatprep.subr.mxu0 0.0
    %5289 = vmatpush1.msra.mxu0 0.0
    %5290 = vmatprep.mubr.f32.mxu0 0.0
    %5291 = vmatmul.mubr.f32.gmra.mrb[0].mxu0 %v5221
    %v5292 = vpop.f32.mrb[0].mxu0
    %v5293 = vadd.f32 0.0, %v5292
    %v5294 = vpop.f32.mrb[0].mxu0
    %5295 = vmatprep.mubr.f32.mxu0 0.0
    %5296 = vmatmul.mubr.f32.gmra.mrb[0].mxu0 %v5224
    %v5297 = vpop.f32.mrb[0].mxu0
    %v5298 = vadd.f32 0.0, %v5297
    %v5299 = vpop.f32.mrb[0].mxu0
    %5300 = vdwg.mxu0
    %v5301 = vld [vmem:[#allocation2] sm:$0x1]
    %v5303 = vlaneseq
    %v5304 = vshrl.u32 %v5303, 7
    %v5305 = vsub.s32 0, %v5304
    %v5306 = vrot.slane %v5301, %v5305
    %v5308 = vadd.f32 %v4384, %v5306
    %v5309 = vadd.f32 %v4389, %v5306
    %v5310 = vadd.f32 %v5293, %v5306
    %v5311 = vadd.f32 %v5298, %v5306
    %v5312 = vadd.f32 %v3190, %v5308
    %v5313 = vadd.f32 %v3191, %v5309
    %v5314 = vadd.f32 %v3192, %v5310
    %v5315 = vadd.f32 %v3193, %v5311
    %v5316 = vld [vmem:[#allocation4] sm:$0x1]
    %v5317 = vld [vmem:[#allocation6] sm:$0x1]
    %v5318 = vsel %vm540, %v5312, 0.0
    %5319 = vadd.xlane.f32.xlu0 %v5318
    %v5320 = vpop.xlane.xlu0 %5319
    %v5321 = vsel %vm540, %v5313, 0.0
    %5322 = vadd.xlane.f32.xlu0 %v5321
    %v5323 = vpop.xlane.xlu0 %5322
    %v5324 = vsel %vm540, %v5314, 0.0
    %5325 = vadd.xlane.f32.xlu0 %v5324
    %v5326 = vpop.xlane.xlu0 %5325
    %v5327 = vsel %vm540, %v5315, 0.0
    %5328 = vadd.xlane.f32.xlu0 %v5327
    %v5329 = vpop.xlane.xlu0 %5328
    %v5330 = vmul.f32 %v5320, %v553
    %v5331 = vmul.f32 %v5323, %v553
    %v5332 = vmul.f32 %v5326, %v553
    %v5333 = vmul.f32 %v5329, %v553
    %v5334 = vsub.f32 %v5312, %v5330
    %v5335 = vsub.f32 %v5313, %v5331
    %v5336 = vsub.f32 %v5314, %v5332
    %v5337 = vsub.f32 %v5315, %v5333
    %v5338 = vmul.f32 %v5334, %v5334
    %v5339 = vmul.f32 %v5335, %v5335
    %v5340 = vmul.f32 %v5336, %v5336
    %v5341 = vmul.f32 %v5337, %v5337
    %v5342 = vsel %vm540, %v5338, 0.0
    %5343 = vadd.xlane.f32.xlu0 %v5342
    %v5344 = vpop.xlane.xlu0 %5343
    %v5345 = vsel %vm540, %v5339, 0.0
    %5346 = vadd.xlane.f32.xlu0 %v5345
    %v5347 = vpop.xlane.xlu0 %5346
    %v5348 = vsel %vm540, %v5340, 0.0
    %5349 = vadd.xlane.f32.xlu0 %v5348
    %v5350 = vpop.xlane.xlu0 %5349
    %v5351 = vsel %vm540, %v5341, 0.0
    %5352 = vadd.xlane.f32.xlu0 %v5351
    %v5353 = vpop.xlane.xlu0 %5352
    %v5354 = vmul.f32 %v5344, %v553
    %v5355 = vmul.f32 %v5347, %v553
    %v5356 = vmul.f32 %v5350, %v553
    %v5357 = vmul.f32 %v5353, %v553
    %v5358 = vadd.f32 %v5354, 1e-05
    %v5359 = vadd.f32 %v5355, 1e-05
    %v5360 = vadd.f32 %v5356, 1e-05
    %v5361 = vadd.f32 %v5357, 1e-05
    %v5362 = vrsqrt.pop %v5358
    %v5363 = vrsqrt.pop %v5359
    %v5364 = vrsqrt.pop %v5360
    %v5365 = vrsqrt.pop %v5361
    %v5366 = vmul.f32 %v5334, %v5362
    %v5367 = vmul.f32 %v5335, %v5363
    %v5368 = vmul.f32 %v5336, %v5364
    %v5369 = vmul.f32 %v5337, %v5365
    %v5371 = vlaneseq
    %v5372 = vshrl.u32 %v5371, 7
    %v5373 = vsub.s32 0, %v5372
    %v5374 = vrot.slane %v5316, %v5373
    %v5376 = vmul.f32 %v5366, %v5374
    %v5377 = vmul.f32 %v5367, %v5374
    %v5378 = vmul.f32 %v5368, %v5374
    %v5379 = vmul.f32 %v5369, %v5374
    %v5381 = vlaneseq
    %v5382 = vshrl.u32 %v5381, 7
    %v5383 = vsub.s32 0, %v5382
    %v5384 = vrot.slane %v5317, %v5383
    %v5386 = vadd.f32 %v5376, %v5384
    %v5387 = vadd.f32 %v5377, %v5384
    %v5388 = vadd.f32 %v5378, %v5384
    %v5389 = vadd.f32 %v5379, %v5384
    %v5390 = vld [vmem:[%s79] sm:$0xff]
    %v5391 = vld [vmem:[%s79 + $0x8] sm:$0xff]
    %v5392 = vld [vmem:[%s79 + $0x10] sm:$0xff]
    %v5393 = vld [vmem:[%s79 + $0x18] sm:$0xff]
    %v5394 = vld [vmem:[#allocation7] sm:$0x1]
    %v5396 = vlaneseq
    %v5397 = vshrl.u32 %v5396, 7
    %v5398 = vsub.s32 0, %v5397
    %v5399 = vrot.slane %v5394, %v5398
    %v5402 = vsel %vm540, %v5386, 0
    %v5405 = vsel %vm540, %v5387, 0
    %v5408 = vsel %vm540, %v5388, 0
    %v5411 = vsel %vm540, %v5389, 0
    %5413 = vmatprep.subr.mxu0 0.0
    %5414 = vmatpush1.msra.mxu0 %v5390
    %5415 = vmatprep.subr.mxu0 0.0
    %5416 = vmatpush1.msra.mxu0 %v5391
    %5417 = vmatprep.subr.mxu0 0.0
    %5418 = vmatpush1.msra.mxu0 %v5392
    %5419 = vmatprep.subr.mxu0 0.0
    %5420 = vmatpush1.msra.mxu0 %v5393
    %5421 = vmatprep.subr.mxu0 0.0
    %5422 = vmatpush1.msra.mxu0 0.0
    %5423 = vmatprep.subr.mxu0 0.0
    %5424 = vmatpush1.msra.mxu0 0.0
    %5425 = vmatprep.subr.mxu0 0.0
    %5426 = vmatpush1.msra.mxu0 0.0
    %5427 = vmatprep.subr.mxu0 0.0
    %5428 = vmatpush1.msra.mxu0 0.0
    %5429 = vmatprep.subr.mxu0 0.0
    %5430 = vmatpush1.msra.mxu0 0.0
    %5431 = vmatprep.subr.mxu0 0.0
    %5432 = vmatpush1.msra.mxu0 0.0
    %5433 = vmatprep.subr.mxu0 0.0
    %5434 = vmatpush1.msra.mxu0 0.0
    %5435 = vmatprep.subr.mxu0 0.0
    %5436 = vmatpush1.msra.mxu0 0.0
    %5437 = vmatprep.subr.mxu0 0.0
    %5438 = vmatpush1.msra.mxu0 0.0
    %5439 = vmatprep.subr.mxu0 0.0
    %5440 = vmatpush1.msra.mxu0 0.0
    %5441 = vmatprep.subr.mxu0 0.0
    %5442 = vmatpush1.msra.mxu0 0.0
    %5443 = vmatprep.subr.mxu0 0.0
    %5444 = vmatpush1.msra.mxu0 0.0
    %5445 = vmatprep.subr.mxu0 0.0
    %5446 = vmatpush1.msra.mxu0 0.0
    %5447 = vmatprep.subr.mxu0 0.0
    %5448 = vmatpush1.msra.mxu0 0.0
    %5449 = vmatprep.subr.mxu0 0.0
    %5450 = vmatpush1.msra.mxu0 0.0
    %5451 = vmatprep.subr.mxu0 0.0
    %5452 = vmatpush1.msra.mxu0 0.0
    %5453 = vmatprep.subr.mxu0 0.0
    %5454 = vmatpush1.msra.mxu0 0.0
    %5455 = vmatprep.subr.mxu0 0.0
    %5456 = vmatpush1.msra.mxu0 0.0
    %5457 = vmatprep.subr.mxu0 0.0
    %5458 = vmatpush1.msra.mxu0 0.0
    %5459 = vmatprep.subr.mxu0 0.0
    %5460 = vmatpush1.msra.mxu0 0.0
    %5461 = vmatprep.subr.mxu0 0.0
    %5462 = vmatpush1.msra.mxu0 0.0
    %5463 = vmatprep.subr.mxu0 0.0
    %5464 = vmatpush1.msra.mxu0 0.0
    %5465 = vmatprep.subr.mxu0 0.0
    %5466 = vmatpush1.msra.mxu0 0.0
    %5467 = vmatprep.subr.mxu0 0.0
    %5468 = vmatpush1.msra.mxu0 0.0
    %5469 = vmatprep.subr.mxu0 0.0
    %5470 = vmatpush1.msra.mxu0 0.0
    %5471 = vmatprep.subr.mxu0 0.0
    %5472 = vmatpush1.msra.mxu0 0.0
    %5473 = vmatprep.subr.mxu0 0.0
    %5474 = vmatpush1.msra.mxu0 0.0
    %5475 = vmatprep.subr.mxu0 0.0
    %5476 = vmatpush1.msra.mxu0 0.0
    %5477 = vmatprep.mubr.f32.mxu0 0.0
    %5478 = vmatmul.mubr.f32.gmra.mrb[0].mxu0 %v5402
    %v5479 = vpop.f32.mrb[0].mxu0
    %v5480 = vadd.f32 %v5399, %v5479
    %v5481 = vpop.f32.mrb[0].mxu0
    %5482 = vmatprep.mubr.f32.mxu0 0.0
    %5483 = vmatmul.mubr.f32.gmra.mrb[0].mxu0 %v5405
    %v5484 = vpop.f32.mrb[0].mxu0
    %v5485 = vadd.f32 %v5399, %v5484
    %v5486 = vpop.f32.mrb[0].mxu0
    %5487 = vmatprep.mubr.f32.mxu0 0.0
    %5488 = vmatmul.mubr.f32.gmra.mrb[0].mxu0 %v5408
    %v5489 = vpop.f32.mrb[0].mxu0
    %v5490 = vadd.f32 %v5399, %v5489
    %v5491 = vpop.f32.mrb[0].mxu0
    %5492 = vmatprep.mubr.f32.mxu0 0.0
    %5493 = vmatmul.mubr.f32.gmra.mrb[0].mxu0 %v5411
    %v5494 = vpop.f32.mrb[0].mxu0
    %v5495 = vadd.f32 %v5399, %v5494
    %v5496 = vpop.f32.mrb[0].mxu0
    %5497 = vdwg.mxu0
    %v5498 = vmul.f32 %v5480, 0.5
    %v5499 = vmul.f32 %v5485, 0.5
    %v5500 = vmul.f32 %v5490, 0.5
    %v5501 = vmul.f32 %v5495, 0.5
    %v5502 = vmul.f32 %v5480, 0.7978846
    %v5503 = vmul.f32 %v5485, 0.7978846
    %v5504 = vmul.f32 %v5490, 0.7978846
    %v5505 = vmul.f32 %v5495, 0.7978846
    %v5506 = vmul.f32 %v5480, 0.044715
    %v5507 = vmul.f32 %v5485, 0.044715
    %v5508 = vmul.f32 %v5490, 0.044715
    %v5509 = vmul.f32 %v5495, 0.044715
    %v5510 = vmul.f32 %v5506, %v5480
    %v5511 = vmul.f32 %v5507, %v5485
    %v5512 = vmul.f32 %v5508, %v5490
    %v5513 = vmul.f32 %v5509, %v5495
    %v5514 = vadd.f32 %v5510, 1.0
    %v5515 = vadd.f32 %v5511, 1.0
    %v5516 = vadd.f32 %v5512, 1.0
    %v5517 = vadd.f32 %v5513, 1.0
    %v5518 = vmul.f32 %v5502, %v5514
    %v5519 = vmul.f32 %v5503, %v5515
    %v5520 = vmul.f32 %v5504, %v5516
    %v5521 = vmul.f32 %v5505, %v5517
    %v5522 = vtanh.pop %v5518
    %v5523 = vtanh.pop %v5519
    %v5524 = vtanh.pop %v5520
    %v5525 = vtanh.pop %v5521
    %v5526 = vadd.f32 %v5522, 1.0
    %v5527 = vadd.f32 %v5523, 1.0
    %v5528 = vadd.f32 %v5524, 1.0
    %v5529 = vadd.f32 %v5525, 1.0
    %v5530 = vmul.f32 %v5498, %v5526
    %v5531 = vmul.f32 %v5499, %v5527
    %v5532 = vmul.f32 %v5500, %v5528
    %v5533 = vmul.f32 %v5501, %v5529
    %v5534 = vld [vmem:[%s83] sm:$0xff]
    %v5535 = vld [vmem:[%s83 + $0x8] sm:$0xff]
    %v5536 = vld [vmem:[%s83 + $0x10] sm:$0xff]
    %v5537 = vld [vmem:[%s83 + $0x18] sm:$0xff]
    %v5538 = vld [vmem:[%s83 + $0x20] sm:$0xff]
    %v5539 = vld [vmem:[%s83 + $0x28] sm:$0xff]
    %v5540 = vld [vmem:[%s83 + $0x30] sm:$0xff]
    %v5541 = vld [vmem:[%s83 + $0x38] sm:$0xff]
    %v5542 = vld [vmem:[%s83 + $0x40] sm:$0xff]
    %v5543 = vld [vmem:[%s83 + $0x48] sm:$0xff]
    %v5544 = vld [vmem:[%s83 + $0x50] sm:$0xff]
    %v5545 = vld [vmem:[%s83 + $0x58] sm:$0xff]
    %v5546 = vld [vmem:[%s83 + $0x60] sm:$0xff]
    %v5547 = vld [vmem:[%s83 + $0x68] sm:$0xff]
    %v5548 = vld [vmem:[%s83 + $0x70] sm:$0xff]
    %v5549 = vld [vmem:[%s83 + $0x78] sm:$0xff]
    %v5550 = vld [vmem:[#allocation9] sm:$0x1]
    %v5552 = vlaneseq
    %v5553 = vshrl.u32 %v5552, 7
    %v5554 = vsub.s32 0, %v5553
    %v5555 = vrot.slane %v5550, %v5554
    %5557 = vmatprep.subr.mxu0 0.0
    %5558 = vmatpush1.msra.mxu0 %v5534
    %5559 = vmatprep.subr.mxu0 0.0
    %5560 = vmatpush1.msra.mxu0 %v5535
    %5561 = vmatprep.subr.mxu0 0.0
    %5562 = vmatpush1.msra.mxu0 %v5536
    %5563 = vmatprep.subr.mxu0 0.0
    %5564 = vmatpush1.msra.mxu0 %v5537
    %5565 = vmatprep.subr.mxu0 0.0
    %5566 = vmatpush1.msra.mxu0 %v5538
    %5567 = vmatprep.subr.mxu0 0.0
    %5568 = vmatpush1.msra.mxu0 %v5539
    %5569 = vmatprep.subr.mxu0 0.0
    %5570 = vmatpush1.msra.mxu0 %v5540
    %5571 = vmatprep.subr.mxu0 0.0
    %5572 = vmatpush1.msra.mxu0 %v5541
    %5573 = vmatprep.subr.mxu0 0.0
    %5574 = vmatpush1.msra.mxu0 %v5542
    %5575 = vmatprep.subr.mxu0 0.0
    %5576 = vmatpush1.msra.mxu0 %v5543
    %5577 = vmatprep.subr.mxu0 0.0
    %5578 = vmatpush1.msra.mxu0 %v5544
    %5579 = vmatprep.subr.mxu0 0.0
    %5580 = vmatpush1.msra.mxu0 %v5545
    %5581 = vmatprep.subr.mxu0 0.0
    %5582 = vmatpush1.msra.mxu0 %v5546
    %5583 = vmatprep.subr.mxu0 0.0
    %5584 = vmatpush1.msra.mxu0 %v5547
    %5585 = vmatprep.subr.mxu0 0.0
    %5586 = vmatpush1.msra.mxu0 %v5548
    %5587 = vmatprep.subr.mxu0 0.0
    %5588 = vmatpush1.msra.mxu0 %v5549
    %5589 = vmatprep.subr.mxu0 0.0
    %5590 = vmatpush1.msra.mxu0 0.0
    %5591 = vmatprep.subr.mxu0 0.0
    %5592 = vmatpush1.msra.mxu0 0.0
    %5593 = vmatprep.subr.mxu0 0.0
    %5594 = vmatpush1.msra.mxu0 0.0
    %5595 = vmatprep.subr.mxu0 0.0
    %5596 = vmatpush1.msra.mxu0 0.0
    %5597 = vmatprep.subr.mxu0 0.0
    %5598 = vmatpush1.msra.mxu0 0.0
    %5599 = vmatprep.subr.mxu0 0.0
    %5600 = vmatpush1.msra.mxu0 0.0
    %5601 = vmatprep.subr.mxu0 0.0
    %5602 = vmatpush1.msra.mxu0 0.0
    %5603 = vmatprep.subr.mxu0 0.0
    %5604 = vmatpush1.msra.mxu0 0.0
    %5605 = vmatprep.subr.mxu0 0.0
    %5606 = vmatpush1.msra.mxu0 0.0
    %5607 = vmatprep.subr.mxu0 0.0
    %5608 = vmatpush1.msra.mxu0 0.0
    %5609 = vmatprep.subr.mxu0 0.0
    %5610 = vmatpush1.msra.mxu0 0.0
    %5611 = vmatprep.subr.mxu0 0.0
    %5612 = vmatpush1.msra.mxu0 0.0
    %5613 = vmatprep.subr.mxu0 0.0
    %5614 = vmatpush1.msra.mxu0 0.0
    %5615 = vmatprep.subr.mxu0 0.0
    %5616 = vmatpush1.msra.mxu0 0.0
    %5617 = vmatprep.subr.mxu0 0.0
    %5618 = vmatpush1.msra.mxu0 0.0
    %5619 = vmatprep.subr.mxu0 0.0
    %5620 = vmatpush1.msra.mxu0 0.0
    %5621 = vmatprep.mubr.f32.mxu0 0.0
    %5622 = vmatmul.mubr.f32.gmra.mrb[0].mxu0 %v5530
    %v5623 = vpop.f32.mrb[0].mxu0
    %v5624 = vadd.f32 %v5555, %v5623
    %v5625 = vpop.f32.mrb[0].mxu0
    %5626 = vmatprep.mubr.f32.mxu0 0.0
    %5627 = vmatmul.mubr.f32.gmra.mrb[0].mxu0 %v5531
    %v5628 = vpop.f32.mrb[0].mxu0
    %v5629 = vadd.f32 %v5555, %v5628
    %v5630 = vpop.f32.mrb[0].mxu0
    %5631 = vmatprep.mubr.f32.mxu0 0.0
    %5632 = vmatmul.mubr.f32.gmra.mrb[0].mxu0 %v5532
    %v5633 = vpop.f32.mrb[0].mxu0
    %v5634 = vadd.f32 %v5555, %v5633
    %v5635 = vpop.f32.mrb[0].mxu0
    %5636 = vmatprep.mubr.f32.mxu0 0.0
    %5637 = vmatmul.mubr.f32.gmra.mrb[0].mxu0 %v5533
    %v5638 = vpop.f32.mrb[0].mxu0
    %v5639 = vadd.f32 %v5555, %v5638
    %v5640 = vpop.f32.mrb[0].mxu0
    %5641 = vdwg.mxu0
    %v5642 = vadd.f32 %v5312, %v5624
    %v5643 = vadd.f32 %v5313, %v5629
    %v5644 = vadd.f32 %v5314, %v5634
    %v5645 = vadd.f32 %v5315, %v5639
    %v5646 = vld [vmem:[#allocation10] sm:$0x1]
    %v5647 = vld [vmem:[#allocation12] sm:$0x1]
    %v5648 = vsel %vm540, %v5642, 0.0
    %5649 = vadd.xlane.f32.xlu0 %v5648
    %v5650 = vpop.xlane.xlu0 %5649
    %v5651 = vsel %vm540, %v5643, 0.0
    %5652 = vadd.xlane.f32.xlu0 %v5651
    %v5653 = vpop.xlane.xlu0 %5652
    %v5654 = vsel %vm540, %v5644, 0.0
    %5655 = vadd.xlane.f32.xlu0 %v5654
    %v5656 = vpop.xlane.xlu0 %5655
    %v5657 = vsel %vm540, %v5645, 0.0
    %5658 = vadd.xlane.f32.xlu0 %v5657
    %v5659 = vpop.xlane.xlu0 %5658
    %v5660 = vmul.f32 %v5650, %v553
    %v5661 = vmul.f32 %v5653, %v553
    %v5662 = vmul.f32 %v5656, %v553
    %v5663 = vmul.f32 %v5659, %v553
    %v5664 = vsub.f32 %v5642, %v5660
    %v5665 = vsub.f32 %v5643, %v5661
    %v5666 = vsub.f32 %v5644, %v5662
    %v5667 = vsub.f32 %v5645, %v5663
    %v5668 = vmul.f32 %v5664, %v5664
    %v5669 = vmul.f32 %v5665, %v5665
    %v5670 = vmul.f32 %v5666, %v5666
    %v5671 = vmul.f32 %v5667, %v5667
    %v5672 = vsel %vm540, %v5668, 0.0
    %5673 = vadd.xlane.f32.xlu0 %v5672
    %v5674 = vpop.xlane.xlu0 %5673
    %v5675 = vsel %vm540, %v5669, 0.0
    %5676 = vadd.xlane.f32.xlu0 %v5675
    %v5677 = vpop.xlane.xlu0 %5676
    %v5678 = vsel %vm540, %v5670, 0.0
    %5679 = vadd.xlane.f32.xlu0 %v5678
    %v5680 = vpop.xlane.xlu0 %5679
    %v5681 = vsel %vm540, %v5671, 0.0
    %5682 = vadd.xlane.f32.xlu0 %v5681
    %v5683 = vpop.xlane.xlu0 %5682
    %v5684 = vmul.f32 %v5674, %v553
    %v5685 = vmul.f32 %v5677, %v553
    %v5686 = vmul.f32 %v5680, %v553
    %v5687 = vmul.f32 %v5683, %v553
    %v5688 = vadd.f32 %v5684, 1e-05
    %v5689 = vadd.f32 %v5685, 1e-05
    %v5690 = vadd.f32 %v5686, 1e-05
    %v5691 = vadd.f32 %v5687, 1e-05
    %v5692 = vrsqrt.pop %v5688
    %v5693 = vrsqrt.pop %v5689
    %v5694 = vrsqrt.pop %v5690
    %v5695 = vrsqrt.pop %v5691
    %v5696 = vmul.f32 %v5664, %v5692
    %v5697 = vmul.f32 %v5665, %v5693
    %v5698 = vmul.f32 %v5666, %v5694
    %v5699 = vmul.f32 %v5667, %v5695
    %v5701 = vlaneseq
    %v5702 = vshrl.u32 %v5701, 7
    %v5703 = vsub.s32 0, %v5702
    %v5704 = vrot.slane %v5646, %v5703
    %v5706 = vmul.f32 %v5696, %v5704
    %v5707 = vmul.f32 %v5697, %v5704
    %v5708 = vmul.f32 %v5698, %v5704
    %v5709 = vmul.f32 %v5699, %v5704
    %v5711 = vlaneseq
    %v5712 = vshrl.u32 %v5711, 7
    %v5713 = vsub.s32 0, %v5712
    %v5714 = vrot.slane %v5647, %v5713
    %v5716 = vadd.f32 %v5706, %v5714
    %v5717 = vadd.f32 %v5707, %v5714
    %v5718 = vadd.f32 %v5708, %v5714
    %v5719 = vadd.f32 %v5709, %v5714
    %v5720 = vld [vmem:[%s91] sm:$0xff]
    %v5721 = vld [vmem:[%s91 + $0x8] sm:$0xff]
    %v5722 = vld [vmem:[%s91 + $0x10] sm:$0xff]
    %v5723 = vld [vmem:[%s91 + $0x18] sm:$0xff]
    %v5724 = vld [vmem:[#allocation13] sm:$0x1]
    %v5726 = vlaneseq
    %v5727 = vshrl.u32 %v5726, 7
    %v5728 = vsub.s32 0, %v5727
    %v5729 = vrot.slane %v5724, %v5728
    %v5732 = vsel %vm540, %v5716, 0
    %v5735 = vsel %vm540, %v5717, 0
    %v5738 = vsel %vm540, %v5718, 0
    %v5741 = vsel %vm540, %v5719, 0
    %5743 = vmatprep.subr.mxu0 0.0
    %5744 = vmatpush1.msra.mxu0 %v5720
    %5745 = vmatprep.subr.mxu0 0.0
    %5746 = vmatpush1.msra.mxu0 %v5721
    %5747 = vmatprep.subr.mxu0 0.0
    %5748 = vmatpush1.msra.mxu0 %v5722
    %5749 = vmatprep.subr.mxu0 0.0
    %5750 = vmatpush1.msra.mxu0 %v5723
    %5751 = vmatprep.subr.mxu0 0.0
    %5752 = vmatpush1.msra.mxu0 0.0
    %5753 = vmatprep.subr.mxu0 0.0
    %5754 = vmatpush1.msra.mxu0 0.0
    %5755 = vmatprep.subr.mxu0 0.0
    %5756 = vmatpush1.msra.mxu0 0.0
    %5757 = vmatprep.subr.mxu0 0.0
    %5758 = vmatpush1.msra.mxu0 0.0
    %5759 = vmatprep.subr.mxu0 0.0
    %5760 = vmatpush1.msra.mxu0 0.0
    %5761 = vmatprep.subr.mxu0 0.0
    %5762 = vmatpush1.msra.mxu0 0.0
    %5763 = vmatprep.subr.mxu0 0.0
    %5764 = vmatpush1.msra.mxu0 0.0
    %5765 = vmatprep.subr.mxu0 0.0
    %5766 = vmatpush1.msra.mxu0 0.0
    %5767 = vmatprep.subr.mxu0 0.0
    %5768 = vmatpush1.msra.mxu0 0.0
    %5769 = vmatprep.subr.mxu0 0.0
    %5770 = vmatpush1.msra.mxu0 0.0
    %5771 = vmatprep.subr.mxu0 0.0
    %5772 = vmatpush1.msra.mxu0 0.0
    %5773 = vmatprep.subr.mxu0 0.0
    %5774 = vmatpush1.msra.mxu0 0.0
    %5775 = vmatprep.subr.mxu0 0.0
    %5776 = vmatpush1.msra.mxu0 0.0
    %5777 = vmatprep.subr.mxu0 0.0
    %5778 = vmatpush1.msra.mxu0 0.0
    %5779 = vmatprep.subr.mxu0 0.0
    %5780 = vmatpush1.msra.mxu0 0.0
    %5781 = vmatprep.subr.mxu0 0.0
    %5782 = vmatpush1.msra.mxu0 0.0
    %5783 = vmatprep.subr.mxu0 0.0
    %5784 = vmatpush1.msra.mxu0 0.0
    %5785 = vmatprep.subr.mxu0 0.0
    %5786 = vmatpush1.msra.mxu0 0.0
    %5787 = vmatprep.subr.mxu0 0.0
    %5788 = vmatpush1.msra.mxu0 0.0
    %5789 = vmatprep.subr.mxu0 0.0
    %5790 = vmatpush1.msra.mxu0 0.0
    %5791 = vmatprep.subr.mxu0 0.0
    %5792 = vmatpush1.msra.mxu0 0.0
    %5793 = vmatprep.subr.mxu0 0.0
    %5794 = vmatpush1.msra.mxu0 0.0
    %5795 = vmatprep.subr.mxu0 0.0
    %5796 = vmatpush1.msra.mxu0 0.0
    %5797 = vmatprep.subr.mxu0 0.0
    %5798 = vmatpush1.msra.mxu0 0.0
    %5799 = vmatprep.subr.mxu0 0.0
    %5800 = vmatpush1.msra.mxu0 0.0
    %5801 = vmatprep.subr.mxu0 0.0
    %5802 = vmatpush1.msra.mxu0 0.0
    %5803 = vmatprep.subr.mxu0 0.0
    %5804 = vmatpush1.msra.mxu0 0.0
    %5805 = vmatprep.subr.mxu0 0.0
    %5806 = vmatpush1.msra.mxu0 0.0
    %5807 = vmatprep.mubr.f32.mxu0 0.0
    %5808 = vmatmul.mubr.f32.gmra.mrb[0].mxu0 %v5732
    %v5809 = vpop.f32.mrb[0].mxu0
    %v5810 = vadd.f32 %v5729, %v5809
    %v5811 = vpop.f32.mrb[0].mxu0
    %5812 = vmatprep.mubr.f32.mxu0 0.0
    %5813 = vmatmul.mubr.f32.gmra.mrb[0].mxu0 %v5735
    %v5814 = vpop.f32.mrb[0].mxu0
    %v5815 = vadd.f32 %v5729, %v5814
    %v5816 = vpop.f32.mrb[0].mxu0
    %5817 = vmatprep.mubr.f32.mxu0 0.0
    %5818 = vmatmul.mubr.f32.gmra.mrb[0].mxu0 %v5738
    %v5819 = vpop.f32.mrb[0].mxu0
    %v5820 = vadd.f32 %v5729, %v5819
    %v5821 = vpop.f32.mrb[0].mxu0
    %5822 = vmatprep.mubr.f32.mxu0 0.0
    %5823 = vmatmul.mubr.f32.gmra.mrb[0].mxu0 %v5741
    %v5824 = vpop.f32.mrb[0].mxu0
    %v5825 = vadd.f32 %v5729, %v5824
    %v5826 = vpop.f32.mrb[0].mxu0
    %5827 = vdwg.mxu0
    %v5828 = vld [vmem:[%s95] sm:$0xff]
    %v5829 = vld [vmem:[%s95 + $0x8] sm:$0xff]
    %v5830 = vld [vmem:[%s95 + $0x10] sm:$0xff]
    %v5831 = vld [vmem:[%s95 + $0x18] sm:$0xff]
    %5834 = vrot.lane.b32.xlu0 %v5810, 96
    %v5835 = vpop.permute.xlu0 %5834
    %5836 = vrot.lane.b32.xlu0 %v5815, 96
    %v5837 = vpop.permute.xlu0 %5836
    %v5838 = vsel %vm3487, %v5810, 0
    %v5840 = vsel %vm3487, %v5815, 0
    %v5842 = vsel %vm3487, %v5835, 0
    %v5844 = vsel %vm3487, %v5837, 0
    %5846 = vmatprep.subr.mxu0 0.0
    %5847 = vmatpush1.xpose.msra.mxu0 %v5842
    %5848 = vmatprep.subr.mxu0 0.0
    %5849 = vmatpush1.xpose.msra.mxu0 %v5844
    %5850 = vmatprep.subr.mxu0 0.0
    %5851 = vmatpush1.xpose.msra.mxu0 0.0
    %5852 = vmatprep.subr.mxu0 0.0
    %5853 = vmatpush1.xpose.msra.mxu0 0.0
    %5854 = vmatprep.subr.mxu0 0.0
    %5855 = vmatpush1.xpose.msra.mxu0 0.0
    %5856 = vmatprep.subr.mxu0 0.0
    %5857 = vmatpush1.xpose.msra.mxu0 0.0
    %5858 = vmatprep.subr.mxu0 0.0
    %5859 = vmatpush1.xpose.msra.mxu0 0.0
    %5860 = vmatprep.subr.mxu0 0.0
    %5861 = vmatpush1.xpose.msra.mxu0 0.0
    %5862 = vmatprep.subr.mxu0 0.0
    %5863 = vmatpush1.xpose.msra.mxu0 0.0
    %5864 = vmatprep.subr.mxu0 0.0
    %5865 = vmatpush1.xpose.msra.mxu0 0.0
    %5866 = vmatprep.subr.mxu0 0.0
    %5867 = vmatpush1.xpose.msra.mxu0 0.0
    %5868 = vmatprep.subr.mxu0 0.0
    %5869 = vmatpush1.xpose.msra.mxu0 0.0
    %5870 = vmatprep.subr.mxu0 0.0
    %5871 = vmatpush1.xpose.msra.mxu0 0.0
    %5872 = vmatprep.subr.mxu0 0.0
    %5873 = vmatpush1.xpose.msra.mxu0 0.0
    %5874 = vmatprep.subr.mxu0 0.0
    %5875 = vmatpush1.xpose.msra.mxu0 0.0
    %5876 = vmatprep.subr.mxu0 0.0
    %5877 = vmatpush1.xpose.msra.mxu0 0.0
    %5878 = vmatprep.subr.mxu0 0.0
    %5879 = vmatpush1.xpose.msra.mxu0 0.0
    %5880 = vmatprep.subr.mxu0 0.0
    %5881 = vmatpush1.xpose.msra.mxu0 0.0
    %5882 = vmatprep.subr.mxu0 0.0
    %5883 = vmatpush1.xpose.msra.mxu0 0.0
    %5884 = vmatprep.subr.mxu0 0.0
    %5885 = vmatpush1.xpose.msra.mxu0 0.0
    %5886 = vmatprep.subr.mxu0 0.0
    %5887 = vmatpush1.xpose.msra.mxu0 0.0
    %5888 = vmatprep.subr.mxu0 0.0
    %5889 = vmatpush1.xpose.msra.mxu0 0.0
    %5890 = vmatprep.subr.mxu0 0.0
    %5891 = vmatpush1.xpose.msra.mxu0 0.0
    %5892 = vmatprep.subr.mxu0 0.0
    %5893 = vmatpush1.xpose.msra.mxu0 0.0
    %5894 = vmatprep.subr.mxu0 0.0
    %5895 = vmatpush1.xpose.msra.mxu0 0.0
    %5896 = vmatprep.subr.mxu0 0.0
    %5897 = vmatpush1.xpose.msra.mxu0 0.0
    %5898 = vmatprep.subr.mxu0 0.0
    %5899 = vmatpush1.xpose.msra.mxu0 0.0
    %5900 = vmatprep.subr.mxu0 0.0
    %5901 = vmatpush1.xpose.msra.mxu0 0.0
    %5902 = vmatprep.subr.mxu0 0.0
    %5903 = vmatpush1.xpose.msra.mxu0 0.0
    %5904 = vmatprep.subr.mxu0 0.0
    %5905 = vmatpush1.xpose.msra.mxu0 0.0
    %5906 = vmatprep.subr.mxu0 0.0
    %5907 = vmatpush1.xpose.msra.mxu0 0.0
    %5908 = vmatprep.subr.mxu0 0.0
    %5909 = vmatpush1.xpose.msra.mxu0 0.0
    %5910 = vmatprep.mubr.f32.mxu0 0.0
    %5911 = vmatmul.mubr.f32.gmra.mrb[0].mxu0 %v5838
    %v5912 = vpop.f32.mrb[0].mxu0
    %v5913 = vadd.f32 %v3217, %v5912
    %v5914 = vpop.f32.mrb[0].mxu0
    %5915 = vmatprep.mubr.f32.mxu0 0.0
    %5916 = vmatmul.mubr.f32.gmra.mrb[0].mxu0 %v5840
    %v5917 = vpop.f32.mrb[0].mxu0
    %v5918 = vadd.f32 %v3218, %v5917
    %v5919 = vpop.f32.mrb[0].mxu0
    %5920 = vdwg.mxu0
    %v5921 = vsel %vm3571, %v5913, -inf
    %5922 = vmax.xlane.f32.xlu0 %v5921
    %v5923 = vpop.xlane.xlu0 %5922
    %v5924 = vsel %vm3571, %v5918, -inf
    %5925 = vmax.xlane.f32.xlu0 %v5924
    %v5926 = vpop.xlane.xlu0 %5925
    %v5927 = vsub.f32 %v5913, %v5923
    %v5928 = vsub.f32 %v5918, %v5926
    %v5929 = vmul.f32 %v5927, 1.442695
    %v5930 = vpow.pop %v5929
    %v5931 = vmul.f32 %v5928, 1.442695
    %v5932 = vpow.pop %v5931
    %v5933 = vsel %vm3571, %v5930, 0.0
    %5934 = vadd.xlane.f32.xlu0 %v5933
    %v5935 = vpop.xlane.xlu0 %5934
    %v5936 = vsel %vm3571, %v5932, 0.0
    %5937 = vadd.xlane.f32.xlu0 %v5936
    %v5938 = vpop.xlane.xlu0 %5937
    %v5939 = vrcp.pop %v5935
    %v5940 = vrcp.pop %v5938
    %v5941 = vmul.f32 %v5930, %v5939
    %v5942 = vmul.f32 %v5932, %v5940
    %5943 = vrot.lane.b32.xlu0 %v5810, 64
    %v5944 = vpop.permute.xlu0 %5943
    %5945 = vrot.lane.b32.xlu0 %v5815, 64
    %v5946 = vpop.permute.xlu0 %5945
    %v5950 = vsel %vm3571, %v5941, 0
    %v5953 = vsel %vm3571, %v5942, 0
    %5955 = vmatprep.subr.mxu0 0.0
    %5956 = vmatpush1.msra.mxu0 %v5944
    %5957 = vmatprep.subr.mxu0 0.0
    %5958 = vmatpush1.msra.mxu0 %v5946
    %5959 = vmatprep.subr.mxu0 0.0
    %5960 = vmatpush1.msra.mxu0 0.0
    %5961 = vmatprep.subr.mxu0 0.0
    %5962 = vmatpush1.msra.mxu0 0.0
    %5963 = vmatprep.subr.mxu0 0.0
    %5964 = vmatpush1.msra.mxu0 0.0
    %5965 = vmatprep.subr.mxu0 0.0
    %5966 = vmatpush1.msra.mxu0 0.0
    %5967 = vmatprep.subr.mxu0 0.0
    %5968 = vmatpush1.msra.mxu0 0.0
    %5969 = vmatprep.subr.mxu0 0.0
    %5970 = vmatpush1.msra.mxu0 0.0
    %5971 = vmatprep.subr.mxu0 0.0
    %5972 = vmatpush1.msra.mxu0 0.0
    %5973 = vmatprep.subr.mxu0 0.0
    %5974 = vmatpush1.msra.mxu0 0.0
    %5975 = vmatprep.subr.mxu0 0.0
    %5976 = vmatpush1.msra.mxu0 0.0
    %5977 = vmatprep.subr.mxu0 0.0
    %5978 = vmatpush1.msra.mxu0 0.0
    %5979 = vmatprep.subr.mxu0 0.0
    %5980 = vmatpush1.msra.mxu0 0.0
    %5981 = vmatprep.subr.mxu0 0.0
    %5982 = vmatpush1.msra.mxu0 0.0
    %5983 = vmatprep.subr.mxu0 0.0
    %5984 = vmatpush1.msra.mxu0 0.0
    %5985 = vmatprep.subr.mxu0 0.0
    %5986 = vmatpush1.msra.mxu0 0.0
    %5987 = vmatprep.subr.mxu0 0.0
    %5988 = vmatpush1.msra.mxu0 0.0
    %5989 = vmatprep.subr.mxu0 0.0
    %5990 = vmatpush1.msra.mxu0 0.0
    %5991 = vmatprep.subr.mxu0 0.0
    %5992 = vmatpush1.msra.mxu0 0.0
    %5993 = vmatprep.subr.mxu0 0.0
    %5994 = vmatpush1.msra.mxu0 0.0
    %5995 = vmatprep.subr.mxu0 0.0
    %5996 = vmatpush1.msra.mxu0 0.0
    %5997 = vmatprep.subr.mxu0 0.0
    %5998 = vmatpush1.msra.mxu0 0.0
    %5999 = vmatprep.subr.mxu0 0.0
    %6000 = vmatpush1.msra.mxu0 0.0
    %6001 = vmatprep.subr.mxu0 0.0
    %6002 = vmatpush1.msra.mxu0 0.0
    %6003 = vmatprep.subr.mxu0 0.0
    %6004 = vmatpush1.msra.mxu0 0.0
    %6005 = vmatprep.subr.mxu0 0.0
    %6006 = vmatpush1.msra.mxu0 0.0
    %6007 = vmatprep.subr.mxu0 0.0
    %6008 = vmatpush1.msra.mxu0 0.0
    %6009 = vmatprep.subr.mxu0 0.0
    %6010 = vmatpush1.msra.mxu0 0.0
    %6011 = vmatprep.subr.mxu0 0.0
    %6012 = vmatpush1.msra.mxu0 0.0
    %6013 = vmatprep.subr.mxu0 0.0
    %6014 = vmatpush1.msra.mxu0 0.0
    %6015 = vmatprep.subr.mxu0 0.0
    %6016 = vmatpush1.msra.mxu0 0.0
    %6017 = vmatprep.subr.mxu0 0.0
    %6018 = vmatpush1.msra.mxu0 0.0
    %6019 = vmatprep.mubr.f32.mxu0 0.0
    %6020 = vmatmul.mubr.f32.gmra.mrb[0].mxu0 %v5950
    %v6021 = vpop.f32.mrb[0].mxu0
    %v6022 = vadd.f32 0.0, %v6021
    %v6023 = vpop.f32.mrb[0].mxu0
    %6024 = vmatprep.mubr.f32.mxu0 0.0
    %6025 = vmatmul.mubr.f32.gmra.mrb[0].mxu0 %v5953
    %v6026 = vpop.f32.mrb[0].mxu0
    %v6027 = vadd.f32 0.0, %v6026
    %v6028 = vpop.f32.mrb[0].mxu0
    %6029 = vdwg.mxu0
    %6030 = vrot.lane.b32.xlu0 %v5810, 120
    %v6031 = vpop.permute.xlu0 %6030
    %6032 = vrot.lane.b32.xlu0 %v5815, 120
    %v6033 = vpop.permute.xlu0 %6032
    %6034 = vrot.lane.b32.xlu0 %v5810, 88
    %v6035 = vpop.permute.xlu0 %6034
    %6036 = vrot.lane.b32.xlu0 %v5815, 88
    %v6037 = vpop.permute.xlu0 %6036
    %v6038 = vsel %vm3487, %v6031, 0
    %v6040 = vsel %vm3487, %v6033, 0
    %v6042 = vsel %vm3487, %v6035, 0
    %v6044 = vsel %vm3487, %v6037, 0
    %6046 = vmatprep.subr.mxu0 0.0
    %6047 = vmatpush1.xpose.msra.mxu0 %v6042
    %6048 = vmatprep.subr.mxu0 0.0
    %6049 = vmatpush1.xpose.msra.mxu0 %v6044
    %6050 = vmatprep.subr.mxu0 0.0
    %6051 = vmatpush1.xpose.msra.mxu0 0.0
    %6052 = vmatprep.subr.mxu0 0.0
    %6053 = vmatpush1.xpose.msra.mxu0 0.0
    %6054 = vmatprep.subr.mxu0 0.0
    %6055 = vmatpush1.xpose.msra.mxu0 0.0
    %6056 = vmatprep.subr.mxu0 0.0
    %6057 = vmatpush1.xpose.msra.mxu0 0.0
    %6058 = vmatprep.subr.mxu0 0.0
    %6059 = vmatpush1.xpose.msra.mxu0 0.0
    %6060 = vmatprep.subr.mxu0 0.0
    %6061 = vmatpush1.xpose.msra.mxu0 0.0
    %6062 = vmatprep.subr.mxu0 0.0
    %6063 = vmatpush1.xpose.msra.mxu0 0.0
    %6064 = vmatprep.subr.mxu0 0.0
    %6065 = vmatpush1.xpose.msra.mxu0 0.0
    %6066 = vmatprep.subr.mxu0 0.0
    %6067 = vmatpush1.xpose.msra.mxu0 0.0
    %6068 = vmatprep.subr.mxu0 0.0
    %6069 = vmatpush1.xpose.msra.mxu0 0.0
    %6070 = vmatprep.subr.mxu0 0.0
    %6071 = vmatpush1.xpose.msra.mxu0 0.0
    %6072 = vmatprep.subr.mxu0 0.0
    %6073 = vmatpush1.xpose.msra.mxu0 0.0
    %6074 = vmatprep.subr.mxu0 0.0
    %6075 = vmatpush1.xpose.msra.mxu0 0.0
    %6076 = vmatprep.subr.mxu0 0.0
    %6077 = vmatpush1.xpose.msra.mxu0 0.0
    %6078 = vmatprep.subr.mxu0 0.0
    %6079 = vmatpush1.xpose.msra.mxu0 0.0
    %6080 = vmatprep.subr.mxu0 0.0
    %6081 = vmatpush1.xpose.msra.mxu0 0.0
    %6082 = vmatprep.subr.mxu0 0.0
    %6083 = vmatpush1.xpose.msra.mxu0 0.0
    %6084 = vmatprep.subr.mxu0 0.0
    %6085 = vmatpush1.xpose.msra.mxu0 0.0
    %6086 = vmatprep.subr.mxu0 0.0
    %6087 = vmatpush1.xpose.msra.mxu0 0.0
    %6088 = vmatprep.subr.mxu0 0.0
    %6089 = vmatpush1.xpose.msra.mxu0 0.0
    %6090 = vmatprep.subr.mxu0 0.0
    %6091 = vmatpush1.xpose.msra.mxu0 0.0
    %6092 = vmatprep.subr.mxu0 0.0
    %6093 = vmatpush1.xpose.msra.mxu0 0.0
    %6094 = vmatprep.subr.mxu0 0.0
    %6095 = vmatpush1.xpose.msra.mxu0 0.0
    %6096 = vmatprep.subr.mxu0 0.0
    %6097 = vmatpush1.xpose.msra.mxu0 0.0
    %6098 = vmatprep.subr.mxu0 0.0
    %6099 = vmatpush1.xpose.msra.mxu0 0.0
    %6100 = vmatprep.subr.mxu0 0.0
    %6101 = vmatpush1.xpose.msra.mxu0 0.0
    %6102 = vmatprep.subr.mxu0 0.0
    %6103 = vmatpush1.xpose.msra.mxu0 0.0
    %6104 = vmatprep.subr.mxu0 0.0
    %6105 = vmatpush1.xpose.msra.mxu0 0.0
    %6106 = vmatprep.subr.mxu0 0.0
    %6107 = vmatpush1.xpose.msra.mxu0 0.0
    %6108 = vmatprep.subr.mxu0 0.0
    %6109 = vmatpush1.xpose.msra.mxu0 0.0
    %6110 = vmatprep.mubr.f32.mxu0 0.0
    %6111 = vmatmul.mubr.f32.gmra.mrb[0].mxu0 %v6038
    %v6112 = vpop.f32.mrb[0].mxu0
    %v6113 = vadd.f32 %v3226, %v6112
    %v6114 = vpop.f32.mrb[0].mxu0
    %6115 = vmatprep.mubr.f32.mxu0 0.0
    %6116 = vmatmul.mubr.f32.gmra.mrb[0].mxu0 %v6040
    %v6117 = vpop.f32.mrb[0].mxu0
    %v6118 = vadd.f32 %v3227, %v6117
    %v6119 = vpop.f32.mrb[0].mxu0
    %6120 = vdwg.mxu0
    %v6121 = vsel %vm3571, %v6113, -inf
    %6122 = vmax.xlane.f32.xlu0 %v6121
    %v6123 = vpop.xlane.xlu0 %6122
    %v6124 = vsel %vm3571, %v6118, -inf
    %6125 = vmax.xlane.f32.xlu0 %v6124
    %v6126 = vpop.xlane.xlu0 %6125
    %v6127 = vsub.f32 %v6113, %v6123
    %v6128 = vsub.f32 %v6118, %v6126
    %v6129 = vmul.f32 %v6127, 1.442695
    %v6130 = vpow.pop %v6129
    %v6131 = vmul.f32 %v6128, 1.442695
    %v6132 = vpow.pop %v6131
    %v6133 = vsel %vm3571, %v6130, 0.0
    %6134 = vadd.xlane.f32.xlu0 %v6133
    %v6135 = vpop.xlane.xlu0 %6134
    %v6136 = vsel %vm3571, %v6132, 0.0
    %6137 = vadd.xlane.f32.xlu0 %v6136
    %v6138 = vpop.xlane.xlu0 %6137
    %v6139 = vrcp.pop %v6135
    %v6140 = vrcp.pop %v6138
    %v6141 = vmul.f32 %v6130, %v6139
    %v6142 = vmul.f32 %v6132, %v6140
    %6143 = vrot.lane.b32.xlu0 %v5810, 56
    %v6144 = vpop.permute.xlu0 %6143
    %6145 = vrot.lane.b32.xlu0 %v5815, 56
    %v6146 = vpop.permute.xlu0 %6145
    %v6150 = vsel %vm3571, %v6141, 0
    %v6153 = vsel %vm3571, %v6142, 0
    %6155 = vmatprep.subr.mxu0 0.0
    %6156 = vmatpush1.msra.mxu0 %v6144
    %6157 = vmatprep.subr.mxu0 0.0
    %6158 = vmatpush1.msra.mxu0 %v6146
    %6159 = vmatprep.subr.mxu0 0.0
    %6160 = vmatpush1.msra.mxu0 0.0
    %6161 = vmatprep.subr.mxu0 0.0
    %6162 = vmatpush1.msra.mxu0 0.0
    %6163 = vmatprep.subr.mxu0 0.0
    %6164 = vmatpush1.msra.mxu0 0.0
    %6165 = vmatprep.subr.mxu0 0.0
    %6166 = vmatpush1.msra.mxu0 0.0
    %6167 = vmatprep.subr.mxu0 0.0
    %6168 = vmatpush1.msra.mxu0 0.0
    %6169 = vmatprep.subr.mxu0 0.0
    %6170 = vmatpush1.msra.mxu0 0.0
    %6171 = vmatprep.subr.mxu0 0.0
    %6172 = vmatpush1.msra.mxu0 0.0
    %6173 = vmatprep.subr.mxu0 0.0
    %6174 = vmatpush1.msra.mxu0 0.0
    %6175 = vmatprep.subr.mxu0 0.0
    %6176 = vmatpush1.msra.mxu0 0.0
    %6177 = vmatprep.subr.mxu0 0.0
    %6178 = vmatpush1.msra.mxu0 0.0
    %6179 = vmatprep.subr.mxu0 0.0
    %6180 = vmatpush1.msra.mxu0 0.0
    %6181 = vmatprep.subr.mxu0 0.0
    %6182 = vmatpush1.msra.mxu0 0.0
    %6183 = vmatprep.subr.mxu0 0.0
    %6184 = vmatpush1.msra.mxu0 0.0
    %6185 = vmatprep.subr.mxu0 0.0
    %6186 = vmatpush1.msra.mxu0 0.0
    %6187 = vmatprep.subr.mxu0 0.0
    %6188 = vmatpush1.msra.mxu0 0.0
    %6189 = vmatprep.subr.mxu0 0.0
    %6190 = vmatpush1.msra.mxu0 0.0
    %6191 = vmatprep.subr.mxu0 0.0
    %6192 = vmatpush1.msra.mxu0 0.0
    %6193 = vmatprep.subr.mxu0 0.0
    %6194 = vmatpush1.msra.mxu0 0.0
    %6195 = vmatprep.subr.mxu0 0.0
    %6196 = vmatpush1.msra.mxu0 0.0
    %6197 = vmatprep.subr.mxu0 0.0
    %6198 = vmatpush1.msra.mxu0 0.0
    %6199 = vmatprep.subr.mxu0 0.0
    %6200 = vmatpush1.msra.mxu0 0.0
    %6201 = vmatprep.subr.mxu0 0.0
    %6202 = vmatpush1.msra.mxu0 0.0
    %6203 = vmatprep.subr.mxu0 0.0
    %6204 = vmatpush1.msra.mxu0 0.0
    %6205 = vmatprep.subr.mxu0 0.0
    %6206 = vmatpush1.msra.mxu0 0.0
    %6207 = vmatprep.subr.mxu0 0.0
    %6208 = vmatpush1.msra.mxu0 0.0
    %6209 = vmatprep.subr.mxu0 0.0
    %6210 = vmatpush1.msra.mxu0 0.0
    %6211 = vmatprep.subr.mxu0 0.0
    %6212 = vmatpush1.msra.mxu0 0.0
    %6213 = vmatprep.subr.mxu0 0.0
    %6214 = vmatpush1.msra.mxu0 0.0
    %6215 = vmatprep.subr.mxu0 0.0
    %6216 = vmatpush1.msra.mxu0 0.0
    %6217 = vmatprep.subr.mxu0 0.0
    %6218 = vmatpush1.msra.mxu0 0.0
    %6219 = vmatprep.mubr.f32.mxu0 0.0
    %6220 = vmatmul.mubr.f32.gmra.mrb[0].mxu0 %v6150
    %v6221 = vpop.f32.mrb[0].mxu0
    %v6222 = vadd.f32 0.0, %v6221
    %v6223 = vpop.f32.mrb[0].mxu0
    %6224 = vmatprep.mubr.f32.mxu0 0.0
    %6225 = vmatmul.mubr.f32.gmra.mrb[0].mxu0 %v6153
    %v6226 = vpop.f32.mrb[0].mxu0
    %v6227 = vadd.f32 0.0, %v6226
    %v6228 = vpop.f32.mrb[0].mxu0
    %6229 = vdwg.mxu0
    %6230 = vrot.lane.b32.xlu0 %v5810, 112
    %v6231 = vpop.permute.xlu0 %6230
    %6232 = vrot.lane.b32.xlu0 %v5815, 112
    %v6233 = vpop.permute.xlu0 %6232
    %6234 = vrot.lane.b32.xlu0 %v5810, 80
    %v6235 = vpop.permute.xlu0 %6234
    %6236 = vrot.lane.b32.xlu0 %v5815, 80
    %v6237 = vpop.permute.xlu0 %6236
    %v6238 = vsel %vm3487, %v6231, 0
    %v6240 = vsel %vm3487, %v6233, 0
    %v6242 = vsel %vm3487, %v6235, 0
    %v6244 = vsel %vm3487, %v6237, 0
    %6246 = vmatprep.subr.mxu0 0.0
    %6247 = vmatpush1.xpose.msra.mxu0 %v6242
    %6248 = vmatprep.subr.mxu0 0.0
    %6249 = vmatpush1.xpose.msra.mxu0 %v6244
    %6250 = vmatprep.subr.mxu0 0.0
    %6251 = vmatpush1.xpose.msra.mxu0 0.0
    %6252 = vmatprep.subr.mxu0 0.0
    %6253 = vmatpush1.xpose.msra.mxu0 0.0
    %6254 = vmatprep.subr.mxu0 0.0
    %6255 = vmatpush1.xpose.msra.mxu0 0.0
    %6256 = vmatprep.subr.mxu0 0.0
    %6257 = vmatpush1.xpose.msra.mxu0 0.0
    %6258 = vmatprep.subr.mxu0 0.0
    %6259 = vmatpush1.xpose.msra.mxu0 0.0
    %6260 = vmatprep.subr.mxu0 0.0
    %6261 = vmatpush1.xpose.msra.mxu0 0.0
    %6262 = vmatprep.subr.mxu0 0.0
    %6263 = vmatpush1.xpose.msra.mxu0 0.0
    %6264 = vmatprep.subr.mxu0 0.0
    %6265 = vmatpush1.xpose.msra.mxu0 0.0
    %6266 = vmatprep.subr.mxu0 0.0
    %6267 = vmatpush1.xpose.msra.mxu0 0.0
    %6268 = vmatprep.subr.mxu0 0.0
    %6269 = vmatpush1.xpose.msra.mxu0 0.0
    %6270 = vmatprep.subr.mxu0 0.0
    %6271 = vmatpush1.xpose.msra.mxu0 0.0
    %6272 = vmatprep.subr.mxu0 0.0
    %6273 = vmatpush1.xpose.msra.mxu0 0.0
    %6274 = vmatprep.subr.mxu0 0.0
    %6275 = vmatpush1.xpose.msra.mxu0 0.0
    %6276 = vmatprep.subr.mxu0 0.0
    %6277 = vmatpush1.xpose.msra.mxu0 0.0
    %6278 = vmatprep.subr.mxu0 0.0
    %6279 = vmatpush1.xpose.msra.mxu0 0.0
    %6280 = vmatprep.subr.mxu0 0.0
    %6281 = vmatpush1.xpose.msra.mxu0 0.0
    %6282 = vmatprep.subr.mxu0 0.0
    %6283 = vmatpush1.xpose.msra.mxu0 0.0
    %6284 = vmatprep.subr.mxu0 0.0
    %6285 = vmatpush1.xpose.msra.mxu0 0.0
    %6286 = vmatprep.subr.mxu0 0.0
    %6287 = vmatpush1.xpose.msra.mxu0 0.0
    %6288 = vmatprep.subr.mxu0 0.0
    %6289 = vmatpush1.xpose.msra.mxu0 0.0
    %6290 = vmatprep.subr.mxu0 0.0
    %6291 = vmatpush1.xpose.msra.mxu0 0.0
    %6292 = vmatprep.subr.mxu0 0.0
    %6293 = vmatpush1.xpose.msra.mxu0 0.0
    %6294 = vmatprep.subr.mxu0 0.0
    %6295 = vmatpush1.xpose.msra.mxu0 0.0
    %6296 = vmatprep.subr.mxu0 0.0
    %6297 = vmatpush1.xpose.msra.mxu0 0.0
    %6298 = vmatprep.subr.mxu0 0.0
    %6299 = vmatpush1.xpose.msra.mxu0 0.0
    %6300 = vmatprep.subr.mxu0 0.0
    %6301 = vmatpush1.xpose.msra.mxu0 0.0
    %6302 = vmatprep.subr.mxu0 0.0
    %6303 = vmatpush1.xpose.msra.mxu0 0.0
    %6304 = vmatprep.subr.mxu0 0.0
    %6305 = vmatpush1.xpose.msra.mxu0 0.0
    %6306 = vmatprep.subr.mxu0 0.0
    %6307 = vmatpush1.xpose.msra.mxu0 0.0
    %6308 = vmatprep.subr.mxu0 0.0
    %6309 = vmatpush1.xpose.msra.mxu0 0.0
    %6310 = vmatprep.mubr.f32.mxu0 0.0
    %6311 = vmatmul.mubr.f32.gmra.mrb[0].mxu0 %v6238
    %v6312 = vpop.f32.mrb[0].mxu0
    %v6313 = vadd.f32 %v3235, %v6312
    %v6314 = vpop.f32.mrb[0].mxu0
    %6315 = vmatprep.mubr.f32.mxu0 0.0
    %6316 = vmatmul.mubr.f32.gmra.mrb[0].mxu0 %v6240
    %v6317 = vpop.f32.mrb[0].mxu0
    %v6318 = vadd.f32 %v3236, %v6317
    %v6319 = vpop.f32.mrb[0].mxu0
    %6320 = vdwg.mxu0
    %v6321 = vsel %vm3571, %v6313, -inf
    %6322 = vmax.xlane.f32.xlu0 %v6321
    %v6323 = vpop.xlane.xlu0 %6322
    %v6324 = vsel %vm3571, %v6318, -inf
    %6325 = vmax.xlane.f32.xlu0 %v6324
    %v6326 = vpop.xlane.xlu0 %6325
    %v6327 = vsub.f32 %v6313, %v6323
    %v6328 = vsub.f32 %v6318, %v6326
    %v6329 = vmul.f32 %v6327, 1.442695
    %v6330 = vpow.pop %v6329
    %v6331 = vmul.f32 %v6328, 1.442695
    %v6332 = vpow.pop %v6331
    %v6333 = vsel %vm3571, %v6330, 0.0
    %6334 = vadd.xlane.f32.xlu0 %v6333
    %v6335 = vpop.xlane.xlu0 %6334
    %v6336 = vsel %vm3571, %v6332, 0.0
    %6337 = vadd.xlane.f32.xlu0 %v6336
    %v6338 = vpop.xlane.xlu0 %6337
    %v6339 = vrcp.pop %v6335
    %v6340 = vrcp.pop %v6338
    %v6341 = vmul.f32 %v6330, %v6339
    %v6342 = vmul.f32 %v6332, %v6340
    %6343 = vrot.lane.b32.xlu0 %v5810, 48
    %v6344 = vpop.permute.xlu0 %6343
    %6345 = vrot.lane.b32.xlu0 %v5815, 48
    %v6346 = vpop.permute.xlu0 %6345
    %v6350 = vsel %vm3571, %v6341, 0
    %v6353 = vsel %vm3571, %v6342, 0
    %6355 = vmatprep.subr.mxu0 0.0
    %6356 = vmatpush1.msra.mxu0 %v6344
    %6357 = vmatprep.subr.mxu0 0.0
    %6358 = vmatpush1.msra.mxu0 %v6346
    %6359 = vmatprep.subr.mxu0 0.0
    %6360 = vmatpush1.msra.mxu0 0.0
    %6361 = vmatprep.subr.mxu0 0.0
    %6362 = vmatpush1.msra.mxu0 0.0
    %6363 = vmatprep.subr.mxu0 0.0
    %6364 = vmatpush1.msra.mxu0 0.0
    %6365 = vmatprep.subr.mxu0 0.0
    %6366 = vmatpush1.msra.mxu0 0.0
    %6367 = vmatprep.subr.mxu0 0.0
    %6368 = vmatpush1.msra.mxu0 0.0
    %6369 = vmatprep.subr.mxu0 0.0
    %6370 = vmatpush1.msra.mxu0 0.0
    %6371 = vmatprep.subr.mxu0 0.0
    %6372 = vmatpush1.msra.mxu0 0.0
    %6373 = vmatprep.subr.mxu0 0.0
    %6374 = vmatpush1.msra.mxu0 0.0
    %6375 = vmatprep.subr.mxu0 0.0
    %6376 = vmatpush1.msra.mxu0 0.0
    %6377 = vmatprep.subr.mxu0 0.0
    %6378 = vmatpush1.msra.mxu0 0.0
    %6379 = vmatprep.subr.mxu0 0.0
    %6380 = vmatpush1.msra.mxu0 0.0
    %6381 = vmatprep.subr.mxu0 0.0
    %6382 = vmatpush1.msra.mxu0 0.0
    %6383 = vmatprep.subr.mxu0 0.0
    %6384 = vmatpush1.msra.mxu0 0.0
    %6385 = vmatprep.subr.mxu0 0.0
    %6386 = vmatpush1.msra.mxu0 0.0
    %6387 = vmatprep.subr.mxu0 0.0
    %6388 = vmatpush1.msra.mxu0 0.0
    %6389 = vmatprep.subr.mxu0 0.0
    %6390 = vmatpush1.msra.mxu0 0.0
    %6391 = vmatprep.subr.mxu0 0.0
    %6392 = vmatpush1.msra.mxu0 0.0
    %6393 = vmatprep.subr.mxu0 0.0
    %6394 = vmatpush1.msra.mxu0 0.0
    %6395 = vmatprep.subr.mxu0 0.0
    %6396 = vmatpush1.msra.mxu0 0.0
    %6397 = vmatprep.subr.mxu0 0.0
    %6398 = vmatpush1.msra.mxu0 0.0
    %6399 = vmatprep.subr.mxu0 0.0
    %6400 = vmatpush1.msra.mxu0 0.0
    %6401 = vmatprep.subr.mxu0 0.0
    %6402 = vmatpush1.msra.mxu0 0.0
    %6403 = vmatprep.subr.mxu0 0.0
    %6404 = vmatpush1.msra.mxu0 0.0
    %6405 = vmatprep.subr.mxu0 0.0
    %6406 = vmatpush1.msra.mxu0 0.0
    %6407 = vmatprep.subr.mxu0 0.0
    %6408 = vmatpush1.msra.mxu0 0.0
    %6409 = vmatprep.subr.mxu0 0.0
    %6410 = vmatpush1.msra.mxu0 0.0
    %6411 = vmatprep.subr.mxu0 0.0
    %6412 = vmatpush1.msra.mxu0 0.0
    %6413 = vmatprep.subr.mxu0 0.0
    %6414 = vmatpush1.msra.mxu0 0.0
    %6415 = vmatprep.subr.mxu0 0.0
    %6416 = vmatpush1.msra.mxu0 0.0
    %6417 = vmatprep.subr.mxu0 0.0
    %6418 = vmatpush1.msra.mxu0 0.0
    %6419 = vmatprep.mubr.f32.mxu0 0.0
    %6420 = vmatmul.mubr.f32.gmra.mrb[0].mxu0 %v6350
    %v6421 = vpop.f32.mrb[0].mxu0
    %v6422 = vadd.f32 0.0, %v6421
    %v6423 = vpop.f32.mrb[0].mxu0
    %6424 = vmatprep.mubr.f32.mxu0 0.0
    %6425 = vmatmul.mubr.f32.gmra.mrb[0].mxu0 %v6353
    %v6426 = vpop.f32.mrb[0].mxu0
    %v6427 = vadd.f32 0.0, %v6426
    %v6428 = vpop.f32.mrb[0].mxu0
    %6429 = vdwg.mxu0
    %6430 = vrot.lane.b32.xlu0 %v5810, 104
    %v6431 = vpop.permute.xlu0 %6430
    %6432 = vrot.lane.b32.xlu0 %v5815, 104
    %v6433 = vpop.permute.xlu0 %6432
    %6434 = vrot.lane.b32.xlu0 %v5810, 72
    %v6435 = vpop.permute.xlu0 %6434
    %6436 = vrot.lane.b32.xlu0 %v5815, 72
    %v6437 = vpop.permute.xlu0 %6436
    %v6438 = vsel %vm3487, %v6431, 0
    %v6440 = vsel %vm3487, %v6433, 0
    %v6442 = vsel %vm3487, %v6435, 0
    %v6444 = vsel %vm3487, %v6437, 0
    %6446 = vmatprep.subr.mxu0 0.0
    %6447 = vmatpush1.xpose.msra.mxu0 %v6442
    %6448 = vmatprep.subr.mxu0 0.0
    %6449 = vmatpush1.xpose.msra.mxu0 %v6444
    %6450 = vmatprep.subr.mxu0 0.0
    %6451 = vmatpush1.xpose.msra.mxu0 0.0
    %6452 = vmatprep.subr.mxu0 0.0
    %6453 = vmatpush1.xpose.msra.mxu0 0.0
    %6454 = vmatprep.subr.mxu0 0.0
    %6455 = vmatpush1.xpose.msra.mxu0 0.0
    %6456 = vmatprep.subr.mxu0 0.0
    %6457 = vmatpush1.xpose.msra.mxu0 0.0
    %6458 = vmatprep.subr.mxu0 0.0
    %6459 = vmatpush1.xpose.msra.mxu0 0.0
    %6460 = vmatprep.subr.mxu0 0.0
    %6461 = vmatpush1.xpose.msra.mxu0 0.0
    %6462 = vmatprep.subr.mxu0 0.0
    %6463 = vmatpush1.xpose.msra.mxu0 0.0
    %6464 = vmatprep.subr.mxu0 0.0
    %6465 = vmatpush1.xpose.msra.mxu0 0.0
    %6466 = vmatprep.subr.mxu0 0.0
    %6467 = vmatpush1.xpose.msra.mxu0 0.0
    %6468 = vmatprep.subr.mxu0 0.0
    %6469 = vmatpush1.xpose.msra.mxu0 0.0
    %6470 = vmatprep.subr.mxu0 0.0
    %6471 = vmatpush1.xpose.msra.mxu0 0.0
    %6472 = vmatprep.subr.mxu0 0.0
    %6473 = vmatpush1.xpose.msra.mxu0 0.0
    %6474 = vmatprep.subr.mxu0 0.0
    %6475 = vmatpush1.xpose.msra.mxu0 0.0
    %6476 = vmatprep.subr.mxu0 0.0
    %6477 = vmatpush1.xpose.msra.mxu0 0.0
    %6478 = vmatprep.subr.mxu0 0.0
    %6479 = vmatpush1.xpose.msra.mxu0 0.0
    %6480 = vmatprep.subr.mxu0 0.0
    %6481 = vmatpush1.xpose.msra.mxu0 0.0
    %6482 = vmatprep.subr.mxu0 0.0
    %6483 = vmatpush1.xpose.msra.mxu0 0.0
    %6484 = vmatprep.subr.mxu0 0.0
    %6485 = vmatpush1.xpose.msra.mxu0 0.0
    %6486 = vmatprep.subr.mxu0 0.0
    %6487 = vmatpush1.xpose.msra.mxu0 0.0
    %6488 = vmatprep.subr.mxu0 0.0
    %6489 = vmatpush1.xpose.msra.mxu0 0.0
    %6490 = vmatprep.subr.mxu0 0.0
    %6491 = vmatpush1.xpose.msra.mxu0 0.0
    %6492 = vmatprep.subr.mxu0 0.0
    %6493 = vmatpush1.xpose.msra.mxu0 0.0
    %6494 = vmatprep.subr.mxu0 0.0
    %6495 = vmatpush1.xpose.msra.mxu0 0.0
    %6496 = vmatprep.subr.mxu0 0.0
    %6497 = vmatpush1.xpose.msra.mxu0 0.0
    %6498 = vmatprep.subr.mxu0 0.0
    %6499 = vmatpush1.xpose.msra.mxu0 0.0
    %6500 = vmatprep.subr.mxu0 0.0
    %6501 = vmatpush1.xpose.msra.mxu0 0.0
    %6502 = vmatprep.subr.mxu0 0.0
    %6503 = vmatpush1.xpose.msra.mxu0 0.0
    %6504 = vmatprep.subr.mxu0 0.0
    %6505 = vmatpush1.xpose.msra.mxu0 0.0
    %6506 = vmatprep.subr.mxu0 0.0
    %6507 = vmatpush1.xpose.msra.mxu0 0.0
    %6508 = vmatprep.subr.mxu0 0.0
    %6509 = vmatpush1.xpose.msra.mxu0 0.0
    %6510 = vmatprep.mubr.f32.mxu0 0.0
    %6511 = vmatmul.mubr.f32.gmra.mrb[0].mxu0 %v6438
    %v6512 = vpop.f32.mrb[0].mxu0
    %v6513 = vadd.f32 %v3244, %v6512
    %v6514 = vpop.f32.mrb[0].mxu0
    %6515 = vmatprep.mubr.f32.mxu0 0.0
    %6516 = vmatmul.mubr.f32.gmra.mrb[0].mxu0 %v6440
    %v6517 = vpop.f32.mrb[0].mxu0
    %v6518 = vadd.f32 %v3245, %v6517
    %v6519 = vpop.f32.mrb[0].mxu0
    %6520 = vdwg.mxu0
    %v6521 = vsel %vm3571, %v6513, -inf
    %6522 = vmax.xlane.f32.xlu0 %v6521
    %v6523 = vpop.xlane.xlu0 %6522
    %v6524 = vsel %vm3571, %v6518, -inf
    %6525 = vmax.xlane.f32.xlu0 %v6524
    %v6526 = vpop.xlane.xlu0 %6525
    %v6527 = vsub.f32 %v6513, %v6523
    %v6528 = vsub.f32 %v6518, %v6526
    %v6529 = vmul.f32 %v6527, 1.442695
    %v6530 = vpow.pop %v6529
    %v6531 = vmul.f32 %v6528, 1.442695
    %v6532 = vpow.pop %v6531
    %v6533 = vsel %vm3571, %v6530, 0.0
    %6534 = vadd.xlane.f32.xlu0 %v6533
    %v6535 = vpop.xlane.xlu0 %6534
    %v6536 = vsel %vm3571, %v6532, 0.0
    %6537 = vadd.xlane.f32.xlu0 %v6536
    %v6538 = vpop.xlane.xlu0 %6537
    %v6539 = vrcp.pop %v6535
    %v6540 = vrcp.pop %v6538
    %v6541 = vmul.f32 %v6530, %v6539
    %v6542 = vmul.f32 %v6532, %v6540
    %6543 = vrot.lane.b32.xlu0 %v5810, 40
    %v6544 = vpop.permute.xlu0 %6543
    %6545 = vrot.lane.b32.xlu0 %v5815, 40
    %v6546 = vpop.permute.xlu0 %6545
    %v6550 = vsel %vm3571, %v6541, 0
    %v6553 = vsel %vm3571, %v6542, 0
    %6555 = vmatprep.subr.mxu0 0.0
    %6556 = vmatpush1.msra.mxu0 %v6544
    %6557 = vmatprep.subr.mxu0 0.0
    %6558 = vmatpush1.msra.mxu0 %v6546
    %6559 = vmatprep.subr.mxu0 0.0
    %6560 = vmatpush1.msra.mxu0 0.0
    %6561 = vmatprep.subr.mxu0 0.0
    %6562 = vmatpush1.msra.mxu0 0.0
    %6563 = vmatprep.subr.mxu0 0.0
    %6564 = vmatpush1.msra.mxu0 0.0
    %6565 = vmatprep.subr.mxu0 0.0
    %6566 = vmatpush1.msra.mxu0 0.0
    %6567 = vmatprep.subr.mxu0 0.0
    %6568 = vmatpush1.msra.mxu0 0.0
    %6569 = vmatprep.subr.mxu0 0.0
    %6570 = vmatpush1.msra.mxu0 0.0
    %6571 = vmatprep.subr.mxu0 0.0
    %6572 = vmatpush1.msra.mxu0 0.0
    %6573 = vmatprep.subr.mxu0 0.0
    %6574 = vmatpush1.msra.mxu0 0.0
    %6575 = vmatprep.subr.mxu0 0.0
    %6576 = vmatpush1.msra.mxu0 0.0
    %6577 = vmatprep.subr.mxu0 0.0
    %6578 = vmatpush1.msra.mxu0 0.0
    %6579 = vmatprep.subr.mxu0 0.0
    %6580 = vmatpush1.msra.mxu0 0.0
    %6581 = vmatprep.subr.mxu0 0.0
    %6582 = vmatpush1.msra.mxu0 0.0
    %6583 = vmatprep.subr.mxu0 0.0
    %6584 = vmatpush1.msra.mxu0 0.0
    %6585 = vmatprep.subr.mxu0 0.0
    %6586 = vmatpush1.msra.mxu0 0.0
    %6587 = vmatprep.subr.mxu0 0.0
    %6588 = vmatpush1.msra.mxu0 0.0
    %6589 = vmatprep.subr.mxu0 0.0
    %6590 = vmatpush1.msra.mxu0 0.0
    %6591 = vmatprep.subr.mxu0 0.0
    %6592 = vmatpush1.msra.mxu0 0.0
    %6593 = vmatprep.subr.mxu0 0.0
    %6594 = vmatpush1.msra.mxu0 0.0
    %6595 = vmatprep.subr.mxu0 0.0
    %6596 = vmatpush1.msra.mxu0 0.0
    %6597 = vmatprep.subr.mxu0 0.0
    %6598 = vmatpush1.msra.mxu0 0.0
    %6599 = vmatprep.subr.mxu0 0.0
    %6600 = vmatpush1.msra.mxu0 0.0
    %6601 = vmatprep.subr.mxu0 0.0
    %6602 = vmatpush1.msra.mxu0 0.0
    %6603 = vmatprep.subr.mxu0 0.0
    %6604 = vmatpush1.msra.mxu0 0.0
    %6605 = vmatprep.subr.mxu0 0.0
    %6606 = vmatpush1.msra.mxu0 0.0
    %6607 = vmatprep.subr.mxu0 0.0
    %6608 = vmatpush1.msra.mxu0 0.0
    %6609 = vmatprep.subr.mxu0 0.0
    %6610 = vmatpush1.msra.mxu0 0.0
    %6611 = vmatprep.subr.mxu0 0.0
    %6612 = vmatpush1.msra.mxu0 0.0
    %6613 = vmatprep.subr.mxu0 0.0
    %6614 = vmatpush1.msra.mxu0 0.0
    %6615 = vmatprep.subr.mxu0 0.0
    %6616 = vmatpush1.msra.mxu0 0.0
    %6617 = vmatprep.subr.mxu0 0.0
    %6618 = vmatpush1.msra.mxu0 0.0
    %6619 = vmatprep.mubr.f32.mxu0 0.0
    %6620 = vmatmul.mubr.f32.gmra.mrb[0].mxu0 %v6550
    %v6621 = vpop.f32.mrb[0].mxu0
    %v6622 = vadd.f32 0.0, %v6621
    %v6623 = vpop.f32.mrb[0].mxu0
    %6624 = vmatprep.mubr.f32.mxu0 0.0
    %6625 = vmatmul.mubr.f32.gmra.mrb[0].mxu0 %v6553
    %v6626 = vpop.f32.mrb[0].mxu0
    %v6627 = vadd.f32 0.0, %v6626
    %v6628 = vpop.f32.mrb[0].mxu0
    %6629 = vdwg.mxu0
    %6632 = vrot.lane.b32.xlu0 %v6222, 8
    %v6633 = vpop.permute.xlu0 %6632
    %6634 = vrot.lane.b32.xlu0 %v6227, 8
    %v6635 = vpop.permute.xlu0 %6634
    %6640 = vrot.lane.b32.xlu0 %v6422, 16
    %v6641 = vpop.permute.xlu0 %6640
    %6642 = vrot.lane.b32.xlu0 %v6427, 16
    %v6643 = vpop.permute.xlu0 %6642
    %6648 = vrot.lane.b32.xlu0 %v6622, 24
    %v6649 = vpop.permute.xlu0 %6648
    %6650 = vrot.lane.b32.xlu0 %v6627, 24
    %v6651 = vpop.permute.xlu0 %6650
    %v6654 = vsel %vm3487, %v6022, %v6633
    %v6655 = vsel %vm3487, %v6027, %v6635
    %v6656 = vsel %vm3571, %v6654, %v6641
    %v6657 = vsel %vm3571, %v6655, %v6643
    %v6658 = vsel %vm830, %v6656, %v6649
    %v6659 = vsel %vm830, %v6657, %v6651
    %v6661 = vsel %vm540, %v6658, 0
    %v6664 = vsel %vm540, %v6659, 0
    %6666 = vmatprep.subr.mxu0 0.0
    %6667 = vmatpush1.msra.mxu0 %v5828
    %6668 = vmatprep.subr.mxu0 0.0
    %6669 = vmatpush1.msra.mxu0 %v5829
    %6670 = vmatprep.subr.mxu0 0.0
    %6671 = vmatpush1.msra.mxu0 %v5830
    %6672 = vmatprep.subr.mxu0 0.0
    %6673 = vmatpush1.msra.mxu0 %v5831
    %6674 = vmatprep.subr.mxu0 0.0
    %6675 = vmatpush1.msra.mxu0 0.0
    %6676 = vmatprep.subr.mxu0 0.0
    %6677 = vmatpush1.msra.mxu0 0.0
    %6678 = vmatprep.subr.mxu0 0.0
    %6679 = vmatpush1.msra.mxu0 0.0
    %6680 = vmatprep.subr.mxu0 0.0
    %6681 = vmatpush1.msra.mxu0 0.0
    %6682 = vmatprep.subr.mxu0 0.0
    %6683 = vmatpush1.msra.mxu0 0.0
    %6684 = vmatprep.subr.mxu0 0.0
    %6685 = vmatpush1.msra.mxu0 0.0
    %6686 = vmatprep.subr.mxu0 0.0
    %6687 = vmatpush1.msra.mxu0 0.0
    %6688 = vmatprep.subr.mxu0 0.0
    %6689 = vmatpush1.msra.mxu0 0.0
    %6690 = vmatprep.subr.mxu0 0.0
    %6691 = vmatpush1.msra.mxu0 0.0
    %6692 = vmatprep.subr.mxu0 0.0
    %6693 = vmatpush1.msra.mxu0 0.0
    %6694 = vmatprep.subr.mxu0 0.0
    %6695 = vmatpush1.msra.mxu0 0.0
    %6696 = vmatprep.subr.mxu0 0.0
    %6697 = vmatpush1.msra.mxu0 0.0
    %6698 = vmatprep.subr.mxu0 0.0
    %6699 = vmatpush1.msra.mxu0 0.0
    %6700 = vmatprep.subr.mxu0 0.0
    %6701 = vmatpush1.msra.mxu0 0.0
    %6702 = vmatprep.subr.mxu0 0.0
    %6703 = vmatpush1.msra.mxu0 0.0
    %6704 = vmatprep.subr.mxu0 0.0
    %6705 = vmatpush1.msra.mxu0 0.0
    %6706 = vmatprep.subr.mxu0 0.0
    %6707 = vmatpush1.msra.mxu0 0.0
    %6708 = vmatprep.subr.mxu0 0.0
    %6709 = vmatpush1.msra.mxu0 0.0
    %6710 = vmatprep.subr.mxu0 0.0
    %6711 = vmatpush1.msra.mxu0 0.0
    %6712 = vmatprep.subr.mxu0 0.0
    %6713 = vmatpush1.msra.mxu0 0.0
    %6714 = vmatprep.subr.mxu0 0.0
    %6715 = vmatpush1.msra.mxu0 0.0
    %6716 = vmatprep.subr.mxu0 0.0
    %6717 = vmatpush1.msra.mxu0 0.0
    %6718 = vmatprep.subr.mxu0 0.0
    %6719 = vmatpush1.msra.mxu0 0.0
    %6720 = vmatprep.subr.mxu0 0.0
    %6721 = vmatpush1.msra.mxu0 0.0
    %6722 = vmatprep.subr.mxu0 0.0
    %6723 = vmatpush1.msra.mxu0 0.0
    %6724 = vmatprep.subr.mxu0 0.0
    %6725 = vmatpush1.msra.mxu0 0.0
    %6726 = vmatprep.subr.mxu0 0.0
    %6727 = vmatpush1.msra.mxu0 0.0
    %6728 = vmatprep.subr.mxu0 0.0
    %6729 = vmatpush1.msra.mxu0 0.0
    %6730 = vmatprep.mubr.f32.mxu0 0.0
    %6731 = vmatmul.mubr.f32.gmra.mrb[0].mxu0 %v6661
    %v6732 = vpop.f32.mrb[0].mxu0
    %v6733 = vadd.f32 0.0, %v6732
    %v6734 = vpop.f32.mrb[0].mxu0
    %6735 = vmatprep.mubr.f32.mxu0 0.0
    %6736 = vmatmul.mubr.f32.gmra.mrb[0].mxu0 %v6664
    %v6737 = vpop.f32.mrb[0].mxu0
    %v6738 = vadd.f32 0.0, %v6737
    %v6739 = vpop.f32.mrb[0].mxu0
    %6740 = vdwg.mxu0
    %6743 = vrot.lane.b32.xlu0 %v5820, 96
    %v6744 = vpop.permute.xlu0 %6743
    %6745 = vrot.lane.b32.xlu0 %v5825, 96
    %v6746 = vpop.permute.xlu0 %6745
    %v6747 = vsel %vm3487, %v5820, 0
    %v6749 = vsel %vm3487, %v5825, 0
    %v6751 = vsel %vm3487, %v6744, 0
    %v6753 = vsel %vm3487, %v6746, 0
    %6755 = vmatprep.subr.mxu0 0.0
    %6756 = vmatpush1.xpose.msra.mxu0 %v6751
    %6757 = vmatprep.subr.mxu0 0.0
    %6758 = vmatpush1.xpose.msra.mxu0 %v6753
    %6759 = vmatprep.subr.mxu0 0.0
    %6760 = vmatpush1.xpose.msra.mxu0 0.0
    %6761 = vmatprep.subr.mxu0 0.0
    %6762 = vmatpush1.xpose.msra.mxu0 0.0
    %6763 = vmatprep.subr.mxu0 0.0
    %6764 = vmatpush1.xpose.msra.mxu0 0.0
    %6765 = vmatprep.subr.mxu0 0.0
    %6766 = vmatpush1.xpose.msra.mxu0 0.0
    %6767 = vmatprep.subr.mxu0 0.0
    %6768 = vmatpush1.xpose.msra.mxu0 0.0
    %6769 = vmatprep.subr.mxu0 0.0
    %6770 = vmatpush1.xpose.msra.mxu0 0.0
    %6771 = vmatprep.subr.mxu0 0.0
    %6772 = vmatpush1.xpose.msra.mxu0 0.0
    %6773 = vmatprep.subr.mxu0 0.0
    %6774 = vmatpush1.xpose.msra.mxu0 0.0
    %6775 = vmatprep.subr.mxu0 0.0
    %6776 = vmatpush1.xpose.msra.mxu0 0.0
    %6777 = vmatprep.subr.mxu0 0.0
    %6778 = vmatpush1.xpose.msra.mxu0 0.0
    %6779 = vmatprep.subr.mxu0 0.0
    %6780 = vmatpush1.xpose.msra.mxu0 0.0
    %6781 = vmatprep.subr.mxu0 0.0
    %6782 = vmatpush1.xpose.msra.mxu0 0.0
    %6783 = vmatprep.subr.mxu0 0.0
    %6784 = vmatpush1.xpose.msra.mxu0 0.0
    %6785 = vmatprep.subr.mxu0 0.0
    %6786 = vmatpush1.xpose.msra.mxu0 0.0
    %6787 = vmatprep.subr.mxu0 0.0
    %6788 = vmatpush1.xpose.msra.mxu0 0.0
    %6789 = vmatprep.subr.mxu0 0.0
    %6790 = vmatpush1.xpose.msra.mxu0 0.0
    %6791 = vmatprep.subr.mxu0 0.0
    %6792 = vmatpush1.xpose.msra.mxu0 0.0
    %6793 = vmatprep.subr.mxu0 0.0
    %6794 = vmatpush1.xpose.msra.mxu0 0.0
    %6795 = vmatprep.subr.mxu0 0.0
    %6796 = vmatpush1.xpose.msra.mxu0 0.0
    %6797 = vmatprep.subr.mxu0 0.0
    %6798 = vmatpush1.xpose.msra.mxu0 0.0
    %6799 = vmatprep.subr.mxu0 0.0
    %6800 = vmatpush1.xpose.msra.mxu0 0.0
    %6801 = vmatprep.subr.mxu0 0.0
    %6802 = vmatpush1.xpose.msra.mxu0 0.0
    %6803 = vmatprep.subr.mxu0 0.0
    %6804 = vmatpush1.xpose.msra.mxu0 0.0
    %6805 = vmatprep.subr.mxu0 0.0
    %6806 = vmatpush1.xpose.msra.mxu0 0.0
    %6807 = vmatprep.subr.mxu0 0.0
    %6808 = vmatpush1.xpose.msra.mxu0 0.0
    %6809 = vmatprep.subr.mxu0 0.0
    %6810 = vmatpush1.xpose.msra.mxu0 0.0
    %6811 = vmatprep.subr.mxu0 0.0
    %6812 = vmatpush1.xpose.msra.mxu0 0.0
    %6813 = vmatprep.subr.mxu0 0.0
    %6814 = vmatpush1.xpose.msra.mxu0 0.0
    %6815 = vmatprep.subr.mxu0 0.0
    %6816 = vmatpush1.xpose.msra.mxu0 0.0
    %6817 = vmatprep.subr.mxu0 0.0
    %6818 = vmatpush1.xpose.msra.mxu0 0.0
    %6819 = vmatprep.mubr.f32.mxu0 0.0
    %6820 = vmatmul.mubr.f32.gmra.mrb[0].mxu0 %v6747
    %v6821 = vpop.f32.mrb[0].mxu0
    %v6822 = vadd.f32 %v3266, %v6821
    %v6823 = vpop.f32.mrb[0].mxu0
    %6824 = vmatprep.mubr.f32.mxu0 0.0
    %6825 = vmatmul.mubr.f32.gmra.mrb[0].mxu0 %v6749
    %v6826 = vpop.f32.mrb[0].mxu0
    %v6827 = vadd.f32 %v3267, %v6826
    %v6828 = vpop.f32.mrb[0].mxu0
    %6829 = vdwg.mxu0
    %v6830 = vsel %vm3571, %v6822, -inf
    %6831 = vmax.xlane.f32.xlu0 %v6830
    %v6832 = vpop.xlane.xlu0 %6831
    %v6833 = vsel %vm3571, %v6827, -inf
    %6834 = vmax.xlane.f32.xlu0 %v6833
    %v6835 = vpop.xlane.xlu0 %6834
    %v6836 = vsub.f32 %v6822, %v6832
    %v6837 = vsub.f32 %v6827, %v6835
    %v6838 = vmul.f32 %v6836, 1.442695
    %v6839 = vpow.pop %v6838
    %v6840 = vmul.f32 %v6837, 1.442695
    %v6841 = vpow.pop %v6840
    %v6842 = vsel %vm3571, %v6839, 0.0
    %6843 = vadd.xlane.f32.xlu0 %v6842
    %v6844 = vpop.xlane.xlu0 %6843
    %v6845 = vsel %vm3571, %v6841, 0.0
    %6846 = vadd.xlane.f32.xlu0 %v6845
    %v6847 = vpop.xlane.xlu0 %6846
    %v6848 = vrcp.pop %v6844
    %v6849 = vrcp.pop %v6847
    %v6850 = vmul.f32 %v6839, %v6848
    %v6851 = vmul.f32 %v6841, %v6849
    %6852 = vrot.lane.b32.xlu0 %v5820, 64
    %v6853 = vpop.permute.xlu0 %6852
    %6854 = vrot.lane.b32.xlu0 %v5825, 64
    %v6855 = vpop.permute.xlu0 %6854
    %v6859 = vsel %vm3571, %v6850, 0
    %v6862 = vsel %vm3571, %v6851, 0
    %6864 = vmatprep.subr.mxu0 0.0
    %6865 = vmatpush1.msra.mxu0 %v6853
    %6866 = vmatprep.subr.mxu0 0.0
    %6867 = vmatpush1.msra.mxu0 %v6855
    %6868 = vmatprep.subr.mxu0 0.0
    %6869 = vmatpush1.msra.mxu0 0.0
    %6870 = vmatprep.subr.mxu0 0.0
    %6871 = vmatpush1.msra.mxu0 0.0
    %6872 = vmatprep.subr.mxu0 0.0
    %6873 = vmatpush1.msra.mxu0 0.0
    %6874 = vmatprep.subr.mxu0 0.0
    %6875 = vmatpush1.msra.mxu0 0.0
    %6876 = vmatprep.subr.mxu0 0.0
    %6877 = vmatpush1.msra.mxu0 0.0
    %6878 = vmatprep.subr.mxu0 0.0
    %6879 = vmatpush1.msra.mxu0 0.0
    %6880 = vmatprep.subr.mxu0 0.0
    %6881 = vmatpush1.msra.mxu0 0.0
    %6882 = vmatprep.subr.mxu0 0.0
    %6883 = vmatpush1.msra.mxu0 0.0
    %6884 = vmatprep.subr.mxu0 0.0
    %6885 = vmatpush1.msra.mxu0 0.0
    %6886 = vmatprep.subr.mxu0 0.0
    %6887 = vmatpush1.msra.mxu0 0.0
    %6888 = vmatprep.subr.mxu0 0.0
    %6889 = vmatpush1.msra.mxu0 0.0
    %6890 = vmatprep.subr.mxu0 0.0
    %6891 = vmatpush1.msra.mxu0 0.0
    %6892 = vmatprep.subr.mxu0 0.0
    %6893 = vmatpush1.msra.mxu0 0.0
    %6894 = vmatprep.subr.mxu0 0.0
    %6895 = vmatpush1.msra.mxu0 0.0
    %6896 = vmatprep.subr.mxu0 0.0
    %6897 = vmatpush1.msra.mxu0 0.0
    %6898 = vmatprep.subr.mxu0 0.0
    %6899 = vmatpush1.msra.mxu0 0.0
    %6900 = vmatprep.subr.mxu0 0.0
    %6901 = vmatpush1.msra.mxu0 0.0
    %6902 = vmatprep.subr.mxu0 0.0
    %6903 = vmatpush1.msra.mxu0 0.0
    %6904 = vmatprep.subr.mxu0 0.0
    %6905 = vmatpush1.msra.mxu0 0.0
    %6906 = vmatprep.subr.mxu0 0.0
    %6907 = vmatpush1.msra.mxu0 0.0
    %6908 = vmatprep.subr.mxu0 0.0
    %6909 = vmatpush1.msra.mxu0 0.0
    %6910 = vmatprep.subr.mxu0 0.0
    %6911 = vmatpush1.msra.mxu0 0.0
    %6912 = vmatprep.subr.mxu0 0.0
    %6913 = vmatpush1.msra.mxu0 0.0
    %6914 = vmatprep.subr.mxu0 0.0
    %6915 = vmatpush1.msra.mxu0 0.0
    %6916 = vmatprep.subr.mxu0 0.0
    %6917 = vmatpush1.msra.mxu0 0.0
    %6918 = vmatprep.subr.mxu0 0.0
    %6919 = vmatpush1.msra.mxu0 0.0
    %6920 = vmatprep.subr.mxu0 0.0
    %6921 = vmatpush1.msra.mxu0 0.0
    %6922 = vmatprep.subr.mxu0 0.0
    %6923 = vmatpush1.msra.mxu0 0.0
    %6924 = vmatprep.subr.mxu0 0.0
    %6925 = vmatpush1.msra.mxu0 0.0
    %6926 = vmatprep.subr.mxu0 0.0
    %6927 = vmatpush1.msra.mxu0 0.0
    %6928 = vmatprep.mubr.f32.mxu0 0.0
    %6929 = vmatmul.mubr.f32.gmra.mrb[0].mxu0 %v6859
    %v6930 = vpop.f32.mrb[0].mxu0
    %v6931 = vadd.f32 0.0, %v6930
    %v6932 = vpop.f32.mrb[0].mxu0
    %6933 = vmatprep.mubr.f32.mxu0 0.0
    %6934 = vmatmul.mubr.f32.gmra.mrb[0].mxu0 %v6862
    %v6935 = vpop.f32.mrb[0].mxu0
    %v6936 = vadd.f32 0.0, %v6935
    %v6937 = vpop.f32.mrb[0].mxu0
    %6938 = vdwg.mxu0
    %6939 = vrot.lane.b32.xlu0 %v5820, 120
    %v6940 = vpop.permute.xlu0 %6939
    %6941 = vrot.lane.b32.xlu0 %v5825, 120
    %v6942 = vpop.permute.xlu0 %6941
    %6943 = vrot.lane.b32.xlu0 %v5820, 88
    %v6944 = vpop.permute.xlu0 %6943
    %6945 = vrot.lane.b32.xlu0 %v5825, 88
    %v6946 = vpop.permute.xlu0 %6945
    %v6947 = vsel %vm3487, %v6940, 0
    %v6949 = vsel %vm3487, %v6942, 0
    %v6951 = vsel %vm3487, %v6944, 0
    %v6953 = vsel %vm3487, %v6946, 0
    %6955 = vmatprep.subr.mxu0 0.0
    %6956 = vmatpush1.xpose.msra.mxu0 %v6951
    %6957 = vmatprep.subr.mxu0 0.0
    %6958 = vmatpush1.xpose.msra.mxu0 %v6953
    %6959 = vmatprep.subr.mxu0 0.0
    %6960 = vmatpush1.xpose.msra.mxu0 0.0
    %6961 = vmatprep.subr.mxu0 0.0
    %6962 = vmatpush1.xpose.msra.mxu0 0.0
    %6963 = vmatprep.subr.mxu0 0.0
    %6964 = vmatpush1.xpose.msra.mxu0 0.0
    %6965 = vmatprep.subr.mxu0 0.0
    %6966 = vmatpush1.xpose.msra.mxu0 0.0
    %6967 = vmatprep.subr.mxu0 0.0
    %6968 = vmatpush1.xpose.msra.mxu0 0.0
    %6969 = vmatprep.subr.mxu0 0.0
    %6970 = vmatpush1.xpose.msra.mxu0 0.0
    %6971 = vmatprep.subr.mxu0 0.0
    %6972 = vmatpush1.xpose.msra.mxu0 0.0
    %6973 = vmatprep.subr.mxu0 0.0
    %6974 = vmatpush1.xpose.msra.mxu0 0.0
    %6975 = vmatprep.subr.mxu0 0.0
    %6976 = vmatpush1.xpose.msra.mxu0 0.0
    %6977 = vmatprep.subr.mxu0 0.0
    %6978 = vmatpush1.xpose.msra.mxu0 0.0
    %6979 = vmatprep.subr.mxu0 0.0
    %6980 = vmatpush1.xpose.msra.mxu0 0.0
    %6981 = vmatprep.subr.mxu0 0.0
    %6982 = vmatpush1.xpose.msra.mxu0 0.0
    %6983 = vmatprep.subr.mxu0 0.0
    %6984 = vmatpush1.xpose.msra.mxu0 0.0
    %6985 = vmatprep.subr.mxu0 0.0
    %6986 = vmatpush1.xpose.msra.mxu0 0.0
    %6987 = vmatprep.subr.mxu0 0.0
    %6988 = vmatpush1.xpose.msra.mxu0 0.0
    %6989 = vmatprep.subr.mxu0 0.0
    %6990 = vmatpush1.xpose.msra.mxu0 0.0
    %6991 = vmatprep.subr.mxu0 0.0
    %6992 = vmatpush1.xpose.msra.mxu0 0.0
    %6993 = vmatprep.subr.mxu0 0.0
    %6994 = vmatpush1.xpose.msra.mxu0 0.0
    %6995 = vmatprep.subr.mxu0 0.0
    %6996 = vmatpush1.xpose.msra.mxu0 0.0
    %6997 = vmatprep.subr.mxu0 0.0
    %6998 = vmatpush1.xpose.msra.mxu0 0.0
    %6999 = vmatprep.subr.mxu0 0.0
    %7000 = vmatpush1.xpose.msra.mxu0 0.0
    %7001 = vmatprep.subr.mxu0 0.0
    %7002 = vmatpush1.xpose.msra.mxu0 0.0
    %7003 = vmatprep.subr.mxu0 0.0
    %7004 = vmatpush1.xpose.msra.mxu0 0.0
    %7005 = vmatprep.subr.mxu0 0.0
    %7006 = vmatpush1.xpose.msra.mxu0 0.0
    %7007 = vmatprep.subr.mxu0 0.0
    %7008 = vmatpush1.xpose.msra.mxu0 0.0
    %7009 = vmatprep.subr.mxu0 0.0
    %7010 = vmatpush1.xpose.msra.mxu0 0.0
    %7011 = vmatprep.subr.mxu0 0.0
    %7012 = vmatpush1.xpose.msra.mxu0 0.0
    %7013 = vmatprep.subr.mxu0 0.0
    %7014 = vmatpush1.xpose.msra.mxu0 0.0
    %7015 = vmatprep.subr.mxu0 0.0
    %7016 = vmatpush1.xpose.msra.mxu0 0.0
    %7017 = vmatprep.subr.mxu0 0.0
    %7018 = vmatpush1.xpose.msra.mxu0 0.0
    %7019 = vmatprep.mubr.f32.mxu0 0.0
    %7020 = vmatmul.mubr.f32.gmra.mrb[0].mxu0 %v6947
    %v7021 = vpop.f32.mrb[0].mxu0
    %v7022 = vadd.f32 %v3275, %v7021
    %v7023 = vpop.f32.mrb[0].mxu0
    %7024 = vmatprep.mubr.f32.mxu0 0.0
    %7025 = vmatmul.mubr.f32.gmra.mrb[0].mxu0 %v6949
    %v7026 = vpop.f32.mrb[0].mxu0
    %v7027 = vadd.f32 %v3276, %v7026
    %v7028 = vpop.f32.mrb[0].mxu0
    %7029 = vdwg.mxu0
    %v7030 = vsel %vm3571, %v7022, -inf
    %7031 = vmax.xlane.f32.xlu0 %v7030
    %v7032 = vpop.xlane.xlu0 %7031
    %v7033 = vsel %vm3571, %v7027, -inf
    %7034 = vmax.xlane.f32.xlu0 %v7033
    %v7035 = vpop.xlane.xlu0 %7034
    %v7036 = vsub.f32 %v7022, %v7032
    %v7037 = vsub.f32 %v7027, %v7035
    %v7038 = vmul.f32 %v7036, 1.442695
    %v7039 = vpow.pop %v7038
    %v7040 = vmul.f32 %v7037, 1.442695
    %v7041 = vpow.pop %v7040
    %v7042 = vsel %vm3571, %v7039, 0.0
    %7043 = vadd.xlane.f32.xlu0 %v7042
    %v7044 = vpop.xlane.xlu0 %7043
    %v7045 = vsel %vm3571, %v7041, 0.0
    %7046 = vadd.xlane.f32.xlu0 %v7045
    %v7047 = vpop.xlane.xlu0 %7046
    %v7048 = vrcp.pop %v7044
    %v7049 = vrcp.pop %v7047
    %v7050 = vmul.f32 %v7039, %v7048
    %v7051 = vmul.f32 %v7041, %v7049
    %7052 = vrot.lane.b32.xlu0 %v5820, 56
    %v7053 = vpop.permute.xlu0 %7052
    %7054 = vrot.lane.b32.xlu0 %v5825, 56
    %v7055 = vpop.permute.xlu0 %7054
    %v7059 = vsel %vm3571, %v7050, 0
    %v7062 = vsel %vm3571, %v7051, 0
    %7064 = vmatprep.subr.mxu0 0.0
    %7065 = vmatpush1.msra.mxu0 %v7053
    %7066 = vmatprep.subr.mxu0 0.0
    %7067 = vmatpush1.msra.mxu0 %v7055
    %7068 = vmatprep.subr.mxu0 0.0
    %7069 = vmatpush1.msra.mxu0 0.0
    %7070 = vmatprep.subr.mxu0 0.0
    %7071 = vmatpush1.msra.mxu0 0.0
    %7072 = vmatprep.subr.mxu0 0.0
    %7073 = vmatpush1.msra.mxu0 0.0
    %7074 = vmatprep.subr.mxu0 0.0
    %7075 = vmatpush1.msra.mxu0 0.0
    %7076 = vmatprep.subr.mxu0 0.0
    %7077 = vmatpush1.msra.mxu0 0.0
    %7078 = vmatprep.subr.mxu0 0.0
    %7079 = vmatpush1.msra.mxu0 0.0
    %7080 = vmatprep.subr.mxu0 0.0
    %7081 = vmatpush1.msra.mxu0 0.0
    %7082 = vmatprep.subr.mxu0 0.0
    %7083 = vmatpush1.msra.mxu0 0.0
    %7084 = vmatprep.subr.mxu0 0.0
    %7085 = vmatpush1.msra.mxu0 0.0
    %7086 = vmatprep.subr.mxu0 0.0
    %7087 = vmatpush1.msra.mxu0 0.0
    %7088 = vmatprep.subr.mxu0 0.0
    %7089 = vmatpush1.msra.mxu0 0.0
    %7090 = vmatprep.subr.mxu0 0.0
    %7091 = vmatpush1.msra.mxu0 0.0
    %7092 = vmatprep.subr.mxu0 0.0
    %7093 = vmatpush1.msra.mxu0 0.0
    %7094 = vmatprep.subr.mxu0 0.0
    %7095 = vmatpush1.msra.mxu0 0.0
    %7096 = vmatprep.subr.mxu0 0.0
    %7097 = vmatpush1.msra.mxu0 0.0
    %7098 = vmatprep.subr.mxu0 0.0
    %7099 = vmatpush1.msra.mxu0 0.0
    %7100 = vmatprep.subr.mxu0 0.0
    %7101 = vmatpush1.msra.mxu0 0.0
    %7102 = vmatprep.subr.mxu0 0.0
    %7103 = vmatpush1.msra.mxu0 0.0
    %7104 = vmatprep.subr.mxu0 0.0
    %7105 = vmatpush1.msra.mxu0 0.0
    %7106 = vmatprep.subr.mxu0 0.0
    %7107 = vmatpush1.msra.mxu0 0.0
    %7108 = vmatprep.subr.mxu0 0.0
    %7109 = vmatpush1.msra.mxu0 0.0
    %7110 = vmatprep.subr.mxu0 0.0
    %7111 = vmatpush1.msra.mxu0 0.0
    %7112 = vmatprep.subr.mxu0 0.0
    %7113 = vmatpush1.msra.mxu0 0.0
    %7114 = vmatprep.subr.mxu0 0.0
    %7115 = vmatpush1.msra.mxu0 0.0
    %7116 = vmatprep.subr.mxu0 0.0
    %7117 = vmatpush1.msra.mxu0 0.0
    %7118 = vmatprep.subr.mxu0 0.0
    %7119 = vmatpush1.msra.mxu0 0.0
    %7120 = vmatprep.subr.mxu0 0.0
    %7121 = vmatpush1.msra.mxu0 0.0
    %7122 = vmatprep.subr.mxu0 0.0
    %7123 = vmatpush1.msra.mxu0 0.0
    %7124 = vmatprep.subr.mxu0 0.0
    %7125 = vmatpush1.msra.mxu0 0.0
    %7126 = vmatprep.subr.mxu0 0.0
    %7127 = vmatpush1.msra.mxu0 0.0
    %7128 = vmatprep.mubr.f32.mxu0 0.0
    %7129 = vmatmul.mubr.f32.gmra.mrb[0].mxu0 %v7059
    %v7130 = vpop.f32.mrb[0].mxu0
    %v7131 = vadd.f32 0.0, %v7130
    %v7132 = vpop.f32.mrb[0].mxu0
    %7133 = vmatprep.mubr.f32.mxu0 0.0
    %7134 = vmatmul.mubr.f32.gmra.mrb[0].mxu0 %v7062
    %v7135 = vpop.f32.mrb[0].mxu0
    %v7136 = vadd.f32 0.0, %v7135
    %v7137 = vpop.f32.mrb[0].mxu0
    %7138 = vdwg.mxu0
    %7139 = vrot.lane.b32.xlu0 %v5820, 112
    %v7140 = vpop.permute.xlu0 %7139
    %7141 = vrot.lane.b32.xlu0 %v5825, 112
    %v7142 = vpop.permute.xlu0 %7141
    %7143 = vrot.lane.b32.xlu0 %v5820, 80
    %v7144 = vpop.permute.xlu0 %7143
    %7145 = vrot.lane.b32.xlu0 %v5825, 80
    %v7146 = vpop.permute.xlu0 %7145
    %v7147 = vsel %vm3487, %v7140, 0
    %v7149 = vsel %vm3487, %v7142, 0
    %v7151 = vsel %vm3487, %v7144, 0
    %v7153 = vsel %vm3487, %v7146, 0
    %7155 = vmatprep.subr.mxu0 0.0
    %7156 = vmatpush1.xpose.msra.mxu0 %v7151
    %7157 = vmatprep.subr.mxu0 0.0
    %7158 = vmatpush1.xpose.msra.mxu0 %v7153
    %7159 = vmatprep.subr.mxu0 0.0
    %7160 = vmatpush1.xpose.msra.mxu0 0.0
    %7161 = vmatprep.subr.mxu0 0.0
    %7162 = vmatpush1.xpose.msra.mxu0 0.0
    %7163 = vmatprep.subr.mxu0 0.0
    %7164 = vmatpush1.xpose.msra.mxu0 0.0
    %7165 = vmatprep.subr.mxu0 0.0
    %7166 = vmatpush1.xpose.msra.mxu0 0.0
    %7167 = vmatprep.subr.mxu0 0.0
    %7168 = vmatpush1.xpose.msra.mxu0 0.0
    %7169 = vmatprep.subr.mxu0 0.0
    %7170 = vmatpush1.xpose.msra.mxu0 0.0
    %7171 = vmatprep.subr.mxu0 0.0
    %7172 = vmatpush1.xpose.msra.mxu0 0.0
    %7173 = vmatprep.subr.mxu0 0.0
    %7174 = vmatpush1.xpose.msra.mxu0 0.0
    %7175 = vmatprep.subr.mxu0 0.0
    %7176 = vmatpush1.xpose.msra.mxu0 0.0
    %7177 = vmatprep.subr.mxu0 0.0
    %7178 = vmatpush1.xpose.msra.mxu0 0.0
    %7179 = vmatprep.subr.mxu0 0.0
    %7180 = vmatpush1.xpose.msra.mxu0 0.0
    %7181 = vmatprep.subr.mxu0 0.0
    %7182 = vmatpush1.xpose.msra.mxu0 0.0
    %7183 = vmatprep.subr.mxu0 0.0
    %7184 = vmatpush1.xpose.msra.mxu0 0.0
    %7185 = vmatprep.subr.mxu0 0.0
    %7186 = vmatpush1.xpose.msra.mxu0 0.0
    %7187 = vmatprep.subr.mxu0 0.0
    %7188 = vmatpush1.xpose.msra.mxu0 0.0
    %7189 = vmatprep.subr.mxu0 0.0
    %7190 = vmatpush1.xpose.msra.mxu0 0.0
    %7191 = vmatprep.subr.mxu0 0.0
    %7192 = vmatpush1.xpose.msra.mxu0 0.0
    %7193 = vmatprep.subr.mxu0 0.0
    %7194 = vmatpush1.xpose.msra.mxu0 0.0
    %7195 = vmatprep.subr.mxu0 0.0
    %7196 = vmatpush1.xpose.msra.mxu0 0.0
    %7197 = vmatprep.subr.mxu0 0.0
    %7198 = vmatpush1.xpose.msra.mxu0 0.0
    %7199 = vmatprep.subr.mxu0 0.0
    %7200 = vmatpush1.xpose.msra.mxu0 0.0
    %7201 = vmatprep.subr.mxu0 0.0
    %7202 = vmatpush1.xpose.msra.mxu0 0.0
    %7203 = vmatprep.subr.mxu0 0.0
    %7204 = vmatpush1.xpose.msra.mxu0 0.0
    %7205 = vmatprep.subr.mxu0 0.0
    %7206 = vmatpush1.xpose.msra.mxu0 0.0
    %7207 = vmatprep.subr.mxu0 0.0
    %7208 = vmatpush1.xpose.msra.mxu0 0.0
    %7209 = vmatprep.subr.mxu0 0.0
    %7210 = vmatpush1.xpose.msra.mxu0 0.0
    %7211 = vmatprep.subr.mxu0 0.0
    %7212 = vmatpush1.xpose.msra.mxu0 0.0
    %7213 = vmatprep.subr.mxu0 0.0
    %7214 = vmatpush1.xpose.msra.mxu0 0.0
    %7215 = vmatprep.subr.mxu0 0.0
    %7216 = vmatpush1.xpose.msra.mxu0 0.0
    %7217 = vmatprep.subr.mxu0 0.0
    %7218 = vmatpush1.xpose.msra.mxu0 0.0
    %7219 = vmatprep.mubr.f32.mxu0 0.0
    %7220 = vmatmul.mubr.f32.gmra.mrb[0].mxu0 %v7147
    %v7221 = vpop.f32.mrb[0].mxu0
    %v7222 = vadd.f32 %v3284, %v7221
    %v7223 = vpop.f32.mrb[0].mxu0
    %7224 = vmatprep.mubr.f32.mxu0 0.0
    %7225 = vmatmul.mubr.f32.gmra.mrb[0].mxu0 %v7149
    %v7226 = vpop.f32.mrb[0].mxu0
    %v7227 = vadd.f32 %v3285, %v7226
    %v7228 = vpop.f32.mrb[0].mxu0
    %7229 = vdwg.mxu0
    %v7230 = vsel %vm3571, %v7222, -inf
    %7231 = vmax.xlane.f32.xlu0 %v7230
    %v7232 = vpop.xlane.xlu0 %7231
    %v7233 = vsel %vm3571, %v7227, -inf
    %7234 = vmax.xlane.f32.xlu0 %v7233
    %v7235 = vpop.xlane.xlu0 %7234
    %v7236 = vsub.f32 %v7222, %v7232
    %v7237 = vsub.f32 %v7227, %v7235
    %v7238 = vmul.f32 %v7236, 1.442695
    %v7239 = vpow.pop %v7238
    %v7240 = vmul.f32 %v7237, 1.442695
    %v7241 = vpow.pop %v7240
    %v7242 = vsel %vm3571, %v7239, 0.0
    %7243 = vadd.xlane.f32.xlu0 %v7242
    %v7244 = vpop.xlane.xlu0 %7243
    %v7245 = vsel %vm3571, %v7241, 0.0
    %7246 = vadd.xlane.f32.xlu0 %v7245
    %v7247 = vpop.xlane.xlu0 %7246
    %v7248 = vrcp.pop %v7244
    %v7249 = vrcp.pop %v7247
    %v7250 = vmul.f32 %v7239, %v7248
    %v7251 = vmul.f32 %v7241, %v7249
    %7252 = vrot.lane.b32.xlu0 %v5820, 48
    %v7253 = vpop.permute.xlu0 %7252
    %7254 = vrot.lane.b32.xlu0 %v5825, 48
    %v7255 = vpop.permute.xlu0 %7254
    %v7259 = vsel %vm3571, %v7250, 0
    %v7262 = vsel %vm3571, %v7251, 0
    %7264 = vmatprep.subr.mxu0 0.0
    %7265 = vmatpush1.msra.mxu0 %v7253
    %7266 = vmatprep.subr.mxu0 0.0
    %7267 = vmatpush1.msra.mxu0 %v7255
    %7268 = vmatprep.subr.mxu0 0.0
    %7269 = vmatpush1.msra.mxu0 0.0
    %7270 = vmatprep.subr.mxu0 0.0
    %7271 = vmatpush1.msra.mxu0 0.0
    %7272 = vmatprep.subr.mxu0 0.0
    %7273 = vmatpush1.msra.mxu0 0.0
    %7274 = vmatprep.subr.mxu0 0.0
    %7275 = vmatpush1.msra.mxu0 0.0
    %7276 = vmatprep.subr.mxu0 0.0
    %7277 = vmatpush1.msra.mxu0 0.0
    %7278 = vmatprep.subr.mxu0 0.0
    %7279 = vmatpush1.msra.mxu0 0.0
    %7280 = vmatprep.subr.mxu0 0.0
    %7281 = vmatpush1.msra.mxu0 0.0
    %7282 = vmatprep.subr.mxu0 0.0
    %7283 = vmatpush1.msra.mxu0 0.0
    %7284 = vmatprep.subr.mxu0 0.0
    %7285 = vmatpush1.msra.mxu0 0.0
    %7286 = vmatprep.subr.mxu0 0.0
    %7287 = vmatpush1.msra.mxu0 0.0
    %7288 = vmatprep.subr.mxu0 0.0
    %7289 = vmatpush1.msra.mxu0 0.0
    %7290 = vmatprep.subr.mxu0 0.0
    %7291 = vmatpush1.msra.mxu0 0.0
    %7292 = vmatprep.subr.mxu0 0.0
    %7293 = vmatpush1.msra.mxu0 0.0
    %7294 = vmatprep.subr.mxu0 0.0
    %7295 = vmatpush1.msra.mxu0 0.0
    %7296 = vmatprep.subr.mxu0 0.0
    %7297 = vmatpush1.msra.mxu0 0.0
    %7298 = vmatprep.subr.mxu0 0.0
    %7299 = vmatpush1.msra.mxu0 0.0
    %7300 = vmatprep.subr.mxu0 0.0
    %7301 = vmatpush1.msra.mxu0 0.0
    %7302 = vmatprep.subr.mxu0 0.0
    %7303 = vmatpush1.msra.mxu0 0.0
    %7304 = vmatprep.subr.mxu0 0.0
    %7305 = vmatpush1.msra.mxu0 0.0
    %7306 = vmatprep.subr.mxu0 0.0
    %7307 = vmatpush1.msra.mxu0 0.0
    %7308 = vmatprep.subr.mxu0 0.0
    %7309 = vmatpush1.msra.mxu0 0.0
    %7310 = vmatprep.subr.mxu0 0.0
    %7311 = vmatpush1.msra.mxu0 0.0
    %7312 = vmatprep.subr.mxu0 0.0
    %7313 = vmatpush1.msra.mxu0 0.0
    %7314 = vmatprep.subr.mxu0 0.0
    %7315 = vmatpush1.msra.mxu0 0.0
    %7316 = vmatprep.subr.mxu0 0.0
    %7317 = vmatpush1.msra.mxu0 0.0
    %7318 = vmatprep.subr.mxu0 0.0
    %7319 = vmatpush1.msra.mxu0 0.0
    %7320 = vmatprep.subr.mxu0 0.0
    %7321 = vmatpush1.msra.mxu0 0.0
    %7322 = vmatprep.subr.mxu0 0.0
    %7323 = vmatpush1.msra.mxu0 0.0
    %7324 = vmatprep.subr.mxu0 0.0
    %7325 = vmatpush1.msra.mxu0 0.0
    %7326 = vmatprep.subr.mxu0 0.0
    %7327 = vmatpush1.msra.mxu0 0.0
    %7328 = vmatprep.mubr.f32.mxu0 0.0
    %7329 = vmatmul.mubr.f32.gmra.mrb[0].mxu0 %v7259
    %v7330 = vpop.f32.mrb[0].mxu0
    %v7331 = vadd.f32 0.0, %v7330
    %v7332 = vpop.f32.mrb[0].mxu0
    %7333 = vmatprep.mubr.f32.mxu0 0.0
    %7334 = vmatmul.mubr.f32.gmra.mrb[0].mxu0 %v7262
    %v7335 = vpop.f32.mrb[0].mxu0
    %v7336 = vadd.f32 0.0, %v7335
    %v7337 = vpop.f32.mrb[0].mxu0
    %7338 = vdwg.mxu0
    %7339 = vrot.lane.b32.xlu0 %v5820, 104
    %v7340 = vpop.permute.xlu0 %7339
    %7341 = vrot.lane.b32.xlu0 %v5825, 104
    %v7342 = vpop.permute.xlu0 %7341
    %7343 = vrot.lane.b32.xlu0 %v5820, 72
    %v7344 = vpop.permute.xlu0 %7343
    %7345 = vrot.lane.b32.xlu0 %v5825, 72
    %v7346 = vpop.permute.xlu0 %7345
    %v7347 = vsel %vm3487, %v7340, 0
    %v7349 = vsel %vm3487, %v7342, 0
    %v7351 = vsel %vm3487, %v7344, 0
    %v7353 = vsel %vm3487, %v7346, 0
    %7355 = vmatprep.subr.mxu0 0.0
    %7356 = vmatpush1.xpose.msra.mxu0 %v7351
    %7357 = vmatprep.subr.mxu0 0.0
    %7358 = vmatpush1.xpose.msra.mxu0 %v7353
    %7359 = vmatprep.subr.mxu0 0.0
    %7360 = vmatpush1.xpose.msra.mxu0 0.0
    %7361 = vmatprep.subr.mxu0 0.0
    %7362 = vmatpush1.xpose.msra.mxu0 0.0
    %7363 = vmatprep.subr.mxu0 0.0
    %7364 = vmatpush1.xpose.msra.mxu0 0.0
    %7365 = vmatprep.subr.mxu0 0.0
    %7366 = vmatpush1.xpose.msra.mxu0 0.0
    %7367 = vmatprep.subr.mxu0 0.0
    %7368 = vmatpush1.xpose.msra.mxu0 0.0
    %7369 = vmatprep.subr.mxu0 0.0
    %7370 = vmatpush1.xpose.msra.mxu0 0.0
    %7371 = vmatprep.subr.mxu0 0.0
    %7372 = vmatpush1.xpose.msra.mxu0 0.0
    %7373 = vmatprep.subr.mxu0 0.0
    %7374 = vmatpush1.xpose.msra.mxu0 0.0
    %7375 = vmatprep.subr.mxu0 0.0
    %7376 = vmatpush1.xpose.msra.mxu0 0.0
    %7377 = vmatprep.subr.mxu0 0.0
    %7378 = vmatpush1.xpose.msra.mxu0 0.0
    %7379 = vmatprep.subr.mxu0 0.0
    %7380 = vmatpush1.xpose.msra.mxu0 0.0
    %7381 = vmatprep.subr.mxu0 0.0
    %7382 = vmatpush1.xpose.msra.mxu0 0.0
    %7383 = vmatprep.subr.mxu0 0.0
    %7384 = vmatpush1.xpose.msra.mxu0 0.0
    %7385 = vmatprep.subr.mxu0 0.0
    %7386 = vmatpush1.xpose.msra.mxu0 0.0
    %7387 = vmatprep.subr.mxu0 0.0
    %7388 = vmatpush1.xpose.msra.mxu0 0.0
    %7389 = vmatprep.subr.mxu0 0.0
    %7390 = vmatpush1.xpose.msra.mxu0 0.0
    %7391 = vmatprep.subr.mxu0 0.0
    %7392 = vmatpush1.xpose.msra.mxu0 0.0
    %7393 = vmatprep.subr.mxu0 0.0
    %7394 = vmatpush1.xpose.msra.mxu0 0.0
    %7395 = vmatprep.subr.mxu0 0.0
    %7396 = vmatpush1.xpose.msra.mxu0 0.0
    %7397 = vmatprep.subr.mxu0 0.0
    %7398 = vmatpush1.xpose.msra.mxu0 0.0
    %7399 = vmatprep.subr.mxu0 0.0
    %7400 = vmatpush1.xpose.msra.mxu0 0.0
    %7401 = vmatprep.subr.mxu0 0.0
    %7402 = vmatpush1.xpose.msra.mxu0 0.0
    %7403 = vmatprep.subr.mxu0 0.0
    %7404 = vmatpush1.xpose.msra.mxu0 0.0
    %7405 = vmatprep.subr.mxu0 0.0
    %7406 = vmatpush1.xpose.msra.mxu0 0.0
    %7407 = vmatprep.subr.mxu0 0.0
    %7408 = vmatpush1.xpose.msra.mxu0 0.0
    %7409 = vmatprep.subr.mxu0 0.0
    %7410 = vmatpush1.xpose.msra.mxu0 0.0
    %7411 = vmatprep.subr.mxu0 0.0
    %7412 = vmatpush1.xpose.msra.mxu0 0.0
    %7413 = vmatprep.subr.mxu0 0.0
    %7414 = vmatpush1.xpose.msra.mxu0 0.0
    %7415 = vmatprep.subr.mxu0 0.0
    %7416 = vmatpush1.xpose.msra.mxu0 0.0
    %7417 = vmatprep.subr.mxu0 0.0
    %7418 = vmatpush1.xpose.msra.mxu0 0.0
    %7419 = vmatprep.mubr.f32.mxu0 0.0
    %7420 = vmatmul.mubr.f32.gmra.mrb[0].mxu0 %v7347
    %v7421 = vpop.f32.mrb[0].mxu0
    %v7422 = vadd.f32 %v3293, %v7421
    %v7423 = vpop.f32.mrb[0].mxu0
    %7424 = vmatprep.mubr.f32.mxu0 0.0
    %7425 = vmatmul.mubr.f32.gmra.mrb[0].mxu0 %v7349
    %v7426 = vpop.f32.mrb[0].mxu0
    %v7427 = vadd.f32 %v3294, %v7426
    %v7428 = vpop.f32.mrb[0].mxu0
    %7429 = vdwg.mxu0
    %v7430 = vsel %vm3571, %v7422, -inf
    %7431 = vmax.xlane.f32.xlu0 %v7430
    %v7432 = vpop.xlane.xlu0 %7431
    %v7433 = vsel %vm3571, %v7427, -inf
    %7434 = vmax.xlane.f32.xlu0 %v7433
    %v7435 = vpop.xlane.xlu0 %7434
    %v7436 = vsub.f32 %v7422, %v7432
    %v7437 = vsub.f32 %v7427, %v7435
    %v7438 = vmul.f32 %v7436, 1.442695
    %v7439 = vpow.pop %v7438
    %v7440 = vmul.f32 %v7437, 1.442695
    %v7441 = vpow.pop %v7440
    %v7442 = vsel %vm3571, %v7439, 0.0
    %7443 = vadd.xlane.f32.xlu0 %v7442
    %v7444 = vpop.xlane.xlu0 %7443
    %v7445 = vsel %vm3571, %v7441, 0.0
    %7446 = vadd.xlane.f32.xlu0 %v7445
    %v7447 = vpop.xlane.xlu0 %7446
    %v7448 = vrcp.pop %v7444
    %v7449 = vrcp.pop %v7447
    %v7450 = vmul.f32 %v7439, %v7448
    %v7451 = vmul.f32 %v7441, %v7449
    %7452 = vrot.lane.b32.xlu0 %v5820, 40
    %v7453 = vpop.permute.xlu0 %7452
    %7454 = vrot.lane.b32.xlu0 %v5825, 40
    %v7455 = vpop.permute.xlu0 %7454
    %v7459 = vsel %vm3571, %v7450, 0
    %v7462 = vsel %vm3571, %v7451, 0
    %7464 = vmatprep.subr.mxu0 0.0
    %7465 = vmatpush1.msra.mxu0 %v7453
    %7466 = vmatprep.subr.mxu0 0.0
    %7467 = vmatpush1.msra.mxu0 %v7455
    %7468 = vmatprep.subr.mxu0 0.0
    %7469 = vmatpush1.msra.mxu0 0.0
    %7470 = vmatprep.subr.mxu0 0.0
    %7471 = vmatpush1.msra.mxu0 0.0
    %7472 = vmatprep.subr.mxu0 0.0
    %7473 = vmatpush1.msra.mxu0 0.0
    %7474 = vmatprep.subr.mxu0 0.0
    %7475 = vmatpush1.msra.mxu0 0.0
    %7476 = vmatprep.subr.mxu0 0.0
    %7477 = vmatpush1.msra.mxu0 0.0
    %7478 = vmatprep.subr.mxu0 0.0
    %7479 = vmatpush1.msra.mxu0 0.0
    %7480 = vmatprep.subr.mxu0 0.0
    %7481 = vmatpush1.msra.mxu0 0.0
    %7482 = vmatprep.subr.mxu0 0.0
    %7483 = vmatpush1.msra.mxu0 0.0
    %7484 = vmatprep.subr.mxu0 0.0
    %7485 = vmatpush1.msra.mxu0 0.0
    %7486 = vmatprep.subr.mxu0 0.0
    %7487 = vmatpush1.msra.mxu0 0.0
    %7488 = vmatprep.subr.mxu0 0.0
    %7489 = vmatpush1.msra.mxu0 0.0
    %7490 = vmatprep.subr.mxu0 0.0
    %7491 = vmatpush1.msra.mxu0 0.0
    %7492 = vmatprep.subr.mxu0 0.0
    %7493 = vmatpush1.msra.mxu0 0.0
    %7494 = vmatprep.subr.mxu0 0.0
    %7495 = vmatpush1.msra.mxu0 0.0
    %7496 = vmatprep.subr.mxu0 0.0
    %7497 = vmatpush1.msra.mxu0 0.0
    %7498 = vmatprep.subr.mxu0 0.0
    %7499 = vmatpush1.msra.mxu0 0.0
    %7500 = vmatprep.subr.mxu0 0.0
    %7501 = vmatpush1.msra.mxu0 0.0
    %7502 = vmatprep.subr.mxu0 0.0
    %7503 = vmatpush1.msra.mxu0 0.0
    %7504 = vmatprep.subr.mxu0 0.0
    %7505 = vmatpush1.msra.mxu0 0.0
    %7506 = vmatprep.subr.mxu0 0.0
    %7507 = vmatpush1.msra.mxu0 0.0
    %7508 = vmatprep.subr.mxu0 0.0
    %7509 = vmatpush1.msra.mxu0 0.0
    %7510 = vmatprep.subr.mxu0 0.0
    %7511 = vmatpush1.msra.mxu0 0.0
    %7512 = vmatprep.subr.mxu0 0.0
    %7513 = vmatpush1.msra.mxu0 0.0
    %7514 = vmatprep.subr.mxu0 0.0
    %7515 = vmatpush1.msra.mxu0 0.0
    %7516 = vmatprep.subr.mxu0 0.0
    %7517 = vmatpush1.msra.mxu0 0.0
    %7518 = vmatprep.subr.mxu0 0.0
    %7519 = vmatpush1.msra.mxu0 0.0
    %7520 = vmatprep.subr.mxu0 0.0
    %7521 = vmatpush1.msra.mxu0 0.0
    %7522 = vmatprep.subr.mxu0 0.0
    %7523 = vmatpush1.msra.mxu0 0.0
    %7524 = vmatprep.subr.mxu0 0.0
    %7525 = vmatpush1.msra.mxu0 0.0
    %7526 = vmatprep.subr.mxu0 0.0
    %7527 = vmatpush1.msra.mxu0 0.0
    %7528 = vmatprep.mubr.f32.mxu0 0.0
    %7529 = vmatmul.mubr.f32.gmra.mrb[0].mxu0 %v7459
    %v7530 = vpop.f32.mrb[0].mxu0
    %v7531 = vadd.f32 0.0, %v7530
    %v7532 = vpop.f32.mrb[0].mxu0
    %7533 = vmatprep.mubr.f32.mxu0 0.0
    %7534 = vmatmul.mubr.f32.gmra.mrb[0].mxu0 %v7462
    %v7535 = vpop.f32.mrb[0].mxu0
    %v7536 = vadd.f32 0.0, %v7535
    %v7537 = vpop.f32.mrb[0].mxu0
    %7538 = vdwg.mxu0
    %7541 = vrot.lane.b32.xlu0 %v7131, 8
    %v7542 = vpop.permute.xlu0 %7541
    %7543 = vrot.lane.b32.xlu0 %v7136, 8
    %v7544 = vpop.permute.xlu0 %7543
    %7549 = vrot.lane.b32.xlu0 %v7331, 16
    %v7550 = vpop.permute.xlu0 %7549
    %7551 = vrot.lane.b32.xlu0 %v7336, 16
    %v7552 = vpop.permute.xlu0 %7551
    %7557 = vrot.lane.b32.xlu0 %v7531, 24
    %v7558 = vpop.permute.xlu0 %7557
    %7559 = vrot.lane.b32.xlu0 %v7536, 24
    %v7560 = vpop.permute.xlu0 %7559
    %v7563 = vsel %vm3487, %v6931, %v7542
    %v7564 = vsel %vm3487, %v6936, %v7544
    %v7565 = vsel %vm3571, %v7563, %v7550
    %v7566 = vsel %vm3571, %v7564, %v7552
    %v7567 = vsel %vm830, %v7565, %v7558
    %v7568 = vsel %vm830, %v7566, %v7560
    %v7570 = vsel %vm540, %v7567, 0
    %v7573 = vsel %vm540, %v7568, 0
    %7575 = vmatprep.subr.mxu0 0.0
    %7576 = vmatpush1.msra.mxu0 %v5828
    %7577 = vmatprep.subr.mxu0 0.0
    %7578 = vmatpush1.msra.mxu0 %v5829
    %7579 = vmatprep.subr.mxu0 0.0
    %7580 = vmatpush1.msra.mxu0 %v5830
    %7581 = vmatprep.subr.mxu0 0.0
    %7582 = vmatpush1.msra.mxu0 %v5831
    %7583 = vmatprep.subr.mxu0 0.0
    %7584 = vmatpush1.msra.mxu0 0.0
    %7585 = vmatprep.subr.mxu0 0.0
    %7586 = vmatpush1.msra.mxu0 0.0
    %7587 = vmatprep.subr.mxu0 0.0
    %7588 = vmatpush1.msra.mxu0 0.0
    %7589 = vmatprep.subr.mxu0 0.0
    %7590 = vmatpush1.msra.mxu0 0.0
    %7591 = vmatprep.subr.mxu0 0.0
    %7592 = vmatpush1.msra.mxu0 0.0
    %7593 = vmatprep.subr.mxu0 0.0
    %7594 = vmatpush1.msra.mxu0 0.0
    %7595 = vmatprep.subr.mxu0 0.0
    %7596 = vmatpush1.msra.mxu0 0.0
    %7597 = vmatprep.subr.mxu0 0.0
    %7598 = vmatpush1.msra.mxu0 0.0
    %7599 = vmatprep.subr.mxu0 0.0
    %7600 = vmatpush1.msra.mxu0 0.0
    %7601 = vmatprep.subr.mxu0 0.0
    %7602 = vmatpush1.msra.mxu0 0.0
    %7603 = vmatprep.subr.mxu0 0.0
    %7604 = vmatpush1.msra.mxu0 0.0
    %7605 = vmatprep.subr.mxu0 0.0
    %7606 = vmatpush1.msra.mxu0 0.0
    %7607 = vmatprep.subr.mxu0 0.0
    %7608 = vmatpush1.msra.mxu0 0.0
    %7609 = vmatprep.subr.mxu0 0.0
    %7610 = vmatpush1.msra.mxu0 0.0
    %7611 = vmatprep.subr.mxu0 0.0
    %7612 = vmatpush1.msra.mxu0 0.0
    %7613 = vmatprep.subr.mxu0 0.0
    %7614 = vmatpush1.msra.mxu0 0.0
    %7615 = vmatprep.subr.mxu0 0.0
    %7616 = vmatpush1.msra.mxu0 0.0
    %7617 = vmatprep.subr.mxu0 0.0
    %7618 = vmatpush1.msra.mxu0 0.0
    %7619 = vmatprep.subr.mxu0 0.0
    %7620 = vmatpush1.msra.mxu0 0.0
    %7621 = vmatprep.subr.mxu0 0.0
    %7622 = vmatpush1.msra.mxu0 0.0
    %7623 = vmatprep.subr.mxu0 0.0
    %7624 = vmatpush1.msra.mxu0 0.0
    %7625 = vmatprep.subr.mxu0 0.0
    %7626 = vmatpush1.msra.mxu0 0.0
    %7627 = vmatprep.subr.mxu0 0.0
    %7628 = vmatpush1.msra.mxu0 0.0
    %7629 = vmatprep.subr.mxu0 0.0
    %7630 = vmatpush1.msra.mxu0 0.0
    %7631 = vmatprep.subr.mxu0 0.0
    %7632 = vmatpush1.msra.mxu0 0.0
    %7633 = vmatprep.subr.mxu0 0.0
    %7634 = vmatpush1.msra.mxu0 0.0
    %7635 = vmatprep.subr.mxu0 0.0
    %7636 = vmatpush1.msra.mxu0 0.0
    %7637 = vmatprep.subr.mxu0 0.0
    %7638 = vmatpush1.msra.mxu0 0.0
    %7639 = vmatprep.mubr.f32.mxu0 0.0
    %7640 = vmatmul.mubr.f32.gmra.mrb[0].mxu0 %v7570
    %v7641 = vpop.f32.mrb[0].mxu0
    %v7642 = vadd.f32 0.0, %v7641
    %v7643 = vpop.f32.mrb[0].mxu0
    %7644 = vmatprep.mubr.f32.mxu0 0.0
    %7645 = vmatmul.mubr.f32.gmra.mrb[0].mxu0 %v7573
    %v7646 = vpop.f32.mrb[0].mxu0
    %v7647 = vadd.f32 0.0, %v7646
    %v7648 = vpop.f32.mrb[0].mxu0
    %7649 = vdwg.mxu0
    %v7650 = vld [vmem:[#allocation15] sm:$0x1]
    %v7652 = vlaneseq
    %v7653 = vshrl.u32 %v7652, 7
    %v7654 = vsub.s32 0, %v7653
    %v7655 = vrot.slane %v7650, %v7654
    %v7657 = vadd.f32 %v6733, %v7655
    %v7658 = vadd.f32 %v6738, %v7655
    %v7659 = vadd.f32 %v7642, %v7655
    %v7660 = vadd.f32 %v7647, %v7655
    %v7661 = vadd.f32 %v5642, %v7657
    %v7662 = vadd.f32 %v5643, %v7658
    %v7663 = vadd.f32 %v5644, %v7659
    %v7664 = vadd.f32 %v5645, %v7660
    %v7665 = vld [vmem:[#allocation16] sm:$0x1]
    %v7666 = vld [vmem:[#allocation18] sm:$0x1]
    %v7667 = vsel %vm540, %v7661, 0.0
    %7668 = vadd.xlane.f32.xlu0 %v7667
    %v7669 = vpop.xlane.xlu0 %7668
    %v7670 = vsel %vm540, %v7662, 0.0
    %7671 = vadd.xlane.f32.xlu0 %v7670
    %v7672 = vpop.xlane.xlu0 %7671
    %v7673 = vsel %vm540, %v7663, 0.0
    %7674 = vadd.xlane.f32.xlu0 %v7673
    %v7675 = vpop.xlane.xlu0 %7674
    %v7676 = vsel %vm540, %v7664, 0.0
    %7677 = vadd.xlane.f32.xlu0 %v7676
    %v7678 = vpop.xlane.xlu0 %7677
    %v7679 = vmul.f32 %v7669, %v553
    %v7680 = vmul.f32 %v7672, %v553
    %v7681 = vmul.f32 %v7675, %v553
    %v7682 = vmul.f32 %v7678, %v553
    %v7683 = vsub.f32 %v7661, %v7679
    %v7684 = vsub.f32 %v7662, %v7680
    %v7685 = vsub.f32 %v7663, %v7681
    %v7686 = vsub.f32 %v7664, %v7682
    %v7687 = vmul.f32 %v7683, %v7683
    %v7688 = vmul.f32 %v7684, %v7684
    %v7689 = vmul.f32 %v7685, %v7685
    %v7690 = vmul.f32 %v7686, %v7686
    %v7691 = vsel %vm540, %v7687, 0.0
    %7692 = vadd.xlane.f32.xlu0 %v7691
    %v7693 = vpop.xlane.xlu0 %7692
    %v7694 = vsel %vm540, %v7688, 0.0
    %7695 = vadd.xlane.f32.xlu0 %v7694
    %v7696 = vpop.xlane.xlu0 %7695
    %v7697 = vsel %vm540, %v7689, 0.0
    %7698 = vadd.xlane.f32.xlu0 %v7697
    %v7699 = vpop.xlane.xlu0 %7698
    %v7700 = vsel %vm540, %v7690, 0.0
    %7701 = vadd.xlane.f32.xlu0 %v7700
    %v7702 = vpop.xlane.xlu0 %7701
    %v7703 = vmul.f32 %v7693, %v553
    %v7704 = vmul.f32 %v7696, %v553
    %v7705 = vmul.f32 %v7699, %v553
    %v7706 = vmul.f32 %v7702, %v553
    %v7707 = vadd.f32 %v7703, 1e-05
    %v7708 = vadd.f32 %v7704, 1e-05
    %v7709 = vadd.f32 %v7705, 1e-05
    %v7710 = vadd.f32 %v7706, 1e-05
    %v7711 = vrsqrt.pop %v7707
    %v7712 = vrsqrt.pop %v7708
    %v7713 = vrsqrt.pop %v7709
    %v7714 = vrsqrt.pop %v7710
    %v7715 = vmul.f32 %v7683, %v7711
    %v7716 = vmul.f32 %v7684, %v7712
    %v7717 = vmul.f32 %v7685, %v7713
    %v7718 = vmul.f32 %v7686, %v7714
    %v7720 = vlaneseq
    %v7721 = vshrl.u32 %v7720, 7
    %v7722 = vsub.s32 0, %v7721
    %v7723 = vrot.slane %v7665, %v7722
    %v7725 = vmul.f32 %v7715, %v7723
    %v7726 = vmul.f32 %v7716, %v7723
    %v7727 = vmul.f32 %v7717, %v7723
    %v7728 = vmul.f32 %v7718, %v7723
    %v7730 = vlaneseq
    %v7731 = vshrl.u32 %v7730, 7
    %v7732 = vsub.s32 0, %v7731
    %v7733 = vrot.slane %v7666, %v7732
    %v7735 = vadd.f32 %v7725, %v7733
    %v7736 = vadd.f32 %v7726, %v7733
    %v7737 = vadd.f32 %v7727, %v7733
    %v7738 = vadd.f32 %v7728, %v7733
    %v7739 = vld [vmem:[%s103] sm:$0xff]
    %v7740 = vld [vmem:[%s103 + $0x8] sm:$0xff]
    %v7741 = vld [vmem:[%s103 + $0x10] sm:$0xff]
    %v7742 = vld [vmem:[%s103 + $0x18] sm:$0xff]
    %v7743 = vld [vmem:[#allocation19] sm:$0x1]
    %v7745 = vlaneseq
    %v7746 = vshrl.u32 %v7745, 7
    %v7747 = vsub.s32 0, %v7746
    %v7748 = vrot.slane %v7743, %v7747
    %v7751 = vsel %vm540, %v7735, 0
    %v7754 = vsel %vm540, %v7736, 0
    %v7757 = vsel %vm540, %v7737, 0
    %v7760 = vsel %vm540, %v7738, 0
    %7762 = vmatprep.subr.mxu0 0.0
    %7763 = vmatpush1.msra.mxu0 %v7739
    %7764 = vmatprep.subr.mxu0 0.0
    %7765 = vmatpush1.msra.mxu0 %v7740
    %7766 = vmatprep.subr.mxu0 0.0
    %7767 = vmatpush1.msra.mxu0 %v7741
    %7768 = vmatprep.subr.mxu0 0.0
    %7769 = vmatpush1.msra.mxu0 %v7742
    %7770 = vmatprep.subr.mxu0 0.0
    %7771 = vmatpush1.msra.mxu0 0.0
    %7772 = vmatprep.subr.mxu0 0.0
    %7773 = vmatpush1.msra.mxu0 0.0
    %7774 = vmatprep.subr.mxu0 0.0
    %7775 = vmatpush1.msra.mxu0 0.0
    %7776 = vmatprep.subr.mxu0 0.0
    %7777 = vmatpush1.msra.mxu0 0.0
    %7778 = vmatprep.subr.mxu0 0.0
    %7779 = vmatpush1.msra.mxu0 0.0
    %7780 = vmatprep.subr.mxu0 0.0
    %7781 = vmatpush1.msra.mxu0 0.0
    %7782 = vmatprep.subr.mxu0 0.0
    %7783 = vmatpush1.msra.mxu0 0.0
    %7784 = vmatprep.subr.mxu0 0.0
    %7785 = vmatpush1.msra.mxu0 0.0
    %7786 = vmatprep.subr.mxu0 0.0
    %7787 = vmatpush1.msra.mxu0 0.0
    %7788 = vmatprep.subr.mxu0 0.0
    %7789 = vmatpush1.msra.mxu0 0.0
    %7790 = vmatprep.subr.mxu0 0.0
    %7791 = vmatpush1.msra.mxu0 0.0
    %7792 = vmatprep.subr.mxu0 0.0
    %7793 = vmatpush1.msra.mxu0 0.0
    %7794 = vmatprep.subr.mxu0 0.0
    %7795 = vmatpush1.msra.mxu0 0.0
    %7796 = vmatprep.subr.mxu0 0.0
    %7797 = vmatpush1.msra.mxu0 0.0
    %7798 = vmatprep.subr.mxu0 0.0
    %7799 = vmatpush1.msra.mxu0 0.0
    %7800 = vmatprep.subr.mxu0 0.0
    %7801 = vmatpush1.msra.mxu0 0.0
    %7802 = vmatprep.subr.mxu0 0.0
    %7803 = vmatpush1.msra.mxu0 0.0
    %7804 = vmatprep.subr.mxu0 0.0
    %7805 = vmatpush1.msra.mxu0 0.0
    %7806 = vmatprep.subr.mxu0 0.0
    %7807 = vmatpush1.msra.mxu0 0.0
    %7808 = vmatprep.subr.mxu0 0.0
    %7809 = vmatpush1.msra.mxu0 0.0
    %7810 = vmatprep.subr.mxu0 0.0
    %7811 = vmatpush1.msra.mxu0 0.0
    %7812 = vmatprep.subr.mxu0 0.0
    %7813 = vmatpush1.msra.mxu0 0.0
    %7814 = vmatprep.subr.mxu0 0.0
    %7815 = vmatpush1.msra.mxu0 0.0
    %7816 = vmatprep.subr.mxu0 0.0
    %7817 = vmatpush1.msra.mxu0 0.0
    %7818 = vmatprep.subr.mxu0 0.0
    %7819 = vmatpush1.msra.mxu0 0.0
    %7820 = vmatprep.subr.mxu0 0.0
    %7821 = vmatpush1.msra.mxu0 0.0
    %7822 = vmatprep.subr.mxu0 0.0
    %7823 = vmatpush1.msra.mxu0 0.0
    %7824 = vmatprep.subr.mxu0 0.0
    %7825 = vmatpush1.msra.mxu0 0.0
    %7826 = vmatprep.mubr.f32.mxu0 0.0
    %7827 = vmatmul.mubr.f32.gmra.mrb[0].mxu0 %v7751
    %v7828 = vpop.f32.mrb[0].mxu0
    %v7829 = vadd.f32 %v7748, %v7828
    %v7830 = vpop.f32.mrb[0].mxu0
    %7831 = vmatprep.mubr.f32.mxu0 0.0
    %7832 = vmatmul.mubr.f32.gmra.mrb[0].mxu0 %v7754
    %v7833 = vpop.f32.mrb[0].mxu0
    %v7834 = vadd.f32 %v7748, %v7833
    %v7835 = vpop.f32.mrb[0].mxu0
    %7836 = vmatprep.mubr.f32.mxu0 0.0
    %7837 = vmatmul.mubr.f32.gmra.mrb[0].mxu0 %v7757
    %v7838 = vpop.f32.mrb[0].mxu0
    %v7839 = vadd.f32 %v7748, %v7838
    %v7840 = vpop.f32.mrb[0].mxu0
    %7841 = vmatprep.mubr.f32.mxu0 0.0
    %7842 = vmatmul.mubr.f32.gmra.mrb[0].mxu0 %v7760
    %v7843 = vpop.f32.mrb[0].mxu0
    %v7844 = vadd.f32 %v7748, %v7843
    %v7845 = vpop.f32.mrb[0].mxu0
    %7846 = vdwg.mxu0
    %v7847 = vmul.f32 %v7829, 0.5
    %v7848 = vmul.f32 %v7834, 0.5
    %v7849 = vmul.f32 %v7839, 0.5
    %v7850 = vmul.f32 %v7844, 0.5
    %v7851 = vmul.f32 %v7829, 0.7978846
    %v7852 = vmul.f32 %v7834, 0.7978846
    %v7853 = vmul.f32 %v7839, 0.7978846
    %v7854 = vmul.f32 %v7844, 0.7978846
    %v7855 = vmul.f32 %v7829, 0.044715
    %v7856 = vmul.f32 %v7834, 0.044715
    %v7857 = vmul.f32 %v7839, 0.044715
    %v7858 = vmul.f32 %v7844, 0.044715
    %v7859 = vmul.f32 %v7855, %v7829
    %v7860 = vmul.f32 %v7856, %v7834
    %v7861 = vmul.f32 %v7857, %v7839
    %v7862 = vmul.f32 %v7858, %v7844
    %v7863 = vadd.f32 %v7859, 1.0
    %v7864 = vadd.f32 %v7860, 1.0
    %v7865 = vadd.f32 %v7861, 1.0
    %v7866 = vadd.f32 %v7862, 1.0
    %v7867 = vmul.f32 %v7851, %v7863
    %v7868 = vmul.f32 %v7852, %v7864
    %v7869 = vmul.f32 %v7853, %v7865
    %v7870 = vmul.f32 %v7854, %v7866
    %v7871 = vtanh.pop %v7867
    %v7872 = vtanh.pop %v7868
    %v7873 = vtanh.pop %v7869
    %v7874 = vtanh.pop %v7870
    %v7875 = vadd.f32 %v7871, 1.0
    %v7876 = vadd.f32 %v7872, 1.0
    %v7877 = vadd.f32 %v7873, 1.0
    %v7878 = vadd.f32 %v7874, 1.0
    %v7879 = vmul.f32 %v7847, %v7875
    %v7880 = vmul.f32 %v7848, %v7876
    %v7881 = vmul.f32 %v7849, %v7877
    %v7882 = vmul.f32 %v7850, %v7878
    %v7883 = vld [vmem:[%s107] sm:$0xff]
    %v7884 = vld [vmem:[%s107 + $0x8] sm:$0xff]
    %v7885 = vld [vmem:[%s107 + $0x10] sm:$0xff]
    %v7886 = vld [vmem:[%s107 + $0x18] sm:$0xff]
    %v7887 = vld [vmem:[%s107 + $0x20] sm:$0xff]
    %v7888 = vld [vmem:[%s107 + $0x28] sm:$0xff]
    %v7889 = vld [vmem:[%s107 + $0x30] sm:$0xff]
    %v7890 = vld [vmem:[%s107 + $0x38] sm:$0xff]
    %v7891 = vld [vmem:[%s107 + $0x40] sm:$0xff]
    %v7892 = vld [vmem:[%s107 + $0x48] sm:$0xff]
    %v7893 = vld [vmem:[%s107 + $0x50] sm:$0xff]
    %v7894 = vld [vmem:[%s107 + $0x58] sm:$0xff]
    %v7895 = vld [vmem:[%s107 + $0x60] sm:$0xff]
    %v7896 = vld [vmem:[%s107 + $0x68] sm:$0xff]
    %v7897 = vld [vmem:[%s107 + $0x70] sm:$0xff]
    %v7898 = vld [vmem:[%s107 + $0x78] sm:$0xff]
    %v7899 = vld [vmem:[#allocation21] sm:$0x1]
    %v7901 = vlaneseq
    %v7902 = vshrl.u32 %v7901, 7
    %v7903 = vsub.s32 0, %v7902
    %v7904 = vrot.slane %v7899, %v7903
    %7906 = vmatprep.subr.mxu0 0.0
    %7907 = vmatpush1.msra.mxu0 %v7883
    %7908 = vmatprep.subr.mxu0 0.0
    %7909 = vmatpush1.msra.mxu0 %v7884
    %7910 = vmatprep.subr.mxu0 0.0
    %7911 = vmatpush1.msra.mxu0 %v7885
    %7912 = vmatprep.subr.mxu0 0.0
    %7913 = vmatpush1.msra.mxu0 %v7886
    %7914 = vmatprep.subr.mxu0 0.0
    %7915 = vmatpush1.msra.mxu0 %v7887
    %7916 = vmatprep.subr.mxu0 0.0
    %7917 = vmatpush1.msra.mxu0 %v7888
    %7918 = vmatprep.subr.mxu0 0.0
    %7919 = vmatpush1.msra.mxu0 %v7889
    %7920 = vmatprep.subr.mxu0 0.0
    %7921 = vmatpush1.msra.mxu0 %v7890
    %7922 = vmatprep.subr.mxu0 0.0
    %7923 = vmatpush1.msra.mxu0 %v7891
    %7924 = vmatprep.subr.mxu0 0.0
    %7925 = vmatpush1.msra.mxu0 %v7892
    %7926 = vmatprep.subr.mxu0 0.0
    %7927 = vmatpush1.msra.mxu0 %v7893
    %7928 = vmatprep.subr.mxu0 0.0
    %7929 = vmatpush1.msra.mxu0 %v7894
    %7930 = vmatprep.subr.mxu0 0.0
    %7931 = vmatpush1.msra.mxu0 %v7895
    %7932 = vmatprep.subr.mxu0 0.0
    %7933 = vmatpush1.msra.mxu0 %v7896
    %7934 = vmatprep.subr.mxu0 0.0
    %7935 = vmatpush1.msra.mxu0 %v7897
    %7936 = vmatprep.subr.mxu0 0.0
    %7937 = vmatpush1.msra.mxu0 %v7898
    %7938 = vmatprep.subr.mxu0 0.0
    %7939 = vmatpush1.msra.mxu0 0.0
    %7940 = vmatprep.subr.mxu0 0.0
    %7941 = vmatpush1.msra.mxu0 0.0
    %7942 = vmatprep.subr.mxu0 0.0
    %7943 = vmatpush1.msra.mxu0 0.0
    %7944 = vmatprep.subr.mxu0 0.0
    %7945 = vmatpush1.msra.mxu0 0.0
    %7946 = vmatprep.subr.mxu0 0.0
    %7947 = vmatpush1.msra.mxu0 0.0
    %7948 = vmatprep.subr.mxu0 0.0
    %7949 = vmatpush1.msra.mxu0 0.0
    %7950 = vmatprep.subr.mxu0 0.0
    %7951 = vmatpush1.msra.mxu0 0.0
    %7952 = vmatprep.subr.mxu0 0.0
    %7953 = vmatpush1.msra.mxu0 0.0
    %7954 = vmatprep.subr.mxu0 0.0
    %7955 = vmatpush1.msra.mxu0 0.0
    %7956 = vmatprep.subr.mxu0 0.0
    %7957 = vmatpush1.msra.mxu0 0.0
    %7958 = vmatprep.subr.mxu0 0.0
    %7959 = vmatpush1.msra.mxu0 0.0
    %7960 = vmatprep.subr.mxu0 0.0
    %7961 = vmatpush1.msra.mxu0 0.0
    %7962 = vmatprep.subr.mxu0 0.0
    %7963 = vmatpush1.msra.mxu0 0.0
    %7964 = vmatprep.subr.mxu0 0.0
    %7965 = vmatpush1.msra.mxu0 0.0
    %7966 = vmatprep.subr.mxu0 0.0
    %7967 = vmatpush1.msra.mxu0 0.0
    %7968 = vmatprep.subr.mxu0 0.0
    %7969 = vmatpush1.msra.mxu0 0.0
    %7970 = vmatprep.mubr.f32.mxu0 0.0
    %7971 = vmatmul.mubr.f32.gmra.mrb[0].mxu0 %v7879
    %v7972 = vpop.f32.mrb[0].mxu0
    %v7973 = vadd.f32 %v7904, %v7972
    %v7974 = vpop.f32.mrb[0].mxu0
    %7975 = vmatprep.mubr.f32.mxu0 0.0
    %7976 = vmatmul.mubr.f32.gmra.mrb[0].mxu0 %v7880
    %v7977 = vpop.f32.mrb[0].mxu0
    %v7978 = vadd.f32 %v7904, %v7977
    %v7979 = vpop.f32.mrb[0].mxu0
    %7980 = vmatprep.mubr.f32.mxu0 0.0
    %7981 = vmatmul.mubr.f32.gmra.mrb[0].mxu0 %v7881
    %v7982 = vpop.f32.mrb[0].mxu0
    %v7983 = vadd.f32 %v7904, %v7982
    %v7984 = vpop.f32.mrb[0].mxu0
    %7985 = vmatprep.mubr.f32.mxu0 0.0
    %7986 = vmatmul.mubr.f32.gmra.mrb[0].mxu0 %v7882
    %v7987 = vpop.f32.mrb[0].mxu0
    %v7988 = vadd.f32 %v7904, %v7987
    %v7989 = vpop.f32.mrb[0].mxu0
    %7990 = vdwg.mxu0
    %v7991 = vadd.f32 %v7661, %v7973
    %v7992 = vadd.f32 %v7662, %v7978
    %v7993 = vadd.f32 %v7663, %v7983
    %v7994 = vadd.f32 %v7664, %v7988
    %v7995 = vld [vmem:[#allocation22] sm:$0x1]
    %v7996 = vld [vmem:[#allocation24] sm:$0x1]
    %v7997 = vsel %vm540, %v7991, 0.0
    %7998 = vadd.xlane.f32.xlu0 %v7997
    %v7999 = vpop.xlane.xlu0 %7998
    %v8000 = vsel %vm540, %v7992, 0.0
    %8001 = vadd.xlane.f32.xlu0 %v8000
    %v8002 = vpop.xlane.xlu0 %8001
    %v8003 = vsel %vm540, %v7993, 0.0
    %8004 = vadd.xlane.f32.xlu0 %v8003
    %v8005 = vpop.xlane.xlu0 %8004
    %v8006 = vsel %vm540, %v7994, 0.0
    %8007 = vadd.xlane.f32.xlu0 %v8006
    %v8008 = vpop.xlane.xlu0 %8007
    %v8009 = vmul.f32 %v7999, %v553
    %v8010 = vmul.f32 %v8002, %v553
    %v8011 = vmul.f32 %v8005, %v553
    %v8012 = vmul.f32 %v8008, %v553
    %v8013 = vsub.f32 %v7991, %v8009
    %v8014 = vsub.f32 %v7992, %v8010
    %v8015 = vsub.f32 %v7993, %v8011
    %v8016 = vsub.f32 %v7994, %v8012
    %v8017 = vmul.f32 %v8013, %v8013
    %v8018 = vmul.f32 %v8014, %v8014
    %v8019 = vmul.f32 %v8015, %v8015
    %v8020 = vmul.f32 %v8016, %v8016
    %v8021 = vsel %vm540, %v8017, 0.0
    %8022 = vadd.xlane.f32.xlu0 %v8021
    %v8023 = vpop.xlane.xlu0 %8022
    %v8024 = vsel %vm540, %v8018, 0.0
    %8025 = vadd.xlane.f32.xlu0 %v8024
    %v8026 = vpop.xlane.xlu0 %8025
    %v8027 = vsel %vm540, %v8019, 0.0
    %8028 = vadd.xlane.f32.xlu0 %v8027
    %v8029 = vpop.xlane.xlu0 %8028
    %v8030 = vsel %vm540, %v8020, 0.0
    %8031 = vadd.xlane.f32.xlu0 %v8030
    %v8032 = vpop.xlane.xlu0 %8031
    %v8033 = vmul.f32 %v8023, %v553
    %v8034 = vmul.f32 %v8026, %v553
    %v8035 = vmul.f32 %v8029, %v553
    %v8036 = vmul.f32 %v8032, %v553
    %v8037 = vadd.f32 %v8033, 1e-05
    %v8038 = vadd.f32 %v8034, 1e-05
    %v8039 = vadd.f32 %v8035, 1e-05
    %v8040 = vadd.f32 %v8036, 1e-05
    %v8041 = vrsqrt.pop %v8037
    %v8042 = vrsqrt.pop %v8038
    %v8043 = vrsqrt.pop %v8039
    %v8044 = vrsqrt.pop %v8040
    %v8045 = vmul.f32 %v8013, %v8041
    %v8046 = vmul.f32 %v8014, %v8042
    %v8047 = vmul.f32 %v8015, %v8043
    %v8048 = vmul.f32 %v8016, %v8044
    %v8050 = vlaneseq
    %v8051 = vshrl.u32 %v8050, 7
    %v8052 = vsub.s32 0, %v8051
    %v8053 = vrot.slane %v7995, %v8052
    %v8055 = vmul.f32 %v8045, %v8053
    %v8056 = vmul.f32 %v8046, %v8053
    %v8057 = vmul.f32 %v8047, %v8053
    %v8058 = vmul.f32 %v8048, %v8053
    %v8060 = vlaneseq
    %v8061 = vshrl.u32 %v8060, 7
    %v8062 = vsub.s32 0, %v8061
    %v8063 = vrot.slane %v7996, %v8062
    %v8065 = vadd.f32 %v8055, %v8063
    %v8066 = vadd.f32 %v8056, %v8063
    %v8067 = vadd.f32 %v8057, %v8063
    %v8068 = vadd.f32 %v8058, %v8063
    %v8070 = vsel %vm540, %v8065, 0
    %v8073 = vsel %vm540, %v8066, 0
    %v8076 = vsel %vm540, %v8067, 0
    %v8079 = vsel %vm540, %v8068, 0
    %v8082 = vsel %vm540, %v437, 0
    %v8085 = vsel %vm540, %v438, 0
    %v8088 = vsel %vm540, %v439, 0
    %v8091 = vsel %vm540, %v440, 0
    %v8094 = vsel %vm540, %v441, 0
    %v8097 = vsel %vm540, %v442, 0
    %v8100 = vsel %vm540, %v443, 0
    %v8103 = vsel %vm540, %v444, 0
    %v8106 = vsel %vm540, %v445, 0
    %v8109 = vsel %vm540, %v446, 0
    %v8112 = vsel %vm540, %v447, 0
    %v8115 = vsel %vm540, %v448, 0
    %v8118 = vsel %vm540, %v449, 0
    %v8121 = vsel %vm540, %v450, 0
    %v8124 = vsel %vm540, %v451, 0
    %v8127 = vsel %vm540, %v452, 0
    %8129 = vmatprep.subr.mxu0 0.0
    %8130 = vmatpush1.xpose.msra.mxu0 %v8082
    %8131 = vmatprep.subr.mxu0 0.0
    %8132 = vmatpush1.xpose.msra.mxu0 %v8085
    %8133 = vmatprep.subr.mxu0 0.0
    %8134 = vmatpush1.xpose.msra.mxu0 %v8088
    %8135 = vmatprep.subr.mxu0 0.0
    %8136 = vmatpush1.xpose.msra.mxu0 %v8091
    %8137 = vmatprep.subr.mxu0 0.0
    %8138 = vmatpush1.xpose.msra.mxu0 %v8094
    %8139 = vmatprep.subr.mxu0 0.0
    %8140 = vmatpush1.xpose.msra.mxu0 %v8097
    %8141 = vmatprep.subr.mxu0 0.0
    %8142 = vmatpush1.xpose.msra.mxu0 %v8100
    %8143 = vmatprep.subr.mxu0 0.0
    %8144 = vmatpush1.xpose.msra.mxu0 %v8103
    %8145 = vmatprep.subr.mxu0 0.0
    %8146 = vmatpush1.xpose.msra.mxu0 %v8106
    %8147 = vmatprep.subr.mxu0 0.0
    %8148 = vmatpush1.xpose.msra.mxu0 %v8109
    %8149 = vmatprep.subr.mxu0 0.0
    %8150 = vmatpush1.xpose.msra.mxu0 %v8112
    %8151 = vmatprep.subr.mxu0 0.0
    %8152 = vmatpush1.xpose.msra.mxu0 %v8115
    %8153 = vmatprep.subr.mxu0 0.0
    %8154 = vmatpush1.xpose.msra.mxu0 %v8118
    %8155 = vmatprep.subr.mxu0 0.0
    %8156 = vmatpush1.xpose.msra.mxu0 %v8121
    %8157 = vmatprep.subr.mxu0 0.0
    %8158 = vmatpush1.xpose.msra.mxu0 %v8124
    %8159 = vmatprep.subr.mxu0 0.0
    %8160 = vmatpush1.xpose.msra.mxu0 %v8127
    %8161 = vmatprep.subr.mxu0 0.0
    %8162 = vmatpush1.xpose.msra.mxu0 0.0
    %8163 = vmatprep.subr.mxu0 0.0
    %8164 = vmatpush1.xpose.msra.mxu0 0.0
    %8165 = vmatprep.subr.mxu0 0.0
    %8166 = vmatpush1.xpose.msra.mxu0 0.0
    %8167 = vmatprep.subr.mxu0 0.0
    %8168 = vmatpush1.xpose.msra.mxu0 0.0
    %8169 = vmatprep.subr.mxu0 0.0
    %8170 = vmatpush1.xpose.msra.mxu0 0.0
    %8171 = vmatprep.subr.mxu0 0.0
    %8172 = vmatpush1.xpose.msra.mxu0 0.0
    %8173 = vmatprep.subr.mxu0 0.0
    %8174 = vmatpush1.xpose.msra.mxu0 0.0
    %8175 = vmatprep.subr.mxu0 0.0
    %8176 = vmatpush1.xpose.msra.mxu0 0.0
    %8177 = vmatprep.subr.mxu0 0.0
    %8178 = vmatpush1.xpose.msra.mxu0 0.0
    %8179 = vmatprep.subr.mxu0 0.0
    %8180 = vmatpush1.xpose.msra.mxu0 0.0
    %8181 = vmatprep.subr.mxu0 0.0
    %8182 = vmatpush1.xpose.msra.mxu0 0.0
    %8183 = vmatprep.subr.mxu0 0.0
    %8184 = vmatpush1.xpose.msra.mxu0 0.0
    %8185 = vmatprep.subr.mxu0 0.0
    %8186 = vmatpush1.xpose.msra.mxu0 0.0
    %8187 = vmatprep.subr.mxu0 0.0
    %8188 = vmatpush1.xpose.msra.mxu0 0.0
    %8189 = vmatprep.subr.mxu0 0.0
    %8190 = vmatpush1.xpose.msra.mxu0 0.0
    %8191 = vmatprep.subr.mxu0 0.0
    %8192 = vmatpush1.xpose.msra.mxu0 0.0
    %8193 = vmatprep.mubr.f32.mxu0 0.0
    %8194 = vmatmul.mubr.f32.gmra.mrb[0].mxu0 %v8070
    %v8195 = vpop.f32.mrb[0].mxu0
    %v8196 = vadd.f32 0.0, %v8195
    %v8197 = vpop.f32.mrb[0].mxu0
    %8198 = vmatprep.mubr.f32.mxu0 0.0
    %8199 = vmatmul.mubr.f32.gmra.mrb[0].mxu0 %v8073
    %v8200 = vpop.f32.mrb[0].mxu0
    %v8201 = vadd.f32 0.0, %v8200
    %v8202 = vpop.f32.mrb[0].mxu0
    %8203 = vmatprep.mubr.f32.mxu0 0.0
    %8204 = vmatmul.mubr.f32.gmra.mrb[0].mxu0 %v8076
    %v8205 = vpop.f32.mrb[0].mxu0
    %v8206 = vadd.f32 0.0, %v8205
    %v8207 = vpop.f32.mrb[0].mxu0
    %8208 = vmatprep.mubr.f32.mxu0 0.0
    %8209 = vmatmul.mubr.f32.gmra.mrb[0].mxu0 %v8079
    %v8210 = vpop.f32.mrb[0].mxu0
    %v8211 = vadd.f32 0.0, %v8210
    %v8212 = vpop.f32.mrb[0].mxu0
    %8213 = vdwg.mxu0
    %8214 = vst [vmem:[%s115] sm:$0xff] %v8196
    %8215 = vst [vmem:[%s115 + $0x8] sm:$0xff] %v8201
    %8216 = vst [vmem:[%s115 + $0x10] sm:$0xff] %v8206
    %8217 = vst [vmem:[%s115 + $0x18] sm:$0xff] %v8211
    // Predicated region
    $region290: #{visual_bloom_forward.1} parent=1 // pred_check
      _
    $region291: #{visual_bloom_forward.1} parent=1 // pred_check_branch
      %8219 = sbr.rel (0) target = $region293
    $region292: #{visual_bloom_forward.1} parent=1 // pred_region
      _
    $region293: #{visual_bloom_forward.1} parent=1 // pred_fallthru
      _
    // Predicated region
    $region294: #{visual_bloom_forward.1} parent=1 // pred_check
      _
    $region295: #{visual_bloom_forward.1} parent=1 // pred_check_branch
      %8221 = sbr.rel (0) target = $region297
    $region296: #{visual_bloom_forward.1} parent=1 // pred_region
      _
    $region297: #{visual_bloom_forward.1} parent=1 // pred_fallthru
      _
    %8222 = vsyncpa [#allocation3], 1
    %8223 = vsyncpa [#allocation5], 1
    %8224 = vsyncpa [#allocation8], 1
    %8225 = vsyncpa [#allocation11], 1
    %8226 = vsyncpa [#allocation14], 1
    %8227 = vsyncpa [#allocation17], 1
    %8228 = vsyncpa [#allocation20], 1
    %8229 = vsyncpa [#allocation23], 1

</llo_original>
